<compile_context>
chip_gen: v7x
topology: tpu7x:2x2x1
jax: 0.10.0
libtpu: 0.0.40
codegen_flags: <defaults>
</compile_context>

<pallas_src>
import jax
import jax.numpy as jnp
from jax.experimental import pallas as pl
from jax.experimental.pallas import tpu as pltpu

EPS = 1e-5
SLOPE = 0.2

# conv geometry: 28x28 -> (k=3,s=2) 13x13 -> (k=5,s=2) 5x5 -> (k=5,s=2) 1x1
H1 = 13                         # conv1 output spatial size
H2 = 5                          # conv2 output spatial size
C1, C2, C3 = 16, 32, 64
A = 7                           # phase-split extent per parity (ceil(13/2), padded)
PHASE_ROWS = 2 * 2 * A * A      # 196 phase-split rows per image
VALID_ROWS = H1 * H1            # 169 real conv1 output positions per image
PAD_ROWS = PHASE_ROWS - VALID_ROWS  # 27 zero-padding rows per image

_VMEM = pl.BlockSpec(memory_space=pltpu.MemorySpace.VMEM)


# ---------------------------------------------------------------------------
# In-kernel helpers
# ---------------------------------------------------------------------------
def _bn_lrelu(y, gamma, beta, count, n_pad):
    """Training-mode BatchNorm (stats over axis 0) folded to one scale/shift FMA + LeakyReLU.

    Padded rows (n_pad of them) are exactly zero, so the plain sum equals the sum over
    valid rows; the variance gets an exact -n_pad*mu^2 correction for the (0-mu)^2 terms
    those rows contribute.
    """
    inv = 1.0 / float(count)
    mu = jnp.sum(y, axis=0, keepdims=True) * inv
    c = y - mu
    var = (jnp.sum(c * c, axis=0, keepdims=True) - float(n_pad) * (mu * mu)) * inv
    scale = gamma * jax.lax.rsqrt(var + EPS)
    shift = beta - mu * scale
    z = y * scale + shift
    return jnp.where(z >= 0.0, z, SLOPE * z)


def _disc_kernel(cols1_ref, w1_ref, w2_ref, w3_ref, wl_ref, bl_ref,
                 g1_ref, be1_ref, g2_ref, be2_ref, g3_ref, be3_ref,
                 o_ref, act1_ref, col2_ref, act2_ref, x3_ref):
    n = o_ref.shape[0]

    # ---- block 1: conv1 (one matmul on host-built patches) + BN + LeakyReLU -----------
    # cols1 rows are ordered (ph, pw, a, b, n); output position (h1, w1) = (2a+ph, 2b+pw).
    # Rows with h1 == 13 or w1 == 13 are zero padding (never read below).
    y1 = jnp.dot(cols1_ref[...], w1_ref[...], preferred_element_type=jnp.float32)
    act1_ref[...] = _bn_lrelu(y1, g1_ref[...], be1_ref[...],
                              count=VALID_ROWS * n, n_pad=PAD_ROWS * n)

    # ---- block 2: in-kernel im2col gather + conv2 matmul + BN + LeakyReLU -------------
    # Phase-split layout makes every gather contiguous: tap (di, dj) of output (oi, oj)
    # reads phase (di%2, dj%2) at (a, b) = (oi + di//2, oj + dj//2).
    for di in range(5):
        for dj in range(5):
            ph, a0 = di % 2, di // 2
            pw, b0 = dj % 2, dj // 2
            t = di * 5 + dj
            base = (ph * 2 + pw) * (A * A)
            for oi in range(H2):
                src = (base + (oi + a0) * A + b0) * n
                col2_ref[pl.ds(oi * H2 * n, H2 * n), pl.ds(t * C1, C1)] = (
                    act1_ref[pl.ds(src, H2 * n), :])
    y2 = jnp.dot(col2_ref[...], w2_ref[...], preferred_element_type=jnp.float32)
    act2_ref[...] = _bn_lrelu(y2, g2_ref[...], be2_ref[...],
                              count=H2 * H2 * n, n_pad=0)

    # ---- block 3: conv3 is a full contraction (5x5 kernel == 5x5 input) ---------------
    for pos in range(H2 * H2):
        x3_ref[:, pl.ds(pos * C2, C2)] = act2_ref[pl.ds(pos * n, n), :]
    y3 = jnp.dot(x3_ref[...], w3_ref[...], preferred_element_type=jnp.float32)
    act3 = _bn_lrelu(y3, g3_ref[...], be3_ref[...], count=n, n_pad=0)

    # ---- final Linear (64 -> 1) as a VPU multiply + lane reduction ---------------------
    o_ref[...] = jnp.sum(act3 * wl_ref[...], axis=1, keepdims=True) + bl_ref[...]


# ---------------------------------------------------------------------------
# Host-side glue
# ---------------------------------------------------------------------------
def _make_cols1(img_nchw):
    """Conv1 patch matrix with rows ordered (ph, pw, a, b, n) and lanes (dh, dw).

    Rows whose conv1 output position is out of range (h1 == 13 or w1 == 13) are zeroed
    so the kernel's padded-row BN correction stays exact.
    """
    n = img_nchw.shape[0]
    x = img_nchw[:, 0]                                  # Cin == 1 -> [N, 28, 28]
    xp = jnp.pad(x, ((0, 0), (0, 4), (0, 4)))           # pad to 32x32 (keeps slices in range)
    blocks = []
    for ph in range(2):
        for pw in range(2):
            taps = []
            for dh in range(3):
                for dw in range(3):
                    # tap (dh, dw) at output (2a+ph, 2b+pw): input index = 4a + 2*ph + dh
                    taps.append(xp[:, 2 * ph + dh: 2 * ph + dh + 4 * A: 4,
                                      2 * pw + dw: 2 * pw + dw + 4 * A: 4])
            blk = jnp.stack(taps, axis=-1)              # [N, A, A, 9]
            if ph == 1:
                blk = blk.at[:, A - 1, :, :].set(0.0)   # h1 = 13 -> padding row
            if pw == 1:
                blk = blk.at[:, :, A - 1, :].set(0.0)   # w1 = 13 -> padding col
            blocks.append(jnp.transpose(blk, (1, 2, 0, 3)))   # [A, A, N, 9]
    cols = jnp.stack(blocks, axis=0).reshape(PHASE_ROWS * n, 9)
    return jnp.pad(cols, ((0, 0), (0, 16 - 9)))         # lane-pad contraction dim 9 -> 16


def prepare_params(p):
    """One-time reshape of PyTorch-layout parameters into the kernel's matmul layouts.

    Conv biases b1/b2/b3 are intentionally dropped: training-mode BatchNorm cancels them.
    """
    w1m = jnp.transpose(p["w1"][:, 0], (1, 2, 0)).reshape(9, C1)       # (dh,dw) x C1
    w1m = jnp.pad(w1m, ((0, 16 - 9), (0, 0)))
    w2m = jnp.transpose(p["w2"], (2, 3, 1, 0)).reshape(25 * C1, C2)    # (di,dj,c1) x C2
    w3m = jnp.transpose(p["w3"], (2, 3, 1, 0)).reshape(25 * C2, C3)    # (oi,oj,c2) x C3
    return (
        w1m, w2m, w3m,
        p["wl"].reshape(1, C3), p["bl"].reshape(1, 1),
        p["g1"].reshape(1, C1), p["be1"].reshape(1, C1),
        p["g2"].reshape(1, C2), p["be2"].reshape(1, C2),
        p["g3"].reshape(1, C3), p["be3"].reshape(1, C3),
    )


@jax.jit
def discriminator_forward(img_nchw, prep):
    n = img_nchw.shape[0]
    cols1 = _make_cols1(img_nchw)
    return pl.pallas_call(
        _disc_kernel,
        out_shape=jax.ShapeDtypeStruct((n, 1), jnp.float32),
        in_specs=[_VMEM] * 12,
        out_specs=_VMEM,
        scratch_shapes=[
            pltpu.VMEM((PHASE_ROWS * n, C1), jnp.float32),    # conv1 activations (phase-split)
            pltpu.VMEM((H2 * H2 * n, 25 * C1), jnp.float32),  # conv2 in-kernel im2col
            pltpu.VMEM((H2 * H2 * n, C2), jnp.float32),       # conv2 activations
            pltpu.VMEM((n, 25 * C2), jnp.float32),            # conv3 input (flattened 5x5x32)
        ],
    )(cols1, *prep)


# ---------------------------------------------------------------------------
# Pure-JAX reference (faithful to the PyTorch module, incl. the cancelled conv biases)
# ---------------------------------------------------------------------------
def _ref_block(x_nchw, w, b, gamma, beta, stride):
    y = jax.lax.conv_general_dilated(
        x_nchw, w, window_strides=(stride, stride), padding="VALID",
        dimension_numbers=("NCHW", "OIHW", "NCHW"))
    y = y + b.reshape(1, -1, 1, 1)
    mu = jnp.mean(y, axis=(0, 2, 3), keepdims=True)
    var = jnp.var(y, axis=(0, 2, 3), keepdims=True)
    z = (y - mu) * jax.lax.rsqrt(var + EPS)
    z = z * gamma.reshape(1, -1, 1, 1) + beta.reshape(1, -1, 1, 1)
    return jnp.where(z >= 0.0, z, SLOPE * z)


def reference_forward(img_nchw, p):
    x = _ref_block(img_nchw, p["w1"], p["b1"], p["g1"], p["be1"], 2)
    x = _ref_block(x, p["w2"], p["b2"], p["g2"], p["be2"], 2)
    x = _ref_block(x, p["w3"], p["b3"], p["g3"], p["be3"], 2)
    x = x.reshape(x.shape[0], -1)
    return x @ p["wl"].T + p["bl"]


# ---------------------------------------------------------------------------
def make_params(key):
    ks = jax.random.split(key, 8)
    s = 0.1
    return {
        "w1": s * jax.random.normal(ks[0], (16, 1, 3, 3), jnp.float32),
        "b1": s * jax.random.normal(ks[1], (16,), jnp.float32),
        "g1": jnp.ones((16,), jnp.float32), "be1": jnp.zeros((16,), jnp.float32),
        "w2": s * jax.random.normal(ks[2], (32, 16, 5, 5), jnp.float32),
        "b2": s * jax.random.normal(ks[3], (32,), jnp.float32),
        "g2": jnp.ones((32,), jnp.float32), "be2": jnp.zeros((32,), jnp.float32),
        "w3": s * jax.random.normal(ks[4], (64, 32, 5, 5), jnp.float32),
        "b3": s * jax.random.normal(ks[5], (64,), jnp.float32),
        "g3": jnp.ones((64,), jnp.float32), "be3": jnp.zeros((64,), jnp.float32),
        "wl": s * jax.random.normal(ks[6], (1, 64), jnp.float32),
        "bl": s * jax.random.normal(ks[7], (1,), jnp.float32),
    }


if __name__ == "__main__":
    key = jax.random.PRNGKey(0)
    k_img, k_par = jax.random.split(key)
    # 28x28 input so the conv stack reduces to 1x1 spatial (Linear expects 64 features);
    # batch of 8 keeps every in-kernel row block sublane-aligned (any batch size works).
    img = jax.random.normal(k_img, (8, 1, 28, 28), jnp.float32)
    params = make_params(k_par)
    prep = prepare_params(params)   # one-time weight-layout prep, hoisted out of the forward

    out = jax.block_until_ready(discriminator_forward(img, prep))
    assert out.shape == (8, 1), out.shape

    ref = jax.block_until_ready(reference_forward(img, params))
    assert jnp.allclose(out, ref, rtol=2e-2, atol=2e-2), (out, ref)

    print("KERNEL_OK")
</pallas_src>

<mosaic_0001>
module attributes {stable_mosaic.version = 11 : i64} {
  func.func @_disc_kernel(%arg0: memref<1568x16xf32, #tpu.memory_space<vmem>>, %arg1: memref<16x16xf32, #tpu.memory_space<vmem>>, %arg2: memref<400x32xf32, #tpu.memory_space<vmem>>, %arg3: memref<800x64xf32, #tpu.memory_space<vmem>>, %arg4: memref<1x64xf32, #tpu.memory_space<vmem>>, %arg5: memref<1x1xf32, #tpu.memory_space<vmem>>, %arg6: memref<1x16xf32, #tpu.memory_space<vmem>>, %arg7: memref<1x16xf32, #tpu.memory_space<vmem>>, %arg8: memref<1x32xf32, #tpu.memory_space<vmem>>, %arg9: memref<1x32xf32, #tpu.memory_space<vmem>>, %arg10: memref<1x64xf32, #tpu.memory_space<vmem>>, %arg11: memref<1x64xf32, #tpu.memory_space<vmem>>, %arg12: memref<8x1xf32, #tpu.memory_space<vmem>>, %arg13: memref<1568x16xf32, #tpu.memory_space<vmem>>, %arg14: memref<200x400xf32, #tpu.memory_space<vmem>>, %arg15: memref<200x32xf32, #tpu.memory_space<vmem>>, %arg16: memref<8x800xf32, #tpu.memory_space<vmem>>) attributes {dimension_semantics = [], scalar_prefetch = 0 : i64, scratch_operands = 4 : i64, tpu.core_type = #tpu.core_type<tc>} {
    %c0 = arith.constant 0 : index
    %c0_0 = arith.constant 0 : index
    %0 = vector.load %arg0[%c0, %c0_0] : memref<1568x16xf32, #tpu.memory_space<vmem>>, vector<1568x16xf32>
    %c0_1 = arith.constant 0 : index
    %c0_2 = arith.constant 0 : index
    %1 = vector.load %arg1[%c0_1, %c0_2] : memref<16x16xf32, #tpu.memory_space<vmem>>, vector<16x16xf32>
    %cst = arith.constant dense<0.000000e+00> : vector<1568x16xf32>
    %2 = tpu.matmul %0, %1, %cst {dimension_numbers = #tpu.dot_dimension_numbers<[1], [0], [0], [1], [0, 0, 1, 1], [], []>} : vector<1568x16xf32>, vector<16x16xf32>, vector<1568x16xf32> -> vector<1568x16xf32>
    %c0_3 = arith.constant 0 : index
    %c0_4 = arith.constant 0 : index
    %3 = vector.load %arg6[%c0_3, %c0_4] : memref<1x16xf32, #tpu.memory_space<vmem>>, vector<1x16xf32>
    %c0_5 = arith.constant 0 : index
    %c0_6 = arith.constant 0 : index
    %4 = vector.load %arg7[%c0_5, %c0_6] : memref<1x16xf32, #tpu.memory_space<vmem>>, vector<1x16xf32>
    %cst_7 = arith.constant dense<0.000000e+00> : vector<16xf32>
    %5 = vector.multi_reduction <add>, %2, %cst_7 [0] : vector<1568x16xf32> to vector<16xf32>
    %6 = vector.shape_cast %5 : vector<16xf32> to vector<1x16xf32>
    %cst_8 = arith.constant 7.396450e-04 : f32
    %7 = vector.broadcast %cst_8 : f32 to vector<1x16xf32>
    %8 = arith.mulf %6, %7 : vector<1x16xf32>
    %9 = vector.broadcast %8 : vector<1x16xf32> to vector<1568x16xf32>
    %10 = arith.subf %2, %9 : vector<1568x16xf32>
    %11 = arith.mulf %10, %10 : vector<1568x16xf32>
    %cst_9 = arith.constant dense<0.000000e+00> : vector<16xf32>
    %12 = vector.multi_reduction <add>, %11, %cst_9 [0] : vector<1568x16xf32> to vector<16xf32>
    %13 = vector.shape_cast %12 : vector<16xf32> to vector<1x16xf32>
    %14 = arith.mulf %8, %8 : vector<1x16xf32>
    %cst_10 = arith.constant 2.160000e+02 : f32
    %15 = vector.broadcast %cst_10 : f32 to vector<1x16xf32>
    %16 = arith.mulf %15, %14 : vector<1x16xf32>
    %17 = arith.subf %13, %16 : vector<1x16xf32>
    %cst_11 = arith.constant 7.396450e-04 : f32
    %18 = vector.broadcast %cst_11 : f32 to vector<1x16xf32>
    %19 = arith.mulf %17, %18 : vector<1x16xf32>
    %cst_12 = arith.constant 9.99999974E-6 : f32
    %20 = vector.broadcast %cst_12 : f32 to vector<1x16xf32>
    %21 = arith.addf %19, %20 : vector<1x16xf32>
    %22 = math.rsqrt %21 : vector<1x16xf32>
    %23 = arith.mulf %3, %22 : vector<1x16xf32>
    %24 = arith.mulf %8, %23 : vector<1x16xf32>
    %25 = arith.subf %4, %24 : vector<1x16xf32>
    %26 = vector.broadcast %23 : vector<1x16xf32> to vector<1568x16xf32>
    %27 = arith.mulf %2, %26 : vector<1568x16xf32>
    %28 = vector.broadcast %25 : vector<1x16xf32> to vector<1568x16xf32>
    %29 = arith.addf %27, %28 : vector<1568x16xf32>
    %cst_13 = arith.constant 0.000000e+00 : f32
    %30 = vector.broadcast %cst_13 : f32 to vector<1568x16xf32>
    %31 = arith.cmpf oge, %29, %30 : vector<1568x16xf32>
    %cst_14 = arith.constant 2.000000e-01 : f32
    %32 = vector.broadcast %cst_14 : f32 to vector<1568x16xf32>
    %33 = arith.mulf %32, %29 : vector<1568x16xf32>
    %34 = arith.select %31, %29, %33 : vector<1568x16xi1>, vector<1568x16xf32>
    %c0_15 = arith.constant 0 : index
    %c0_16 = arith.constant 0 : index
    %35 = vector.load %arg13[%c0_15, %c0_16] : memref<1568x16xf32, #tpu.memory_space<vmem>>, vector<1568x16xf32>
    tpu.vector_store %arg13[%c0_15, %c0_16], %34 {strides = array<i32>} : memref<1568x16xf32, #tpu.memory_space<vmem>>, vector<1568x16xf32>,
    %c0_17 = arith.constant 0 : index
    %c0_18 = arith.constant 0 : index
    %36 = vector.load %arg13[%c0_17, %c0_18] : memref<1568x16xf32, #tpu.memory_space<vmem>>, vector<40x16xf32>
    %c0_19 = arith.constant 0 : index
    %c0_20 = arith.constant 0 : index
    %37 = vector.load %arg14[%c0_19, %c0_20] : memref<200x400xf32, #tpu.memory_space<vmem>>, vector<40x16xf32>
    tpu.vector_store %arg14[%c0_19, %c0_20], %36 {strides = array<i32>} : memref<200x400xf32, #tpu.memory_space<vmem>>, vector<40x16xf32>,
    %c56 = arith.constant 56 : index
    %c0_21 = arith.constant 0 : index
    %38 = vector.load %arg13[%c56, %c0_21] : memref<1568x16xf32, #tpu.memory_space<vmem>>, vector<40x16xf32>
    %c40 = arith.constant 40 : index
    %c0_22 = arith.constant 0 : index
    %39 = vector.load %arg14[%c40, %c0_22] : memref<200x400xf32, #tpu.memory_space<vmem>>, vector<40x16xf32>
    tpu.vector_store %arg14[%c40, %c0_22], %38 {strides = array<i32>} : memref<200x400xf32, #tpu.memory_space<vmem>>, vector<40x16xf32>,
    %c112 = arith.constant 112 : index
    %c0_23 = arith.constant 0 : index
    %40 = vector.load %arg13[%c112, %c0_23] : memref<1568x16xf32, #tpu.memory_space<vmem>>, vector<40x16xf32>
    %c80 = arith.constant 80 : index
    %c0_24 = arith.constant 0 : index
    %41 = vector.load %arg14[%c80, %c0_24] : memref<200x400xf32, #tpu.memory_space<vmem>>, vector<40x16xf32>
    tpu.vector_store %arg14[%c80, %c0_24], %40 {strides = array<i32>} : memref<200x400xf32, #tpu.memory_space<vmem>>, vector<40x16xf32>,
    %c168 = arith.constant 168 : index
    %c0_25 = arith.constant 0 : index
    %42 = vector.load %arg13[%c168, %c0_25] : memref<1568x16xf32, #tpu.memory_space<vmem>>, vector<40x16xf32>
    %c120 = arith.constant 120 : index
    %c0_26 = arith.constant 0 : index
    %43 = vector.load %arg14[%c120, %c0_26] : memref<200x400xf32, #tpu.memory_space<vmem>>, vector<40x16xf32>
    tpu.vector_store %arg14[%c120, %c0_26], %42 {strides = array<i32>} : memref<200x400xf32, #tpu.memory_space<vmem>>, vector<40x16xf32>,
    %c224 = arith.constant 224 : index
    %c0_27 = arith.constant 0 : index
    %44 = vector.load %arg13[%c224, %c0_27] : memref<1568x16xf32, #tpu.memory_space<vmem>>, vector<40x16xf32>
    %c160 = arith.constant 160 : index
    %c0_28 = arith.constant 0 : index
    %45 = vector.load %arg14[%c160, %c0_28] : memref<200x400xf32, #tpu.memory_space<vmem>>, vector<40x16xf32>
    tpu.vector_store %arg14[%c160, %c0_28], %44 {strides = array<i32>} : memref<200x400xf32, #tpu.memory_space<vmem>>, vector<40x16xf32>,
    %c392 = arith.constant 392 : index
    %c0_29 = arith.constant 0 : index
    %46 = vector.load %arg13[%c392, %c0_29] : memref<1568x16xf32, #tpu.memory_space<vmem>>, vector<40x16xf32>
    %c0_30 = arith.constant 0 : index
    %c16 = arith.constant 16 : index
    %47 = vector.load %arg14[%c0_30, %c16] : memref<200x400xf32, #tpu.memory_space<vmem>>, vector<40x16xf32>
    tpu.vector_store %arg14[%c0_30, %c16], %46 {strides = array<i32>} : memref<200x400xf32, #tpu.memory_space<vmem>>, vector<40x16xf32>,
    %c448 = arith.constant 448 : index
    %c0_31 = arith.constant 0 : index
    %48 = vector.load %arg13[%c448, %c0_31] : memref<1568x16xf32, #tpu.memory_space<vmem>>, vector<40x16xf32>
    %c40_32 = arith.constant 40 : index
    %c16_33 = arith.constant 16 : index
    %49 = vector.load %arg14[%c40_32, %c16_33] : memref<200x400xf32, #tpu.memory_space<vmem>>, vector<40x16xf32>
    tpu.vector_store %arg14[%c40_32, %c16_33], %48 {strides = array<i32>} : memref<200x400xf32, #tpu.memory_space<vmem>>, vector<40x16xf32>,
    %c504 = arith.constant 504 : index
    %c0_34 = arith.constant 0 : index
    %50 = vector.load %arg13[%c504, %c0_34] : memref<1568x16xf32, #tpu.memory_space<vmem>>, vector<40x16xf32>
    %c80_35 = arith.constant 80 : index
    %c16_36 = arith.constant 16 : index
    %51 = vector.load %arg14[%c80_35, %c16_36] : memref<200x400xf32, #tpu.memory_space<vmem>>, vector<40x16xf32>
    tpu.vector_store %arg14[%c80_35, %c16_36], %50 {strides = array<i32>} : memref<200x400xf32, #tpu.memory_space<vmem>>, vector<40x16xf32>,
    %c560 = arith.constant 560 : index
    %c0_37 = arith.constant 0 : index
    %52 = vector.load %arg13[%c560, %c0_37] : memref<1568x16xf32, #tpu.memory_space<vmem>>, vector<40x16xf32>
    %c120_38 = arith.constant 120 : index
    %c16_39 = arith.constant 16 : index
    %53 = vector.load %arg14[%c120_38, %c16_39] : memref<200x400xf32, #tpu.memory_space<vmem>>, vector<40x16xf32>
    tpu.vector_store %arg14[%c120_38, %c16_39], %52 {strides = array<i32>} : memref<200x400xf32, #tpu.memory_space<vmem>>, vector<40x16xf32>,
    %c616 = arith.constant 616 : index
    %c0_40 = arith.constant 0 : index
    %54 = vector.load %arg13[%c616, %c0_40] : memref<1568x16xf32, #tpu.memory_space<vmem>>, vector<40x16xf32>
    %c160_41 = arith.constant 160 : index
    %c16_42 = arith.constant 16 : index
    %55 = vector.load %arg14[%c160_41, %c16_42] : memref<200x400xf32, #tpu.memory_space<vmem>>, vector<40x16xf32>
    tpu.vector_store %arg14[%c160_41, %c16_42], %54 {strides = array<i32>} : memref<200x400xf32, #tpu.memory_space<vmem>>, vector<40x16xf32>,
    %c8 = arith.constant 8 : index
    %c0_43 = arith.constant 0 : index
    %56 = vector.load %arg13[%c8, %c0_43] : memref<1568x16xf32, #tpu.memory_space<vmem>>, vector<40x16xf32>
    %c0_44 = arith.constant 0 : index
    %c32 = arith.constant 32 : index
    %57 = vector.load %arg14[%c0_44, %c32] : memref<200x400xf32, #tpu.memory_space<vmem>>, vector<40x16xf32>
    tpu.vector_store %arg14[%c0_44, %c32], %56 {strides = array<i32>} : memref<200x400xf32, #tpu.memory_space<vmem>>, vector<40x16xf32>,
    %c64 = arith.constant 64 : index
    %c0_45 = arith.constant 0 : index
    %58 = vector.load %arg13[%c64, %c0_45] : memref<1568x16xf32, #tpu.memory_space<vmem>>, vector<40x16xf32>
    %c40_46 = arith.constant 40 : index
    %c32_47 = arith.constant 32 : index
    %59 = vector.load %arg14[%c40_46, %c32_47] : memref<200x400xf32, #tpu.memory_space<vmem>>, vector<40x16xf32>
    tpu.vector_store %arg14[%c40_46, %c32_47], %58 {strides = array<i32>} : memref<200x400xf32, #tpu.memory_space<vmem>>, vector<40x16xf32>,
    %c120_48 = arith.constant 120 : index
    %c0_49 = arith.constant 0 : index
    %60 = vector.load %arg13[%c120_48, %c0_49] : memref<1568x16xf32, #tpu.memory_space<vmem>>, vector<40x16xf32>
    %c80_50 = arith.constant 80 : index
    %c32_51 = arith.constant 32 : index
    %61 = vector.load %arg14[%c80_50, %c32_51] : memref<200x400xf32, #tpu.memory_space<vmem>>, vector<40x16xf32>
    tpu.vector_store %arg14[%c80_50, %c32_51], %60 {strides = array<i32>} : memref<200x400xf32, #tpu.memory_space<vmem>>, vector<40x16xf32>,
    %c176 = arith.constant 176 : index
    %c0_52 = arith.constant 0 : index
    %62 = vector.load %arg13[%c176, %c0_52] : memref<1568x16xf32, #tpu.memory_space<vmem>>, vector<40x16xf32>
    %c120_53 = arith.constant 120 : index
    %c32_54 = arith.constant 32 : index
    %63 = vector.load %arg14[%c120_53, %c32_54] : memref<200x400xf32, #tpu.memory_space<vmem>>, vector<40x16xf32>
    tpu.vector_store %arg14[%c120_53, %c32_54], %62 {strides = array<i32>} : memref<200x400xf32, #tpu.memory_space<vmem>>, vector<40x16xf32>,
    %c232 = arith.constant 232 : index
    %c0_55 = arith.constant 0 : index
    %64 = vector.load %arg13[%c232, %c0_55] : memref<1568x16xf32, #tpu.memory_space<vmem>>, vector<40x16xf32>
    %c160_56 = arith.constant 160 : index
    %c32_57 = arith.constant 32 : index
    %65 = vector.load %arg14[%c160_56, %c32_57] : memref<200x400xf32, #tpu.memory_space<vmem>>, vector<40x16xf32>
    tpu.vector_store %arg14[%c160_56, %c32_57], %64 {strides = array<i32>} : memref<200x400xf32, #tpu.memory_space<vmem>>, vector<40x16xf32>,
    %c400 = arith.constant 400 : index
    %c0_58 = arith.constant 0 : index
    %66 = vector.load %arg13[%c400, %c0_58] : memref<1568x16xf32, #tpu.memory_space<vmem>>, vector<40x16xf32>
    %c0_59 = arith.constant 0 : index
    %c48 = arith.constant 48 : index
    %67 = vector.load %arg14[%c0_59, %c48] : memref<200x400xf32, #tpu.memory_space<vmem>>, vector<40x16xf32>
    tpu.vector_store %arg14[%c0_59, %c48], %66 {strides = array<i32>} : memref<200x400xf32, #tpu.memory_space<vmem>>, vector<40x16xf32>,
    %c456 = arith.constant 456 : index
    %c0_60 = arith.constant 0 : index
    %68 = vector.load %arg13[%c456, %c0_60] : memref<1568x16xf32, #tpu.memory_space<vmem>>, vector<40x16xf32>
    %c40_61 = arith.constant 40 : index
    %c48_62 = arith.constant 48 : index
    %69 = vector.load %arg14[%c40_61, %c48_62] : memref<200x400xf32, #tpu.memory_space<vmem>>, vector<40x16xf32>
    tpu.vector_store %arg14[%c40_61, %c48_62], %68 {strides = array<i32>} : memref<200x400xf32, #tpu.memory_space<vmem>>, vector<40x16xf32>,
    %c512 = arith.constant 512 : index
    %c0_63 = arith.constant 0 : index
    %70 = vector.load %arg13[%c512, %c0_63] : memref<1568x16xf32, #tpu.memory_space<vmem>>, vector<40x16xf32>
    %c80_64 = arith.constant 80 : index
    %c48_65 = arith.constant 48 : index
    %71 = vector.load %arg14[%c80_64, %c48_65] : memref<200x400xf32, #tpu.memory_space<vmem>>, vector<40x16xf32>
    tpu.vector_store %arg14[%c80_64, %c48_65], %70 {strides = array<i32>} : memref<200x400xf32, #tpu.memory_space<vmem>>, vector<40x16xf32>,
    %c568 = arith.constant 568 : index
    %c0_66 = arith.constant 0 : index
    %72 = vector.load %arg13[%c568, %c0_66] : memref<1568x16xf32, #tpu.memory_space<vmem>>, vector<40x16xf32>
    %c120_67 = arith.constant 120 : index
    %c48_68 = arith.constant 48 : index
    %73 = vector.load %arg14[%c120_67, %c48_68] : memref<200x400xf32, #tpu.memory_space<vmem>>, vector<40x16xf32>
    tpu.vector_store %arg14[%c120_67, %c48_68], %72 {strides = array<i32>} : memref<200x400xf32, #tpu.memory_space<vmem>>, vector<40x16xf32>,
    %c624 = arith.constant 624 : index
    %c0_69 = arith.constant 0 : index
    %74 = vector.load %arg13[%c624, %c0_69] : memref<1568x16xf32, #tpu.memory_space<vmem>>, vector<40x16xf32>
    %c160_70 = arith.constant 160 : index
    %c48_71 = arith.constant 48 : index
    %75 = vector.load %arg14[%c160_70, %c48_71] : memref<200x400xf32, #tpu.memory_space<vmem>>, vector<40x16xf32>
    tpu.vector_store %arg14[%c160_70, %c48_71], %74 {strides = array<i32>} : memref<200x400xf32, #tpu.memory_space<vmem>>, vector<40x16xf32>,
    %c16_72 = arith.constant 16 : index
    %c0_73 = arith.constant 0 : index
    %76 = vector.load %arg13[%c16_72, %c0_73] : memref<1568x16xf32, #tpu.memory_space<vmem>>, vector<40x16xf32>
    %c0_74 = arith.constant 0 : index
    %c64_75 = arith.constant 64 : index
    %77 = vector.load %arg14[%c0_74, %c64_75] : memref<200x400xf32, #tpu.memory_space<vmem>>, vector<40x16xf32>
    tpu.vector_store %arg14[%c0_74, %c64_75], %76 {strides = array<i32>} : memref<200x400xf32, #tpu.memory_space<vmem>>, vector<40x16xf32>,
    %c72 = arith.constant 72 : index
    %c0_76 = arith.constant 0 : index
    %78 = vector.load %arg13[%c72, %c0_76] : memref<1568x16xf32, #tpu.memory_space<vmem>>, vector<40x16xf32>
    %c40_77 = arith.constant 40 : index
    %c64_78 = arith.constant 64 : index
    %79 = vector.load %arg14[%c40_77, %c64_78] : memref<200x400xf32, #tpu.memory_space<vmem>>, vector<40x16xf32>
    tpu.vector_store %arg14[%c40_77, %c64_78], %78 {strides = array<i32>} : memref<200x400xf32, #tpu.memory_space<vmem>>, vector<40x16xf32>,
    %c128 = arith.constant 128 : index
    %c0_79 = arith.constant 0 : index
    %80 = vector.load %arg13[%c128, %c0_79] : memref<1568x16xf32, #tpu.memory_space<vmem>>, vector<40x16xf32>
    %c80_80 = arith.constant 80 : index
    %c64_81 = arith.constant 64 : index
    %81 = vector.load %arg14[%c80_80, %c64_81] : memref<200x400xf32, #tpu.memory_space<vmem>>, vector<40x16xf32>
    tpu.vector_store %arg14[%c80_80, %c64_81], %80 {strides = array<i32>} : memref<200x400xf32, #tpu.memory_space<vmem>>, vector<40x16xf32>,
    %c184 = arith.constant 184 : index
    %c0_82 = arith.constant 0 : index
    %82 = vector.load %arg13[%c184, %c0_82] : memref<1568x16xf32, #tpu.memory_space<vmem>>, vector<40x16xf32>
    %c120_83 = arith.constant 120 : index
    %c64_84 = arith.constant 64 : index
    %83 = vector.load %arg14[%c120_83, %c64_84] : memref<200x400xf32, #tpu.memory_space<vmem>>, vector<40x16xf32>
    tpu.vector_store %arg14[%c120_83, %c64_84], %82 {strides = array<i32>} : memref<200x400xf32, #tpu.memory_space<vmem>>, vector<40x16xf32>,
    %c240 = arith.constant 240 : index
    %c0_85 = arith.constant 0 : index
    %84 = vector.load %arg13[%c240, %c0_85] : memref<1568x16xf32, #tpu.memory_space<vmem>>, vector<40x16xf32>
    %c160_86 = arith.constant 160 : index
    %c64_87 = arith.constant 64 : index
    %85 = vector.load %arg14[%c160_86, %c64_87] : memref<200x400xf32, #tpu.memory_space<vmem>>, vector<40x16xf32>
    tpu.vector_store %arg14[%c160_86, %c64_87], %84 {strides = array<i32>} : memref<200x400xf32, #tpu.memory_space<vmem>>, vector<40x16xf32>,
    %c784 = arith.constant 784 : index
    %c0_88 = arith.constant 0 : index
    %86 = vector.load %arg13[%c784, %c0_88] : memref<1568x16xf32, #tpu.memory_space<vmem>>, vector<40x16xf32>
    %c0_89 = arith.constant 0 : index
    %c80_90 = arith.constant 80 : index
    %87 = vector.load %arg14[%c0_89, %c80_90] : memref<200x400xf32, #tpu.memory_space<vmem>>, vector<40x16xf32>
    tpu.vector_store %arg14[%c0_89, %c80_90], %86 {strides = array<i32>} : memref<200x400xf32, #tpu.memory_space<vmem>>, vector<40x16xf32>,
    %c840 = arith.constant 840 : index
    %c0_91 = arith.constant 0 : index
    %88 = vector.load %arg13[%c840, %c0_91] : memref<1568x16xf32, #tpu.memory_space<vmem>>, vector<40x16xf32>
    %c40_92 = arith.constant 40 : index
    %c80_93 = arith.constant 80 : index
    %89 = vector.load %arg14[%c40_92, %c80_93] : memref<200x400xf32, #tpu.memory_space<vmem>>, vector<40x16xf32>
    tpu.vector_store %arg14[%c40_92, %c80_93], %88 {strides = array<i32>} : memref<200x400xf32, #tpu.memory_space<vmem>>, vector<40x16xf32>,
    %c896 = arith.constant 896 : index
    %c0_94 = arith.constant 0 : index
    %90 = vector.load %arg13[%c896, %c0_94] : memref<1568x16xf32, #tpu.memory_space<vmem>>, vector<40x16xf32>
    %c80_95 = arith.constant 80 : index
    %c80_96 = arith.constant 80 : index
    %91 = vector.load %arg14[%c80_95, %c80_96] : memref<200x400xf32, #tpu.memory_space<vmem>>, vector<40x16xf32>
    tpu.vector_store %arg14[%c80_95, %c80_96], %90 {strides = array<i32>} : memref<200x400xf32, #tpu.memory_space<vmem>>, vector<40x16xf32>,
    %c952 = arith.constant 952 : index
    %c0_97 = arith.constant 0 : index
    %92 = vector.load %arg13[%c952, %c0_97] : memref<1568x16xf32, #tpu.memory_space<vmem>>, vector<40x16xf32>
    %c120_98 = arith.constant 120 : index
    %c80_99 = arith.constant 80 : index
    %93 = vector.load %arg14[%c120_98, %c80_99] : memref<200x400xf32, #tpu.memory_space<vmem>>, vector<40x16xf32>
    tpu.vector_store %arg14[%c120_98, %c80_99], %92 {strides = array<i32>} : memref<200x400xf32, #tpu.memory_space<vmem>>, vector<40x16xf32>,
    %c1008 = arith.constant 1008 : index
    %c0_100 = arith.constant 0 : index
    %94 = vector.load %arg13[%c1008, %c0_100] : memref<1568x16xf32, #tpu.memory_space<vmem>>, vector<40x16xf32>
    %c160_101 = arith.constant 160 : index
    %c80_102 = arith.constant 80 : index
    %95 = vector.load %arg14[%c160_101, %c80_102] : memref<200x400xf32, #tpu.memory_space<vmem>>, vector<40x16xf32>
    tpu.vector_store %arg14[%c160_101, %c80_102], %94 {strides = array<i32>} : memref<200x400xf32, #tpu.memory_space<vmem>>, vector<40x16xf32>,
    %c1176 = arith.constant 1176 : index
    %c0_103 = arith.constant 0 : index
    %96 = vector.load %arg13[%c1176, %c0_103] : memref<1568x16xf32, #tpu.memory_space<vmem>>, vector<40x16xf32>
    %c0_104 = arith.constant 0 : index
    %c96 = arith.constant 96 : index
    %97 = vector.load %arg14[%c0_104, %c96] : memref<200x400xf32, #tpu.memory_space<vmem>>, vector<40x16xf32>
    tpu.vector_store %arg14[%c0_104, %c96], %96 {strides = array<i32>} : memref<200x400xf32, #tpu.memory_space<vmem>>, vector<40x16xf32>,
    %c1232 = arith.constant 1232 : index
    %c0_105 = arith.constant 0 : index
    %98 = vector.load %arg13[%c1232, %c0_105] : memref<1568x16xf32, #tpu.memory_space<vmem>>, vector<40x16xf32>
    %c40_106 = arith.constant 40 : index
    %c96_107 = arith.constant 96 : index
    %99 = vector.load %arg14[%c40_106, %c96_107] : memref<200x400xf32, #tpu.memory_space<vmem>>, vector<40x16xf32>
    tpu.vector_store %arg14[%c40_106, %c96_107], %98 {strides = array<i32>} : memref<200x400xf32, #tpu.memory_space<vmem>>, vector<40x16xf32>,
    %c1288 = arith.constant 1288 : index
    %c0_108 = arith.constant 0 : index
    %100 = vector.load %arg13[%c1288, %c0_108] : memref<1568x16xf32, #tpu.memory_space<vmem>>, vector<40x16xf32>
    %c80_109 = arith.constant 80 : index
    %c96_110 = arith.constant 96 : index
    %101 = vector.load %arg14[%c80_109, %c96_110] : memref<200x400xf32, #tpu.memory_space<vmem>>, vector<40x16xf32>
    tpu.vector_store %arg14[%c80_109, %c96_110], %100 {strides = array<i32>} : memref<200x400xf32, #tpu.memory_space<vmem>>, vector<40x16xf32>,
    %c1344 = arith.constant 1344 : index
    %c0_111 = arith.constant 0 : index
    %102 = vector.load %arg13[%c1344, %c0_111] : memref<1568x16xf32, #tpu.memory_space<vmem>>, vector<40x16xf32>
    %c120_112 = arith.constant 120 : index
    %c96_113 = arith.constant 96 : index
    %103 = vector.load %arg14[%c120_112, %c96_113] : memref<200x400xf32, #tpu.memory_space<vmem>>, vector<40x16xf32>
    tpu.vector_store %arg14[%c120_112, %c96_113], %102 {strides = array<i32>} : memref<200x400xf32, #tpu.memory_space<vmem>>, vector<40x16xf32>,
    %c1400 = arith.constant 1400 : index
    %c0_114 = arith.constant 0 : index
    %104 = vector.load %arg13[%c1400, %c0_114] : memref<1568x16xf32, #tpu.memory_space<vmem>>, vector<40x16xf32>
    %c160_115 = arith.constant 160 : index
    %c96_116 = arith.constant 96 : index
    %105 = vector.load %arg14[%c160_115, %c96_116] : memref<200x400xf32, #tpu.memory_space<vmem>>, vector<40x16xf32>
    tpu.vector_store %arg14[%c160_115, %c96_116], %104 {strides = array<i32>} : memref<200x400xf32, #tpu.memory_space<vmem>>, vector<40x16xf32>,
    %c792 = arith.constant 792 : index
    %c0_117 = arith.constant 0 : index
    %106 = vector.load %arg13[%c792, %c0_117] : memref<1568x16xf32, #tpu.memory_space<vmem>>, vector<40x16xf32>
    %c0_118 = arith.constant 0 : index
    %c112_119 = arith.constant 112 : index
    %107 = vector.load %arg14[%c0_118, %c112_119] : memref<200x400xf32, #tpu.memory_space<vmem>>, vector<40x16xf32>
    tpu.vector_store %arg14[%c0_118, %c112_119], %106 {strides = array<i32>} : memref<200x400xf32, #tpu.memory_space<vmem>>, vector<40x16xf32>,
    %c848 = arith.constant 848 : index
    %c0_120 = arith.constant 0 : index
    %108 = vector.load %arg13[%c848, %c0_120] : memref<1568x16xf32, #tpu.memory_space<vmem>>, vector<40x16xf32>
    %c40_121 = arith.constant 40 : index
    %c112_122 = arith.constant 112 : index
    %109 = vector.load %arg14[%c40_121, %c112_122] : memref<200x400xf32, #tpu.memory_space<vmem>>, vector<40x16xf32>
    tpu.vector_store %arg14[%c40_121, %c112_122], %108 {strides = array<i32>} : memref<200x400xf32, #tpu.memory_space<vmem>>, vector<40x16xf32>,
    %c904 = arith.constant 904 : index
    %c0_123 = arith.constant 0 : index
    %110 = vector.load %arg13[%c904, %c0_123] : memref<1568x16xf32, #tpu.memory_space<vmem>>, vector<40x16xf32>
    %c80_124 = arith.constant 80 : index
    %c112_125 = arith.constant 112 : index
    %111 = vector.load %arg14[%c80_124, %c112_125] : memref<200x400xf32, #tpu.memory_space<vmem>>, vector<40x16xf32>
    tpu.vector_store %arg14[%c80_124, %c112_125], %110 {strides = array<i32>} : memref<200x400xf32, #tpu.memory_space<vmem>>, vector<40x16xf32>,
    %c960 = arith.constant 960 : index
    %c0_126 = arith.constant 0 : index
    %112 = vector.load %arg13[%c960, %c0_126] : memref<1568x16xf32, #tpu.memory_space<vmem>>, vector<40x16xf32>
    %c120_127 = arith.constant 120 : index
    %c112_128 = arith.constant 112 : index
    %113 = vector.load %arg14[%c120_127, %c112_128] : memref<200x400xf32, #tpu.memory_space<vmem>>, vector<40x16xf32>
    tpu.vector_store %arg14[%c120_127, %c112_128], %112 {strides = array<i32>} : memref<200x400xf32, #tpu.memory_space<vmem>>, vector<40x16xf32>,
    %c1016 = arith.constant 1016 : index
    %c0_129 = arith.constant 0 : index
    %114 = vector.load %arg13[%c1016, %c0_129] : memref<1568x16xf32, #tpu.memory_space<vmem>>, vector<40x16xf32>
    %c160_130 = arith.constant 160 : index
    %c112_131 = arith.constant 112 : index
    %115 = vector.load %arg14[%c160_130, %c112_131] : memref<200x400xf32, #tpu.memory_space<vmem>>, vector<40x16xf32>
    tpu.vector_store %arg14[%c160_130, %c112_131], %114 {strides = array<i32>} : memref<200x400xf32, #tpu.memory_space<vmem>>, vector<40x16xf32>,
    %c1184 = arith.constant 1184 : index
    %c0_132 = arith.constant 0 : index
    %116 = vector.load %arg13[%c1184, %c0_132] : memref<1568x16xf32, #tpu.memory_space<vmem>>, vector<40x16xf32>
    %c0_133 = arith.constant 0 : index
    %c128_134 = arith.constant 128 : index
    %117 = vector.load %arg14[%c0_133, %c128_134] : memref<200x400xf32, #tpu.memory_space<vmem>>, vector<40x16xf32>
    tpu.vector_store %arg14[%c0_133, %c128_134], %116 {strides = array<i32>} : memref<200x400xf32, #tpu.memory_space<vmem>>, vector<40x16xf32>,
    %c1240 = arith.constant 1240 : index
    %c0_135 = arith.constant 0 : index
    %118 = vector.load %arg13[%c1240, %c0_135] : memref<1568x16xf32, #tpu.memory_space<vmem>>, vector<40x16xf32>
    %c40_136 = arith.constant 40 : index
    %c128_137 = arith.constant 128 : index
    %119 = vector.load %arg14[%c40_136, %c128_137] : memref<200x400xf32, #tpu.memory_space<vmem>>, vector<40x16xf32>
    tpu.vector_store %arg14[%c40_136, %c128_137], %118 {strides = array<i32>} : memref<200x400xf32, #tpu.memory_space<vmem>>, vector<40x16xf32>,
    %c1296 = arith.constant 1296 : index
    %c0_138 = arith.constant 0 : index
    %120 = vector.load %arg13[%c1296, %c0_138] : memref<1568x16xf32, #tpu.memory_space<vmem>>, vector<40x16xf32>
    %c80_139 = arith.constant 80 : index
    %c128_140 = arith.constant 128 : index
    %121 = vector.load %arg14[%c80_139, %c128_140] : memref<200x400xf32, #tpu.memory_space<vmem>>, vector<40x16xf32>
    tpu.vector_store %arg14[%c80_139, %c128_140], %120 {strides = array<i32>} : memref<200x400xf32, #tpu.memory_space<vmem>>, vector<40x16xf32>,
    %c1352 = arith.constant 1352 : index
    %c0_141 = arith.constant 0 : index
    %122 = vector.load %arg13[%c1352, %c0_141] : memref<1568x16xf32, #tpu.memory_space<vmem>>, vector<40x16xf32>
    %c120_142 = arith.constant 120 : index
    %c128_143 = arith.constant 128 : index
    %123 = vector.load %arg14[%c120_142, %c128_143] : memref<200x400xf32, #tpu.memory_space<vmem>>, vector<40x16xf32>
    tpu.vector_store %arg14[%c120_142, %c128_143], %122 {strides = array<i32>} : memref<200x400xf32, #tpu.memory_space<vmem>>, vector<40x16xf32>,
    %c1408 = arith.constant 1408 : index
    %c0_144 = arith.constant 0 : index
    %124 = vector.load %arg13[%c1408, %c0_144] : memref<1568x16xf32, #tpu.memory_space<vmem>>, vector<40x16xf32>
    %c160_145 = arith.constant 160 : index
    %c128_146 = arith.constant 128 : index
    %125 = vector.load %arg14[%c160_145, %c128_146] : memref<200x400xf32, #tpu.memory_space<vmem>>, vector<40x16xf32>
    tpu.vector_store %arg14[%c160_145, %c128_146], %124 {strides = array<i32>} : memref<200x400xf32, #tpu.memory_space<vmem>>, vector<40x16xf32>,
    %c800 = arith.constant 800 : index
    %c0_147 = arith.constant 0 : index
    %126 = vector.load %arg13[%c800, %c0_147] : memref<1568x16xf32, #tpu.memory_space<vmem>>, vector<40x16xf32>
    %c0_148 = arith.constant 0 : index
    %c144 = arith.constant 144 : index
    %127 = vector.load %arg14[%c0_148, %c144] : memref<200x400xf32, #tpu.memory_space<vmem>>, vector<40x16xf32>
    tpu.vector_store %arg14[%c0_148, %c144], %126 {strides = array<i32>} : memref<200x400xf32, #tpu.memory_space<vmem>>, vector<40x16xf32>,
    %c856 = arith.constant 856 : index
    %c0_149 = arith.constant 0 : index
    %128 = vector.load %arg13[%c856, %c0_149] : memref<1568x16xf32, #tpu.memory_space<vmem>>, vector<40x16xf32>
    %c40_150 = arith.constant 40 : index
    %c144_151 = arith.constant 144 : index
    %129 = vector.load %arg14[%c40_150, %c144_151] : memref<200x400xf32, #tpu.memory_space<vmem>>, vector<40x16xf32>
    tpu.vector_store %arg14[%c40_150, %c144_151], %128 {strides = array<i32>} : memref<200x400xf32, #tpu.memory_space<vmem>>, vector<40x16xf32>,
    %c912 = arith.constant 912 : index
    %c0_152 = arith.constant 0 : index
    %130 = vector.load %arg13[%c912, %c0_152] : memref<1568x16xf32, #tpu.memory_space<vmem>>, vector<40x16xf32>
    %c80_153 = arith.constant 80 : index
    %c144_154 = arith.constant 144 : index
    %131 = vector.load %arg14[%c80_153, %c144_154] : memref<200x400xf32, #tpu.memory_space<vmem>>, vector<40x16xf32>
    tpu.vector_store %arg14[%c80_153, %c144_154], %130 {strides = array<i32>} : memref<200x400xf32, #tpu.memory_space<vmem>>, vector<40x16xf32>,
    %c968 = arith.constant 968 : index
    %c0_155 = arith.constant 0 : index
    %132 = vector.load %arg13[%c968, %c0_155] : memref<1568x16xf32, #tpu.memory_space<vmem>>, vector<40x16xf32>
    %c120_156 = arith.constant 120 : index
    %c144_157 = arith.constant 144 : index
    %133 = vector.load %arg14[%c120_156, %c144_157] : memref<200x400xf32, #tpu.memory_space<vmem>>, vector<40x16xf32>
    tpu.vector_store %arg14[%c120_156, %c144_157], %132 {strides = array<i32>} : memref<200x400xf32, #tpu.memory_space<vmem>>, vector<40x16xf32>,
    %c1024 = arith.constant 1024 : index
    %c0_158 = arith.constant 0 : index
    %134 = vector.load %arg13[%c1024, %c0_158] : memref<1568x16xf32, #tpu.memory_space<vmem>>, vector<40x16xf32>
    %c160_159 = arith.constant 160 : index
    %c144_160 = arith.constant 144 : index
    %135 = vector.load %arg14[%c160_159, %c144_160] : memref<200x400xf32, #tpu.memory_space<vmem>>, vector<40x16xf32>
    tpu.vector_store %arg14[%c160_159, %c144_160], %134 {strides = array<i32>} : memref<200x400xf32, #tpu.memory_space<vmem>>, vector<40x16xf32>,
    %c56_161 = arith.constant 56 : index
    %c0_162 = arith.constant 0 : index
    %136 = vector.load %arg13[%c56_161, %c0_162] : memref<1568x16xf32, #tpu.memory_space<vmem>>, vector<40x16xf32>
    %c0_163 = arith.constant 0 : index
    %c160_164 = arith.constant 160 : index
    %137 = vector.load %arg14[%c0_163, %c160_164] : memref<200x400xf32, #tpu.memory_space<vmem>>, vector<40x16xf32>
    tpu.vector_store %arg14[%c0_163, %c160_164], %136 {strides = array<i32>} : memref<200x400xf32, #tpu.memory_space<vmem>>, vector<40x16xf32>,
    %c112_165 = arith.constant 112 : index
    %c0_166 = arith.constant 0 : index
    %138 = vector.load %arg13[%c112_165, %c0_166] : memref<1568x16xf32, #tpu.memory_space<vmem>>, vector<40x16xf32>
    %c40_167 = arith.constant 40 : index
    %c160_168 = arith.constant 160 : index
    %139 = vector.load %arg14[%c40_167, %c160_168] : memref<200x400xf32, #tpu.memory_space<vmem>>, vector<40x16xf32>
    tpu.vector_store %arg14[%c40_167, %c160_168], %138 {strides = array<i32>} : memref<200x400xf32, #tpu.memory_space<vmem>>, vector<40x16xf32>,
    %c168_169 = arith.constant 168 : index
    %c0_170 = arith.constant 0 : index
    %140 = vector.load %arg13[%c168_169, %c0_170] : memref<1568x16xf32, #tpu.memory_space<vmem>>, vector<40x16xf32>
    %c80_171 = arith.constant 80 : index
    %c160_172 = arith.constant 160 : index
    %141 = vector.load %arg14[%c80_171, %c160_172] : memref<200x400xf32, #tpu.memory_space<vmem>>, vector<40x16xf32>
    tpu.vector_store %arg14[%c80_171, %c160_172], %140 {strides = array<i32>} : memref<200x400xf32, #tpu.memory_space<vmem>>, vector<40x16xf32>,
    %c224_173 = arith.constant 224 : index
    %c0_174 = arith.constant 0 : index
    %142 = vector.load %arg13[%c224_173, %c0_174] : memref<1568x16xf32, #tpu.memory_space<vmem>>, vector<40x16xf32>
    %c120_175 = arith.constant 120 : index
    %c160_176 = arith.constant 160 : index
    %143 = vector.load %arg14[%c120_175, %c160_176] : memref<200x400xf32, #tpu.memory_space<vmem>>, vector<40x16xf32>
    tpu.vector_store %arg14[%c120_175, %c160_176], %142 {strides = array<i32>} : memref<200x400xf32, #tpu.memory_space<vmem>>, vector<40x16xf32>,
    %c280 = arith.constant 280 : index
    %c0_177 = arith.constant 0 : index
    %144 = vector.load %arg13[%c280, %c0_177] : memref<1568x16xf32, #tpu.memory_space<vmem>>, vector<40x16xf32>
    %c160_178 = arith.constant 160 : index
    %c160_179 = arith.constant 160 : index
    %145 = vector.load %arg14[%c160_178, %c160_179] : memref<200x400xf32, #tpu.memory_space<vmem>>, vector<40x16xf32>
    tpu.vector_store %arg14[%c160_178, %c160_179], %144 {strides = array<i32>} : memref<200x400xf32, #tpu.memory_space<vmem>>, vector<40x16xf32>,
    %c448_180 = arith.constant 448 : index
    %c0_181 = arith.constant 0 : index
    %146 = vector.load %arg13[%c448_180, %c0_181] : memref<1568x16xf32, #tpu.memory_space<vmem>>, vector<40x16xf32>
    %c0_182 = arith.constant 0 : index
    %c176_183 = arith.constant 176 : index
    %147 = vector.load %arg14[%c0_182, %c176_183] : memref<200x400xf32, #tpu.memory_space<vmem>>, vector<40x16xf32>
    tpu.vector_store %arg14[%c0_182, %c176_183], %146 {strides = array<i32>} : memref<200x400xf32, #tpu.memory_space<vmem>>, vector<40x16xf32>,
    %c504_184 = arith.constant 504 : index
    %c0_185 = arith.constant 0 : index
    %148 = vector.load %arg13[%c504_184, %c0_185] : memref<1568x16xf32, #tpu.memory_space<vmem>>, vector<40x16xf32>
    %c40_186 = arith.constant 40 : index
    %c176_187 = arith.constant 176 : index
    %149 = vector.load %arg14[%c40_186, %c176_187] : memref<200x400xf32, #tpu.memory_space<vmem>>, vector<40x16xf32>
    tpu.vector_store %arg14[%c40_186, %c176_187], %148 {strides = array<i32>} : memref<200x400xf32, #tpu.memory_space<vmem>>, vector<40x16xf32>,
    %c560_188 = arith.constant 560 : index
    %c0_189 = arith.constant 0 : index
    %150 = vector.load %arg13[%c560_188, %c0_189] : memref<1568x16xf32, #tpu.memory_space<vmem>>, vector<40x16xf32>
    %c80_190 = arith.constant 80 : index
    %c176_191 = arith.constant 176 : index
    %151 = vector.load %arg14[%c80_190, %c176_191] : memref<200x400xf32, #tpu.memory_space<vmem>>, vector<40x16xf32>
    tpu.vector_store %arg14[%c80_190, %c176_191], %150 {strides = array<i32>} : memref<200x400xf32, #tpu.memory_space<vmem>>, vector<40x16xf32>,
    %c616_192 = arith.constant 616 : index
    %c0_193 = arith.constant 0 : index
    %152 = vector.load %arg13[%c616_192, %c0_193] : memref<1568x16xf32, #tpu.memory_space<vmem>>, vector<40x16xf32>
    %c120_194 = arith.constant 120 : index
    %c176_195 = arith.constant 176 : index
    %153 = vector.load %arg14[%c120_194, %c176_195] : memref<200x400xf32, #tpu.memory_space<vmem>>, vector<40x16xf32>
    tpu.vector_store %arg14[%c120_194, %c176_195], %152 {strides = array<i32>} : memref<200x400xf32, #tpu.memory_space<vmem>>, vector<40x16xf32>,
    %c672 = arith.constant 672 : index
    %c0_196 = arith.constant 0 : index
    %154 = vector.load %arg13[%c672, %c0_196] : memref<1568x16xf32, #tpu.memory_space<vmem>>, vector<40x16xf32>
    %c160_197 = arith.constant 160 : index
    %c176_198 = arith.constant 176 : index
    %155 = vector.load %arg14[%c160_197, %c176_198] : memref<200x400xf32, #tpu.memory_space<vmem>>, vector<40x16xf32>
    tpu.vector_store %arg14[%c160_197, %c176_198], %154 {strides = array<i32>} : memref<200x400xf32, #tpu.memory_space<vmem>>, vector<40x16xf32>,
    %c64_199 = arith.constant 64 : index
    %c0_200 = arith.constant 0 : index
    %156 = vector.load %arg13[%c64_199, %c0_200] : memref<1568x16xf32, #tpu.memory_space<vmem>>, vector<40x16xf32>
    %c0_201 = arith.constant 0 : index
    %c192 = arith.constant 192 : index
    %157 = vector.load %arg14[%c0_201, %c192] : memref<200x400xf32, #tpu.memory_space<vmem>>, vector<40x16xf32>
    tpu.vector_store %arg14[%c0_201, %c192], %156 {strides = array<i32>} : memref<200x400xf32, #tpu.memory_space<vmem>>, vector<40x16xf32>,
    %c120_202 = arith.constant 120 : index
    %c0_203 = arith.constant 0 : index
    %158 = vector.load %arg13[%c120_202, %c0_203] : memref<1568x16xf32, #tpu.memory_space<vmem>>, vector<40x16xf32>
    %c40_204 = arith.constant 40 : index
    %c192_205 = arith.constant 192 : index
    %159 = vector.load %arg14[%c40_204, %c192_205] : memref<200x400xf32, #tpu.memory_space<vmem>>, vector<40x16xf32>
    tpu.vector_store %arg14[%c40_204, %c192_205], %158 {strides = array<i32>} : memref<200x400xf32, #tpu.memory_space<vmem>>, vector<40x16xf32>,
    %c176_206 = arith.constant 176 : index
    %c0_207 = arith.constant 0 : index
    %160 = vector.load %arg13[%c176_206, %c0_207] : memref<1568x16xf32, #tpu.memory_space<vmem>>, vector<40x16xf32>
    %c80_208 = arith.constant 80 : index
    %c192_209 = arith.constant 192 : index
    %161 = vector.load %arg14[%c80_208, %c192_209] : memref<200x400xf32, #tpu.memory_space<vmem>>, vector<40x16xf32>
    tpu.vector_store %arg14[%c80_208, %c192_209], %160 {strides = array<i32>} : memref<200x400xf32, #tpu.memory_space<vmem>>, vector<40x16xf32>,
    %c232_210 = arith.constant 232 : index
    %c0_211 = arith.constant 0 : index
    %162 = vector.load %arg13[%c232_210, %c0_211] : memref<1568x16xf32, #tpu.memory_space<vmem>>, vector<40x16xf32>
    %c120_212 = arith.constant 120 : index
    %c192_213 = arith.constant 192 : index
    %163 = vector.load %arg14[%c120_212, %c192_213] : memref<200x400xf32, #tpu.memory_space<vmem>>, vector<40x16xf32>
    tpu.vector_store %arg14[%c120_212, %c192_213], %162 {strides = array<i32>} : memref<200x400xf32, #tpu.memory_space<vmem>>, vector<40x16xf32>,
    %c288 = arith.constant 288 : index
    %c0_214 = arith.constant 0 : index
    %164 = vector.load %arg13[%c288, %c0_214] : memref<1568x16xf32, #tpu.memory_space<vmem>>, vector<40x16xf32>
    %c160_215 = arith.constant 160 : index
    %c192_216 = arith.constant 192 : index
    %165 = vector.load %arg14[%c160_215, %c192_216] : memref<200x400xf32, #tpu.memory_space<vmem>>, vector<40x16xf32>
    tpu.vector_store %arg14[%c160_215, %c192_216], %164 {strides = array<i32>} : memref<200x400xf32, #tpu.memory_space<vmem>>, vector<40x16xf32>,
    %c456_217 = arith.constant 456 : index
    %c0_218 = arith.constant 0 : index
    %166 = vector.load %arg13[%c456_217, %c0_218] : memref<1568x16xf32, #tpu.memory_space<vmem>>, vector<40x16xf32>
    %c0_219 = arith.constant 0 : index
    %c208 = arith.constant 208 : index
    %167 = vector.load %arg14[%c0_219, %c208] : memref<200x400xf32, #tpu.memory_space<vmem>>, vector<40x16xf32>
    tpu.vector_store %arg14[%c0_219, %c208], %166 {strides = array<i32>} : memref<200x400xf32, #tpu.memory_space<vmem>>, vector<40x16xf32>,
    %c512_220 = arith.constant 512 : index
    %c0_221 = arith.constant 0 : index
    %168 = vector.load %arg13[%c512_220, %c0_221] : memref<1568x16xf32, #tpu.memory_space<vmem>>, vector<40x16xf32>
    %c40_222 = arith.constant 40 : index
    %c208_223 = arith.constant 208 : index
    %169 = vector.load %arg14[%c40_222, %c208_223] : memref<200x400xf32, #tpu.memory_space<vmem>>, vector<40x16xf32>
    tpu.vector_store %arg14[%c40_222, %c208_223], %168 {strides = array<i32>} : memref<200x400xf32, #tpu.memory_space<vmem>>, vector<40x16xf32>,
    %c568_224 = arith.constant 568 : index
    %c0_225 = arith.constant 0 : index
    %170 = vector.load %arg13[%c568_224, %c0_225] : memref<1568x16xf32, #tpu.memory_space<vmem>>, vector<40x16xf32>
    %c80_226 = arith.constant 80 : index
    %c208_227 = arith.constant 208 : index
    %171 = vector.load %arg14[%c80_226, %c208_227] : memref<200x400xf32, #tpu.memory_space<vmem>>, vector<40x16xf32>
    tpu.vector_store %arg14[%c80_226, %c208_227], %170 {strides = array<i32>} : memref<200x400xf32, #tpu.memory_space<vmem>>, vector<40x16xf32>,
    %c624_228 = arith.constant 624 : index
    %c0_229 = arith.constant 0 : index
    %172 = vector.load %arg13[%c624_228, %c0_229] : memref<1568x16xf32, #tpu.memory_space<vmem>>, vector<40x16xf32>
    %c120_230 = arith.constant 120 : index
    %c208_231 = arith.constant 208 : index
    %173 = vector.load %arg14[%c120_230, %c208_231] : memref<200x400xf32, #tpu.memory_space<vmem>>, vector<40x16xf32>
    tpu.vector_store %arg14[%c120_230, %c208_231], %172 {strides = array<i32>} : memref<200x400xf32, #tpu.memory_space<vmem>>, vector<40x16xf32>,
    %c680 = arith.constant 680 : index
    %c0_232 = arith.constant 0 : index
    %174 = vector.load %arg13[%c680, %c0_232] : memref<1568x16xf32, #tpu.memory_space<vmem>>, vector<40x16xf32>
    %c160_233 = arith.constant 160 : index
    %c208_234 = arith.constant 208 : index
    %175 = vector.load %arg14[%c160_233, %c208_234] : memref<200x400xf32, #tpu.memory_space<vmem>>, vector<40x16xf32>
    tpu.vector_store %arg14[%c160_233, %c208_234], %174 {strides = array<i32>} : memref<200x400xf32, #tpu.memory_space<vmem>>, vector<40x16xf32>,
    %c72_235 = arith.constant 72 : index
    %c0_236 = arith.constant 0 : index
    %176 = vector.load %arg13[%c72_235, %c0_236] : memref<1568x16xf32, #tpu.memory_space<vmem>>, vector<40x16xf32>
    %c0_237 = arith.constant 0 : index
    %c224_238 = arith.constant 224 : index
    %177 = vector.load %arg14[%c0_237, %c224_238] : memref<200x400xf32, #tpu.memory_space<vmem>>, vector<40x16xf32>
    tpu.vector_store %arg14[%c0_237, %c224_238], %176 {strides = array<i32>} : memref<200x400xf32, #tpu.memory_space<vmem>>, vector<40x16xf32>,
    %c128_239 = arith.constant 128 : index
    %c0_240 = arith.constant 0 : index
    %178 = vector.load %arg13[%c128_239, %c0_240] : memref<1568x16xf32, #tpu.memory_space<vmem>>, vector<40x16xf32>
    %c40_241 = arith.constant 40 : index
    %c224_242 = arith.constant 224 : index
    %179 = vector.load %arg14[%c40_241, %c224_242] : memref<200x400xf32, #tpu.memory_space<vmem>>, vector<40x16xf32>
    tpu.vector_store %arg14[%c40_241, %c224_242], %178 {strides = array<i32>} : memref<200x400xf32, #tpu.memory_space<vmem>>, vector<40x16xf32>,
    %c184_243 = arith.constant 184 : index
    %c0_244 = arith.constant 0 : index
    %180 = vector.load %arg13[%c184_243, %c0_244] : memref<1568x16xf32, #tpu.memory_space<vmem>>, vector<40x16xf32>
    %c80_245 = arith.constant 80 : index
    %c224_246 = arith.constant 224 : index
    %181 = vector.load %arg14[%c80_245, %c224_246] : memref<200x400xf32, #tpu.memory_space<vmem>>, vector<40x16xf32>
    tpu.vector_store %arg14[%c80_245, %c224_246], %180 {strides = array<i32>} : memref<200x400xf32, #tpu.memory_space<vmem>>, vector<40x16xf32>,
    %c240_247 = arith.constant 240 : index
    %c0_248 = arith.constant 0 : index
    %182 = vector.load %arg13[%c240_247, %c0_248] : memref<1568x16xf32, #tpu.memory_space<vmem>>, vector<40x16xf32>
    %c120_249 = arith.constant 120 : index
    %c224_250 = arith.constant 224 : index
    %183 = vector.load %arg14[%c120_249, %c224_250] : memref<200x400xf32, #tpu.memory_space<vmem>>, vector<40x16xf32>
    tpu.vector_store %arg14[%c120_249, %c224_250], %182 {strides = array<i32>} : memref<200x400xf32, #tpu.memory_space<vmem>>, vector<40x16xf32>,
    %c296 = arith.constant 296 : index
    %c0_251 = arith.constant 0 : index
    %184 = vector.load %arg13[%c296, %c0_251] : memref<1568x16xf32, #tpu.memory_space<vmem>>, vector<40x16xf32>
    %c160_252 = arith.constant 160 : index
    %c224_253 = arith.constant 224 : index
    %185 = vector.load %arg14[%c160_252, %c224_253] : memref<200x400xf32, #tpu.memory_space<vmem>>, vector<40x16xf32>
    tpu.vector_store %arg14[%c160_252, %c224_253], %184 {strides = array<i32>} : memref<200x400xf32, #tpu.memory_space<vmem>>, vector<40x16xf32>,
    %c840_254 = arith.constant 840 : index
    %c0_255 = arith.constant 0 : index
    %186 = vector.load %arg13[%c840_254, %c0_255] : memref<1568x16xf32, #tpu.memory_space<vmem>>, vector<40x16xf32>
    %c0_256 = arith.constant 0 : index
    %c240_257 = arith.constant 240 : index
    %187 = vector.load %arg14[%c0_256, %c240_257] : memref<200x400xf32, #tpu.memory_space<vmem>>, vector<40x16xf32>
    tpu.vector_store %arg14[%c0_256, %c240_257], %186 {strides = array<i32>} : memref<200x400xf32, #tpu.memory_space<vmem>>, vector<40x16xf32>,
    %c896_258 = arith.constant 896 : index
    %c0_259 = arith.constant 0 : index
    %188 = vector.load %arg13[%c896_258, %c0_259] : memref<1568x16xf32, #tpu.memory_space<vmem>>, vector<40x16xf32>
    %c40_260 = arith.constant 40 : index
    %c240_261 = arith.constant 240 : index
    %189 = vector.load %arg14[%c40_260, %c240_261] : memref<200x400xf32, #tpu.memory_space<vmem>>, vector<40x16xf32>
    tpu.vector_store %arg14[%c40_260, %c240_261], %188 {strides = array<i32>} : memref<200x400xf32, #tpu.memory_space<vmem>>, vector<40x16xf32>,
    %c952_262 = arith.constant 952 : index
    %c0_263 = arith.constant 0 : index
    %190 = vector.load %arg13[%c952_262, %c0_263] : memref<1568x16xf32, #tpu.memory_space<vmem>>, vector<40x16xf32>
    %c80_264 = arith.constant 80 : index
    %c240_265 = arith.constant 240 : index
    %191 = vector.load %arg14[%c80_264, %c240_265] : memref<200x400xf32, #tpu.memory_space<vmem>>, vector<40x16xf32>
    tpu.vector_store %arg14[%c80_264, %c240_265], %190 {strides = array<i32>} : memref<200x400xf32, #tpu.memory_space<vmem>>, vector<40x16xf32>,
    %c1008_266 = arith.constant 1008 : index
    %c0_267 = arith.constant 0 : index
    %192 = vector.load %arg13[%c1008_266, %c0_267] : memref<1568x16xf32, #tpu.memory_space<vmem>>, vector<40x16xf32>
    %c120_268 = arith.constant 120 : index
    %c240_269 = arith.constant 240 : index
    %193 = vector.load %arg14[%c120_268, %c240_269] : memref<200x400xf32, #tpu.memory_space<vmem>>, vector<40x16xf32>
    tpu.vector_store %arg14[%c120_268, %c240_269], %192 {strides = array<i32>} : memref<200x400xf32, #tpu.memory_space<vmem>>, vector<40x16xf32>,
    %c1064 = arith.constant 1064 : index
    %c0_270 = arith.constant 0 : index
    %194 = vector.load %arg13[%c1064, %c0_270] : memref<1568x16xf32, #tpu.memory_space<vmem>>, vector<40x16xf32>
    %c160_271 = arith.constant 160 : index
    %c240_272 = arith.constant 240 : index
    %195 = vector.load %arg14[%c160_271, %c240_272] : memref<200x400xf32, #tpu.memory_space<vmem>>, vector<40x16xf32>
    tpu.vector_store %arg14[%c160_271, %c240_272], %194 {strides = array<i32>} : memref<200x400xf32, #tpu.memory_space<vmem>>, vector<40x16xf32>,
    %c1232_273 = arith.constant 1232 : index
    %c0_274 = arith.constant 0 : index
    %196 = vector.load %arg13[%c1232_273, %c0_274] : memref<1568x16xf32, #tpu.memory_space<vmem>>, vector<40x16xf32>
    %c0_275 = arith.constant 0 : index
    %c256 = arith.constant 256 : index
    %197 = vector.load %arg14[%c0_275, %c256] : memref<200x400xf32, #tpu.memory_space<vmem>>, vector<40x16xf32>
    tpu.vector_store %arg14[%c0_275, %c256], %196 {strides = array<i32>} : memref<200x400xf32, #tpu.memory_space<vmem>>, vector<40x16xf32>,
    %c1288_276 = arith.constant 1288 : index
    %c0_277 = arith.constant 0 : index
    %198 = vector.load %arg13[%c1288_276, %c0_277] : memref<1568x16xf32, #tpu.memory_space<vmem>>, vector<40x16xf32>
    %c40_278 = arith.constant 40 : index
    %c256_279 = arith.constant 256 : index
    %199 = vector.load %arg14[%c40_278, %c256_279] : memref<200x400xf32, #tpu.memory_space<vmem>>, vector<40x16xf32>
    tpu.vector_store %arg14[%c40_278, %c256_279], %198 {strides = array<i32>} : memref<200x400xf32, #tpu.memory_space<vmem>>, vector<40x16xf32>,
    %c1344_280 = arith.constant 1344 : index
    %c0_281 = arith.constant 0 : index
    %200 = vector.load %arg13[%c1344_280, %c0_281] : memref<1568x16xf32, #tpu.memory_space<vmem>>, vector<40x16xf32>
    %c80_282 = arith.constant 80 : index
    %c256_283 = arith.constant 256 : index
    %201 = vector.load %arg14[%c80_282, %c256_283] : memref<200x400xf32, #tpu.memory_space<vmem>>, vector<40x16xf32>
    tpu.vector_store %arg14[%c80_282, %c256_283], %200 {strides = array<i32>} : memref<200x400xf32, #tpu.memory_space<vmem>>, vector<40x16xf32>,
    %c1400_284 = arith.constant 1400 : index
    %c0_285 = arith.constant 0 : index
    %202 = vector.load %arg13[%c1400_284, %c0_285] : memref<1568x16xf32, #tpu.memory_space<vmem>>, vector<40x16xf32>
    %c120_286 = arith.constant 120 : index
    %c256_287 = arith.constant 256 : index
    %203 = vector.load %arg14[%c120_286, %c256_287] : memref<200x400xf32, #tpu.memory_space<vmem>>, vector<40x16xf32>
    tpu.vector_store %arg14[%c120_286, %c256_287], %202 {strides = array<i32>} : memref<200x400xf32, #tpu.memory_space<vmem>>, vector<40x16xf32>,
    %c1456 = arith.constant 1456 : index
    %c0_288 = arith.constant 0 : index
    %204 = vector.load %arg13[%c1456, %c0_288] : memref<1568x16xf32, #tpu.memory_space<vmem>>, vector<40x16xf32>
    %c160_289 = arith.constant 160 : index
    %c256_290 = arith.constant 256 : index
    %205 = vector.load %arg14[%c160_289, %c256_290] : memref<200x400xf32, #tpu.memory_space<vmem>>, vector<40x16xf32>
    tpu.vector_store %arg14[%c160_289, %c256_290], %204 {strides = array<i32>} : memref<200x400xf32, #tpu.memory_space<vmem>>, vector<40x16xf32>,
    %c848_291 = arith.constant 848 : index
    %c0_292 = arith.constant 0 : index
    %206 = vector.load %arg13[%c848_291, %c0_292] : memref<1568x16xf32, #tpu.memory_space<vmem>>, vector<40x16xf32>
    %c0_293 = arith.constant 0 : index
    %c272 = arith.constant 272 : index
    %207 = vector.load %arg14[%c0_293, %c272] : memref<200x400xf32, #tpu.memory_space<vmem>>, vector<40x16xf32>
    tpu.vector_store %arg14[%c0_293, %c272], %206 {strides = array<i32>} : memref<200x400xf32, #tpu.memory_space<vmem>>, vector<40x16xf32>,
    %c904_294 = arith.constant 904 : index
    %c0_295 = arith.constant 0 : index
    %208 = vector.load %arg13[%c904_294, %c0_295] : memref<1568x16xf32, #tpu.memory_space<vmem>>, vector<40x16xf32>
    %c40_296 = arith.constant 40 : index
    %c272_297 = arith.constant 272 : index
    %209 = vector.load %arg14[%c40_296, %c272_297] : memref<200x400xf32, #tpu.memory_space<vmem>>, vector<40x16xf32>
    tpu.vector_store %arg14[%c40_296, %c272_297], %208 {strides = array<i32>} : memref<200x400xf32, #tpu.memory_space<vmem>>, vector<40x16xf32>,
    %c960_298 = arith.constant 960 : index
    %c0_299 = arith.constant 0 : index
    %210 = vector.load %arg13[%c960_298, %c0_299] : memref<1568x16xf32, #tpu.memory_space<vmem>>, vector<40x16xf32>
    %c80_300 = arith.constant 80 : index
    %c272_301 = arith.constant 272 : index
    %211 = vector.load %arg14[%c80_300, %c272_301] : memref<200x400xf32, #tpu.memory_space<vmem>>, vector<40x16xf32>
    tpu.vector_store %arg14[%c80_300, %c272_301], %210 {strides = array<i32>} : memref<200x400xf32, #tpu.memory_space<vmem>>, vector<40x16xf32>,
    %c1016_302 = arith.constant 1016 : index
    %c0_303 = arith.constant 0 : index
    %212 = vector.load %arg13[%c1016_302, %c0_303] : memref<1568x16xf32, #tpu.memory_space<vmem>>, vector<40x16xf32>
    %c120_304 = arith.constant 120 : index
    %c272_305 = arith.constant 272 : index
    %213 = vector.load %arg14[%c120_304, %c272_305] : memref<200x400xf32, #tpu.memory_space<vmem>>, vector<40x16xf32>
    tpu.vector_store %arg14[%c120_304, %c272_305], %212 {strides = array<i32>} : memref<200x400xf32, #tpu.memory_space<vmem>>, vector<40x16xf32>,
    %c1072 = arith.constant 1072 : index
    %c0_306 = arith.constant 0 : index
    %214 = vector.load %arg13[%c1072, %c0_306] : memref<1568x16xf32, #tpu.memory_space<vmem>>, vector<40x16xf32>
    %c160_307 = arith.constant 160 : index
    %c272_308 = arith.constant 272 : index
    %215 = vector.load %arg14[%c160_307, %c272_308] : memref<200x400xf32, #tpu.memory_space<vmem>>, vector<40x16xf32>
    tpu.vector_store %arg14[%c160_307, %c272_308], %214 {strides = array<i32>} : memref<200x400xf32, #tpu.memory_space<vmem>>, vector<40x16xf32>,
    %c1240_309 = arith.constant 1240 : index
    %c0_310 = arith.constant 0 : index
    %216 = vector.load %arg13[%c1240_309, %c0_310] : memref<1568x16xf32, #tpu.memory_space<vmem>>, vector<40x16xf32>
    %c0_311 = arith.constant 0 : index
    %c288_312 = arith.constant 288 : index
    %217 = vector.load %arg14[%c0_311, %c288_312] : memref<200x400xf32, #tpu.memory_space<vmem>>, vector<40x16xf32>
    tpu.vector_store %arg14[%c0_311, %c288_312], %216 {strides = array<i32>} : memref<200x400xf32, #tpu.memory_space<vmem>>, vector<40x16xf32>,
    %c1296_313 = arith.constant 1296 : index
    %c0_314 = arith.constant 0 : index
    %218 = vector.load %arg13[%c1296_313, %c0_314] : memref<1568x16xf32, #tpu.memory_space<vmem>>, vector<40x16xf32>
    %c40_315 = arith.constant 40 : index
    %c288_316 = arith.constant 288 : index
    %219 = vector.load %arg14[%c40_315, %c288_316] : memref<200x400xf32, #tpu.memory_space<vmem>>, vector<40x16xf32>
    tpu.vector_store %arg14[%c40_315, %c288_316], %218 {strides = array<i32>} : memref<200x400xf32, #tpu.memory_space<vmem>>, vector<40x16xf32>,
    %c1352_317 = arith.constant 1352 : index
    %c0_318 = arith.constant 0 : index
    %220 = vector.load %arg13[%c1352_317, %c0_318] : memref<1568x16xf32, #tpu.memory_space<vmem>>, vector<40x16xf32>
    %c80_319 = arith.constant 80 : index
    %c288_320 = arith.constant 288 : index
    %221 = vector.load %arg14[%c80_319, %c288_320] : memref<200x400xf32, #tpu.memory_space<vmem>>, vector<40x16xf32>
    tpu.vector_store %arg14[%c80_319, %c288_320], %220 {strides = array<i32>} : memref<200x400xf32, #tpu.memory_space<vmem>>, vector<40x16xf32>,
    %c1408_321 = arith.constant 1408 : index
    %c0_322 = arith.constant 0 : index
    %222 = vector.load %arg13[%c1408_321, %c0_322] : memref<1568x16xf32, #tpu.memory_space<vmem>>, vector<40x16xf32>
    %c120_323 = arith.constant 120 : index
    %c288_324 = arith.constant 288 : index
    %223 = vector.load %arg14[%c120_323, %c288_324] : memref<200x400xf32, #tpu.memory_space<vmem>>, vector<40x16xf32>
    tpu.vector_store %arg14[%c120_323, %c288_324], %222 {strides = array<i32>} : memref<200x400xf32, #tpu.memory_space<vmem>>, vector<40x16xf32>,
    %c1464 = arith.constant 1464 : index
    %c0_325 = arith.constant 0 : index
    %224 = vector.load %arg13[%c1464, %c0_325] : memref<1568x16xf32, #tpu.memory_space<vmem>>, vector<40x16xf32>
    %c160_326 = arith.constant 160 : index
    %c288_327 = arith.constant 288 : index
    %225 = vector.load %arg14[%c160_326, %c288_327] : memref<200x400xf32, #tpu.memory_space<vmem>>, vector<40x16xf32>
    tpu.vector_store %arg14[%c160_326, %c288_327], %224 {strides = array<i32>} : memref<200x400xf32, #tpu.memory_space<vmem>>, vector<40x16xf32>,
    %c856_328 = arith.constant 856 : index
    %c0_329 = arith.constant 0 : index
    %226 = vector.load %arg13[%c856_328, %c0_329] : memref<1568x16xf32, #tpu.memory_space<vmem>>, vector<40x16xf32>
    %c0_330 = arith.constant 0 : index
    %c304 = arith.constant 304 : index
    %227 = vector.load %arg14[%c0_330, %c304] : memref<200x400xf32, #tpu.memory_space<vmem>>, vector<40x16xf32>
    tpu.vector_store %arg14[%c0_330, %c304], %226 {strides = array<i32>} : memref<200x400xf32, #tpu.memory_space<vmem>>, vector<40x16xf32>,
    %c912_331 = arith.constant 912 : index
    %c0_332 = arith.constant 0 : index
    %228 = vector.load %arg13[%c912_331, %c0_332] : memref<1568x16xf32, #tpu.memory_space<vmem>>, vector<40x16xf32>
    %c40_333 = arith.constant 40 : index
    %c304_334 = arith.constant 304 : index
    %229 = vector.load %arg14[%c40_333, %c304_334] : memref<200x400xf32, #tpu.memory_space<vmem>>, vector<40x16xf32>
    tpu.vector_store %arg14[%c40_333, %c304_334], %228 {strides = array<i32>} : memref<200x400xf32, #tpu.memory_space<vmem>>, vector<40x16xf32>,
    %c968_335 = arith.constant 968 : index
    %c0_336 = arith.constant 0 : index
    %230 = vector.load %arg13[%c968_335, %c0_336] : memref<1568x16xf32, #tpu.memory_space<vmem>>, vector<40x16xf32>
    %c80_337 = arith.constant 80 : index
    %c304_338 = arith.constant 304 : index
    %231 = vector.load %arg14[%c80_337, %c304_338] : memref<200x400xf32, #tpu.memory_space<vmem>>, vector<40x16xf32>
    tpu.vector_store %arg14[%c80_337, %c304_338], %230 {strides = array<i32>} : memref<200x400xf32, #tpu.memory_space<vmem>>, vector<40x16xf32>,
    %c1024_339 = arith.constant 1024 : index
    %c0_340 = arith.constant 0 : index
    %232 = vector.load %arg13[%c1024_339, %c0_340] : memref<1568x16xf32, #tpu.memory_space<vmem>>, vector<40x16xf32>
    %c120_341 = arith.constant 120 : index
    %c304_342 = arith.constant 304 : index
    %233 = vector.load %arg14[%c120_341, %c304_342] : memref<200x400xf32, #tpu.memory_space<vmem>>, vector<40x16xf32>
    tpu.vector_store %arg14[%c120_341, %c304_342], %232 {strides = array<i32>} : memref<200x400xf32, #tpu.memory_space<vmem>>, vector<40x16xf32>,
    %c1080 = arith.constant 1080 : index
    %c0_343 = arith.constant 0 : index
    %234 = vector.load %arg13[%c1080, %c0_343] : memref<1568x16xf32, #tpu.memory_space<vmem>>, vector<40x16xf32>
    %c160_344 = arith.constant 160 : index
    %c304_345 = arith.constant 304 : index
    %235 = vector.load %arg14[%c160_344, %c304_345] : memref<200x400xf32, #tpu.memory_space<vmem>>, vector<40x16xf32>
    tpu.vector_store %arg14[%c160_344, %c304_345], %234 {strides = array<i32>} : memref<200x400xf32, #tpu.memory_space<vmem>>, vector<40x16xf32>,
    %c112_346 = arith.constant 112 : index
    %c0_347 = arith.constant 0 : index
    %236 = vector.load %arg13[%c112_346, %c0_347] : memref<1568x16xf32, #tpu.memory_space<vmem>>, vector<40x16xf32>
    %c0_348 = arith.constant 0 : index
    %c320 = arith.constant 320 : index
    %237 = vector.load %arg14[%c0_348, %c320] : memref<200x400xf32, #tpu.memory_space<vmem>>, vector<40x16xf32>
    tpu.vector_store %arg14[%c0_348, %c320], %236 {strides = array<i32>} : memref<200x400xf32, #tpu.memory_space<vmem>>, vector<40x16xf32>,
    %c168_349 = arith.constant 168 : index
    %c0_350 = arith.constant 0 : index
    %238 = vector.load %arg13[%c168_349, %c0_350] : memref<1568x16xf32, #tpu.memory_space<vmem>>, vector<40x16xf32>
    %c40_351 = arith.constant 40 : index
    %c320_352 = arith.constant 320 : index
    %239 = vector.load %arg14[%c40_351, %c320_352] : memref<200x400xf32, #tpu.memory_space<vmem>>, vector<40x16xf32>
    tpu.vector_store %arg14[%c40_351, %c320_352], %238 {strides = array<i32>} : memref<200x400xf32, #tpu.memory_space<vmem>>, vector<40x16xf32>,
    %c224_353 = arith.constant 224 : index
    %c0_354 = arith.constant 0 : index
    %240 = vector.load %arg13[%c224_353, %c0_354] : memref<1568x16xf32, #tpu.memory_space<vmem>>, vector<40x16xf32>
    %c80_355 = arith.constant 80 : index
    %c320_356 = arith.constant 320 : index
    %241 = vector.load %arg14[%c80_355, %c320_356] : memref<200x400xf32, #tpu.memory_space<vmem>>, vector<40x16xf32>
    tpu.vector_store %arg14[%c80_355, %c320_356], %240 {strides = array<i32>} : memref<200x400xf32, #tpu.memory_space<vmem>>, vector<40x16xf32>,
    %c280_357 = arith.constant 280 : index
    %c0_358 = arith.constant 0 : index
    %242 = vector.load %arg13[%c280_357, %c0_358] : memref<1568x16xf32, #tpu.memory_space<vmem>>, vector<40x16xf32>
    %c120_359 = arith.constant 120 : index
    %c320_360 = arith.constant 320 : index
    %243 = vector.load %arg14[%c120_359, %c320_360] : memref<200x400xf32, #tpu.memory_space<vmem>>, vector<40x16xf32>
    tpu.vector_store %arg14[%c120_359, %c320_360], %242 {strides = array<i32>} : memref<200x400xf32, #tpu.memory_space<vmem>>, vector<40x16xf32>,
    %c336 = arith.constant 336 : index
    %c0_361 = arith.constant 0 : index
    %244 = vector.load %arg13[%c336, %c0_361] : memref<1568x16xf32, #tpu.memory_space<vmem>>, vector<40x16xf32>
    %c160_362 = arith.constant 160 : index
    %c320_363 = arith.constant 320 : index
    %245 = vector.load %arg14[%c160_362, %c320_363] : memref<200x400xf32, #tpu.memory_space<vmem>>, vector<40x16xf32>
    tpu.vector_store %arg14[%c160_362, %c320_363], %244 {strides = array<i32>} : memref<200x400xf32, #tpu.memory_space<vmem>>, vector<40x16xf32>,
    %c504_364 = arith.constant 504 : index
    %c0_365 = arith.constant 0 : index
    %246 = vector.load %arg13[%c504_364, %c0_365] : memref<1568x16xf32, #tpu.memory_space<vmem>>, vector<40x16xf32>
    %c0_366 = arith.constant 0 : index
    %c336_367 = arith.constant 336 : index
    %247 = vector.load %arg14[%c0_366, %c336_367] : memref<200x400xf32, #tpu.memory_space<vmem>>, vector<40x16xf32>
    tpu.vector_store %arg14[%c0_366, %c336_367], %246 {strides = array<i32>} : memref<200x400xf32, #tpu.memory_space<vmem>>, vector<40x16xf32>,
    %c560_368 = arith.constant 560 : index
    %c0_369 = arith.constant 0 : index
    %248 = vector.load %arg13[%c560_368, %c0_369] : memref<1568x16xf32, #tpu.memory_space<vmem>>, vector<40x16xf32>
    %c40_370 = arith.constant 40 : index
    %c336_371 = arith.constant 336 : index
    %249 = vector.load %arg14[%c40_370, %c336_371] : memref<200x400xf32, #tpu.memory_space<vmem>>, vector<40x16xf32>
    tpu.vector_store %arg14[%c40_370, %c336_371], %248 {strides = array<i32>} : memref<200x400xf32, #tpu.memory_space<vmem>>, vector<40x16xf32>,
    %c616_372 = arith.constant 616 : index
    %c0_373 = arith.constant 0 : index
    %250 = vector.load %arg13[%c616_372, %c0_373] : memref<1568x16xf32, #tpu.memory_space<vmem>>, vector<40x16xf32>
    %c80_374 = arith.constant 80 : index
    %c336_375 = arith.constant 336 : index
    %251 = vector.load %arg14[%c80_374, %c336_375] : memref<200x400xf32, #tpu.memory_space<vmem>>, vector<40x16xf32>
    tpu.vector_store %arg14[%c80_374, %c336_375], %250 {strides = array<i32>} : memref<200x400xf32, #tpu.memory_space<vmem>>, vector<40x16xf32>,
    %c672_376 = arith.constant 672 : index
    %c0_377 = arith.constant 0 : index
    %252 = vector.load %arg13[%c672_376, %c0_377] : memref<1568x16xf32, #tpu.memory_space<vmem>>, vector<40x16xf32>
    %c120_378 = arith.constant 120 : index
    %c336_379 = arith.constant 336 : index
    %253 = vector.load %arg14[%c120_378, %c336_379] : memref<200x400xf32, #tpu.memory_space<vmem>>, vector<40x16xf32>
    tpu.vector_store %arg14[%c120_378, %c336_379], %252 {strides = array<i32>} : memref<200x400xf32, #tpu.memory_space<vmem>>, vector<40x16xf32>,
    %c728 = arith.constant 728 : index
    %c0_380 = arith.constant 0 : index
    %254 = vector.load %arg13[%c728, %c0_380] : memref<1568x16xf32, #tpu.memory_space<vmem>>, vector<40x16xf32>
    %c160_381 = arith.constant 160 : index
    %c336_382 = arith.constant 336 : index
    %255 = vector.load %arg14[%c160_381, %c336_382] : memref<200x400xf32, #tpu.memory_space<vmem>>, vector<40x16xf32>
    tpu.vector_store %arg14[%c160_381, %c336_382], %254 {strides = array<i32>} : memref<200x400xf32, #tpu.memory_space<vmem>>, vector<40x16xf32>,
    %c120_383 = arith.constant 120 : index
    %c0_384 = arith.constant 0 : index
    %256 = vector.load %arg13[%c120_383, %c0_384] : memref<1568x16xf32, #tpu.memory_space<vmem>>, vector<40x16xf32>
    %c0_385 = arith.constant 0 : index
    %c352 = arith.constant 352 : index
    %257 = vector.load %arg14[%c0_385, %c352] : memref<200x400xf32, #tpu.memory_space<vmem>>, vector<40x16xf32>
    tpu.vector_store %arg14[%c0_385, %c352], %256 {strides = array<i32>} : memref<200x400xf32, #tpu.memory_space<vmem>>, vector<40x16xf32>,
    %c176_386 = arith.constant 176 : index
    %c0_387 = arith.constant 0 : index
    %258 = vector.load %arg13[%c176_386, %c0_387] : memref<1568x16xf32, #tpu.memory_space<vmem>>, vector<40x16xf32>
    %c40_388 = arith.constant 40 : index
    %c352_389 = arith.constant 352 : index
    %259 = vector.load %arg14[%c40_388, %c352_389] : memref<200x400xf32, #tpu.memory_space<vmem>>, vector<40x16xf32>
    tpu.vector_store %arg14[%c40_388, %c352_389], %258 {strides = array<i32>} : memref<200x400xf32, #tpu.memory_space<vmem>>, vector<40x16xf32>,
    %c232_390 = arith.constant 232 : index
    %c0_391 = arith.constant 0 : index
    %260 = vector.load %arg13[%c232_390, %c0_391] : memref<1568x16xf32, #tpu.memory_space<vmem>>, vector<40x16xf32>
    %c80_392 = arith.constant 80 : index
    %c352_393 = arith.constant 352 : index
    %261 = vector.load %arg14[%c80_392, %c352_393] : memref<200x400xf32, #tpu.memory_space<vmem>>, vector<40x16xf32>
    tpu.vector_store %arg14[%c80_392, %c352_393], %260 {strides = array<i32>} : memref<200x400xf32, #tpu.memory_space<vmem>>, vector<40x16xf32>,
    %c288_394 = arith.constant 288 : index
    %c0_395 = arith.constant 0 : index
    %262 = vector.load %arg13[%c288_394, %c0_395] : memref<1568x16xf32, #tpu.memory_space<vmem>>, vector<40x16xf32>
    %c120_396 = arith.constant 120 : index
    %c352_397 = arith.constant 352 : index
    %263 = vector.load %arg14[%c120_396, %c352_397] : memref<200x400xf32, #tpu.memory_space<vmem>>, vector<40x16xf32>
    tpu.vector_store %arg14[%c120_396, %c352_397], %262 {strides = array<i32>} : memref<200x400xf32, #tpu.memory_space<vmem>>, vector<40x16xf32>,
    %c344 = arith.constant 344 : index
    %c0_398 = arith.constant 0 : index
    %264 = vector.load %arg13[%c344, %c0_398] : memref<1568x16xf32, #tpu.memory_space<vmem>>, vector<40x16xf32>
    %c160_399 = arith.constant 160 : index
    %c352_400 = arith.constant 352 : index
    %265 = vector.load %arg14[%c160_399, %c352_400] : memref<200x400xf32, #tpu.memory_space<vmem>>, vector<40x16xf32>
    tpu.vector_store %arg14[%c160_399, %c352_400], %264 {strides = array<i32>} : memref<200x400xf32, #tpu.memory_space<vmem>>, vector<40x16xf32>,
    %c512_401 = arith.constant 512 : index
    %c0_402 = arith.constant 0 : index
    %266 = vector.load %arg13[%c512_401, %c0_402] : memref<1568x16xf32, #tpu.memory_space<vmem>>, vector<40x16xf32>
    %c0_403 = arith.constant 0 : index
    %c368 = arith.constant 368 : index
    %267 = vector.load %arg14[%c0_403, %c368] : memref<200x400xf32, #tpu.memory_space<vmem>>, vector<40x16xf32>
    tpu.vector_store %arg14[%c0_403, %c368], %266 {strides = array<i32>} : memref<200x400xf32, #tpu.memory_space<vmem>>, vector<40x16xf32>,
    %c568_404 = arith.constant 568 : index
    %c0_405 = arith.constant 0 : index
    %268 = vector.load %arg13[%c568_404, %c0_405] : memref<1568x16xf32, #tpu.memory_space<vmem>>, vector<40x16xf32>
    %c40_406 = arith.constant 40 : index
    %c368_407 = arith.constant 368 : index
    %269 = vector.load %arg14[%c40_406, %c368_407] : memref<200x400xf32, #tpu.memory_space<vmem>>, vector<40x16xf32>
    tpu.vector_store %arg14[%c40_406, %c368_407], %268 {strides = array<i32>} : memref<200x400xf32, #tpu.memory_space<vmem>>, vector<40x16xf32>,
    %c624_408 = arith.constant 624 : index
    %c0_409 = arith.constant 0 : index
    %270 = vector.load %arg13[%c624_408, %c0_409] : memref<1568x16xf32, #tpu.memory_space<vmem>>, vector<40x16xf32>
    %c80_410 = arith.constant 80 : index
    %c368_411 = arith.constant 368 : index
    %271 = vector.load %arg14[%c80_410, %c368_411] : memref<200x400xf32, #tpu.memory_space<vmem>>, vector<40x16xf32>
    tpu.vector_store %arg14[%c80_410, %c368_411], %270 {strides = array<i32>} : memref<200x400xf32, #tpu.memory_space<vmem>>, vector<40x16xf32>,
    %c680_412 = arith.constant 680 : index
    %c0_413 = arith.constant 0 : index
    %272 = vector.load %arg13[%c680_412, %c0_413] : memref<1568x16xf32, #tpu.memory_space<vmem>>, vector<40x16xf32>
    %c120_414 = arith.constant 120 : index
    %c368_415 = arith.constant 368 : index
    %273 = vector.load %arg14[%c120_414, %c368_415] : memref<200x400xf32, #tpu.memory_space<vmem>>, vector<40x16xf32>
    tpu.vector_store %arg14[%c120_414, %c368_415], %272 {strides = array<i32>} : memref<200x400xf32, #tpu.memory_space<vmem>>, vector<40x16xf32>,
    %c736 = arith.constant 736 : index
    %c0_416 = arith.constant 0 : index
    %274 = vector.load %arg13[%c736, %c0_416] : memref<1568x16xf32, #tpu.memory_space<vmem>>, vector<40x16xf32>
    %c160_417 = arith.constant 160 : index
    %c368_418 = arith.constant 368 : index
    %275 = vector.load %arg14[%c160_417, %c368_418] : memref<200x400xf32, #tpu.memory_space<vmem>>, vector<40x16xf32>
    tpu.vector_store %arg14[%c160_417, %c368_418], %274 {strides = array<i32>} : memref<200x400xf32, #tpu.memory_space<vmem>>, vector<40x16xf32>,
    %c128_419 = arith.constant 128 : index
    %c0_420 = arith.constant 0 : index
    %276 = vector.load %arg13[%c128_419, %c0_420] : memref<1568x16xf32, #tpu.memory_space<vmem>>, vector<40x16xf32>
    %c0_421 = arith.constant 0 : index
    %c384 = arith.constant 384 : index
    %277 = vector.load %arg14[%c0_421, %c384] : memref<200x400xf32, #tpu.memory_space<vmem>>, vector<40x16xf32>
    tpu.vector_store %arg14[%c0_421, %c384], %276 {strides = array<i32>} : memref<200x400xf32, #tpu.memory_space<vmem>>, vector<40x16xf32>,
    %c184_422 = arith.constant 184 : index
    %c0_423 = arith.constant 0 : index
    %278 = vector.load %arg13[%c184_422, %c0_423] : memref<1568x16xf32, #tpu.memory_space<vmem>>, vector<40x16xf32>
    %c40_424 = arith.constant 40 : index
    %c384_425 = arith.constant 384 : index
    %279 = vector.load %arg14[%c40_424, %c384_425] : memref<200x400xf32, #tpu.memory_space<vmem>>, vector<40x16xf32>
    tpu.vector_store %arg14[%c40_424, %c384_425], %278 {strides = array<i32>} : memref<200x400xf32, #tpu.memory_space<vmem>>, vector<40x16xf32>,
    %c240_426 = arith.constant 240 : index
    %c0_427 = arith.constant 0 : index
    %280 = vector.load %arg13[%c240_426, %c0_427] : memref<1568x16xf32, #tpu.memory_space<vmem>>, vector<40x16xf32>
    %c80_428 = arith.constant 80 : index
    %c384_429 = arith.constant 384 : index
    %281 = vector.load %arg14[%c80_428, %c384_429] : memref<200x400xf32, #tpu.memory_space<vmem>>, vector<40x16xf32>
    tpu.vector_store %arg14[%c80_428, %c384_429], %280 {strides = array<i32>} : memref<200x400xf32, #tpu.memory_space<vmem>>, vector<40x16xf32>,
    %c296_430 = arith.constant 296 : index
    %c0_431 = arith.constant 0 : index
    %282 = vector.load %arg13[%c296_430, %c0_431] : memref<1568x16xf32, #tpu.memory_space<vmem>>, vector<40x16xf32>
    %c120_432 = arith.constant 120 : index
    %c384_433 = arith.constant 384 : index
    %283 = vector.load %arg14[%c120_432, %c384_433] : memref<200x400xf32, #tpu.memory_space<vmem>>, vector<40x16xf32>
    tpu.vector_store %arg14[%c120_432, %c384_433], %282 {strides = array<i32>} : memref<200x400xf32, #tpu.memory_space<vmem>>, vector<40x16xf32>,
    %c352_434 = arith.constant 352 : index
    %c0_435 = arith.constant 0 : index
    %284 = vector.load %arg13[%c352_434, %c0_435] : memref<1568x16xf32, #tpu.memory_space<vmem>>, vector<40x16xf32>
    %c160_436 = arith.constant 160 : index
    %c384_437 = arith.constant 384 : index
    %285 = vector.load %arg14[%c160_436, %c384_437] : memref<200x400xf32, #tpu.memory_space<vmem>>, vector<40x16xf32>
    tpu.vector_store %arg14[%c160_436, %c384_437], %284 {strides = array<i32>} : memref<200x400xf32, #tpu.memory_space<vmem>>, vector<40x16xf32>,
    %c0_438 = arith.constant 0 : index
    %c0_439 = arith.constant 0 : index
    %286 = vector.load %arg14[%c0_438, %c0_439] : memref<200x400xf32, #tpu.memory_space<vmem>>, vector<200x400xf32>
    %c0_440 = arith.constant 0 : index
    %c0_441 = arith.constant 0 : index
    %287 = vector.load %arg2[%c0_440, %c0_441] : memref<400x32xf32, #tpu.memory_space<vmem>>, vector<400x32xf32>
    %cst_442 = arith.constant dense<0.000000e+00> : vector<200x32xf32>
    %288 = tpu.matmul %286, %287, %cst_442 {dimension_numbers = #tpu.dot_dimension_numbers<[1], [0], [0], [1], [0, 0, 1, 1], [], []>} : vector<200x400xf32>, vector<400x32xf32>, vector<200x32xf32> -> vector<200x32xf32>
    %c0_443 = arith.constant 0 : index
    %c0_444 = arith.constant 0 : index
    %289 = vector.load %arg8[%c0_443, %c0_444] : memref<1x32xf32, #tpu.memory_space<vmem>>, vector<1x32xf32>
    %c0_445 = arith.constant 0 : index
    %c0_446 = arith.constant 0 : index
    %290 = vector.load %arg9[%c0_445, %c0_446] : memref<1x32xf32, #tpu.memory_space<vmem>>, vector<1x32xf32>
    %cst_447 = arith.constant dense<0.000000e+00> : vector<32xf32>
    %291 = vector.multi_reduction <add>, %288, %cst_447 [0] : vector<200x32xf32> to vector<32xf32>
    %292 = vector.shape_cast %291 : vector<32xf32> to vector<1x32xf32>
    %cst_448 = arith.constant 5.000000e-03 : f32
    %293 = vector.broadcast %cst_448 : f32 to vector<1x32xf32>
    %294 = arith.mulf %292, %293 : vector<1x32xf32>
    %295 = vector.broadcast %294 : vector<1x32xf32> to vector<200x32xf32>
    %296 = arith.subf %288, %295 : vector<200x32xf32>
    %297 = arith.mulf %296, %296 : vector<200x32xf32>
    %cst_449 = arith.constant dense<0.000000e+00> : vector<32xf32>
    %298 = vector.multi_reduction <add>, %297, %cst_449 [0] : vector<200x32xf32> to vector<32xf32>
    %299 = vector.shape_cast %298 : vector<32xf32> to vector<1x32xf32>
    %300 = arith.mulf %294, %294 : vector<1x32xf32>
    %cst_450 = arith.constant 0.000000e+00 : f32
    %301 = vector.broadcast %cst_450 : f32 to vector<1x32xf32>
    %302 = arith.mulf %301, %300 : vector<1x32xf32>
    %303 = arith.subf %299, %302 : vector<1x32xf32>
    %cst_451 = arith.constant 5.000000e-03 : f32
    %304 = vector.broadcast %cst_451 : f32 to vector<1x32xf32>
    %305 = arith.mulf %303, %304 : vector<1x32xf32>
    %cst_452 = arith.constant 9.99999974E-6 : f32
    %306 = vector.broadcast %cst_452 : f32 to vector<1x32xf32>
    %307 = arith.addf %305, %306 : vector<1x32xf32>
    %308 = math.rsqrt %307 : vector<1x32xf32>
    %309 = arith.mulf %289, %308 : vector<1x32xf32>
    %310 = arith.mulf %294, %309 : vector<1x32xf32>
    %311 = arith.subf %290, %310 : vector<1x32xf32>
    %312 = vector.broadcast %309 : vector<1x32xf32> to vector<200x32xf32>
    %313 = arith.mulf %288, %312 : vector<200x32xf32>
    %314 = vector.broadcast %311 : vector<1x32xf32> to vector<200x32xf32>
    %315 = arith.addf %313, %314 : vector<200x32xf32>
    %cst_453 = arith.constant 0.000000e+00 : f32
    %316 = vector.broadcast %cst_453 : f32 to vector<200x32xf32>
    %317 = arith.cmpf oge, %315, %316 : vector<200x32xf32>
    %cst_454 = arith.constant 2.000000e-01 : f32
    %318 = vector.broadcast %cst_454 : f32 to vector<200x32xf32>
    %319 = arith.mulf %318, %315 : vector<200x32xf32>
    %320 = arith.select %317, %315, %319 : vector<200x32xi1>, vector<200x32xf32>
    %c0_455 = arith.constant 0 : index
    %c0_456 = arith.constant 0 : index
    %321 = vector.load %arg15[%c0_455, %c0_456] : memref<200x32xf32, #tpu.memory_space<vmem>>, vector<200x32xf32>
    tpu.vector_store %arg15[%c0_455, %c0_456], %320 {strides = array<i32>} : memref<200x32xf32, #tpu.memory_space<vmem>>, vector<200x32xf32>,
    %c0_457 = arith.constant 0 : index
    %c0_458 = arith.constant 0 : index
    %322 = vector.load %arg15[%c0_457, %c0_458] : memref<200x32xf32, #tpu.memory_space<vmem>>, vector<8x32xf32>
    %c0_459 = arith.constant 0 : index
    %c0_460 = arith.constant 0 : index
    %323 = vector.load %arg16[%c0_459, %c0_460] : memref<8x800xf32, #tpu.memory_space<vmem>>, vector<8x32xf32>
    tpu.vector_store %arg16[%c0_459, %c0_460], %322 {strides = array<i32>} : memref<8x800xf32, #tpu.memory_space<vmem>>, vector<8x32xf32>,
    %c8_461 = arith.constant 8 : index
    %c0_462 = arith.constant 0 : index
    %324 = vector.load %arg15[%c8_461, %c0_462] : memref<200x32xf32, #tpu.memory_space<vmem>>, vector<8x32xf32>
    %c0_463 = arith.constant 0 : index
    %c32_464 = arith.constant 32 : index
    %325 = vector.load %arg16[%c0_463, %c32_464] : memref<8x800xf32, #tpu.memory_space<vmem>>, vector<8x32xf32>
    tpu.vector_store %arg16[%c0_463, %c32_464], %324 {strides = array<i32>} : memref<8x800xf32, #tpu.memory_space<vmem>>, vector<8x32xf32>,
    %c16_465 = arith.constant 16 : index
    %c0_466 = arith.constant 0 : index
    %326 = vector.load %arg15[%c16_465, %c0_466] : memref<200x32xf32, #tpu.memory_space<vmem>>, vector<8x32xf32>
    %c0_467 = arith.constant 0 : index
    %c64_468 = arith.constant 64 : index
    %327 = vector.load %arg16[%c0_467, %c64_468] : memref<8x800xf32, #tpu.memory_space<vmem>>, vector<8x32xf32>
    tpu.vector_store %arg16[%c0_467, %c64_468], %326 {strides = array<i32>} : memref<8x800xf32, #tpu.memory_space<vmem>>, vector<8x32xf32>,
    %c24 = arith.constant 24 : index
    %c0_469 = arith.constant 0 : index
    %328 = vector.load %arg15[%c24, %c0_469] : memref<200x32xf32, #tpu.memory_space<vmem>>, vector<8x32xf32>
    %c0_470 = arith.constant 0 : index
    %c96_471 = arith.constant 96 : index
    %329 = vector.load %arg16[%c0_470, %c96_471] : memref<8x800xf32, #tpu.memory_space<vmem>>, vector<8x32xf32>
    tpu.vector_store %arg16[%c0_470, %c96_471], %328 {strides = array<i32>} : memref<8x800xf32, #tpu.memory_space<vmem>>, vector<8x32xf32>,
    %c32_472 = arith.constant 32 : index
    %c0_473 = arith.constant 0 : index
    %330 = vector.load %arg15[%c32_472, %c0_473] : memref<200x32xf32, #tpu.memory_space<vmem>>, vector<8x32xf32>
    %c0_474 = arith.constant 0 : index
    %c128_475 = arith.constant 128 : index
    %331 = vector.load %arg16[%c0_474, %c128_475] : memref<8x800xf32, #tpu.memory_space<vmem>>, vector<8x32xf32>
    tpu.vector_store %arg16[%c0_474, %c128_475], %330 {strides = array<i32>} : memref<8x800xf32, #tpu.memory_space<vmem>>, vector<8x32xf32>,
    %c40_476 = arith.constant 40 : index
    %c0_477 = arith.constant 0 : index
    %332 = vector.load %arg15[%c40_476, %c0_477] : memref<200x32xf32, #tpu.memory_space<vmem>>, vector<8x32xf32>
    %c0_478 = arith.constant 0 : index
    %c160_479 = arith.constant 160 : index
    %333 = vector.load %arg16[%c0_478, %c160_479] : memref<8x800xf32, #tpu.memory_space<vmem>>, vector<8x32xf32>
    tpu.vector_store %arg16[%c0_478, %c160_479], %332 {strides = array<i32>} : memref<8x800xf32, #tpu.memory_space<vmem>>, vector<8x32xf32>,
    %c48_480 = arith.constant 48 : index
    %c0_481 = arith.constant 0 : index
    %334 = vector.load %arg15[%c48_480, %c0_481] : memref<200x32xf32, #tpu.memory_space<vmem>>, vector<8x32xf32>
    %c0_482 = arith.constant 0 : index
    %c192_483 = arith.constant 192 : index
    %335 = vector.load %arg16[%c0_482, %c192_483] : memref<8x800xf32, #tpu.memory_space<vmem>>, vector<8x32xf32>
    tpu.vector_store %arg16[%c0_482, %c192_483], %334 {strides = array<i32>} : memref<8x800xf32, #tpu.memory_space<vmem>>, vector<8x32xf32>,
    %c56_484 = arith.constant 56 : index
    %c0_485 = arith.constant 0 : index
    %336 = vector.load %arg15[%c56_484, %c0_485] : memref<200x32xf32, #tpu.memory_space<vmem>>, vector<8x32xf32>
    %c0_486 = arith.constant 0 : index
    %c224_487 = arith.constant 224 : index
    %337 = vector.load %arg16[%c0_486, %c224_487] : memref<8x800xf32, #tpu.memory_space<vmem>>, vector<8x32xf32>
    tpu.vector_store %arg16[%c0_486, %c224_487], %336 {strides = array<i32>} : memref<8x800xf32, #tpu.memory_space<vmem>>, vector<8x32xf32>,
    %c64_488 = arith.constant 64 : index
    %c0_489 = arith.constant 0 : index
    %338 = vector.load %arg15[%c64_488, %c0_489] : memref<200x32xf32, #tpu.memory_space<vmem>>, vector<8x32xf32>
    %c0_490 = arith.constant 0 : index
    %c256_491 = arith.constant 256 : index
    %339 = vector.load %arg16[%c0_490, %c256_491] : memref<8x800xf32, #tpu.memory_space<vmem>>, vector<8x32xf32>
    tpu.vector_store %arg16[%c0_490, %c256_491], %338 {strides = array<i32>} : memref<8x800xf32, #tpu.memory_space<vmem>>, vector<8x32xf32>,
    %c72_492 = arith.constant 72 : index
    %c0_493 = arith.constant 0 : index
    %340 = vector.load %arg15[%c72_492, %c0_493] : memref<200x32xf32, #tpu.memory_space<vmem>>, vector<8x32xf32>
    %c0_494 = arith.constant 0 : index
    %c288_495 = arith.constant 288 : index
    %341 = vector.load %arg16[%c0_494, %c288_495] : memref<8x800xf32, #tpu.memory_space<vmem>>, vector<8x32xf32>
    tpu.vector_store %arg16[%c0_494, %c288_495], %340 {strides = array<i32>} : memref<8x800xf32, #tpu.memory_space<vmem>>, vector<8x32xf32>,
    %c80_496 = arith.constant 80 : index
    %c0_497 = arith.constant 0 : index
    %342 = vector.load %arg15[%c80_496, %c0_497] : memref<200x32xf32, #tpu.memory_space<vmem>>, vector<8x32xf32>
    %c0_498 = arith.constant 0 : index
    %c320_499 = arith.constant 320 : index
    %343 = vector.load %arg16[%c0_498, %c320_499] : memref<8x800xf32, #tpu.memory_space<vmem>>, vector<8x32xf32>
    tpu.vector_store %arg16[%c0_498, %c320_499], %342 {strides = array<i32>} : memref<8x800xf32, #tpu.memory_space<vmem>>, vector<8x32xf32>,
    %c88 = arith.constant 88 : index
    %c0_500 = arith.constant 0 : index
    %344 = vector.load %arg15[%c88, %c0_500] : memref<200x32xf32, #tpu.memory_space<vmem>>, vector<8x32xf32>
    %c0_501 = arith.constant 0 : index
    %c352_502 = arith.constant 352 : index
    %345 = vector.load %arg16[%c0_501, %c352_502] : memref<8x800xf32, #tpu.memory_space<vmem>>, vector<8x32xf32>
    tpu.vector_store %arg16[%c0_501, %c352_502], %344 {strides = array<i32>} : memref<8x800xf32, #tpu.memory_space<vmem>>, vector<8x32xf32>,
    %c96_503 = arith.constant 96 : index
    %c0_504 = arith.constant 0 : index
    %346 = vector.load %arg15[%c96_503, %c0_504] : memref<200x32xf32, #tpu.memory_space<vmem>>, vector<8x32xf32>
    %c0_505 = arith.constant 0 : index
    %c384_506 = arith.constant 384 : index
    %347 = vector.load %arg16[%c0_505, %c384_506] : memref<8x800xf32, #tpu.memory_space<vmem>>, vector<8x32xf32>
    tpu.vector_store %arg16[%c0_505, %c384_506], %346 {strides = array<i32>} : memref<8x800xf32, #tpu.memory_space<vmem>>, vector<8x32xf32>,
    %c104 = arith.constant 104 : index
    %c0_507 = arith.constant 0 : index
    %348 = vector.load %arg15[%c104, %c0_507] : memref<200x32xf32, #tpu.memory_space<vmem>>, vector<8x32xf32>
    %c0_508 = arith.constant 0 : index
    %c416 = arith.constant 416 : index
    %349 = vector.load %arg16[%c0_508, %c416] : memref<8x800xf32, #tpu.memory_space<vmem>>, vector<8x32xf32>
    tpu.vector_store %arg16[%c0_508, %c416], %348 {strides = array<i32>} : memref<8x800xf32, #tpu.memory_space<vmem>>, vector<8x32xf32>,
    %c112_509 = arith.constant 112 : index
    %c0_510 = arith.constant 0 : index
    %350 = vector.load %arg15[%c112_509, %c0_510] : memref<200x32xf32, #tpu.memory_space<vmem>>, vector<8x32xf32>
    %c0_511 = arith.constant 0 : index
    %c448_512 = arith.constant 448 : index
    %351 = vector.load %arg16[%c0_511, %c448_512] : memref<8x800xf32, #tpu.memory_space<vmem>>, vector<8x32xf32>
    tpu.vector_store %arg16[%c0_511, %c448_512], %350 {strides = array<i32>} : memref<8x800xf32, #tpu.memory_space<vmem>>, vector<8x32xf32>,
    %c120_513 = arith.constant 120 : index
    %c0_514 = arith.constant 0 : index
    %352 = vector.load %arg15[%c120_513, %c0_514] : memref<200x32xf32, #tpu.memory_space<vmem>>, vector<8x32xf32>
    %c0_515 = arith.constant 0 : index
    %c480 = arith.constant 480 : index
    %353 = vector.load %arg16[%c0_515, %c480] : memref<8x800xf32, #tpu.memory_space<vmem>>, vector<8x32xf32>
    tpu.vector_store %arg16[%c0_515, %c480], %352 {strides = array<i32>} : memref<8x800xf32, #tpu.memory_space<vmem>>, vector<8x32xf32>,
    %c128_516 = arith.constant 128 : index
    %c0_517 = arith.constant 0 : index
    %354 = vector.load %arg15[%c128_516, %c0_517] : memref<200x32xf32, #tpu.memory_space<vmem>>, vector<8x32xf32>
    %c0_518 = arith.constant 0 : index
    %c512_519 = arith.constant 512 : index
    %355 = vector.load %arg16[%c0_518, %c512_519] : memref<8x800xf32, #tpu.memory_space<vmem>>, vector<8x32xf32>
    tpu.vector_store %arg16[%c0_518, %c512_519], %354 {strides = array<i32>} : memref<8x800xf32, #tpu.memory_space<vmem>>, vector<8x32xf32>,
    %c136 = arith.constant 136 : index
    %c0_520 = arith.constant 0 : index
    %356 = vector.load %arg15[%c136, %c0_520] : memref<200x32xf32, #tpu.memory_space<vmem>>, vector<8x32xf32>
    %c0_521 = arith.constant 0 : index
    %c544 = arith.constant 544 : index
    %357 = vector.load %arg16[%c0_521, %c544] : memref<8x800xf32, #tpu.memory_space<vmem>>, vector<8x32xf32>
    tpu.vector_store %arg16[%c0_521, %c544], %356 {strides = array<i32>} : memref<8x800xf32, #tpu.memory_space<vmem>>, vector<8x32xf32>,
    %c144_522 = arith.constant 144 : index
    %c0_523 = arith.constant 0 : index
    %358 = vector.load %arg15[%c144_522, %c0_523] : memref<200x32xf32, #tpu.memory_space<vmem>>, vector<8x32xf32>
    %c0_524 = arith.constant 0 : index
    %c576 = arith.constant 576 : index
    %359 = vector.load %arg16[%c0_524, %c576] : memref<8x800xf32, #tpu.memory_space<vmem>>, vector<8x32xf32>
    tpu.vector_store %arg16[%c0_524, %c576], %358 {strides = array<i32>} : memref<8x800xf32, #tpu.memory_space<vmem>>, vector<8x32xf32>,
    %c152 = arith.constant 152 : index
    %c0_525 = arith.constant 0 : index
    %360 = vector.load %arg15[%c152, %c0_525] : memref<200x32xf32, #tpu.memory_space<vmem>>, vector<8x32xf32>
    %c0_526 = arith.constant 0 : index
    %c608 = arith.constant 608 : index
    %361 = vector.load %arg16[%c0_526, %c608] : memref<8x800xf32, #tpu.memory_space<vmem>>, vector<8x32xf32>
    tpu.vector_store %arg16[%c0_526, %c608], %360 {strides = array<i32>} : memref<8x800xf32, #tpu.memory_space<vmem>>, vector<8x32xf32>,
    %c160_527 = arith.constant 160 : index
    %c0_528 = arith.constant 0 : index
    %362 = vector.load %arg15[%c160_527, %c0_528] : memref<200x32xf32, #tpu.memory_space<vmem>>, vector<8x32xf32>
    %c0_529 = arith.constant 0 : index
    %c640 = arith.constant 640 : index
    %363 = vector.load %arg16[%c0_529, %c640] : memref<8x800xf32, #tpu.memory_space<vmem>>, vector<8x32xf32>
    tpu.vector_store %arg16[%c0_529, %c640], %362 {strides = array<i32>} : memref<8x800xf32, #tpu.memory_space<vmem>>, vector<8x32xf32>,
    %c168_530 = arith.constant 168 : index
    %c0_531 = arith.constant 0 : index
    %364 = vector.load %arg15[%c168_530, %c0_531] : memref<200x32xf32, #tpu.memory_space<vmem>>, vector<8x32xf32>
    %c0_532 = arith.constant 0 : index
    %c672_533 = arith.constant 672 : index
    %365 = vector.load %arg16[%c0_532, %c672_533] : memref<8x800xf32, #tpu.memory_space<vmem>>, vector<8x32xf32>
    tpu.vector_store %arg16[%c0_532, %c672_533], %364 {strides = array<i32>} : memref<8x800xf32, #tpu.memory_space<vmem>>, vector<8x32xf32>,
    %c176_534 = arith.constant 176 : index
    %c0_535 = arith.constant 0 : index
    %366 = vector.load %arg15[%c176_534, %c0_535] : memref<200x32xf32, #tpu.memory_space<vmem>>, vector<8x32xf32>
    %c0_536 = arith.constant 0 : index
    %c704 = arith.constant 704 : index
    %367 = vector.load %arg16[%c0_536, %c704] : memref<8x800xf32, #tpu.memory_space<vmem>>, vector<8x32xf32>
    tpu.vector_store %arg16[%c0_536, %c704], %366 {strides = array<i32>} : memref<8x800xf32, #tpu.memory_space<vmem>>, vector<8x32xf32>,
    %c184_537 = arith.constant 184 : index
    %c0_538 = arith.constant 0 : index
    %368 = vector.load %arg15[%c184_537, %c0_538] : memref<200x32xf32, #tpu.memory_space<vmem>>, vector<8x32xf32>
    %c0_539 = arith.constant 0 : index
    %c736_540 = arith.constant 736 : index
    %369 = vector.load %arg16[%c0_539, %c736_540] : memref<8x800xf32, #tpu.memory_space<vmem>>, vector<8x32xf32>
    tpu.vector_store %arg16[%c0_539, %c736_540], %368 {strides = array<i32>} : memref<8x800xf32, #tpu.memory_space<vmem>>, vector<8x32xf32>,
    %c192_541 = arith.constant 192 : index
    %c0_542 = arith.constant 0 : index
    %370 = vector.load %arg15[%c192_541, %c0_542] : memref<200x32xf32, #tpu.memory_space<vmem>>, vector<8x32xf32>
    %c0_543 = arith.constant 0 : index
    %c768 = arith.constant 768 : index
    %371 = vector.load %arg16[%c0_543, %c768] : memref<8x800xf32, #tpu.memory_space<vmem>>, vector<8x32xf32>
    tpu.vector_store %arg16[%c0_543, %c768], %370 {strides = array<i32>} : memref<8x800xf32, #tpu.memory_space<vmem>>, vector<8x32xf32>,
    %c0_544 = arith.constant 0 : index
    %c0_545 = arith.constant 0 : index
    %372 = vector.load %arg16[%c0_544, %c0_545] : memref<8x800xf32, #tpu.memory_space<vmem>>, vector<8x800xf32>
    %c0_546 = arith.constant 0 : index
    %c0_547 = arith.constant 0 : index
    %373 = vector.load %arg3[%c0_546, %c0_547] : memref<800x64xf32, #tpu.memory_space<vmem>>, vector<800x64xf32>
    %cst_548 = arith.constant dense<0.000000e+00> : vector<8x64xf32>
    %374 = tpu.matmul %372, %373, %cst_548 {dimension_numbers = #tpu.dot_dimension_numbers<[1], [0], [0], [1], [0, 0, 1, 1], [], []>} : vector<8x800xf32>, vector<800x64xf32>, vector<8x64xf32> -> vector<8x64xf32>
    %c0_549 = arith.constant 0 : index
    %c0_550 = arith.constant 0 : index
    %375 = vector.load %arg10[%c0_549, %c0_550] : memref<1x64xf32, #tpu.memory_space<vmem>>, vector<1x64xf32>
    %c0_551 = arith.constant 0 : index
    %c0_552 = arith.constant 0 : index
    %376 = vector.load %arg11[%c0_551, %c0_552] : memref<1x64xf32, #tpu.memory_space<vmem>>, vector<1x64xf32>
    %cst_553 = arith.constant dense<0.000000e+00> : vector<64xf32>
    %377 = vector.multi_reduction <add>, %374, %cst_553 [0] : vector<8x64xf32> to vector<64xf32>
    %378 = vector.shape_cast %377 : vector<64xf32> to vector<1x64xf32>
    %cst_554 = arith.constant 1.250000e-01 : f32
    %379 = vector.broadcast %cst_554 : f32 to vector<1x64xf32>
    %380 = arith.mulf %378, %379 : vector<1x64xf32>
    %381 = vector.broadcast %380 : vector<1x64xf32> to vector<8x64xf32>
    %382 = arith.subf %374, %381 : vector<8x64xf32>
    %383 = arith.mulf %382, %382 : vector<8x64xf32>
    %cst_555 = arith.constant dense<0.000000e+00> : vector<64xf32>
    %384 = vector.multi_reduction <add>, %383, %cst_555 [0] : vector<8x64xf32> to vector<64xf32>
    %385 = vector.shape_cast %384 : vector<64xf32> to vector<1x64xf32>
    %386 = arith.mulf %380, %380 : vector<1x64xf32>
    %cst_556 = arith.constant 0.000000e+00 : f32
    %387 = vector.broadcast %cst_556 : f32 to vector<1x64xf32>
    %388 = arith.mulf %387, %386 : vector<1x64xf32>
    %389 = arith.subf %385, %388 : vector<1x64xf32>
    %cst_557 = arith.constant 1.250000e-01 : f32
    %390 = vector.broadcast %cst_557 : f32 to vector<1x64xf32>
    %391 = arith.mulf %389, %390 : vector<1x64xf32>
    %cst_558 = arith.constant 9.99999974E-6 : f32
    %392 = vector.broadcast %cst_558 : f32 to vector<1x64xf32>
    %393 = arith.addf %391, %392 : vector<1x64xf32>
    %394 = math.rsqrt %393 : vector<1x64xf32>
    %395 = arith.mulf %375, %394 : vector<1x64xf32>
    %396 = arith.mulf %380, %395 : vector<1x64xf32>
    %397 = arith.subf %376, %396 : vector<1x64xf32>
    %398 = vector.broadcast %395 : vector<1x64xf32> to vector<8x64xf32>
    %399 = arith.mulf %374, %398 : vector<8x64xf32>
    %400 = vector.broadcast %397 : vector<1x64xf32> to vector<8x64xf32>
    %401 = arith.addf %399, %400 : vector<8x64xf32>
    %cst_559 = arith.constant 0.000000e+00 : f32
    %402 = vector.broadcast %cst_559 : f32 to vector<8x64xf32>
    %403 = arith.cmpf oge, %401, %402 : vector<8x64xf32>
    %cst_560 = arith.constant 2.000000e-01 : f32
    %404 = vector.broadcast %cst_560 : f32 to vector<8x64xf32>
    %405 = arith.mulf %404, %401 : vector<8x64xf32>
    %406 = arith.select %403, %401, %405 : vector<8x64xi1>, vector<8x64xf32>
    %c0_561 = arith.constant 0 : index
    %c0_562 = arith.constant 0 : index
    %407 = vector.load %arg4[%c0_561, %c0_562] : memref<1x64xf32, #tpu.memory_space<vmem>>, vector<1x64xf32>
    %408 = vector.broadcast %407 : vector<1x64xf32> to vector<8x64xf32>
    %409 = arith.mulf %406, %408 : vector<8x64xf32>
    %cst_563 = arith.constant dense<0.000000e+00> : vector<8xf32>
    %410 = vector.multi_reduction <add>, %409, %cst_563 [1] : vector<8x64xf32> to vector<8xf32>
    %411 = vector.shape_cast %410 : vector<8xf32> to vector<8x1xf32>
    %c0_564 = arith.constant 0 : index
    %c0_565 = arith.constant 0 : index
    %412 = vector.load %arg5[%c0_564, %c0_565] : memref<1x1xf32, #tpu.memory_space<vmem>>, vector<1x1xf32>
    %413 = vector.broadcast %412 : vector<1x1xf32> to vector<8x1xf32>
    %414 = arith.addf %411, %413 : vector<8x1xf32>
    %c0_566 = arith.constant 0 : index
    %c0_567 = arith.constant 0 : index
    %415 = vector.load %arg12[%c0_566, %c0_567] : memref<8x1xf32, #tpu.memory_space<vmem>>, vector<8x1xf32>
    tpu.vector_store %arg12[%c0_566, %c0_567], %414 {strides = array<i32>} : memref<8x1xf32, #tpu.memory_space<vmem>>, vector<8x1xf32>,
    return
  }
}

</mosaic_0001>

<llo_original>
// kernel: discriminator_forward.1
$region0: #{discriminator_forward.1}
  #allocation0 [shape = 'u32[]', space=smem, size = 0x4, offset = 0x4, fixed_abs, tag = 'smem constant byte address 0x4 - core index']
  #allocation1 [shape = 'u32[144,128]{1,0:T(1,128)}', space=vmem, size = 0x12000, scoped, tag = 'internal scratch']
  #allocation2 [shape = 'f32[1568,16]{1,0:T(8,128)}', space=vmem, size = 0xc4000, scoped, tag = 'scratch operand']
  #allocation3 [shape = 'f32[200,400]{1,0:T(8,128)}', space=vmem, size = 0x64000, scoped, tag = 'scratch operand']
  #allocation4 [shape = 'f32[200,32]{1,0:T(8,128)}', space=vmem, size = 0x19000, scoped, tag = 'scratch operand']
  #allocation5 [shape = 'f32[8,800]{1,0:T(8,128)}', space=vmem, size = 0x7000, scoped, tag = 'scratch operand']
  #allocation6 [shape = 'f32[1,1]{1,0:T(1,128)S(1)}', space=vmem, size = 0x200, scoped, tag = 'scoped memory for discriminator_forward.1']
  %s0 = inlined_call_operand.vmem [shape: f32[1568,16], index: 0, kind: input, shape index: {}]
  %s1 = inlined_call_operand.vmem [shape: f32[16,16], index: 1, kind: input, shape index: {}]
  %s2 = inlined_call_operand.vmem [shape: f32[400,32], index: 2, kind: input, shape index: {}]
  %s3 = inlined_call_operand.vmem [shape: f32[800,64], index: 3, kind: input, shape index: {}]
  %s4 = inlined_call_operand.vmem [shape: f32[1,64], index: 4, kind: input, shape index: {}]
  %s5 = inlined_call_operand.<no memory space> [shape: f32[1,1], index: 5, kind: input, shape index: {}]
  %s6 = inlined_call_operand.vmem [shape: f32[1,16], index: 6, kind: input, shape index: {}]
  %s7 = inlined_call_operand.vmem [shape: f32[1,16], index: 7, kind: input, shape index: {}]
  %s8 = inlined_call_operand.vmem [shape: f32[1,32], index: 8, kind: input, shape index: {}]
  %s9 = inlined_call_operand.vmem [shape: f32[1,32], index: 9, kind: input, shape index: {}]
  %s10 = inlined_call_operand.vmem [shape: f32[1,64], index: 10, kind: input, shape index: {}]
  %s11 = inlined_call_operand.vmem [shape: f32[1,64], index: 11, kind: input, shape index: {}]
  %s12 = inlined_call_operand.vmem [shape: f32[8,1], index: 12, kind: output, shape index: {}]
  %s13 = sld [smem:[#allocation0]]
  $region58: #{discriminator_forward.1} parent=0
    _
  %s15 = ssub.s32 1, %s13
  %s16 = scalar_select 0, %s15, %s13
  %v17 = vstv %s5
  %18 = vst [vmem:[#allocation6] sm:$0x1] %v17
  // Predicated region
  $region2: #{discriminator_forward.1} parent=0 // pred_check
    _
  $region3: #{discriminator_forward.1} parent=0 // pred_check_branch
    %20 = sbr.rel (0) target = $region5
  $region4: #{discriminator_forward.1} parent=0 // pred_region
    _
  $region5: #{discriminator_forward.1} parent=0 // pred_fallthru
    _
  // Predicated region
  $region6: #{discriminator_forward.1} parent=0 // pred_check
    _
  $region7: #{discriminator_forward.1} parent=0 // pred_check_branch
    %22 = sbr.rel (0) target = $region9
  $region8: #{discriminator_forward.1} parent=0 // pred_region
    _
  $region9: #{discriminator_forward.1} parent=0 // pred_fallthru
    _
  // Predicated region
  $region10: #{discriminator_forward.1} parent=0 // pred_check
    _
  $region11: #{discriminator_forward.1} parent=0 // pred_check_branch
    %24 = sbr.rel (0) target = $region13
  $region12: #{discriminator_forward.1} parent=0 // pred_region
    _
  $region13: #{discriminator_forward.1} parent=0 // pred_fallthru
    _
  // Predicated region
  $region14: #{discriminator_forward.1} parent=0 // pred_check
    _
  $region15: #{discriminator_forward.1} parent=0 // pred_check_branch
    %26 = sbr.rel (0) target = $region17
  $region16: #{discriminator_forward.1} parent=0 // pred_region
    _
  $region17: #{discriminator_forward.1} parent=0 // pred_fallthru
    _
  // Predicated region
  $region18: #{discriminator_forward.1} parent=0 // pred_check
    _
  $region19: #{discriminator_forward.1} parent=0 // pred_check_branch
    %28 = sbr.rel (0) target = $region21
  $region20: #{discriminator_forward.1} parent=0 // pred_region
    _
  $region21: #{discriminator_forward.1} parent=0 // pred_fallthru
    _
  // Predicated region
  $region22: #{discriminator_forward.1} parent=0 // pred_check
    _
  $region23: #{discriminator_forward.1} parent=0 // pred_check_branch
    %30 = sbr.rel (0) target = $region25
  $region24: #{discriminator_forward.1} parent=0 // pred_region
    _
  $region25: #{discriminator_forward.1} parent=0 // pred_fallthru
    _
  // Predicated region
  $region26: #{discriminator_forward.1} parent=0 // pred_check
    _
  $region27: #{discriminator_forward.1} parent=0 // pred_check_branch
    %32 = sbr.rel (0) target = $region29
  $region28: #{discriminator_forward.1} parent=0 // pred_region
    _
  $region29: #{discriminator_forward.1} parent=0 // pred_fallthru
    _
  // Predicated region
  $region30: #{discriminator_forward.1} parent=0 // pred_check
    _
  $region31: #{discriminator_forward.1} parent=0 // pred_check_branch
    %34 = sbr.rel (0) target = $region33
  $region32: #{discriminator_forward.1} parent=0 // pred_region
    _
  $region33: #{discriminator_forward.1} parent=0 // pred_fallthru
    _
  // Predicated region
  $region34: #{discriminator_forward.1} parent=0 // pred_check
    _
  $region35: #{discriminator_forward.1} parent=0 // pred_check_branch
    %36 = sbr.rel (0) target = $region37
  $region36: #{discriminator_forward.1} parent=0 // pred_region
    _
  $region37: #{discriminator_forward.1} parent=0 // pred_fallthru
    _
  // Predicated region
  $region38: #{discriminator_forward.1} parent=0 // pred_check
    _
  $region39: #{discriminator_forward.1} parent=0 // pred_check_branch
    %38 = sbr.rel (0) target = $region41
  $region40: #{discriminator_forward.1} parent=0 // pred_region
    _
  $region41: #{discriminator_forward.1} parent=0 // pred_fallthru
    _
  // Predicated region
  $region42: #{discriminator_forward.1} parent=0 // pred_check
    _
  $region43: #{discriminator_forward.1} parent=0 // pred_check_branch
    %40 = sbr.rel (0) target = $region45
  $region44: #{discriminator_forward.1} parent=0 // pred_region
    _
  $region45: #{discriminator_forward.1} parent=0 // pred_fallthru
    _
  // Predicated region
  $region46: #{discriminator_forward.1} parent=0 // pred_check
    _
  $region47: #{discriminator_forward.1} parent=0 // pred_check_branch
    %42 = sbr.rel (0) target = $region49
  $region48: #{discriminator_forward.1} parent=0 // pred_region
    _
  $region49: #{discriminator_forward.1} parent=0 // pred_fallthru
    _
  %v43 = vld [vmem:[%s0] sm:$0xff]
  %v44 = vld [vmem:[%s0 + $0x8] sm:$0xff]
  %v45 = vld [vmem:[%s0 + $0x10] sm:$0xff]
  %v46 = vld [vmem:[%s0 + $0x18] sm:$0xff]
  %v47 = vld [vmem:[%s0 + $0x20] sm:$0xff]
  %v48 = vld [vmem:[%s0 + $0x28] sm:$0xff]
  %v49 = vld [vmem:[%s0 + $0x30] sm:$0xff]
  %v50 = vld [vmem:[%s0 + $0x38] sm:$0xff]
  %v51 = vld [vmem:[%s0 + $0x40] sm:$0xff]
  %v52 = vld [vmem:[%s0 + $0x48] sm:$0xff]
  %v53 = vld [vmem:[%s0 + $0x50] sm:$0xff]
  %v54 = vld [vmem:[%s0 + $0x58] sm:$0xff]
  %v55 = vld [vmem:[%s0 + $0x60] sm:$0xff]
  %v56 = vld [vmem:[%s0 + $0x68] sm:$0xff]
  %v57 = vld [vmem:[%s0 + $0x70] sm:$0xff]
  %v58 = vld [vmem:[%s0 + $0x78] sm:$0xff]
  %v59 = vld [vmem:[%s0 + $0x80] sm:$0xff]
  %v60 = vld [vmem:[%s0 + $0x88] sm:$0xff]
  %v61 = vld [vmem:[%s0 + $0x90] sm:$0xff]
  %v62 = vld [vmem:[%s0 + $0x98] sm:$0xff]
  %v63 = vld [vmem:[%s0 + $0xa0] sm:$0xff]
  %v64 = vld [vmem:[%s0 + $0xa8] sm:$0xff]
  %v65 = vld [vmem:[%s0 + $0xb0] sm:$0xff]
  %v66 = vld [vmem:[%s0 + $0xb8] sm:$0xff]
  %v67 = vld [vmem:[%s0 + $0xc0] sm:$0xff]
  %v68 = vld [vmem:[%s0 + $0xc8] sm:$0xff]
  %v69 = vld [vmem:[%s0 + $0xd0] sm:$0xff]
  %v70 = vld [vmem:[%s0 + $0xd8] sm:$0xff]
  %v71 = vld [vmem:[%s0 + $0xe0] sm:$0xff]
  %v72 = vld [vmem:[%s0 + $0xe8] sm:$0xff]
  %v73 = vld [vmem:[%s0 + $0xf0] sm:$0xff]
  %v74 = vld [vmem:[%s0 + $0xf8] sm:$0xff]
  %v75 = vld [vmem:[%s0 + $0x100] sm:$0xff]
  %v76 = vld [vmem:[%s0 + $0x108] sm:$0xff]
  %v77 = vld [vmem:[%s0 + $0x110] sm:$0xff]
  %v78 = vld [vmem:[%s0 + $0x118] sm:$0xff]
  %v79 = vld [vmem:[%s0 + $0x120] sm:$0xff]
  %v80 = vld [vmem:[%s0 + $0x128] sm:$0xff]
  %v81 = vld [vmem:[%s0 + $0x130] sm:$0xff]
  %v82 = vld [vmem:[%s0 + $0x138] sm:$0xff]
  %v83 = vld [vmem:[%s0 + $0x140] sm:$0xff]
  %v84 = vld [vmem:[%s0 + $0x148] sm:$0xff]
  %v85 = vld [vmem:[%s0 + $0x150] sm:$0xff]
  %v86 = vld [vmem:[%s0 + $0x158] sm:$0xff]
  %v87 = vld [vmem:[%s0 + $0x160] sm:$0xff]
  %v88 = vld [vmem:[%s0 + $0x168] sm:$0xff]
  %v89 = vld [vmem:[%s0 + $0x170] sm:$0xff]
  %v90 = vld [vmem:[%s0 + $0x178] sm:$0xff]
  %v91 = vld [vmem:[%s0 + $0x180] sm:$0xff]
  %v92 = vld [vmem:[%s0 + $0x188] sm:$0xff]
  %v93 = vld [vmem:[%s0 + $0x190] sm:$0xff]
  %v94 = vld [vmem:[%s0 + $0x198] sm:$0xff]
  %v95 = vld [vmem:[%s0 + $0x1a0] sm:$0xff]
  %v96 = vld [vmem:[%s0 + $0x1a8] sm:$0xff]
  %v97 = vld [vmem:[%s0 + $0x1b0] sm:$0xff]
  %v98 = vld [vmem:[%s0 + $0x1b8] sm:$0xff]
  %v99 = vld [vmem:[%s0 + $0x1c0] sm:$0xff]
  %v100 = vld [vmem:[%s0 + $0x1c8] sm:$0xff]
  %v101 = vld [vmem:[%s0 + $0x1d0] sm:$0xff]
  %v102 = vld [vmem:[%s0 + $0x1d8] sm:$0xff]
  %v103 = vld [vmem:[%s0 + $0x1e0] sm:$0xff]
  %v104 = vld [vmem:[%s0 + $0x1e8] sm:$0xff]
  %v105 = vld [vmem:[%s0 + $0x1f0] sm:$0xff]
  %v106 = vld [vmem:[%s0 + $0x1f8] sm:$0xff]
  %v107 = vld [vmem:[%s0 + $0x200] sm:$0xff]
  %v108 = vld [vmem:[%s0 + $0x208] sm:$0xff]
  %v109 = vld [vmem:[%s0 + $0x210] sm:$0xff]
  %v110 = vld [vmem:[%s0 + $0x218] sm:$0xff]
  %v111 = vld [vmem:[%s0 + $0x220] sm:$0xff]
  %v112 = vld [vmem:[%s0 + $0x228] sm:$0xff]
  %v113 = vld [vmem:[%s0 + $0x230] sm:$0xff]
  %v114 = vld [vmem:[%s0 + $0x238] sm:$0xff]
  %v115 = vld [vmem:[%s0 + $0x240] sm:$0xff]
  %v116 = vld [vmem:[%s0 + $0x248] sm:$0xff]
  %v117 = vld [vmem:[%s0 + $0x250] sm:$0xff]
  %v118 = vld [vmem:[%s0 + $0x258] sm:$0xff]
  %v119 = vld [vmem:[%s0 + $0x260] sm:$0xff]
  %v120 = vld [vmem:[%s0 + $0x268] sm:$0xff]
  %v121 = vld [vmem:[%s0 + $0x270] sm:$0xff]
  %v122 = vld [vmem:[%s0 + $0x278] sm:$0xff]
  %v123 = vld [vmem:[%s0 + $0x280] sm:$0xff]
  %v124 = vld [vmem:[%s0 + $0x288] sm:$0xff]
  %v125 = vld [vmem:[%s0 + $0x290] sm:$0xff]
  %v126 = vld [vmem:[%s0 + $0x298] sm:$0xff]
  %v127 = vld [vmem:[%s0 + $0x2a0] sm:$0xff]
  %v128 = vld [vmem:[%s0 + $0x2a8] sm:$0xff]
  %v129 = vld [vmem:[%s0 + $0x2b0] sm:$0xff]
  %v130 = vld [vmem:[%s0 + $0x2b8] sm:$0xff]
  %v131 = vld [vmem:[%s0 + $0x2c0] sm:$0xff]
  %v132 = vld [vmem:[%s0 + $0x2c8] sm:$0xff]
  %v133 = vld [vmem:[%s0 + $0x2d0] sm:$0xff]
  %v134 = vld [vmem:[%s0 + $0x2d8] sm:$0xff]
  %v135 = vld [vmem:[%s0 + $0x2e0] sm:$0xff]
  %v136 = vld [vmem:[%s0 + $0x2e8] sm:$0xff]
  %v137 = vld [vmem:[%s0 + $0x2f0] sm:$0xff]
  %v138 = vld [vmem:[%s0 + $0x2f8] sm:$0xff]
  %v139 = vld [vmem:[%s0 + $0x300] sm:$0xff]
  %v140 = vld [vmem:[%s0 + $0x308] sm:$0xff]
  %v141 = vld [vmem:[%s0 + $0x310] sm:$0xff]
  %v142 = vld [vmem:[%s0 + $0x318] sm:$0xff]
  %v143 = vld [vmem:[%s0 + $0x320] sm:$0xff]
  %v144 = vld [vmem:[%s0 + $0x328] sm:$0xff]
  %v145 = vld [vmem:[%s0 + $0x330] sm:$0xff]
  %v146 = vld [vmem:[%s0 + $0x338] sm:$0xff]
  %v147 = vld [vmem:[%s0 + $0x340] sm:$0xff]
  %v148 = vld [vmem:[%s0 + $0x348] sm:$0xff]
  %v149 = vld [vmem:[%s0 + $0x350] sm:$0xff]
  %v150 = vld [vmem:[%s0 + $0x358] sm:$0xff]
  %v151 = vld [vmem:[%s0 + $0x360] sm:$0xff]
  %v152 = vld [vmem:[%s0 + $0x368] sm:$0xff]
  %v153 = vld [vmem:[%s0 + $0x370] sm:$0xff]
  %v154 = vld [vmem:[%s0 + $0x378] sm:$0xff]
  %v155 = vld [vmem:[%s0 + $0x380] sm:$0xff]
  %v156 = vld [vmem:[%s0 + $0x388] sm:$0xff]
  %v157 = vld [vmem:[%s0 + $0x390] sm:$0xff]
  %v158 = vld [vmem:[%s0 + $0x398] sm:$0xff]
  %v159 = vld [vmem:[%s0 + $0x3a0] sm:$0xff]
  %v160 = vld [vmem:[%s0 + $0x3a8] sm:$0xff]
  %v161 = vld [vmem:[%s0 + $0x3b0] sm:$0xff]
  %v162 = vld [vmem:[%s0 + $0x3b8] sm:$0xff]
  %v163 = vld [vmem:[%s0 + $0x3c0] sm:$0xff]
  %v164 = vld [vmem:[%s0 + $0x3c8] sm:$0xff]
  %v165 = vld [vmem:[%s0 + $0x3d0] sm:$0xff]
  %v166 = vld [vmem:[%s0 + $0x3d8] sm:$0xff]
  %v167 = vld [vmem:[%s0 + $0x3e0] sm:$0xff]
  %v168 = vld [vmem:[%s0 + $0x3e8] sm:$0xff]
  %v169 = vld [vmem:[%s0 + $0x3f0] sm:$0xff]
  %v170 = vld [vmem:[%s0 + $0x3f8] sm:$0xff]
  %v171 = vld [vmem:[%s0 + $0x400] sm:$0xff]
  %v172 = vld [vmem:[%s0 + $0x408] sm:$0xff]
  %v173 = vld [vmem:[%s0 + $0x410] sm:$0xff]
  %v174 = vld [vmem:[%s0 + $0x418] sm:$0xff]
  %v175 = vld [vmem:[%s0 + $0x420] sm:$0xff]
  %v176 = vld [vmem:[%s0 + $0x428] sm:$0xff]
  %v177 = vld [vmem:[%s0 + $0x430] sm:$0xff]
  %v178 = vld [vmem:[%s0 + $0x438] sm:$0xff]
  %v179 = vld [vmem:[%s0 + $0x440] sm:$0xff]
  %v180 = vld [vmem:[%s0 + $0x448] sm:$0xff]
  %v181 = vld [vmem:[%s0 + $0x450] sm:$0xff]
  %v182 = vld [vmem:[%s0 + $0x458] sm:$0xff]
  %v183 = vld [vmem:[%s0 + $0x460] sm:$0xff]
  %v184 = vld [vmem:[%s0 + $0x468] sm:$0xff]
  %v185 = vld [vmem:[%s0 + $0x470] sm:$0xff]
  %v186 = vld [vmem:[%s0 + $0x478] sm:$0xff]
  %v187 = vld [vmem:[%s0 + $0x480] sm:$0xff]
  %v188 = vld [vmem:[%s0 + $0x488] sm:$0xff]
  %v189 = vld [vmem:[%s0 + $0x490] sm:$0xff]
  %v190 = vld [vmem:[%s0 + $0x498] sm:$0xff]
  %v191 = vld [vmem:[%s0 + $0x4a0] sm:$0xff]
  %v192 = vld [vmem:[%s0 + $0x4a8] sm:$0xff]
  %v193 = vld [vmem:[%s0 + $0x4b0] sm:$0xff]
  %v194 = vld [vmem:[%s0 + $0x4b8] sm:$0xff]
  %v195 = vld [vmem:[%s0 + $0x4c0] sm:$0xff]
  %v196 = vld [vmem:[%s0 + $0x4c8] sm:$0xff]
  %v197 = vld [vmem:[%s0 + $0x4d0] sm:$0xff]
  %v198 = vld [vmem:[%s0 + $0x4d8] sm:$0xff]
  %v199 = vld [vmem:[%s0 + $0x4e0] sm:$0xff]
  %v200 = vld [vmem:[%s0 + $0x4e8] sm:$0xff]
  %v201 = vld [vmem:[%s0 + $0x4f0] sm:$0xff]
  %v202 = vld [vmem:[%s0 + $0x4f8] sm:$0xff]
  %v203 = vld [vmem:[%s0 + $0x500] sm:$0xff]
  %v204 = vld [vmem:[%s0 + $0x508] sm:$0xff]
  %v205 = vld [vmem:[%s0 + $0x510] sm:$0xff]
  %v206 = vld [vmem:[%s0 + $0x518] sm:$0xff]
  %v207 = vld [vmem:[%s0 + $0x520] sm:$0xff]
  %v208 = vld [vmem:[%s0 + $0x528] sm:$0xff]
  %v209 = vld [vmem:[%s0 + $0x530] sm:$0xff]
  %v210 = vld [vmem:[%s0 + $0x538] sm:$0xff]
  %v211 = vld [vmem:[%s0 + $0x540] sm:$0xff]
  %v212 = vld [vmem:[%s0 + $0x548] sm:$0xff]
  %v213 = vld [vmem:[%s0 + $0x550] sm:$0xff]
  %v214 = vld [vmem:[%s0 + $0x558] sm:$0xff]
  %v215 = vld [vmem:[%s0 + $0x560] sm:$0xff]
  %v216 = vld [vmem:[%s0 + $0x568] sm:$0xff]
  %v217 = vld [vmem:[%s0 + $0x570] sm:$0xff]
  %v218 = vld [vmem:[%s0 + $0x578] sm:$0xff]
  %v219 = vld [vmem:[%s0 + $0x580] sm:$0xff]
  %v220 = vld [vmem:[%s0 + $0x588] sm:$0xff]
  %v221 = vld [vmem:[%s0 + $0x590] sm:$0xff]
  %v222 = vld [vmem:[%s0 + $0x598] sm:$0xff]
  %v223 = vld [vmem:[%s0 + $0x5a0] sm:$0xff]
  %v224 = vld [vmem:[%s0 + $0x5a8] sm:$0xff]
  %v225 = vld [vmem:[%s0 + $0x5b0] sm:$0xff]
  %v226 = vld [vmem:[%s0 + $0x5b8] sm:$0xff]
  %v227 = vld [vmem:[%s0 + $0x5c0] sm:$0xff]
  %v228 = vld [vmem:[%s0 + $0x5c8] sm:$0xff]
  %v229 = vld [vmem:[%s0 + $0x5d0] sm:$0xff]
  %v230 = vld [vmem:[%s0 + $0x5d8] sm:$0xff]
  %v231 = vld [vmem:[%s0 + $0x5e0] sm:$0xff]
  %v232 = vld [vmem:[%s0 + $0x5e8] sm:$0xff]
  %v233 = vld [vmem:[%s0 + $0x5f0] sm:$0xff]
  %v234 = vld [vmem:[%s0 + $0x5f8] sm:$0xff]
  %v235 = vld [vmem:[%s0 + $0x600] sm:$0xff]
  %v236 = vld [vmem:[%s0 + $0x608] sm:$0xff]
  %v237 = vld [vmem:[%s0 + $0x610] sm:$0xff]
  %v238 = vld [vmem:[%s0 + $0x618] sm:$0xff]
  %v239 = vld [vmem:[%s1] sm:$0xff]
  %v240 = vld [vmem:[%s1 + $0x8] sm:$0xff]
  %vm241 = vcmask 130048
  %v243 = vsel %vm241, %v43, 0
  %v246 = vsel %vm241, %v44, 0
  %v249 = vsel %vm241, %v45, 0
  %v252 = vsel %vm241, %v46, 0
  %v255 = vsel %vm241, %v47, 0
  %v258 = vsel %vm241, %v48, 0
  %v261 = vsel %vm241, %v49, 0
  %v264 = vsel %vm241, %v50, 0
  %v267 = vsel %vm241, %v51, 0
  %v270 = vsel %vm241, %v52, 0
  %v273 = vsel %vm241, %v53, 0
  %v276 = vsel %vm241, %v54, 0
  %v279 = vsel %vm241, %v55, 0
  %v282 = vsel %vm241, %v56, 0
  %v285 = vsel %vm241, %v57, 0
  %v288 = vsel %vm241, %v58, 0
  %v291 = vsel %vm241, %v59, 0
  %v294 = vsel %vm241, %v60, 0
  %v297 = vsel %vm241, %v61, 0
  %v300 = vsel %vm241, %v62, 0
  %v303 = vsel %vm241, %v63, 0
  %v306 = vsel %vm241, %v64, 0
  %v309 = vsel %vm241, %v65, 0
  %v312 = vsel %vm241, %v66, 0
  %v315 = vsel %vm241, %v67, 0
  %v318 = vsel %vm241, %v68, 0
  %v321 = vsel %vm241, %v69, 0
  %v324 = vsel %vm241, %v70, 0
  %v327 = vsel %vm241, %v71, 0
  %v330 = vsel %vm241, %v72, 0
  %v333 = vsel %vm241, %v73, 0
  %v336 = vsel %vm241, %v74, 0
  %v339 = vsel %vm241, %v75, 0
  %v342 = vsel %vm241, %v76, 0
  %v345 = vsel %vm241, %v77, 0
  %v348 = vsel %vm241, %v78, 0
  %v351 = vsel %vm241, %v79, 0
  %v354 = vsel %vm241, %v80, 0
  %v357 = vsel %vm241, %v81, 0
  %v360 = vsel %vm241, %v82, 0
  %v363 = vsel %vm241, %v83, 0
  %v366 = vsel %vm241, %v84, 0
  %v369 = vsel %vm241, %v85, 0
  %v372 = vsel %vm241, %v86, 0
  %v375 = vsel %vm241, %v87, 0
  %v378 = vsel %vm241, %v88, 0
  %v381 = vsel %vm241, %v89, 0
  %v384 = vsel %vm241, %v90, 0
  %v387 = vsel %vm241, %v91, 0
  %v390 = vsel %vm241, %v92, 0
  %v393 = vsel %vm241, %v93, 0
  %v396 = vsel %vm241, %v94, 0
  %v399 = vsel %vm241, %v95, 0
  %v402 = vsel %vm241, %v96, 0
  %v405 = vsel %vm241, %v97, 0
  %v408 = vsel %vm241, %v98, 0
  %v411 = vsel %vm241, %v99, 0
  %v414 = vsel %vm241, %v100, 0
  %v417 = vsel %vm241, %v101, 0
  %v420 = vsel %vm241, %v102, 0
  %v423 = vsel %vm241, %v103, 0
  %v426 = vsel %vm241, %v104, 0
  %v429 = vsel %vm241, %v105, 0
  %v432 = vsel %vm241, %v106, 0
  %v435 = vsel %vm241, %v107, 0
  %v438 = vsel %vm241, %v108, 0
  %v441 = vsel %vm241, %v109, 0
  %v444 = vsel %vm241, %v110, 0
  %v447 = vsel %vm241, %v111, 0
  %v450 = vsel %vm241, %v112, 0
  %v453 = vsel %vm241, %v113, 0
  %v456 = vsel %vm241, %v114, 0
  %v459 = vsel %vm241, %v115, 0
  %v462 = vsel %vm241, %v116, 0
  %v465 = vsel %vm241, %v117, 0
  %v468 = vsel %vm241, %v118, 0
  %v471 = vsel %vm241, %v119, 0
  %v474 = vsel %vm241, %v120, 0
  %v477 = vsel %vm241, %v121, 0
  %v480 = vsel %vm241, %v122, 0
  %v483 = vsel %vm241, %v123, 0
  %v486 = vsel %vm241, %v124, 0
  %v489 = vsel %vm241, %v125, 0
  %v492 = vsel %vm241, %v126, 0
  %v495 = vsel %vm241, %v127, 0
  %v498 = vsel %vm241, %v128, 0
  %v501 = vsel %vm241, %v129, 0
  %v504 = vsel %vm241, %v130, 0
  %v507 = vsel %vm241, %v131, 0
  %v510 = vsel %vm241, %v132, 0
  %v513 = vsel %vm241, %v133, 0
  %v516 = vsel %vm241, %v134, 0
  %v519 = vsel %vm241, %v135, 0
  %v522 = vsel %vm241, %v136, 0
  %v525 = vsel %vm241, %v137, 0
  %v528 = vsel %vm241, %v138, 0
  %v531 = vsel %vm241, %v139, 0
  %v534 = vsel %vm241, %v140, 0
  %v537 = vsel %vm241, %v141, 0
  %v540 = vsel %vm241, %v142, 0
  %v543 = vsel %vm241, %v143, 0
  %v546 = vsel %vm241, %v144, 0
  %v549 = vsel %vm241, %v145, 0
  %v552 = vsel %vm241, %v146, 0
  %v555 = vsel %vm241, %v147, 0
  %v558 = vsel %vm241, %v148, 0
  %v561 = vsel %vm241, %v149, 0
  %v564 = vsel %vm241, %v150, 0
  %v567 = vsel %vm241, %v151, 0
  %v570 = vsel %vm241, %v152, 0
  %v573 = vsel %vm241, %v153, 0
  %v576 = vsel %vm241, %v154, 0
  %v579 = vsel %vm241, %v155, 0
  %v582 = vsel %vm241, %v156, 0
  %v585 = vsel %vm241, %v157, 0
  %v588 = vsel %vm241, %v158, 0
  %v591 = vsel %vm241, %v159, 0
  %v594 = vsel %vm241, %v160, 0
  %v597 = vsel %vm241, %v161, 0
  %v600 = vsel %vm241, %v162, 0
  %v603 = vsel %vm241, %v163, 0
  %v606 = vsel %vm241, %v164, 0
  %v609 = vsel %vm241, %v165, 0
  %v612 = vsel %vm241, %v166, 0
  %v615 = vsel %vm241, %v167, 0
  %v618 = vsel %vm241, %v168, 0
  %v621 = vsel %vm241, %v169, 0
  %v624 = vsel %vm241, %v170, 0
  %v627 = vsel %vm241, %v171, 0
  %v630 = vsel %vm241, %v172, 0
  %v633 = vsel %vm241, %v173, 0
  %v636 = vsel %vm241, %v174, 0
  %v639 = vsel %vm241, %v175, 0
  %v642 = vsel %vm241, %v176, 0
  %v645 = vsel %vm241, %v177, 0
  %v648 = vsel %vm241, %v178, 0
  %v651 = vsel %vm241, %v179, 0
  %v654 = vsel %vm241, %v180, 0
  %v657 = vsel %vm241, %v181, 0
  %v660 = vsel %vm241, %v182, 0
  %v663 = vsel %vm241, %v183, 0
  %v666 = vsel %vm241, %v184, 0
  %v669 = vsel %vm241, %v185, 0
  %v672 = vsel %vm241, %v186, 0
  %v675 = vsel %vm241, %v187, 0
  %v678 = vsel %vm241, %v188, 0
  %v681 = vsel %vm241, %v189, 0
  %v684 = vsel %vm241, %v190, 0
  %v687 = vsel %vm241, %v191, 0
  %v690 = vsel %vm241, %v192, 0
  %v693 = vsel %vm241, %v193, 0
  %v696 = vsel %vm241, %v194, 0
  %v699 = vsel %vm241, %v195, 0
  %v702 = vsel %vm241, %v196, 0
  %v705 = vsel %vm241, %v197, 0
  %v708 = vsel %vm241, %v198, 0
  %v711 = vsel %vm241, %v199, 0
  %v714 = vsel %vm241, %v200, 0
  %v717 = vsel %vm241, %v201, 0
  %v720 = vsel %vm241, %v202, 0
  %v723 = vsel %vm241, %v203, 0
  %v726 = vsel %vm241, %v204, 0
  %v729 = vsel %vm241, %v205, 0
  %v732 = vsel %vm241, %v206, 0
  %v735 = vsel %vm241, %v207, 0
  %v738 = vsel %vm241, %v208, 0
  %v741 = vsel %vm241, %v209, 0
  %v744 = vsel %vm241, %v210, 0
  %v747 = vsel %vm241, %v211, 0
  %v750 = vsel %vm241, %v212, 0
  %v753 = vsel %vm241, %v213, 0
  %v756 = vsel %vm241, %v214, 0
  %v759 = vsel %vm241, %v215, 0
  %v762 = vsel %vm241, %v216, 0
  %v765 = vsel %vm241, %v217, 0
  %v768 = vsel %vm241, %v218, 0
  %v771 = vsel %vm241, %v219, 0
  %v774 = vsel %vm241, %v220, 0
  %v777 = vsel %vm241, %v221, 0
  %v780 = vsel %vm241, %v222, 0
  %v783 = vsel %vm241, %v223, 0
  %v786 = vsel %vm241, %v224, 0
  %v789 = vsel %vm241, %v225, 0
  %v792 = vsel %vm241, %v226, 0
  %v795 = vsel %vm241, %v227, 0
  %v798 = vsel %vm241, %v228, 0
  %v801 = vsel %vm241, %v229, 0
  %v804 = vsel %vm241, %v230, 0
  %v807 = vsel %vm241, %v231, 0
  %v810 = vsel %vm241, %v232, 0
  %v813 = vsel %vm241, %v233, 0
  %v816 = vsel %vm241, %v234, 0
  %v819 = vsel %vm241, %v235, 0
  %v822 = vsel %vm241, %v236, 0
  %v825 = vsel %vm241, %v237, 0
  %v828 = vsel %vm241, %v238, 0
  %830 = vmatprep.subr.mxu0 0.0
  %831 = vmatpush1.msra.mxu0 %v239
  %832 = vmatprep.subr.mxu0 0.0
  %833 = vmatpush1.msra.mxu0 %v240
  %834 = vmatprep.subr.mxu0 0.0
  %835 = vmatpush1.msra.mxu0 0.0
  %836 = vmatprep.subr.mxu0 0.0
  %837 = vmatpush1.msra.mxu0 0.0
  %838 = vmatprep.subr.mxu0 0.0
  %839 = vmatpush1.msra.mxu0 0.0
  %840 = vmatprep.subr.mxu0 0.0
  %841 = vmatpush1.msra.mxu0 0.0
  %842 = vmatprep.subr.mxu0 0.0
  %843 = vmatpush1.msra.mxu0 0.0
  %844 = vmatprep.subr.mxu0 0.0
  %845 = vmatpush1.msra.mxu0 0.0
  %846 = vmatprep.subr.mxu0 0.0
  %847 = vmatpush1.msra.mxu0 0.0
  %848 = vmatprep.subr.mxu0 0.0
  %849 = vmatpush1.msra.mxu0 0.0
  %850 = vmatprep.subr.mxu0 0.0
  %851 = vmatpush1.msra.mxu0 0.0
  %852 = vmatprep.subr.mxu0 0.0
  %853 = vmatpush1.msra.mxu0 0.0
  %854 = vmatprep.subr.mxu0 0.0
  %855 = vmatpush1.msra.mxu0 0.0
  %856 = vmatprep.subr.mxu0 0.0
  %857 = vmatpush1.msra.mxu0 0.0
  %858 = vmatprep.subr.mxu0 0.0
  %859 = vmatpush1.msra.mxu0 0.0
  %860 = vmatprep.subr.mxu0 0.0
  %861 = vmatpush1.msra.mxu0 0.0
  %862 = vmatprep.subr.mxu0 0.0
  %863 = vmatpush1.msra.mxu0 0.0
  %864 = vmatprep.subr.mxu0 0.0
  %865 = vmatpush1.msra.mxu0 0.0
  %866 = vmatprep.subr.mxu0 0.0
  %867 = vmatpush1.msra.mxu0 0.0
  %868 = vmatprep.subr.mxu0 0.0
  %869 = vmatpush1.msra.mxu0 0.0
  %870 = vmatprep.subr.mxu0 0.0
  %871 = vmatpush1.msra.mxu0 0.0
  %872 = vmatprep.subr.mxu0 0.0
  %873 = vmatpush1.msra.mxu0 0.0
  %874 = vmatprep.subr.mxu0 0.0
  %875 = vmatpush1.msra.mxu0 0.0
  %876 = vmatprep.subr.mxu0 0.0
  %877 = vmatpush1.msra.mxu0 0.0
  %878 = vmatprep.subr.mxu0 0.0
  %879 = vmatpush1.msra.mxu0 0.0
  %880 = vmatprep.subr.mxu0 0.0
  %881 = vmatpush1.msra.mxu0 0.0
  %882 = vmatprep.subr.mxu0 0.0
  %883 = vmatpush1.msra.mxu0 0.0
  %884 = vmatprep.subr.mxu0 0.0
  %885 = vmatpush1.msra.mxu0 0.0
  %886 = vmatprep.subr.mxu0 0.0
  %887 = vmatpush1.msra.mxu0 0.0
  %888 = vmatprep.subr.mxu0 0.0
  %889 = vmatpush1.msra.mxu0 0.0
  %890 = vmatprep.subr.mxu0 0.0
  %891 = vmatpush1.msra.mxu0 0.0
  %892 = vmatprep.subr.mxu0 0.0
  %893 = vmatpush1.msra.mxu0 0.0
  %894 = vmatprep.mubr.f32.mxu0 0.0
  %895 = vmatmul.mubr.f32.gmra.mrb[0].mxu0 %v243
  %v896 = vpop.f32.mrb[0].mxu0
  %v897 = vadd.f32 0.0, %v896
  %v898 = vpop.f32.mrb[0].mxu0
  %899 = vmatprep.mubr.f32.mxu0 0.0
  %900 = vmatmul.mubr.f32.gmra.mrb[0].mxu0 %v246
  %v901 = vpop.f32.mrb[0].mxu0
  %v902 = vadd.f32 0.0, %v901
  %v903 = vpop.f32.mrb[0].mxu0
  %904 = vmatprep.mubr.f32.mxu0 0.0
  %905 = vmatmul.mubr.f32.gmra.mrb[0].mxu0 %v249
  %v906 = vpop.f32.mrb[0].mxu0
  %v907 = vadd.f32 0.0, %v906
  %v908 = vpop.f32.mrb[0].mxu0
  %909 = vmatprep.mubr.f32.mxu0 0.0
  %910 = vmatmul.mubr.f32.gmra.mrb[0].mxu0 %v252
  %v911 = vpop.f32.mrb[0].mxu0
  %v912 = vadd.f32 0.0, %v911
  %v913 = vpop.f32.mrb[0].mxu0
  %914 = vmatprep.mubr.f32.mxu0 0.0
  %915 = vmatmul.mubr.f32.gmra.mrb[0].mxu0 %v255
  %v916 = vpop.f32.mrb[0].mxu0
  %v917 = vadd.f32 0.0, %v916
  %v918 = vpop.f32.mrb[0].mxu0
  %919 = vmatprep.mubr.f32.mxu0 0.0
  %920 = vmatmul.mubr.f32.gmra.mrb[0].mxu0 %v258
  %v921 = vpop.f32.mrb[0].mxu0
  %v922 = vadd.f32 0.0, %v921
  %v923 = vpop.f32.mrb[0].mxu0
  %924 = vmatprep.mubr.f32.mxu0 0.0
  %925 = vmatmul.mubr.f32.gmra.mrb[0].mxu0 %v261
  %v926 = vpop.f32.mrb[0].mxu0
  %v927 = vadd.f32 0.0, %v926
  %v928 = vpop.f32.mrb[0].mxu0
  %929 = vmatprep.mubr.f32.mxu0 0.0
  %930 = vmatmul.mubr.f32.gmra.mrb[0].mxu0 %v264
  %v931 = vpop.f32.mrb[0].mxu0
  %v932 = vadd.f32 0.0, %v931
  %v933 = vpop.f32.mrb[0].mxu0
  %934 = vmatprep.mubr.f32.mxu0 0.0
  %935 = vmatmul.mubr.f32.gmra.mrb[0].mxu0 %v267
  %v936 = vpop.f32.mrb[0].mxu0
  %v937 = vadd.f32 0.0, %v936
  %v938 = vpop.f32.mrb[0].mxu0
  %939 = vmatprep.mubr.f32.mxu0 0.0
  %940 = vmatmul.mubr.f32.gmra.mrb[0].mxu0 %v270
  %v941 = vpop.f32.mrb[0].mxu0
  %v942 = vadd.f32 0.0, %v941
  %v943 = vpop.f32.mrb[0].mxu0
  %944 = vmatprep.mubr.f32.mxu0 0.0
  %945 = vmatmul.mubr.f32.gmra.mrb[0].mxu0 %v273
  %v946 = vpop.f32.mrb[0].mxu0
  %v947 = vadd.f32 0.0, %v946
  %v948 = vpop.f32.mrb[0].mxu0
  %949 = vmatprep.mubr.f32.mxu0 0.0
  %950 = vmatmul.mubr.f32.gmra.mrb[0].mxu0 %v276
  %v951 = vpop.f32.mrb[0].mxu0
  %v952 = vadd.f32 0.0, %v951
  %v953 = vpop.f32.mrb[0].mxu0
  %954 = vmatprep.mubr.f32.mxu0 0.0
  %955 = vmatmul.mubr.f32.gmra.mrb[0].mxu0 %v279
  %v956 = vpop.f32.mrb[0].mxu0
  %v957 = vadd.f32 0.0, %v956
  %v958 = vpop.f32.mrb[0].mxu0
  %959 = vmatprep.mubr.f32.mxu0 0.0
  %960 = vmatmul.mubr.f32.gmra.mrb[0].mxu0 %v282
  %v961 = vpop.f32.mrb[0].mxu0
  %v962 = vadd.f32 0.0, %v961
  %v963 = vpop.f32.mrb[0].mxu0
  %964 = vmatprep.mubr.f32.mxu0 0.0
  %965 = vmatmul.mubr.f32.gmra.mrb[0].mxu0 %v285
  %v966 = vpop.f32.mrb[0].mxu0
  %v967 = vadd.f32 0.0, %v966
  %v968 = vpop.f32.mrb[0].mxu0
  %969 = vmatprep.mubr.f32.mxu0 0.0
  %970 = vmatmul.mubr.f32.gmra.mrb[0].mxu0 %v288
  %v971 = vpop.f32.mrb[0].mxu0
  %v972 = vadd.f32 0.0, %v971
  %v973 = vpop.f32.mrb[0].mxu0
  %974 = vmatprep.mubr.f32.mxu0 0.0
  %975 = vmatmul.mubr.f32.gmra.mrb[0].mxu0 %v291
  %v976 = vpop.f32.mrb[0].mxu0
  %v977 = vadd.f32 0.0, %v976
  %v978 = vpop.f32.mrb[0].mxu0
  %979 = vmatprep.mubr.f32.mxu0 0.0
  %980 = vmatmul.mubr.f32.gmra.mrb[0].mxu0 %v294
  %v981 = vpop.f32.mrb[0].mxu0
  %v982 = vadd.f32 0.0, %v981
  %v983 = vpop.f32.mrb[0].mxu0
  %984 = vmatprep.mubr.f32.mxu0 0.0
  %985 = vmatmul.mubr.f32.gmra.mrb[0].mxu0 %v297
  %v986 = vpop.f32.mrb[0].mxu0
  %v987 = vadd.f32 0.0, %v986
  %v988 = vpop.f32.mrb[0].mxu0
  %989 = vmatprep.mubr.f32.mxu0 0.0
  %990 = vmatmul.mubr.f32.gmra.mrb[0].mxu0 %v300
  %v991 = vpop.f32.mrb[0].mxu0
  %v992 = vadd.f32 0.0, %v991
  %v993 = vpop.f32.mrb[0].mxu0
  %994 = vmatprep.mubr.f32.mxu0 0.0
  %995 = vmatmul.mubr.f32.gmra.mrb[0].mxu0 %v303
  %v996 = vpop.f32.mrb[0].mxu0
  %v997 = vadd.f32 0.0, %v996
  %v998 = vpop.f32.mrb[0].mxu0
  %999 = vmatprep.mubr.f32.mxu0 0.0
  %1000 = vmatmul.mubr.f32.gmra.mrb[0].mxu0 %v306
  %v1001 = vpop.f32.mrb[0].mxu0
  %v1002 = vadd.f32 0.0, %v1001
  %v1003 = vpop.f32.mrb[0].mxu0
  %1004 = vmatprep.mubr.f32.mxu0 0.0
  %1005 = vmatmul.mubr.f32.gmra.mrb[0].mxu0 %v309
  %v1006 = vpop.f32.mrb[0].mxu0
  %v1007 = vadd.f32 0.0, %v1006
  %v1008 = vpop.f32.mrb[0].mxu0
  %1009 = vmatprep.mubr.f32.mxu0 0.0
  %1010 = vmatmul.mubr.f32.gmra.mrb[0].mxu0 %v312
  %v1011 = vpop.f32.mrb[0].mxu0
  %v1012 = vadd.f32 0.0, %v1011
  %v1013 = vpop.f32.mrb[0].mxu0
  %1014 = vmatprep.mubr.f32.mxu0 0.0
  %1015 = vmatmul.mubr.f32.gmra.mrb[0].mxu0 %v315
  %v1016 = vpop.f32.mrb[0].mxu0
  %v1017 = vadd.f32 0.0, %v1016
  %v1018 = vpop.f32.mrb[0].mxu0
  %1019 = vmatprep.mubr.f32.mxu0 0.0
  %1020 = vmatmul.mubr.f32.gmra.mrb[0].mxu0 %v318
  %v1021 = vpop.f32.mrb[0].mxu0
  %v1022 = vadd.f32 0.0, %v1021
  %v1023 = vpop.f32.mrb[0].mxu0
  %1024 = vmatprep.mubr.f32.mxu0 0.0
  %1025 = vmatmul.mubr.f32.gmra.mrb[0].mxu0 %v321
  %v1026 = vpop.f32.mrb[0].mxu0
  %v1027 = vadd.f32 0.0, %v1026
  %v1028 = vpop.f32.mrb[0].mxu0
  %1029 = vmatprep.mubr.f32.mxu0 0.0
  %1030 = vmatmul.mubr.f32.gmra.mrb[0].mxu0 %v324
  %v1031 = vpop.f32.mrb[0].mxu0
  %v1032 = vadd.f32 0.0, %v1031
  %v1033 = vpop.f32.mrb[0].mxu0
  %1034 = vmatprep.mubr.f32.mxu0 0.0
  %1035 = vmatmul.mubr.f32.gmra.mrb[0].mxu0 %v327
  %v1036 = vpop.f32.mrb[0].mxu0
  %v1037 = vadd.f32 0.0, %v1036
  %v1038 = vpop.f32.mrb[0].mxu0
  %1039 = vmatprep.mubr.f32.mxu0 0.0
  %1040 = vmatmul.mubr.f32.gmra.mrb[0].mxu0 %v330
  %v1041 = vpop.f32.mrb[0].mxu0
  %v1042 = vadd.f32 0.0, %v1041
  %v1043 = vpop.f32.mrb[0].mxu0
  %1044 = vmatprep.mubr.f32.mxu0 0.0
  %1045 = vmatmul.mubr.f32.gmra.mrb[0].mxu0 %v333
  %v1046 = vpop.f32.mrb[0].mxu0
  %v1047 = vadd.f32 0.0, %v1046
  %v1048 = vpop.f32.mrb[0].mxu0
  %1049 = vmatprep.mubr.f32.mxu0 0.0
  %1050 = vmatmul.mubr.f32.gmra.mrb[0].mxu0 %v336
  %v1051 = vpop.f32.mrb[0].mxu0
  %v1052 = vadd.f32 0.0, %v1051
  %v1053 = vpop.f32.mrb[0].mxu0
  %1054 = vmatprep.mubr.f32.mxu0 0.0
  %1055 = vmatmul.mubr.f32.gmra.mrb[0].mxu0 %v339
  %v1056 = vpop.f32.mrb[0].mxu0
  %v1057 = vadd.f32 0.0, %v1056
  %v1058 = vpop.f32.mrb[0].mxu0
  %1059 = vmatprep.mubr.f32.mxu0 0.0
  %1060 = vmatmul.mubr.f32.gmra.mrb[0].mxu0 %v342
  %v1061 = vpop.f32.mrb[0].mxu0
  %v1062 = vadd.f32 0.0, %v1061
  %v1063 = vpop.f32.mrb[0].mxu0
  %1064 = vmatprep.mubr.f32.mxu0 0.0
  %1065 = vmatmul.mubr.f32.gmra.mrb[0].mxu0 %v345
  %v1066 = vpop.f32.mrb[0].mxu0
  %v1067 = vadd.f32 0.0, %v1066
  %v1068 = vpop.f32.mrb[0].mxu0
  %1069 = vmatprep.mubr.f32.mxu0 0.0
  %1070 = vmatmul.mubr.f32.gmra.mrb[0].mxu0 %v348
  %v1071 = vpop.f32.mrb[0].mxu0
  %v1072 = vadd.f32 0.0, %v1071
  %v1073 = vpop.f32.mrb[0].mxu0
  %1074 = vmatprep.mubr.f32.mxu0 0.0
  %1075 = vmatmul.mubr.f32.gmra.mrb[0].mxu0 %v351
  %v1076 = vpop.f32.mrb[0].mxu0
  %v1077 = vadd.f32 0.0, %v1076
  %v1078 = vpop.f32.mrb[0].mxu0
  %1079 = vmatprep.mubr.f32.mxu0 0.0
  %1080 = vmatmul.mubr.f32.gmra.mrb[0].mxu0 %v354
  %v1081 = vpop.f32.mrb[0].mxu0
  %v1082 = vadd.f32 0.0, %v1081
  %v1083 = vpop.f32.mrb[0].mxu0
  %1084 = vmatprep.mubr.f32.mxu0 0.0
  %1085 = vmatmul.mubr.f32.gmra.mrb[0].mxu0 %v357
  %v1086 = vpop.f32.mrb[0].mxu0
  %v1087 = vadd.f32 0.0, %v1086
  %v1088 = vpop.f32.mrb[0].mxu0
  %1089 = vmatprep.mubr.f32.mxu0 0.0
  %1090 = vmatmul.mubr.f32.gmra.mrb[0].mxu0 %v360
  %v1091 = vpop.f32.mrb[0].mxu0
  %v1092 = vadd.f32 0.0, %v1091
  %v1093 = vpop.f32.mrb[0].mxu0
  %1094 = vmatprep.mubr.f32.mxu0 0.0
  %1095 = vmatmul.mubr.f32.gmra.mrb[0].mxu0 %v363
  %v1096 = vpop.f32.mrb[0].mxu0
  %v1097 = vadd.f32 0.0, %v1096
  %v1098 = vpop.f32.mrb[0].mxu0
  %1099 = vmatprep.mubr.f32.mxu0 0.0
  %1100 = vmatmul.mubr.f32.gmra.mrb[0].mxu0 %v366
  %v1101 = vpop.f32.mrb[0].mxu0
  %v1102 = vadd.f32 0.0, %v1101
  %v1103 = vpop.f32.mrb[0].mxu0
  %1104 = vmatprep.mubr.f32.mxu0 0.0
  %1105 = vmatmul.mubr.f32.gmra.mrb[0].mxu0 %v369
  %v1106 = vpop.f32.mrb[0].mxu0
  %v1107 = vadd.f32 0.0, %v1106
  %v1108 = vpop.f32.mrb[0].mxu0
  %1109 = vmatprep.mubr.f32.mxu0 0.0
  %1110 = vmatmul.mubr.f32.gmra.mrb[0].mxu0 %v372
  %v1111 = vpop.f32.mrb[0].mxu0
  %v1112 = vadd.f32 0.0, %v1111
  %v1113 = vpop.f32.mrb[0].mxu0
  %1114 = vmatprep.mubr.f32.mxu0 0.0
  %1115 = vmatmul.mubr.f32.gmra.mrb[0].mxu0 %v375
  %v1116 = vpop.f32.mrb[0].mxu0
  %v1117 = vadd.f32 0.0, %v1116
  %v1118 = vpop.f32.mrb[0].mxu0
  %1119 = vmatprep.mubr.f32.mxu0 0.0
  %1120 = vmatmul.mubr.f32.gmra.mrb[0].mxu0 %v378
  %v1121 = vpop.f32.mrb[0].mxu0
  %v1122 = vadd.f32 0.0, %v1121
  %v1123 = vpop.f32.mrb[0].mxu0
  %1124 = vmatprep.mubr.f32.mxu0 0.0
  %1125 = vmatmul.mubr.f32.gmra.mrb[0].mxu0 %v381
  %v1126 = vpop.f32.mrb[0].mxu0
  %v1127 = vadd.f32 0.0, %v1126
  %v1128 = vpop.f32.mrb[0].mxu0
  %1129 = vmatprep.mubr.f32.mxu0 0.0
  %1130 = vmatmul.mubr.f32.gmra.mrb[0].mxu0 %v384
  %v1131 = vpop.f32.mrb[0].mxu0
  %v1132 = vadd.f32 0.0, %v1131
  %v1133 = vpop.f32.mrb[0].mxu0
  %1134 = vmatprep.mubr.f32.mxu0 0.0
  %1135 = vmatmul.mubr.f32.gmra.mrb[0].mxu0 %v387
  %v1136 = vpop.f32.mrb[0].mxu0
  %v1137 = vadd.f32 0.0, %v1136
  %v1138 = vpop.f32.mrb[0].mxu0
  %1139 = vmatprep.mubr.f32.mxu0 0.0
  %1140 = vmatmul.mubr.f32.gmra.mrb[0].mxu0 %v390
  %v1141 = vpop.f32.mrb[0].mxu0
  %v1142 = vadd.f32 0.0, %v1141
  %v1143 = vpop.f32.mrb[0].mxu0
  %1144 = vmatprep.mubr.f32.mxu0 0.0
  %1145 = vmatmul.mubr.f32.gmra.mrb[0].mxu0 %v393
  %v1146 = vpop.f32.mrb[0].mxu0
  %v1147 = vadd.f32 0.0, %v1146
  %v1148 = vpop.f32.mrb[0].mxu0
  %1149 = vmatprep.mubr.f32.mxu0 0.0
  %1150 = vmatmul.mubr.f32.gmra.mrb[0].mxu0 %v396
  %v1151 = vpop.f32.mrb[0].mxu0
  %v1152 = vadd.f32 0.0, %v1151
  %v1153 = vpop.f32.mrb[0].mxu0
  %1154 = vmatprep.mubr.f32.mxu0 0.0
  %1155 = vmatmul.mubr.f32.gmra.mrb[0].mxu0 %v399
  %v1156 = vpop.f32.mrb[0].mxu0
  %v1157 = vadd.f32 0.0, %v1156
  %v1158 = vpop.f32.mrb[0].mxu0
  %1159 = vmatprep.mubr.f32.mxu0 0.0
  %1160 = vmatmul.mubr.f32.gmra.mrb[0].mxu0 %v402
  %v1161 = vpop.f32.mrb[0].mxu0
  %v1162 = vadd.f32 0.0, %v1161
  %v1163 = vpop.f32.mrb[0].mxu0
  %1164 = vmatprep.mubr.f32.mxu0 0.0
  %1165 = vmatmul.mubr.f32.gmra.mrb[0].mxu0 %v405
  %v1166 = vpop.f32.mrb[0].mxu0
  %v1167 = vadd.f32 0.0, %v1166
  %v1168 = vpop.f32.mrb[0].mxu0
  %1169 = vmatprep.mubr.f32.mxu0 0.0
  %1170 = vmatmul.mubr.f32.gmra.mrb[0].mxu0 %v408
  %v1171 = vpop.f32.mrb[0].mxu0
  %v1172 = vadd.f32 0.0, %v1171
  %v1173 = vpop.f32.mrb[0].mxu0
  %1174 = vmatprep.mubr.f32.mxu0 0.0
  %1175 = vmatmul.mubr.f32.gmra.mrb[0].mxu0 %v411
  %v1176 = vpop.f32.mrb[0].mxu0
  %v1177 = vadd.f32 0.0, %v1176
  %v1178 = vpop.f32.mrb[0].mxu0
  %1179 = vmatprep.mubr.f32.mxu0 0.0
  %1180 = vmatmul.mubr.f32.gmra.mrb[0].mxu0 %v414
  %v1181 = vpop.f32.mrb[0].mxu0
  %v1182 = vadd.f32 0.0, %v1181
  %v1183 = vpop.f32.mrb[0].mxu0
  %1184 = vmatprep.mubr.f32.mxu0 0.0
  %1185 = vmatmul.mubr.f32.gmra.mrb[0].mxu0 %v417
  %v1186 = vpop.f32.mrb[0].mxu0
  %v1187 = vadd.f32 0.0, %v1186
  %v1188 = vpop.f32.mrb[0].mxu0
  %1189 = vmatprep.mubr.f32.mxu0 0.0
  %1190 = vmatmul.mubr.f32.gmra.mrb[0].mxu0 %v420
  %v1191 = vpop.f32.mrb[0].mxu0
  %v1192 = vadd.f32 0.0, %v1191
  %v1193 = vpop.f32.mrb[0].mxu0
  %1194 = vmatprep.mubr.f32.mxu0 0.0
  %1195 = vmatmul.mubr.f32.gmra.mrb[0].mxu0 %v423
  %v1196 = vpop.f32.mrb[0].mxu0
  %v1197 = vadd.f32 0.0, %v1196
  %v1198 = vpop.f32.mrb[0].mxu0
  %1199 = vmatprep.mubr.f32.mxu0 0.0
  %1200 = vmatmul.mubr.f32.gmra.mrb[0].mxu0 %v426
  %v1201 = vpop.f32.mrb[0].mxu0
  %v1202 = vadd.f32 0.0, %v1201
  %v1203 = vpop.f32.mrb[0].mxu0
  %1204 = vmatprep.mubr.f32.mxu0 0.0
  %1205 = vmatmul.mubr.f32.gmra.mrb[0].mxu0 %v429
  %v1206 = vpop.f32.mrb[0].mxu0
  %v1207 = vadd.f32 0.0, %v1206
  %v1208 = vpop.f32.mrb[0].mxu0
  %1209 = vmatprep.mubr.f32.mxu0 0.0
  %1210 = vmatmul.mubr.f32.gmra.mrb[0].mxu0 %v432
  %v1211 = vpop.f32.mrb[0].mxu0
  %v1212 = vadd.f32 0.0, %v1211
  %v1213 = vpop.f32.mrb[0].mxu0
  %1214 = vmatprep.mubr.f32.mxu0 0.0
  %1215 = vmatmul.mubr.f32.gmra.mrb[0].mxu0 %v435
  %v1216 = vpop.f32.mrb[0].mxu0
  %v1217 = vadd.f32 0.0, %v1216
  %v1218 = vpop.f32.mrb[0].mxu0
  %1219 = vmatprep.mubr.f32.mxu0 0.0
  %1220 = vmatmul.mubr.f32.gmra.mrb[0].mxu0 %v438
  %v1221 = vpop.f32.mrb[0].mxu0
  %v1222 = vadd.f32 0.0, %v1221
  %v1223 = vpop.f32.mrb[0].mxu0
  %1224 = vmatprep.mubr.f32.mxu0 0.0
  %1225 = vmatmul.mubr.f32.gmra.mrb[0].mxu0 %v441
  %v1226 = vpop.f32.mrb[0].mxu0
  %v1227 = vadd.f32 0.0, %v1226
  %v1228 = vpop.f32.mrb[0].mxu0
  %1229 = vmatprep.mubr.f32.mxu0 0.0
  %1230 = vmatmul.mubr.f32.gmra.mrb[0].mxu0 %v444
  %v1231 = vpop.f32.mrb[0].mxu0
  %v1232 = vadd.f32 0.0, %v1231
  %v1233 = vpop.f32.mrb[0].mxu0
  %1234 = vmatprep.mubr.f32.mxu0 0.0
  %1235 = vmatmul.mubr.f32.gmra.mrb[0].mxu0 %v447
  %v1236 = vpop.f32.mrb[0].mxu0
  %v1237 = vadd.f32 0.0, %v1236
  %v1238 = vpop.f32.mrb[0].mxu0
  %1239 = vmatprep.mubr.f32.mxu0 0.0
  %1240 = vmatmul.mubr.f32.gmra.mrb[0].mxu0 %v450
  %v1241 = vpop.f32.mrb[0].mxu0
  %v1242 = vadd.f32 0.0, %v1241
  %v1243 = vpop.f32.mrb[0].mxu0
  %1244 = vmatprep.mubr.f32.mxu0 0.0
  %1245 = vmatmul.mubr.f32.gmra.mrb[0].mxu0 %v453
  %v1246 = vpop.f32.mrb[0].mxu0
  %v1247 = vadd.f32 0.0, %v1246
  %v1248 = vpop.f32.mrb[0].mxu0
  %1249 = vmatprep.mubr.f32.mxu0 0.0
  %1250 = vmatmul.mubr.f32.gmra.mrb[0].mxu0 %v456
  %v1251 = vpop.f32.mrb[0].mxu0
  %v1252 = vadd.f32 0.0, %v1251
  %v1253 = vpop.f32.mrb[0].mxu0
  %1254 = vmatprep.mubr.f32.mxu0 0.0
  %1255 = vmatmul.mubr.f32.gmra.mrb[0].mxu0 %v459
  %v1256 = vpop.f32.mrb[0].mxu0
  %v1257 = vadd.f32 0.0, %v1256
  %v1258 = vpop.f32.mrb[0].mxu0
  %1259 = vmatprep.mubr.f32.mxu0 0.0
  %1260 = vmatmul.mubr.f32.gmra.mrb[0].mxu0 %v462
  %v1261 = vpop.f32.mrb[0].mxu0
  %v1262 = vadd.f32 0.0, %v1261
  %v1263 = vpop.f32.mrb[0].mxu0
  %1264 = vmatprep.mubr.f32.mxu0 0.0
  %1265 = vmatmul.mubr.f32.gmra.mrb[0].mxu0 %v465
  %v1266 = vpop.f32.mrb[0].mxu0
  %v1267 = vadd.f32 0.0, %v1266
  %v1268 = vpop.f32.mrb[0].mxu0
  %1269 = vmatprep.mubr.f32.mxu0 0.0
  %1270 = vmatmul.mubr.f32.gmra.mrb[0].mxu0 %v468
  %v1271 = vpop.f32.mrb[0].mxu0
  %v1272 = vadd.f32 0.0, %v1271
  %v1273 = vpop.f32.mrb[0].mxu0
  %1274 = vmatprep.mubr.f32.mxu0 0.0
  %1275 = vmatmul.mubr.f32.gmra.mrb[0].mxu0 %v471
  %v1276 = vpop.f32.mrb[0].mxu0
  %v1277 = vadd.f32 0.0, %v1276
  %v1278 = vpop.f32.mrb[0].mxu0
  %1279 = vmatprep.mubr.f32.mxu0 0.0
  %1280 = vmatmul.mubr.f32.gmra.mrb[0].mxu0 %v474
  %v1281 = vpop.f32.mrb[0].mxu0
  %v1282 = vadd.f32 0.0, %v1281
  %v1283 = vpop.f32.mrb[0].mxu0
  %1284 = vmatprep.mubr.f32.mxu0 0.0
  %1285 = vmatmul.mubr.f32.gmra.mrb[0].mxu0 %v477
  %v1286 = vpop.f32.mrb[0].mxu0
  %v1287 = vadd.f32 0.0, %v1286
  %v1288 = vpop.f32.mrb[0].mxu0
  %1289 = vmatprep.mubr.f32.mxu0 0.0
  %1290 = vmatmul.mubr.f32.gmra.mrb[0].mxu0 %v480
  %v1291 = vpop.f32.mrb[0].mxu0
  %v1292 = vadd.f32 0.0, %v1291
  %v1293 = vpop.f32.mrb[0].mxu0
  %1294 = vmatprep.mubr.f32.mxu0 0.0
  %1295 = vmatmul.mubr.f32.gmra.mrb[0].mxu0 %v483
  %v1296 = vpop.f32.mrb[0].mxu0
  %v1297 = vadd.f32 0.0, %v1296
  %v1298 = vpop.f32.mrb[0].mxu0
  %1299 = vmatprep.mubr.f32.mxu0 0.0
  %1300 = vmatmul.mubr.f32.gmra.mrb[0].mxu0 %v486
  %v1301 = vpop.f32.mrb[0].mxu0
  %v1302 = vadd.f32 0.0, %v1301
  %v1303 = vpop.f32.mrb[0].mxu0
  %1304 = vmatprep.mubr.f32.mxu0 0.0
  %1305 = vmatmul.mubr.f32.gmra.mrb[0].mxu0 %v489
  %v1306 = vpop.f32.mrb[0].mxu0
  %v1307 = vadd.f32 0.0, %v1306
  %v1308 = vpop.f32.mrb[0].mxu0
  %1309 = vmatprep.mubr.f32.mxu0 0.0
  %1310 = vmatmul.mubr.f32.gmra.mrb[0].mxu0 %v492
  %v1311 = vpop.f32.mrb[0].mxu0
  %v1312 = vadd.f32 0.0, %v1311
  %v1313 = vpop.f32.mrb[0].mxu0
  %1314 = vmatprep.mubr.f32.mxu0 0.0
  %1315 = vmatmul.mubr.f32.gmra.mrb[0].mxu0 %v495
  %v1316 = vpop.f32.mrb[0].mxu0
  %v1317 = vadd.f32 0.0, %v1316
  %v1318 = vpop.f32.mrb[0].mxu0
  %1319 = vmatprep.mubr.f32.mxu0 0.0
  %1320 = vmatmul.mubr.f32.gmra.mrb[0].mxu0 %v498
  %v1321 = vpop.f32.mrb[0].mxu0
  %v1322 = vadd.f32 0.0, %v1321
  %v1323 = vpop.f32.mrb[0].mxu0
  %1324 = vmatprep.mubr.f32.mxu0 0.0
  %1325 = vmatmul.mubr.f32.gmra.mrb[0].mxu0 %v501
  %v1326 = vpop.f32.mrb[0].mxu0
  %v1327 = vadd.f32 0.0, %v1326
  %v1328 = vpop.f32.mrb[0].mxu0
  %1329 = vmatprep.mubr.f32.mxu0 0.0
  %1330 = vmatmul.mubr.f32.gmra.mrb[0].mxu0 %v504
  %v1331 = vpop.f32.mrb[0].mxu0
  %v1332 = vadd.f32 0.0, %v1331
  %v1333 = vpop.f32.mrb[0].mxu0
  %1334 = vmatprep.mubr.f32.mxu0 0.0
  %1335 = vmatmul.mubr.f32.gmra.mrb[0].mxu0 %v507
  %v1336 = vpop.f32.mrb[0].mxu0
  %v1337 = vadd.f32 0.0, %v1336
  %v1338 = vpop.f32.mrb[0].mxu0
  %1339 = vmatprep.mubr.f32.mxu0 0.0
  %1340 = vmatmul.mubr.f32.gmra.mrb[0].mxu0 %v510
  %v1341 = vpop.f32.mrb[0].mxu0
  %v1342 = vadd.f32 0.0, %v1341
  %v1343 = vpop.f32.mrb[0].mxu0
  %1344 = vmatprep.mubr.f32.mxu0 0.0
  %1345 = vmatmul.mubr.f32.gmra.mrb[0].mxu0 %v513
  %v1346 = vpop.f32.mrb[0].mxu0
  %v1347 = vadd.f32 0.0, %v1346
  %v1348 = vpop.f32.mrb[0].mxu0
  %1349 = vmatprep.mubr.f32.mxu0 0.0
  %1350 = vmatmul.mubr.f32.gmra.mrb[0].mxu0 %v516
  %v1351 = vpop.f32.mrb[0].mxu0
  %v1352 = vadd.f32 0.0, %v1351
  %v1353 = vpop.f32.mrb[0].mxu0
  %1354 = vmatprep.mubr.f32.mxu0 0.0
  %1355 = vmatmul.mubr.f32.gmra.mrb[0].mxu0 %v519
  %v1356 = vpop.f32.mrb[0].mxu0
  %v1357 = vadd.f32 0.0, %v1356
  %v1358 = vpop.f32.mrb[0].mxu0
  %1359 = vmatprep.mubr.f32.mxu0 0.0
  %1360 = vmatmul.mubr.f32.gmra.mrb[0].mxu0 %v522
  %v1361 = vpop.f32.mrb[0].mxu0
  %v1362 = vadd.f32 0.0, %v1361
  %v1363 = vpop.f32.mrb[0].mxu0
  %1364 = vmatprep.mubr.f32.mxu0 0.0
  %1365 = vmatmul.mubr.f32.gmra.mrb[0].mxu0 %v525
  %v1366 = vpop.f32.mrb[0].mxu0
  %v1367 = vadd.f32 0.0, %v1366
  %v1368 = vpop.f32.mrb[0].mxu0
  %1369 = vmatprep.mubr.f32.mxu0 0.0
  %1370 = vmatmul.mubr.f32.gmra.mrb[0].mxu0 %v528
  %v1371 = vpop.f32.mrb[0].mxu0
  %v1372 = vadd.f32 0.0, %v1371
  %v1373 = vpop.f32.mrb[0].mxu0
  %1374 = vmatprep.mubr.f32.mxu0 0.0
  %1375 = vmatmul.mubr.f32.gmra.mrb[0].mxu0 %v531
  %v1376 = vpop.f32.mrb[0].mxu0
  %v1377 = vadd.f32 0.0, %v1376
  %v1378 = vpop.f32.mrb[0].mxu0
  %1379 = vmatprep.mubr.f32.mxu0 0.0
  %1380 = vmatmul.mubr.f32.gmra.mrb[0].mxu0 %v534
  %v1381 = vpop.f32.mrb[0].mxu0
  %v1382 = vadd.f32 0.0, %v1381
  %v1383 = vpop.f32.mrb[0].mxu0
  %1384 = vmatprep.mubr.f32.mxu0 0.0
  %1385 = vmatmul.mubr.f32.gmra.mrb[0].mxu0 %v537
  %v1386 = vpop.f32.mrb[0].mxu0
  %v1387 = vadd.f32 0.0, %v1386
  %v1388 = vpop.f32.mrb[0].mxu0
  %1389 = vmatprep.mubr.f32.mxu0 0.0
  %1390 = vmatmul.mubr.f32.gmra.mrb[0].mxu0 %v540
  %v1391 = vpop.f32.mrb[0].mxu0
  %v1392 = vadd.f32 0.0, %v1391
  %v1393 = vpop.f32.mrb[0].mxu0
  %1394 = vmatprep.mubr.f32.mxu0 0.0
  %1395 = vmatmul.mubr.f32.gmra.mrb[0].mxu0 %v543
  %v1396 = vpop.f32.mrb[0].mxu0
  %v1397 = vadd.f32 0.0, %v1396
  %v1398 = vpop.f32.mrb[0].mxu0
  %1399 = vmatprep.mubr.f32.mxu0 0.0
  %1400 = vmatmul.mubr.f32.gmra.mrb[0].mxu0 %v546
  %v1401 = vpop.f32.mrb[0].mxu0
  %v1402 = vadd.f32 0.0, %v1401
  %v1403 = vpop.f32.mrb[0].mxu0
  %1404 = vmatprep.mubr.f32.mxu0 0.0
  %1405 = vmatmul.mubr.f32.gmra.mrb[0].mxu0 %v549
  %v1406 = vpop.f32.mrb[0].mxu0
  %v1407 = vadd.f32 0.0, %v1406
  %v1408 = vpop.f32.mrb[0].mxu0
  %1409 = vmatprep.mubr.f32.mxu0 0.0
  %1410 = vmatmul.mubr.f32.gmra.mrb[0].mxu0 %v552
  %v1411 = vpop.f32.mrb[0].mxu0
  %v1412 = vadd.f32 0.0, %v1411
  %v1413 = vpop.f32.mrb[0].mxu0
  %1414 = vmatprep.mubr.f32.mxu0 0.0
  %1415 = vmatmul.mubr.f32.gmra.mrb[0].mxu0 %v555
  %v1416 = vpop.f32.mrb[0].mxu0
  %v1417 = vadd.f32 0.0, %v1416
  %v1418 = vpop.f32.mrb[0].mxu0
  %1419 = vmatprep.mubr.f32.mxu0 0.0
  %1420 = vmatmul.mubr.f32.gmra.mrb[0].mxu0 %v558
  %v1421 = vpop.f32.mrb[0].mxu0
  %v1422 = vadd.f32 0.0, %v1421
  %v1423 = vpop.f32.mrb[0].mxu0
  %1424 = vmatprep.mubr.f32.mxu0 0.0
  %1425 = vmatmul.mubr.f32.gmra.mrb[0].mxu0 %v561
  %v1426 = vpop.f32.mrb[0].mxu0
  %v1427 = vadd.f32 0.0, %v1426
  %v1428 = vpop.f32.mrb[0].mxu0
  %1429 = vmatprep.mubr.f32.mxu0 0.0
  %1430 = vmatmul.mubr.f32.gmra.mrb[0].mxu0 %v564
  %v1431 = vpop.f32.mrb[0].mxu0
  %v1432 = vadd.f32 0.0, %v1431
  %v1433 = vpop.f32.mrb[0].mxu0
  %1434 = vmatprep.mubr.f32.mxu0 0.0
  %1435 = vmatmul.mubr.f32.gmra.mrb[0].mxu0 %v567
  %v1436 = vpop.f32.mrb[0].mxu0
  %v1437 = vadd.f32 0.0, %v1436
  %v1438 = vpop.f32.mrb[0].mxu0
  %1439 = vmatprep.mubr.f32.mxu0 0.0
  %1440 = vmatmul.mubr.f32.gmra.mrb[0].mxu0 %v570
  %v1441 = vpop.f32.mrb[0].mxu0
  %v1442 = vadd.f32 0.0, %v1441
  %v1443 = vpop.f32.mrb[0].mxu0
  %1444 = vmatprep.mubr.f32.mxu0 0.0
  %1445 = vmatmul.mubr.f32.gmra.mrb[0].mxu0 %v573
  %v1446 = vpop.f32.mrb[0].mxu0
  %v1447 = vadd.f32 0.0, %v1446
  %v1448 = vpop.f32.mrb[0].mxu0
  %1449 = vmatprep.mubr.f32.mxu0 0.0
  %1450 = vmatmul.mubr.f32.gmra.mrb[0].mxu0 %v576
  %v1451 = vpop.f32.mrb[0].mxu0
  %v1452 = vadd.f32 0.0, %v1451
  %v1453 = vpop.f32.mrb[0].mxu0
  %1454 = vmatprep.mubr.f32.mxu0 0.0
  %1455 = vmatmul.mubr.f32.gmra.mrb[0].mxu0 %v579
  %v1456 = vpop.f32.mrb[0].mxu0
  %v1457 = vadd.f32 0.0, %v1456
  %v1458 = vpop.f32.mrb[0].mxu0
  %1459 = vmatprep.mubr.f32.mxu0 0.0
  %1460 = vmatmul.mubr.f32.gmra.mrb[0].mxu0 %v582
  %v1461 = vpop.f32.mrb[0].mxu0
  %v1462 = vadd.f32 0.0, %v1461
  %v1463 = vpop.f32.mrb[0].mxu0
  %1464 = vmatprep.mubr.f32.mxu0 0.0
  %1465 = vmatmul.mubr.f32.gmra.mrb[0].mxu0 %v585
  %v1466 = vpop.f32.mrb[0].mxu0
  %v1467 = vadd.f32 0.0, %v1466
  %v1468 = vpop.f32.mrb[0].mxu0
  %1469 = vmatprep.mubr.f32.mxu0 0.0
  %1470 = vmatmul.mubr.f32.gmra.mrb[0].mxu0 %v588
  %v1471 = vpop.f32.mrb[0].mxu0
  %v1472 = vadd.f32 0.0, %v1471
  %v1473 = vpop.f32.mrb[0].mxu0
  %1474 = vmatprep.mubr.f32.mxu0 0.0
  %1475 = vmatmul.mubr.f32.gmra.mrb[0].mxu0 %v591
  %v1476 = vpop.f32.mrb[0].mxu0
  %v1477 = vadd.f32 0.0, %v1476
  %v1478 = vpop.f32.mrb[0].mxu0
  %1479 = vmatprep.mubr.f32.mxu0 0.0
  %1480 = vmatmul.mubr.f32.gmra.mrb[0].mxu0 %v594
  %v1481 = vpop.f32.mrb[0].mxu0
  %v1482 = vadd.f32 0.0, %v1481
  %v1483 = vpop.f32.mrb[0].mxu0
  %1484 = vmatprep.mubr.f32.mxu0 0.0
  %1485 = vmatmul.mubr.f32.gmra.mrb[0].mxu0 %v597
  %v1486 = vpop.f32.mrb[0].mxu0
  %v1487 = vadd.f32 0.0, %v1486
  %v1488 = vpop.f32.mrb[0].mxu0
  %1489 = vmatprep.mubr.f32.mxu0 0.0
  %1490 = vmatmul.mubr.f32.gmra.mrb[0].mxu0 %v600
  %v1491 = vpop.f32.mrb[0].mxu0
  %v1492 = vadd.f32 0.0, %v1491
  %v1493 = vpop.f32.mrb[0].mxu0
  %1494 = vmatprep.mubr.f32.mxu0 0.0
  %1495 = vmatmul.mubr.f32.gmra.mrb[0].mxu0 %v603
  %v1496 = vpop.f32.mrb[0].mxu0
  %v1497 = vadd.f32 0.0, %v1496
  %v1498 = vpop.f32.mrb[0].mxu0
  %1499 = vmatprep.mubr.f32.mxu0 0.0
  %1500 = vmatmul.mubr.f32.gmra.mrb[0].mxu0 %v606
  %v1501 = vpop.f32.mrb[0].mxu0
  %v1502 = vadd.f32 0.0, %v1501
  %v1503 = vpop.f32.mrb[0].mxu0
  %1504 = vmatprep.mubr.f32.mxu0 0.0
  %1505 = vmatmul.mubr.f32.gmra.mrb[0].mxu0 %v609
  %v1506 = vpop.f32.mrb[0].mxu0
  %v1507 = vadd.f32 0.0, %v1506
  %v1508 = vpop.f32.mrb[0].mxu0
  %1509 = vmatprep.mubr.f32.mxu0 0.0
  %1510 = vmatmul.mubr.f32.gmra.mrb[0].mxu0 %v612
  %v1511 = vpop.f32.mrb[0].mxu0
  %v1512 = vadd.f32 0.0, %v1511
  %v1513 = vpop.f32.mrb[0].mxu0
  %1514 = vmatprep.mubr.f32.mxu0 0.0
  %1515 = vmatmul.mubr.f32.gmra.mrb[0].mxu0 %v615
  %v1516 = vpop.f32.mrb[0].mxu0
  %v1517 = vadd.f32 0.0, %v1516
  %v1518 = vpop.f32.mrb[0].mxu0
  %1519 = vmatprep.mubr.f32.mxu0 0.0
  %1520 = vmatmul.mubr.f32.gmra.mrb[0].mxu0 %v618
  %v1521 = vpop.f32.mrb[0].mxu0
  %v1522 = vadd.f32 0.0, %v1521
  %v1523 = vpop.f32.mrb[0].mxu0
  %1524 = vmatprep.mubr.f32.mxu0 0.0
  %1525 = vmatmul.mubr.f32.gmra.mrb[0].mxu0 %v621
  %v1526 = vpop.f32.mrb[0].mxu0
  %v1527 = vadd.f32 0.0, %v1526
  %v1528 = vpop.f32.mrb[0].mxu0
  %1529 = vmatprep.mubr.f32.mxu0 0.0
  %1530 = vmatmul.mubr.f32.gmra.mrb[0].mxu0 %v624
  %v1531 = vpop.f32.mrb[0].mxu0
  %v1532 = vadd.f32 0.0, %v1531
  %v1533 = vpop.f32.mrb[0].mxu0
  %1534 = vmatprep.mubr.f32.mxu0 0.0
  %1535 = vmatmul.mubr.f32.gmra.mrb[0].mxu0 %v627
  %v1536 = vpop.f32.mrb[0].mxu0
  %v1537 = vadd.f32 0.0, %v1536
  %v1538 = vpop.f32.mrb[0].mxu0
  %1539 = vmatprep.mubr.f32.mxu0 0.0
  %1540 = vmatmul.mubr.f32.gmra.mrb[0].mxu0 %v630
  %v1541 = vpop.f32.mrb[0].mxu0
  %v1542 = vadd.f32 0.0, %v1541
  %v1543 = vpop.f32.mrb[0].mxu0
  %1544 = vmatprep.mubr.f32.mxu0 0.0
  %1545 = vmatmul.mubr.f32.gmra.mrb[0].mxu0 %v633
  %v1546 = vpop.f32.mrb[0].mxu0
  %v1547 = vadd.f32 0.0, %v1546
  %v1548 = vpop.f32.mrb[0].mxu0
  %1549 = vmatprep.mubr.f32.mxu0 0.0
  %1550 = vmatmul.mubr.f32.gmra.mrb[0].mxu0 %v636
  %v1551 = vpop.f32.mrb[0].mxu0
  %v1552 = vadd.f32 0.0, %v1551
  %v1553 = vpop.f32.mrb[0].mxu0
  %1554 = vmatprep.mubr.f32.mxu0 0.0
  %1555 = vmatmul.mubr.f32.gmra.mrb[0].mxu0 %v639
  %v1556 = vpop.f32.mrb[0].mxu0
  %v1557 = vadd.f32 0.0, %v1556
  %v1558 = vpop.f32.mrb[0].mxu0
  %1559 = vmatprep.mubr.f32.mxu0 0.0
  %1560 = vmatmul.mubr.f32.gmra.mrb[0].mxu0 %v642
  %v1561 = vpop.f32.mrb[0].mxu0
  %v1562 = vadd.f32 0.0, %v1561
  %v1563 = vpop.f32.mrb[0].mxu0
  %1564 = vmatprep.mubr.f32.mxu0 0.0
  %1565 = vmatmul.mubr.f32.gmra.mrb[0].mxu0 %v645
  %v1566 = vpop.f32.mrb[0].mxu0
  %v1567 = vadd.f32 0.0, %v1566
  %v1568 = vpop.f32.mrb[0].mxu0
  %1569 = vmatprep.mubr.f32.mxu0 0.0
  %1570 = vmatmul.mubr.f32.gmra.mrb[0].mxu0 %v648
  %v1571 = vpop.f32.mrb[0].mxu0
  %v1572 = vadd.f32 0.0, %v1571
  %v1573 = vpop.f32.mrb[0].mxu0
  %1574 = vmatprep.mubr.f32.mxu0 0.0
  %1575 = vmatmul.mubr.f32.gmra.mrb[0].mxu0 %v651
  %v1576 = vpop.f32.mrb[0].mxu0
  %v1577 = vadd.f32 0.0, %v1576
  %v1578 = vpop.f32.mrb[0].mxu0
  %1579 = vmatprep.mubr.f32.mxu0 0.0
  %1580 = vmatmul.mubr.f32.gmra.mrb[0].mxu0 %v654
  %v1581 = vpop.f32.mrb[0].mxu0
  %v1582 = vadd.f32 0.0, %v1581
  %v1583 = vpop.f32.mrb[0].mxu0
  %1584 = vmatprep.mubr.f32.mxu0 0.0
  %1585 = vmatmul.mubr.f32.gmra.mrb[0].mxu0 %v657
  %v1586 = vpop.f32.mrb[0].mxu0
  %v1587 = vadd.f32 0.0, %v1586
  %v1588 = vpop.f32.mrb[0].mxu0
  %1589 = vmatprep.mubr.f32.mxu0 0.0
  %1590 = vmatmul.mubr.f32.gmra.mrb[0].mxu0 %v660
  %v1591 = vpop.f32.mrb[0].mxu0
  %v1592 = vadd.f32 0.0, %v1591
  %v1593 = vpop.f32.mrb[0].mxu0
  %1594 = vmatprep.mubr.f32.mxu0 0.0
  %1595 = vmatmul.mubr.f32.gmra.mrb[0].mxu0 %v663
  %v1596 = vpop.f32.mrb[0].mxu0
  %v1597 = vadd.f32 0.0, %v1596
  %v1598 = vpop.f32.mrb[0].mxu0
  %1599 = vmatprep.mubr.f32.mxu0 0.0
  %1600 = vmatmul.mubr.f32.gmra.mrb[0].mxu0 %v666
  %v1601 = vpop.f32.mrb[0].mxu0
  %v1602 = vadd.f32 0.0, %v1601
  %v1603 = vpop.f32.mrb[0].mxu0
  %1604 = vmatprep.mubr.f32.mxu0 0.0
  %1605 = vmatmul.mubr.f32.gmra.mrb[0].mxu0 %v669
  %v1606 = vpop.f32.mrb[0].mxu0
  %v1607 = vadd.f32 0.0, %v1606
  %v1608 = vpop.f32.mrb[0].mxu0
  %1609 = vmatprep.mubr.f32.mxu0 0.0
  %1610 = vmatmul.mubr.f32.gmra.mrb[0].mxu0 %v672
  %v1611 = vpop.f32.mrb[0].mxu0
  %v1612 = vadd.f32 0.0, %v1611
  %v1613 = vpop.f32.mrb[0].mxu0
  %1614 = vmatprep.mubr.f32.mxu0 0.0
  %1615 = vmatmul.mubr.f32.gmra.mrb[0].mxu0 %v675
  %v1616 = vpop.f32.mrb[0].mxu0
  %v1617 = vadd.f32 0.0, %v1616
  %v1618 = vpop.f32.mrb[0].mxu0
  %1619 = vmatprep.mubr.f32.mxu0 0.0
  %1620 = vmatmul.mubr.f32.gmra.mrb[0].mxu0 %v678
  %v1621 = vpop.f32.mrb[0].mxu0
  %v1622 = vadd.f32 0.0, %v1621
  %v1623 = vpop.f32.mrb[0].mxu0
  %1624 = vmatprep.mubr.f32.mxu0 0.0
  %1625 = vmatmul.mubr.f32.gmra.mrb[0].mxu0 %v681
  %v1626 = vpop.f32.mrb[0].mxu0
  %v1627 = vadd.f32 0.0, %v1626
  %v1628 = vpop.f32.mrb[0].mxu0
  %1629 = vmatprep.mubr.f32.mxu0 0.0
  %1630 = vmatmul.mubr.f32.gmra.mrb[0].mxu0 %v684
  %v1631 = vpop.f32.mrb[0].mxu0
  %v1632 = vadd.f32 0.0, %v1631
  %v1633 = vpop.f32.mrb[0].mxu0
  %1634 = vmatprep.mubr.f32.mxu0 0.0
  %1635 = vmatmul.mubr.f32.gmra.mrb[0].mxu0 %v687
  %v1636 = vpop.f32.mrb[0].mxu0
  %v1637 = vadd.f32 0.0, %v1636
  %v1638 = vpop.f32.mrb[0].mxu0
  %1639 = vmatprep.mubr.f32.mxu0 0.0
  %1640 = vmatmul.mubr.f32.gmra.mrb[0].mxu0 %v690
  %v1641 = vpop.f32.mrb[0].mxu0
  %v1642 = vadd.f32 0.0, %v1641
  %v1643 = vpop.f32.mrb[0].mxu0
  %1644 = vmatprep.mubr.f32.mxu0 0.0
  %1645 = vmatmul.mubr.f32.gmra.mrb[0].mxu0 %v693
  %v1646 = vpop.f32.mrb[0].mxu0
  %v1647 = vadd.f32 0.0, %v1646
  %v1648 = vpop.f32.mrb[0].mxu0
  %1649 = vmatprep.mubr.f32.mxu0 0.0
  %1650 = vmatmul.mubr.f32.gmra.mrb[0].mxu0 %v696
  %v1651 = vpop.f32.mrb[0].mxu0
  %v1652 = vadd.f32 0.0, %v1651
  %v1653 = vpop.f32.mrb[0].mxu0
  %1654 = vmatprep.mubr.f32.mxu0 0.0
  %1655 = vmatmul.mubr.f32.gmra.mrb[0].mxu0 %v699
  %v1656 = vpop.f32.mrb[0].mxu0
  %v1657 = vadd.f32 0.0, %v1656
  %v1658 = vpop.f32.mrb[0].mxu0
  %1659 = vmatprep.mubr.f32.mxu0 0.0
  %1660 = vmatmul.mubr.f32.gmra.mrb[0].mxu0 %v702
  %v1661 = vpop.f32.mrb[0].mxu0
  %v1662 = vadd.f32 0.0, %v1661
  %v1663 = vpop.f32.mrb[0].mxu0
  %1664 = vmatprep.mubr.f32.mxu0 0.0
  %1665 = vmatmul.mubr.f32.gmra.mrb[0].mxu0 %v705
  %v1666 = vpop.f32.mrb[0].mxu0
  %v1667 = vadd.f32 0.0, %v1666
  %v1668 = vpop.f32.mrb[0].mxu0
  %1669 = vmatprep.mubr.f32.mxu0 0.0
  %1670 = vmatmul.mubr.f32.gmra.mrb[0].mxu0 %v708
  %v1671 = vpop.f32.mrb[0].mxu0
  %v1672 = vadd.f32 0.0, %v1671
  %v1673 = vpop.f32.mrb[0].mxu0
  %1674 = vmatprep.mubr.f32.mxu0 0.0
  %1675 = vmatmul.mubr.f32.gmra.mrb[0].mxu0 %v711
  %v1676 = vpop.f32.mrb[0].mxu0
  %v1677 = vadd.f32 0.0, %v1676
  %v1678 = vpop.f32.mrb[0].mxu0
  %1679 = vmatprep.mubr.f32.mxu0 0.0
  %1680 = vmatmul.mubr.f32.gmra.mrb[0].mxu0 %v714
  %v1681 = vpop.f32.mrb[0].mxu0
  %v1682 = vadd.f32 0.0, %v1681
  %v1683 = vpop.f32.mrb[0].mxu0
  %1684 = vmatprep.mubr.f32.mxu0 0.0
  %1685 = vmatmul.mubr.f32.gmra.mrb[0].mxu0 %v717
  %v1686 = vpop.f32.mrb[0].mxu0
  %v1687 = vadd.f32 0.0, %v1686
  %v1688 = vpop.f32.mrb[0].mxu0
  %1689 = vmatprep.mubr.f32.mxu0 0.0
  %1690 = vmatmul.mubr.f32.gmra.mrb[0].mxu0 %v720
  %v1691 = vpop.f32.mrb[0].mxu0
  %v1692 = vadd.f32 0.0, %v1691
  %v1693 = vpop.f32.mrb[0].mxu0
  %1694 = vmatprep.mubr.f32.mxu0 0.0
  %1695 = vmatmul.mubr.f32.gmra.mrb[0].mxu0 %v723
  %v1696 = vpop.f32.mrb[0].mxu0
  %v1697 = vadd.f32 0.0, %v1696
  %v1698 = vpop.f32.mrb[0].mxu0
  %1699 = vmatprep.mubr.f32.mxu0 0.0
  %1700 = vmatmul.mubr.f32.gmra.mrb[0].mxu0 %v726
  %v1701 = vpop.f32.mrb[0].mxu0
  %v1702 = vadd.f32 0.0, %v1701
  %v1703 = vpop.f32.mrb[0].mxu0
  %1704 = vmatprep.mubr.f32.mxu0 0.0
  %1705 = vmatmul.mubr.f32.gmra.mrb[0].mxu0 %v729
  %v1706 = vpop.f32.mrb[0].mxu0
  %v1707 = vadd.f32 0.0, %v1706
  %v1708 = vpop.f32.mrb[0].mxu0
  %1709 = vmatprep.mubr.f32.mxu0 0.0
  %1710 = vmatmul.mubr.f32.gmra.mrb[0].mxu0 %v732
  %v1711 = vpop.f32.mrb[0].mxu0
  %v1712 = vadd.f32 0.0, %v1711
  %v1713 = vpop.f32.mrb[0].mxu0
  %1714 = vmatprep.mubr.f32.mxu0 0.0
  %1715 = vmatmul.mubr.f32.gmra.mrb[0].mxu0 %v735
  %v1716 = vpop.f32.mrb[0].mxu0
  %v1717 = vadd.f32 0.0, %v1716
  %v1718 = vpop.f32.mrb[0].mxu0
  %1719 = vmatprep.mubr.f32.mxu0 0.0
  %1720 = vmatmul.mubr.f32.gmra.mrb[0].mxu0 %v738
  %v1721 = vpop.f32.mrb[0].mxu0
  %v1722 = vadd.f32 0.0, %v1721
  %v1723 = vpop.f32.mrb[0].mxu0
  %1724 = vmatprep.mubr.f32.mxu0 0.0
  %1725 = vmatmul.mubr.f32.gmra.mrb[0].mxu0 %v741
  %v1726 = vpop.f32.mrb[0].mxu0
  %v1727 = vadd.f32 0.0, %v1726
  %v1728 = vpop.f32.mrb[0].mxu0
  %1729 = vmatprep.mubr.f32.mxu0 0.0
  %1730 = vmatmul.mubr.f32.gmra.mrb[0].mxu0 %v744
  %v1731 = vpop.f32.mrb[0].mxu0
  %v1732 = vadd.f32 0.0, %v1731
  %v1733 = vpop.f32.mrb[0].mxu0
  %1734 = vmatprep.mubr.f32.mxu0 0.0
  %1735 = vmatmul.mubr.f32.gmra.mrb[0].mxu0 %v747
  %v1736 = vpop.f32.mrb[0].mxu0
  %v1737 = vadd.f32 0.0, %v1736
  %v1738 = vpop.f32.mrb[0].mxu0
  %1739 = vmatprep.mubr.f32.mxu0 0.0
  %1740 = vmatmul.mubr.f32.gmra.mrb[0].mxu0 %v750
  %v1741 = vpop.f32.mrb[0].mxu0
  %v1742 = vadd.f32 0.0, %v1741
  %v1743 = vpop.f32.mrb[0].mxu0
  %1744 = vmatprep.mubr.f32.mxu0 0.0
  %1745 = vmatmul.mubr.f32.gmra.mrb[0].mxu0 %v753
  %v1746 = vpop.f32.mrb[0].mxu0
  %v1747 = vadd.f32 0.0, %v1746
  %v1748 = vpop.f32.mrb[0].mxu0
  %1749 = vmatprep.mubr.f32.mxu0 0.0
  %1750 = vmatmul.mubr.f32.gmra.mrb[0].mxu0 %v756
  %v1751 = vpop.f32.mrb[0].mxu0
  %v1752 = vadd.f32 0.0, %v1751
  %v1753 = vpop.f32.mrb[0].mxu0
  %1754 = vmatprep.mubr.f32.mxu0 0.0
  %1755 = vmatmul.mubr.f32.gmra.mrb[0].mxu0 %v759
  %v1756 = vpop.f32.mrb[0].mxu0
  %v1757 = vadd.f32 0.0, %v1756
  %v1758 = vpop.f32.mrb[0].mxu0
  %1759 = vmatprep.mubr.f32.mxu0 0.0
  %1760 = vmatmul.mubr.f32.gmra.mrb[0].mxu0 %v762
  %v1761 = vpop.f32.mrb[0].mxu0
  %v1762 = vadd.f32 0.0, %v1761
  %v1763 = vpop.f32.mrb[0].mxu0
  %1764 = vmatprep.mubr.f32.mxu0 0.0
  %1765 = vmatmul.mubr.f32.gmra.mrb[0].mxu0 %v765
  %v1766 = vpop.f32.mrb[0].mxu0
  %v1767 = vadd.f32 0.0, %v1766
  %v1768 = vpop.f32.mrb[0].mxu0
  %1769 = vmatprep.mubr.f32.mxu0 0.0
  %1770 = vmatmul.mubr.f32.gmra.mrb[0].mxu0 %v768
  %v1771 = vpop.f32.mrb[0].mxu0
  %v1772 = vadd.f32 0.0, %v1771
  %v1773 = vpop.f32.mrb[0].mxu0
  %1774 = vmatprep.mubr.f32.mxu0 0.0
  %1775 = vmatmul.mubr.f32.gmra.mrb[0].mxu0 %v771
  %v1776 = vpop.f32.mrb[0].mxu0
  %v1777 = vadd.f32 0.0, %v1776
  %v1778 = vpop.f32.mrb[0].mxu0
  %1779 = vmatprep.mubr.f32.mxu0 0.0
  %1780 = vmatmul.mubr.f32.gmra.mrb[0].mxu0 %v774
  %v1781 = vpop.f32.mrb[0].mxu0
  %v1782 = vadd.f32 0.0, %v1781
  %v1783 = vpop.f32.mrb[0].mxu0
  %1784 = vmatprep.mubr.f32.mxu0 0.0
  %1785 = vmatmul.mubr.f32.gmra.mrb[0].mxu0 %v777
  %v1786 = vpop.f32.mrb[0].mxu0
  %v1787 = vadd.f32 0.0, %v1786
  %v1788 = vpop.f32.mrb[0].mxu0
  %1789 = vmatprep.mubr.f32.mxu0 0.0
  %1790 = vmatmul.mubr.f32.gmra.mrb[0].mxu0 %v780
  %v1791 = vpop.f32.mrb[0].mxu0
  %v1792 = vadd.f32 0.0, %v1791
  %v1793 = vpop.f32.mrb[0].mxu0
  %1794 = vmatprep.mubr.f32.mxu0 0.0
  %1795 = vmatmul.mubr.f32.gmra.mrb[0].mxu0 %v783
  %v1796 = vpop.f32.mrb[0].mxu0
  %v1797 = vadd.f32 0.0, %v1796
  %v1798 = vpop.f32.mrb[0].mxu0
  %1799 = vmatprep.mubr.f32.mxu0 0.0
  %1800 = vmatmul.mubr.f32.gmra.mrb[0].mxu0 %v786
  %v1801 = vpop.f32.mrb[0].mxu0
  %v1802 = vadd.f32 0.0, %v1801
  %v1803 = vpop.f32.mrb[0].mxu0
  %1804 = vmatprep.mubr.f32.mxu0 0.0
  %1805 = vmatmul.mubr.f32.gmra.mrb[0].mxu0 %v789
  %v1806 = vpop.f32.mrb[0].mxu0
  %v1807 = vadd.f32 0.0, %v1806
  %v1808 = vpop.f32.mrb[0].mxu0
  %1809 = vmatprep.mubr.f32.mxu0 0.0
  %1810 = vmatmul.mubr.f32.gmra.mrb[0].mxu0 %v792
  %v1811 = vpop.f32.mrb[0].mxu0
  %v1812 = vadd.f32 0.0, %v1811
  %v1813 = vpop.f32.mrb[0].mxu0
  %1814 = vmatprep.mubr.f32.mxu0 0.0
  %1815 = vmatmul.mubr.f32.gmra.mrb[0].mxu0 %v795
  %v1816 = vpop.f32.mrb[0].mxu0
  %v1817 = vadd.f32 0.0, %v1816
  %v1818 = vpop.f32.mrb[0].mxu0
  %1819 = vmatprep.mubr.f32.mxu0 0.0
  %1820 = vmatmul.mubr.f32.gmra.mrb[0].mxu0 %v798
  %v1821 = vpop.f32.mrb[0].mxu0
  %v1822 = vadd.f32 0.0, %v1821
  %v1823 = vpop.f32.mrb[0].mxu0
  %1824 = vmatprep.mubr.f32.mxu0 0.0
  %1825 = vmatmul.mubr.f32.gmra.mrb[0].mxu0 %v801
  %v1826 = vpop.f32.mrb[0].mxu0
  %v1827 = vadd.f32 0.0, %v1826
  %v1828 = vpop.f32.mrb[0].mxu0
  %1829 = vmatprep.mubr.f32.mxu0 0.0
  %1830 = vmatmul.mubr.f32.gmra.mrb[0].mxu0 %v804
  %v1831 = vpop.f32.mrb[0].mxu0
  %v1832 = vadd.f32 0.0, %v1831
  %v1833 = vpop.f32.mrb[0].mxu0
  %1834 = vmatprep.mubr.f32.mxu0 0.0
  %1835 = vmatmul.mubr.f32.gmra.mrb[0].mxu0 %v807
  %v1836 = vpop.f32.mrb[0].mxu0
  %v1837 = vadd.f32 0.0, %v1836
  %v1838 = vpop.f32.mrb[0].mxu0
  %1839 = vmatprep.mubr.f32.mxu0 0.0
  %1840 = vmatmul.mubr.f32.gmra.mrb[0].mxu0 %v810
  %v1841 = vpop.f32.mrb[0].mxu0
  %v1842 = vadd.f32 0.0, %v1841
  %v1843 = vpop.f32.mrb[0].mxu0
  %1844 = vmatprep.mubr.f32.mxu0 0.0
  %1845 = vmatmul.mubr.f32.gmra.mrb[0].mxu0 %v813
  %v1846 = vpop.f32.mrb[0].mxu0
  %v1847 = vadd.f32 0.0, %v1846
  %v1848 = vpop.f32.mrb[0].mxu0
  %1849 = vmatprep.mubr.f32.mxu0 0.0
  %1850 = vmatmul.mubr.f32.gmra.mrb[0].mxu0 %v816
  %v1851 = vpop.f32.mrb[0].mxu0
  %v1852 = vadd.f32 0.0, %v1851
  %v1853 = vpop.f32.mrb[0].mxu0
  %1854 = vmatprep.mubr.f32.mxu0 0.0
  %1855 = vmatmul.mubr.f32.gmra.mrb[0].mxu0 %v819
  %v1856 = vpop.f32.mrb[0].mxu0
  %v1857 = vadd.f32 0.0, %v1856
  %v1858 = vpop.f32.mrb[0].mxu0
  %1859 = vmatprep.mubr.f32.mxu0 0.0
  %1860 = vmatmul.mubr.f32.gmra.mrb[0].mxu0 %v822
  %v1861 = vpop.f32.mrb[0].mxu0
  %v1862 = vadd.f32 0.0, %v1861
  %v1863 = vpop.f32.mrb[0].mxu0
  %1864 = vmatprep.mubr.f32.mxu0 0.0
  %1865 = vmatmul.mubr.f32.gmra.mrb[0].mxu0 %v825
  %v1866 = vpop.f32.mrb[0].mxu0
  %v1867 = vadd.f32 0.0, %v1866
  %v1868 = vpop.f32.mrb[0].mxu0
  %1869 = vmatprep.mubr.f32.mxu0 0.0
  %1870 = vmatmul.mubr.f32.gmra.mrb[0].mxu0 %v828
  %v1871 = vpop.f32.mrb[0].mxu0
  %v1872 = vadd.f32 0.0, %v1871
  %v1873 = vpop.f32.mrb[0].mxu0
  %1874 = vdwg.mxu0
  %v1875 = vld [vmem:[%s6] sm:$0x1]
  %v1876 = vld [vmem:[%s7] sm:$0x1]
  %v1877 = vsel %vm241, %v897, 0.0
  %v1878 = vsel %vm241, %v902, 0.0
  %v1879 = vadd.f32 %v1877, %v1878
  %v1880 = vsel %vm241, %v907, 0.0
  %v1881 = vadd.f32 %v1879, %v1880
  %v1882 = vsel %vm241, %v912, 0.0
  %v1883 = vadd.f32 %v1881, %v1882
  %v1884 = vsel %vm241, %v917, 0.0
  %v1885 = vadd.f32 %v1883, %v1884
  %v1886 = vsel %vm241, %v922, 0.0
  %v1887 = vadd.f32 %v1885, %v1886
  %v1888 = vsel %vm241, %v927, 0.0
  %v1889 = vadd.f32 %v1887, %v1888
  %v1890 = vsel %vm241, %v932, 0.0
  %v1891 = vadd.f32 %v1889, %v1890
  %v1892 = vsel %vm241, %v937, 0.0
  %v1893 = vadd.f32 %v1891, %v1892
  %v1894 = vsel %vm241, %v942, 0.0
  %v1895 = vadd.f32 %v1893, %v1894
  %v1896 = vsel %vm241, %v947, 0.0
  %v1897 = vadd.f32 %v1895, %v1896
  %v1898 = vsel %vm241, %v952, 0.0
  %v1899 = vadd.f32 %v1897, %v1898
  %v1900 = vsel %vm241, %v957, 0.0
  %v1901 = vadd.f32 %v1899, %v1900
  %v1902 = vsel %vm241, %v962, 0.0
  %v1903 = vadd.f32 %v1901, %v1902
  %v1904 = vsel %vm241, %v967, 0.0
  %v1905 = vadd.f32 %v1903, %v1904
  %v1906 = vsel %vm241, %v972, 0.0
  %v1907 = vadd.f32 %v1905, %v1906
  %v1908 = vsel %vm241, %v977, 0.0
  %v1909 = vadd.f32 %v1907, %v1908
  %v1910 = vsel %vm241, %v982, 0.0
  %v1911 = vadd.f32 %v1909, %v1910
  %v1912 = vsel %vm241, %v987, 0.0
  %v1913 = vadd.f32 %v1911, %v1912
  %v1914 = vsel %vm241, %v992, 0.0
  %v1915 = vadd.f32 %v1913, %v1914
  %v1916 = vsel %vm241, %v997, 0.0
  %v1917 = vadd.f32 %v1915, %v1916
  %v1918 = vsel %vm241, %v1002, 0.0
  %v1919 = vadd.f32 %v1917, %v1918
  %v1920 = vsel %vm241, %v1007, 0.0
  %v1921 = vadd.f32 %v1919, %v1920
  %v1922 = vsel %vm241, %v1012, 0.0
  %v1923 = vadd.f32 %v1921, %v1922
  %v1924 = vsel %vm241, %v1017, 0.0
  %v1925 = vadd.f32 %v1923, %v1924
  %v1926 = vsel %vm241, %v1022, 0.0
  %v1927 = vadd.f32 %v1925, %v1926
  %v1928 = vsel %vm241, %v1027, 0.0
  %v1929 = vadd.f32 %v1927, %v1928
  %v1930 = vsel %vm241, %v1032, 0.0
  %v1931 = vadd.f32 %v1929, %v1930
  %v1932 = vsel %vm241, %v1037, 0.0
  %v1933 = vadd.f32 %v1931, %v1932
  %v1934 = vsel %vm241, %v1042, 0.0
  %v1935 = vadd.f32 %v1933, %v1934
  %v1936 = vsel %vm241, %v1047, 0.0
  %v1937 = vadd.f32 %v1935, %v1936
  %v1938 = vsel %vm241, %v1052, 0.0
  %v1939 = vadd.f32 %v1937, %v1938
  %v1940 = vsel %vm241, %v1057, 0.0
  %v1941 = vadd.f32 %v1939, %v1940
  %v1942 = vsel %vm241, %v1062, 0.0
  %v1943 = vadd.f32 %v1941, %v1942
  %v1944 = vsel %vm241, %v1067, 0.0
  %v1945 = vadd.f32 %v1943, %v1944
  %v1946 = vsel %vm241, %v1072, 0.0
  %v1947 = vadd.f32 %v1945, %v1946
  %v1948 = vsel %vm241, %v1077, 0.0
  %v1949 = vadd.f32 %v1947, %v1948
  %v1950 = vsel %vm241, %v1082, 0.0
  %v1951 = vadd.f32 %v1949, %v1950
  %v1952 = vsel %vm241, %v1087, 0.0
  %v1953 = vadd.f32 %v1951, %v1952
  %v1954 = vsel %vm241, %v1092, 0.0
  %v1955 = vadd.f32 %v1953, %v1954
  %v1956 = vsel %vm241, %v1097, 0.0
  %v1957 = vadd.f32 %v1955, %v1956
  %v1958 = vsel %vm241, %v1102, 0.0
  %v1959 = vadd.f32 %v1957, %v1958
  %v1960 = vsel %vm241, %v1107, 0.0
  %v1961 = vadd.f32 %v1959, %v1960
  %v1962 = vsel %vm241, %v1112, 0.0
  %v1963 = vadd.f32 %v1961, %v1962
  %v1964 = vsel %vm241, %v1117, 0.0
  %v1965 = vadd.f32 %v1963, %v1964
  %v1966 = vsel %vm241, %v1122, 0.0
  %v1967 = vadd.f32 %v1965, %v1966
  %v1968 = vsel %vm241, %v1127, 0.0
  %v1969 = vadd.f32 %v1967, %v1968
  %v1970 = vsel %vm241, %v1132, 0.0
  %v1971 = vadd.f32 %v1969, %v1970
  %v1972 = vsel %vm241, %v1137, 0.0
  %v1973 = vadd.f32 %v1971, %v1972
  %v1974 = vsel %vm241, %v1142, 0.0
  %v1975 = vadd.f32 %v1973, %v1974
  %v1976 = vsel %vm241, %v1147, 0.0
  %v1977 = vadd.f32 %v1975, %v1976
  %v1978 = vsel %vm241, %v1152, 0.0
  %v1979 = vadd.f32 %v1977, %v1978
  %v1980 = vsel %vm241, %v1157, 0.0
  %v1981 = vadd.f32 %v1979, %v1980
  %v1982 = vsel %vm241, %v1162, 0.0
  %v1983 = vadd.f32 %v1981, %v1982
  %v1984 = vsel %vm241, %v1167, 0.0
  %v1985 = vadd.f32 %v1983, %v1984
  %v1986 = vsel %vm241, %v1172, 0.0
  %v1987 = vadd.f32 %v1985, %v1986
  %v1988 = vsel %vm241, %v1177, 0.0
  %v1989 = vadd.f32 %v1987, %v1988
  %v1990 = vsel %vm241, %v1182, 0.0
  %v1991 = vadd.f32 %v1989, %v1990
  %v1992 = vsel %vm241, %v1187, 0.0
  %v1993 = vadd.f32 %v1991, %v1992
  %v1994 = vsel %vm241, %v1192, 0.0
  %v1995 = vadd.f32 %v1993, %v1994
  %v1996 = vsel %vm241, %v1197, 0.0
  %v1997 = vadd.f32 %v1995, %v1996
  %v1998 = vsel %vm241, %v1202, 0.0
  %v1999 = vadd.f32 %v1997, %v1998
  %v2000 = vsel %vm241, %v1207, 0.0
  %v2001 = vadd.f32 %v1999, %v2000
  %v2002 = vsel %vm241, %v1212, 0.0
  %v2003 = vadd.f32 %v2001, %v2002
  %v2004 = vsel %vm241, %v1217, 0.0
  %v2005 = vadd.f32 %v2003, %v2004
  %v2006 = vsel %vm241, %v1222, 0.0
  %v2007 = vadd.f32 %v2005, %v2006
  %v2008 = vsel %vm241, %v1227, 0.0
  %v2009 = vadd.f32 %v2007, %v2008
  %v2010 = vsel %vm241, %v1232, 0.0
  %v2011 = vadd.f32 %v2009, %v2010
  %v2012 = vsel %vm241, %v1237, 0.0
  %v2013 = vadd.f32 %v2011, %v2012
  %v2014 = vsel %vm241, %v1242, 0.0
  %v2015 = vadd.f32 %v2013, %v2014
  %v2016 = vsel %vm241, %v1247, 0.0
  %v2017 = vadd.f32 %v2015, %v2016
  %v2018 = vsel %vm241, %v1252, 0.0
  %v2019 = vadd.f32 %v2017, %v2018
  %v2020 = vsel %vm241, %v1257, 0.0
  %v2021 = vadd.f32 %v2019, %v2020
  %v2022 = vsel %vm241, %v1262, 0.0
  %v2023 = vadd.f32 %v2021, %v2022
  %v2024 = vsel %vm241, %v1267, 0.0
  %v2025 = vadd.f32 %v2023, %v2024
  %v2026 = vsel %vm241, %v1272, 0.0
  %v2027 = vadd.f32 %v2025, %v2026
  %v2028 = vsel %vm241, %v1277, 0.0
  %v2029 = vadd.f32 %v2027, %v2028
  %v2030 = vsel %vm241, %v1282, 0.0
  %v2031 = vadd.f32 %v2029, %v2030
  %v2032 = vsel %vm241, %v1287, 0.0
  %v2033 = vadd.f32 %v2031, %v2032
  %v2034 = vsel %vm241, %v1292, 0.0
  %v2035 = vadd.f32 %v2033, %v2034
  %v2036 = vsel %vm241, %v1297, 0.0
  %v2037 = vadd.f32 %v2035, %v2036
  %v2038 = vsel %vm241, %v1302, 0.0
  %v2039 = vadd.f32 %v2037, %v2038
  %v2040 = vsel %vm241, %v1307, 0.0
  %v2041 = vadd.f32 %v2039, %v2040
  %v2042 = vsel %vm241, %v1312, 0.0
  %v2043 = vadd.f32 %v2041, %v2042
  %v2044 = vsel %vm241, %v1317, 0.0
  %v2045 = vadd.f32 %v2043, %v2044
  %v2046 = vsel %vm241, %v1322, 0.0
  %v2047 = vadd.f32 %v2045, %v2046
  %v2048 = vsel %vm241, %v1327, 0.0
  %v2049 = vadd.f32 %v2047, %v2048
  %v2050 = vsel %vm241, %v1332, 0.0
  %v2051 = vadd.f32 %v2049, %v2050
  %v2052 = vsel %vm241, %v1337, 0.0
  %v2053 = vadd.f32 %v2051, %v2052
  %v2054 = vsel %vm241, %v1342, 0.0
  %v2055 = vadd.f32 %v2053, %v2054
  %v2056 = vsel %vm241, %v1347, 0.0
  %v2057 = vadd.f32 %v2055, %v2056
  %v2058 = vsel %vm241, %v1352, 0.0
  %v2059 = vadd.f32 %v2057, %v2058
  %v2060 = vsel %vm241, %v1357, 0.0
  %v2061 = vadd.f32 %v2059, %v2060
  %v2062 = vsel %vm241, %v1362, 0.0
  %v2063 = vadd.f32 %v2061, %v2062
  %v2064 = vsel %vm241, %v1367, 0.0
  %v2065 = vadd.f32 %v2063, %v2064
  %v2066 = vsel %vm241, %v1372, 0.0
  %v2067 = vadd.f32 %v2065, %v2066
  %v2068 = vsel %vm241, %v1377, 0.0
  %v2069 = vadd.f32 %v2067, %v2068
  %v2070 = vsel %vm241, %v1382, 0.0
  %v2071 = vadd.f32 %v2069, %v2070
  %v2072 = vsel %vm241, %v1387, 0.0
  %v2073 = vadd.f32 %v2071, %v2072
  %v2074 = vsel %vm241, %v1392, 0.0
  %v2075 = vadd.f32 %v2073, %v2074
  %v2076 = vsel %vm241, %v1397, 0.0
  %v2077 = vadd.f32 %v2075, %v2076
  %v2078 = vsel %vm241, %v1402, 0.0
  %v2079 = vadd.f32 %v2077, %v2078
  %v2080 = vsel %vm241, %v1407, 0.0
  %v2081 = vadd.f32 %v2079, %v2080
  %v2082 = vsel %vm241, %v1412, 0.0
  %v2083 = vadd.f32 %v2081, %v2082
  %v2084 = vsel %vm241, %v1417, 0.0
  %v2085 = vadd.f32 %v2083, %v2084
  %v2086 = vsel %vm241, %v1422, 0.0
  %v2087 = vadd.f32 %v2085, %v2086
  %v2088 = vsel %vm241, %v1427, 0.0
  %v2089 = vadd.f32 %v2087, %v2088
  %v2090 = vsel %vm241, %v1432, 0.0
  %v2091 = vadd.f32 %v2089, %v2090
  %v2092 = vsel %vm241, %v1437, 0.0
  %v2093 = vadd.f32 %v2091, %v2092
  %v2094 = vsel %vm241, %v1442, 0.0
  %v2095 = vadd.f32 %v2093, %v2094
  %v2096 = vsel %vm241, %v1447, 0.0
  %v2097 = vadd.f32 %v2095, %v2096
  %v2098 = vsel %vm241, %v1452, 0.0
  %v2099 = vadd.f32 %v2097, %v2098
  %v2100 = vsel %vm241, %v1457, 0.0
  %v2101 = vadd.f32 %v2099, %v2100
  %v2102 = vsel %vm241, %v1462, 0.0
  %v2103 = vadd.f32 %v2101, %v2102
  %v2104 = vsel %vm241, %v1467, 0.0
  %v2105 = vadd.f32 %v2103, %v2104
  %v2106 = vsel %vm241, %v1472, 0.0
  %v2107 = vadd.f32 %v2105, %v2106
  %v2108 = vsel %vm241, %v1477, 0.0
  %v2109 = vadd.f32 %v2107, %v2108
  %v2110 = vsel %vm241, %v1482, 0.0
  %v2111 = vadd.f32 %v2109, %v2110
  %v2112 = vsel %vm241, %v1487, 0.0
  %v2113 = vadd.f32 %v2111, %v2112
  %v2114 = vsel %vm241, %v1492, 0.0
  %v2115 = vadd.f32 %v2113, %v2114
  %v2116 = vsel %vm241, %v1497, 0.0
  %v2117 = vadd.f32 %v2115, %v2116
  %v2118 = vsel %vm241, %v1502, 0.0
  %v2119 = vadd.f32 %v2117, %v2118
  %v2120 = vsel %vm241, %v1507, 0.0
  %v2121 = vadd.f32 %v2119, %v2120
  %v2122 = vsel %vm241, %v1512, 0.0
  %v2123 = vadd.f32 %v2121, %v2122
  %v2124 = vsel %vm241, %v1517, 0.0
  %v2125 = vadd.f32 %v2123, %v2124
  %v2126 = vsel %vm241, %v1522, 0.0
  %v2127 = vadd.f32 %v2125, %v2126
  %v2128 = vsel %vm241, %v1527, 0.0
  %v2129 = vadd.f32 %v2127, %v2128
  %v2130 = vsel %vm241, %v1532, 0.0
  %v2131 = vadd.f32 %v2129, %v2130
  %v2132 = vsel %vm241, %v1537, 0.0
  %v2133 = vadd.f32 %v2131, %v2132
  %v2134 = vsel %vm241, %v1542, 0.0
  %v2135 = vadd.f32 %v2133, %v2134
  %v2136 = vsel %vm241, %v1547, 0.0
  %v2137 = vadd.f32 %v2135, %v2136
  %v2138 = vsel %vm241, %v1552, 0.0
  %v2139 = vadd.f32 %v2137, %v2138
  %v2140 = vsel %vm241, %v1557, 0.0
  %v2141 = vadd.f32 %v2139, %v2140
  %v2142 = vsel %vm241, %v1562, 0.0
  %v2143 = vadd.f32 %v2141, %v2142
  %v2144 = vsel %vm241, %v1567, 0.0
  %v2145 = vadd.f32 %v2143, %v2144
  %v2146 = vsel %vm241, %v1572, 0.0
  %v2147 = vadd.f32 %v2145, %v2146
  %v2148 = vsel %vm241, %v1577, 0.0
  %v2149 = vadd.f32 %v2147, %v2148
  %v2150 = vsel %vm241, %v1582, 0.0
  %v2151 = vadd.f32 %v2149, %v2150
  %v2152 = vsel %vm241, %v1587, 0.0
  %v2153 = vadd.f32 %v2151, %v2152
  %v2154 = vsel %vm241, %v1592, 0.0
  %v2155 = vadd.f32 %v2153, %v2154
  %v2156 = vsel %vm241, %v1597, 0.0
  %v2157 = vadd.f32 %v2155, %v2156
  %v2158 = vsel %vm241, %v1602, 0.0
  %v2159 = vadd.f32 %v2157, %v2158
  %v2160 = vsel %vm241, %v1607, 0.0
  %v2161 = vadd.f32 %v2159, %v2160
  %v2162 = vsel %vm241, %v1612, 0.0
  %v2163 = vadd.f32 %v2161, %v2162
  %v2164 = vsel %vm241, %v1617, 0.0
  %v2165 = vadd.f32 %v2163, %v2164
  %v2166 = vsel %vm241, %v1622, 0.0
  %v2167 = vadd.f32 %v2165, %v2166
  %v2168 = vsel %vm241, %v1627, 0.0
  %v2169 = vadd.f32 %v2167, %v2168
  %v2170 = vsel %vm241, %v1632, 0.0
  %v2171 = vadd.f32 %v2169, %v2170
  %v2172 = vsel %vm241, %v1637, 0.0
  %v2173 = vadd.f32 %v2171, %v2172
  %v2174 = vsel %vm241, %v1642, 0.0
  %v2175 = vadd.f32 %v2173, %v2174
  %v2176 = vsel %vm241, %v1647, 0.0
  %v2177 = vadd.f32 %v2175, %v2176
  %v2178 = vsel %vm241, %v1652, 0.0
  %v2179 = vadd.f32 %v2177, %v2178
  %v2180 = vsel %vm241, %v1657, 0.0
  %v2181 = vadd.f32 %v2179, %v2180
  %v2182 = vsel %vm241, %v1662, 0.0
  %v2183 = vadd.f32 %v2181, %v2182
  %v2184 = vsel %vm241, %v1667, 0.0
  %v2185 = vadd.f32 %v2183, %v2184
  %v2186 = vsel %vm241, %v1672, 0.0
  %v2187 = vadd.f32 %v2185, %v2186
  %v2188 = vsel %vm241, %v1677, 0.0
  %v2189 = vadd.f32 %v2187, %v2188
  %v2190 = vsel %vm241, %v1682, 0.0
  %v2191 = vadd.f32 %v2189, %v2190
  %v2192 = vsel %vm241, %v1687, 0.0
  %v2193 = vadd.f32 %v2191, %v2192
  %v2194 = vsel %vm241, %v1692, 0.0
  %v2195 = vadd.f32 %v2193, %v2194
  %v2196 = vsel %vm241, %v1697, 0.0
  %v2197 = vadd.f32 %v2195, %v2196
  %v2198 = vsel %vm241, %v1702, 0.0
  %v2199 = vadd.f32 %v2197, %v2198
  %v2200 = vsel %vm241, %v1707, 0.0
  %v2201 = vadd.f32 %v2199, %v2200
  %v2202 = vsel %vm241, %v1712, 0.0
  %v2203 = vadd.f32 %v2201, %v2202
  %v2204 = vsel %vm241, %v1717, 0.0
  %v2205 = vadd.f32 %v2203, %v2204
  %v2206 = vsel %vm241, %v1722, 0.0
  %v2207 = vadd.f32 %v2205, %v2206
  %v2208 = vsel %vm241, %v1727, 0.0
  %v2209 = vadd.f32 %v2207, %v2208
  %v2210 = vsel %vm241, %v1732, 0.0
  %v2211 = vadd.f32 %v2209, %v2210
  %v2212 = vsel %vm241, %v1737, 0.0
  %v2213 = vadd.f32 %v2211, %v2212
  %v2214 = vsel %vm241, %v1742, 0.0
  %v2215 = vadd.f32 %v2213, %v2214
  %v2216 = vsel %vm241, %v1747, 0.0
  %v2217 = vadd.f32 %v2215, %v2216
  %v2218 = vsel %vm241, %v1752, 0.0
  %v2219 = vadd.f32 %v2217, %v2218
  %v2220 = vsel %vm241, %v1757, 0.0
  %v2221 = vadd.f32 %v2219, %v2220
  %v2222 = vsel %vm241, %v1762, 0.0
  %v2223 = vadd.f32 %v2221, %v2222
  %v2224 = vsel %vm241, %v1767, 0.0
  %v2225 = vadd.f32 %v2223, %v2224
  %v2226 = vsel %vm241, %v1772, 0.0
  %v2227 = vadd.f32 %v2225, %v2226
  %v2228 = vsel %vm241, %v1777, 0.0
  %v2229 = vadd.f32 %v2227, %v2228
  %v2230 = vsel %vm241, %v1782, 0.0
  %v2231 = vadd.f32 %v2229, %v2230
  %v2232 = vsel %vm241, %v1787, 0.0
  %v2233 = vadd.f32 %v2231, %v2232
  %v2234 = vsel %vm241, %v1792, 0.0
  %v2235 = vadd.f32 %v2233, %v2234
  %v2236 = vsel %vm241, %v1797, 0.0
  %v2237 = vadd.f32 %v2235, %v2236
  %v2238 = vsel %vm241, %v1802, 0.0
  %v2239 = vadd.f32 %v2237, %v2238
  %v2240 = vsel %vm241, %v1807, 0.0
  %v2241 = vadd.f32 %v2239, %v2240
  %v2242 = vsel %vm241, %v1812, 0.0
  %v2243 = vadd.f32 %v2241, %v2242
  %v2244 = vsel %vm241, %v1817, 0.0
  %v2245 = vadd.f32 %v2243, %v2244
  %v2246 = vsel %vm241, %v1822, 0.0
  %v2247 = vadd.f32 %v2245, %v2246
  %v2248 = vsel %vm241, %v1827, 0.0
  %v2249 = vadd.f32 %v2247, %v2248
  %v2250 = vsel %vm241, %v1832, 0.0
  %v2251 = vadd.f32 %v2249, %v2250
  %v2252 = vsel %vm241, %v1837, 0.0
  %v2253 = vadd.f32 %v2251, %v2252
  %v2254 = vsel %vm241, %v1842, 0.0
  %v2255 = vadd.f32 %v2253, %v2254
  %v2256 = vsel %vm241, %v1847, 0.0
  %v2257 = vadd.f32 %v2255, %v2256
  %v2258 = vsel %vm241, %v1852, 0.0
  %v2259 = vadd.f32 %v2257, %v2258
  %v2260 = vsel %vm241, %v1857, 0.0
  %v2261 = vadd.f32 %v2259, %v2260
  %v2262 = vsel %vm241, %v1862, 0.0
  %v2263 = vadd.f32 %v2261, %v2262
  %v2264 = vsel %vm241, %v1867, 0.0
  %v2265 = vadd.f32 %v2263, %v2264
  %v2266 = vsel %vm241, %v1872, 0.0
  %v2267 = vadd.f32 %v2265, %v2266
  %v2268 = vrot.slane %v2267, 4
  %v2269 = vadd.f32 %v2267, %v2268
  %v2270 = vrot.slane %v2269, 2
  %v2271 = vadd.f32 %v2269, %v2270
  %v2272 = vrot.slane %v2271, 1
  %v2273 = vadd.f32 %v2271, %v2272
  %v2274 = vmul.f32 %v2273, 0.000739645
  %v2275 = vsub.f32 %v897, %v2274
  %v2276 = vsub.f32 %v902, %v2274
  %v2277 = vsub.f32 %v907, %v2274
  %v2278 = vsub.f32 %v912, %v2274
  %v2279 = vsub.f32 %v917, %v2274
  %v2280 = vsub.f32 %v922, %v2274
  %v2281 = vsub.f32 %v927, %v2274
  %v2282 = vsub.f32 %v932, %v2274
  %v2283 = vsub.f32 %v937, %v2274
  %v2284 = vsub.f32 %v942, %v2274
  %v2285 = vsub.f32 %v947, %v2274
  %v2286 = vsub.f32 %v952, %v2274
  %v2287 = vsub.f32 %v957, %v2274
  %v2288 = vsub.f32 %v962, %v2274
  %v2289 = vsub.f32 %v967, %v2274
  %v2290 = vsub.f32 %v972, %v2274
  %v2291 = vsub.f32 %v977, %v2274
  %v2292 = vsub.f32 %v982, %v2274
  %v2293 = vsub.f32 %v987, %v2274
  %v2294 = vsub.f32 %v992, %v2274
  %v2295 = vsub.f32 %v997, %v2274
  %v2296 = vsub.f32 %v1002, %v2274
  %v2297 = vsub.f32 %v1007, %v2274
  %v2298 = vsub.f32 %v1012, %v2274
  %v2299 = vsub.f32 %v1017, %v2274
  %v2300 = vsub.f32 %v1022, %v2274
  %v2301 = vsub.f32 %v1027, %v2274
  %v2302 = vsub.f32 %v1032, %v2274
  %v2303 = vsub.f32 %v1037, %v2274
  %v2304 = vsub.f32 %v1042, %v2274
  %v2305 = vsub.f32 %v1047, %v2274
  %v2306 = vsub.f32 %v1052, %v2274
  %v2307 = vsub.f32 %v1057, %v2274
  %v2308 = vsub.f32 %v1062, %v2274
  %v2309 = vsub.f32 %v1067, %v2274
  %v2310 = vsub.f32 %v1072, %v2274
  %v2311 = vsub.f32 %v1077, %v2274
  %v2312 = vsub.f32 %v1082, %v2274
  %v2313 = vsub.f32 %v1087, %v2274
  %v2314 = vsub.f32 %v1092, %v2274
  %v2315 = vsub.f32 %v1097, %v2274
  %v2316 = vsub.f32 %v1102, %v2274
  %v2317 = vsub.f32 %v1107, %v2274
  %v2318 = vsub.f32 %v1112, %v2274
  %v2319 = vsub.f32 %v1117, %v2274
  %v2320 = vsub.f32 %v1122, %v2274
  %v2321 = vsub.f32 %v1127, %v2274
  %v2322 = vsub.f32 %v1132, %v2274
  %v2323 = vsub.f32 %v1137, %v2274
  %v2324 = vsub.f32 %v1142, %v2274
  %v2325 = vsub.f32 %v1147, %v2274
  %v2326 = vsub.f32 %v1152, %v2274
  %v2327 = vsub.f32 %v1157, %v2274
  %v2328 = vsub.f32 %v1162, %v2274
  %v2329 = vsub.f32 %v1167, %v2274
  %v2330 = vsub.f32 %v1172, %v2274
  %v2331 = vsub.f32 %v1177, %v2274
  %v2332 = vsub.f32 %v1182, %v2274
  %v2333 = vsub.f32 %v1187, %v2274
  %v2334 = vsub.f32 %v1192, %v2274
  %v2335 = vsub.f32 %v1197, %v2274
  %v2336 = vsub.f32 %v1202, %v2274
  %v2337 = vsub.f32 %v1207, %v2274
  %v2338 = vsub.f32 %v1212, %v2274
  %v2339 = vsub.f32 %v1217, %v2274
  %v2340 = vsub.f32 %v1222, %v2274
  %v2341 = vsub.f32 %v1227, %v2274
  %v2342 = vsub.f32 %v1232, %v2274
  %v2343 = vsub.f32 %v1237, %v2274
  %v2344 = vsub.f32 %v1242, %v2274
  %v2345 = vsub.f32 %v1247, %v2274
  %v2346 = vsub.f32 %v1252, %v2274
  %v2347 = vsub.f32 %v1257, %v2274
  %v2348 = vsub.f32 %v1262, %v2274
  %v2349 = vsub.f32 %v1267, %v2274
  %v2350 = vsub.f32 %v1272, %v2274
  %v2351 = vsub.f32 %v1277, %v2274
  %v2352 = vsub.f32 %v1282, %v2274
  %v2353 = vsub.f32 %v1287, %v2274
  %v2354 = vsub.f32 %v1292, %v2274
  %v2355 = vsub.f32 %v1297, %v2274
  %v2356 = vsub.f32 %v1302, %v2274
  %v2357 = vsub.f32 %v1307, %v2274
  %v2358 = vsub.f32 %v1312, %v2274
  %v2359 = vsub.f32 %v1317, %v2274
  %v2360 = vsub.f32 %v1322, %v2274
  %v2361 = vsub.f32 %v1327, %v2274
  %v2362 = vsub.f32 %v1332, %v2274
  %v2363 = vsub.f32 %v1337, %v2274
  %v2364 = vsub.f32 %v1342, %v2274
  %v2365 = vsub.f32 %v1347, %v2274
  %v2366 = vsub.f32 %v1352, %v2274
  %v2367 = vsub.f32 %v1357, %v2274
  %v2368 = vsub.f32 %v1362, %v2274
  %v2369 = vsub.f32 %v1367, %v2274
  %v2370 = vsub.f32 %v1372, %v2274
  %v2371 = vsub.f32 %v1377, %v2274
  %v2372 = vsub.f32 %v1382, %v2274
  %v2373 = vsub.f32 %v1387, %v2274
  %v2374 = vsub.f32 %v1392, %v2274
  %v2375 = vsub.f32 %v1397, %v2274
  %v2376 = vsub.f32 %v1402, %v2274
  %v2377 = vsub.f32 %v1407, %v2274
  %v2378 = vsub.f32 %v1412, %v2274
  %v2379 = vsub.f32 %v1417, %v2274
  %v2380 = vsub.f32 %v1422, %v2274
  %v2381 = vsub.f32 %v1427, %v2274
  %v2382 = vsub.f32 %v1432, %v2274
  %v2383 = vsub.f32 %v1437, %v2274
  %v2384 = vsub.f32 %v1442, %v2274
  %v2385 = vsub.f32 %v1447, %v2274
  %v2386 = vsub.f32 %v1452, %v2274
  %v2387 = vsub.f32 %v1457, %v2274
  %v2388 = vsub.f32 %v1462, %v2274
  %v2389 = vsub.f32 %v1467, %v2274
  %v2390 = vsub.f32 %v1472, %v2274
  %v2391 = vsub.f32 %v1477, %v2274
  %v2392 = vsub.f32 %v1482, %v2274
  %v2393 = vsub.f32 %v1487, %v2274
  %v2394 = vsub.f32 %v1492, %v2274
  %v2395 = vsub.f32 %v1497, %v2274
  %v2396 = vsub.f32 %v1502, %v2274
  %v2397 = vsub.f32 %v1507, %v2274
  %v2398 = vsub.f32 %v1512, %v2274
  %v2399 = vsub.f32 %v1517, %v2274
  %v2400 = vsub.f32 %v1522, %v2274
  %v2401 = vsub.f32 %v1527, %v2274
  %v2402 = vsub.f32 %v1532, %v2274
  %v2403 = vsub.f32 %v1537, %v2274
  %v2404 = vsub.f32 %v1542, %v2274
  %v2405 = vsub.f32 %v1547, %v2274
  %v2406 = vsub.f32 %v1552, %v2274
  %v2407 = vsub.f32 %v1557, %v2274
  %v2408 = vsub.f32 %v1562, %v2274
  %v2409 = vsub.f32 %v1567, %v2274
  %v2410 = vsub.f32 %v1572, %v2274
  %v2411 = vsub.f32 %v1577, %v2274
  %v2412 = vsub.f32 %v1582, %v2274
  %v2413 = vsub.f32 %v1587, %v2274
  %v2414 = vsub.f32 %v1592, %v2274
  %v2415 = vsub.f32 %v1597, %v2274
  %v2416 = vsub.f32 %v1602, %v2274
  %v2417 = vsub.f32 %v1607, %v2274
  %v2418 = vsub.f32 %v1612, %v2274
  %v2419 = vsub.f32 %v1617, %v2274
  %v2420 = vsub.f32 %v1622, %v2274
  %v2421 = vsub.f32 %v1627, %v2274
  %v2422 = vsub.f32 %v1632, %v2274
  %v2423 = vsub.f32 %v1637, %v2274
  %v2424 = vsub.f32 %v1642, %v2274
  %v2425 = vsub.f32 %v1647, %v2274
  %v2426 = vsub.f32 %v1652, %v2274
  %v2427 = vsub.f32 %v1657, %v2274
  %v2428 = vsub.f32 %v1662, %v2274
  %v2429 = vsub.f32 %v1667, %v2274
  %v2430 = vsub.f32 %v1672, %v2274
  %v2431 = vsub.f32 %v1677, %v2274
  %v2432 = vsub.f32 %v1682, %v2274
  %v2433 = vsub.f32 %v1687, %v2274
  %v2434 = vsub.f32 %v1692, %v2274
  %v2435 = vsub.f32 %v1697, %v2274
  %v2436 = vsub.f32 %v1702, %v2274
  %v2437 = vsub.f32 %v1707, %v2274
  %v2438 = vsub.f32 %v1712, %v2274
  %v2439 = vsub.f32 %v1717, %v2274
  %v2440 = vsub.f32 %v1722, %v2274
  %v2441 = vsub.f32 %v1727, %v2274
  %v2442 = vsub.f32 %v1732, %v2274
  %v2443 = vsub.f32 %v1737, %v2274
  %v2444 = vsub.f32 %v1742, %v2274
  %v2445 = vsub.f32 %v1747, %v2274
  %v2446 = vsub.f32 %v1752, %v2274
  %v2447 = vsub.f32 %v1757, %v2274
  %v2448 = vsub.f32 %v1762, %v2274
  %v2449 = vsub.f32 %v1767, %v2274
  %v2450 = vsub.f32 %v1772, %v2274
  %v2451 = vsub.f32 %v1777, %v2274
  %v2452 = vsub.f32 %v1782, %v2274
  %v2453 = vsub.f32 %v1787, %v2274
  %v2454 = vsub.f32 %v1792, %v2274
  %v2455 = vsub.f32 %v1797, %v2274
  %v2456 = vsub.f32 %v1802, %v2274
  %v2457 = vsub.f32 %v1807, %v2274
  %v2458 = vsub.f32 %v1812, %v2274
  %v2459 = vsub.f32 %v1817, %v2274
  %v2460 = vsub.f32 %v1822, %v2274
  %v2461 = vsub.f32 %v1827, %v2274
  %v2462 = vsub.f32 %v1832, %v2274
  %v2463 = vsub.f32 %v1837, %v2274
  %v2464 = vsub.f32 %v1842, %v2274
  %v2465 = vsub.f32 %v1847, %v2274
  %v2466 = vsub.f32 %v1852, %v2274
  %v2467 = vsub.f32 %v1857, %v2274
  %v2468 = vsub.f32 %v1862, %v2274
  %v2469 = vsub.f32 %v1867, %v2274
  %v2470 = vsub.f32 %v1872, %v2274
  %v2471 = vmul.f32 %v2275, %v2275
  %v2472 = vmul.f32 %v2276, %v2276
  %v2473 = vmul.f32 %v2277, %v2277
  %v2474 = vmul.f32 %v2278, %v2278
  %v2475 = vmul.f32 %v2279, %v2279
  %v2476 = vmul.f32 %v2280, %v2280
  %v2477 = vmul.f32 %v2281, %v2281
  %v2478 = vmul.f32 %v2282, %v2282
  %v2479 = vmul.f32 %v2283, %v2283
  %v2480 = vmul.f32 %v2284, %v2284
  %v2481 = vmul.f32 %v2285, %v2285
  %v2482 = vmul.f32 %v2286, %v2286
  %v2483 = vmul.f32 %v2287, %v2287
  %v2484 = vmul.f32 %v2288, %v2288
  %v2485 = vmul.f32 %v2289, %v2289
  %v2486 = vmul.f32 %v2290, %v2290
  %v2487 = vmul.f32 %v2291, %v2291
  %v2488 = vmul.f32 %v2292, %v2292
  %v2489 = vmul.f32 %v2293, %v2293
  %v2490 = vmul.f32 %v2294, %v2294
  %v2491 = vmul.f32 %v2295, %v2295
  %v2492 = vmul.f32 %v2296, %v2296
  %v2493 = vmul.f32 %v2297, %v2297
  %v2494 = vmul.f32 %v2298, %v2298
  %v2495 = vmul.f32 %v2299, %v2299
  %v2496 = vmul.f32 %v2300, %v2300
  %v2497 = vmul.f32 %v2301, %v2301
  %v2498 = vmul.f32 %v2302, %v2302
  %v2499 = vmul.f32 %v2303, %v2303
  %v2500 = vmul.f32 %v2304, %v2304
  %v2501 = vmul.f32 %v2305, %v2305
  %v2502 = vmul.f32 %v2306, %v2306
  %v2503 = vmul.f32 %v2307, %v2307
  %v2504 = vmul.f32 %v2308, %v2308
  %v2505 = vmul.f32 %v2309, %v2309
  %v2506 = vmul.f32 %v2310, %v2310
  %v2507 = vmul.f32 %v2311, %v2311
  %v2508 = vmul.f32 %v2312, %v2312
  %v2509 = vmul.f32 %v2313, %v2313
  %v2510 = vmul.f32 %v2314, %v2314
  %v2511 = vmul.f32 %v2315, %v2315
  %v2512 = vmul.f32 %v2316, %v2316
  %v2513 = vmul.f32 %v2317, %v2317
  %v2514 = vmul.f32 %v2318, %v2318
  %v2515 = vmul.f32 %v2319, %v2319
  %v2516 = vmul.f32 %v2320, %v2320
  %v2517 = vmul.f32 %v2321, %v2321
  %v2518 = vmul.f32 %v2322, %v2322
  %v2519 = vmul.f32 %v2323, %v2323
  %v2520 = vmul.f32 %v2324, %v2324
  %v2521 = vmul.f32 %v2325, %v2325
  %v2522 = vmul.f32 %v2326, %v2326
  %v2523 = vmul.f32 %v2327, %v2327
  %v2524 = vmul.f32 %v2328, %v2328
  %v2525 = vmul.f32 %v2329, %v2329
  %v2526 = vmul.f32 %v2330, %v2330
  %v2527 = vmul.f32 %v2331, %v2331
  %v2528 = vmul.f32 %v2332, %v2332
  %v2529 = vmul.f32 %v2333, %v2333
  %v2530 = vmul.f32 %v2334, %v2334
  %v2531 = vmul.f32 %v2335, %v2335
  %v2532 = vmul.f32 %v2336, %v2336
  %v2533 = vmul.f32 %v2337, %v2337
  %v2534 = vmul.f32 %v2338, %v2338
  %v2535 = vmul.f32 %v2339, %v2339
  %v2536 = vmul.f32 %v2340, %v2340
  %v2537 = vmul.f32 %v2341, %v2341
  %v2538 = vmul.f32 %v2342, %v2342
  %v2539 = vmul.f32 %v2343, %v2343
  %v2540 = vmul.f32 %v2344, %v2344
  %v2541 = vmul.f32 %v2345, %v2345
  %v2542 = vmul.f32 %v2346, %v2346
  %v2543 = vmul.f32 %v2347, %v2347
  %v2544 = vmul.f32 %v2348, %v2348
  %v2545 = vmul.f32 %v2349, %v2349
  %v2546 = vmul.f32 %v2350, %v2350
  %v2547 = vmul.f32 %v2351, %v2351
  %v2548 = vmul.f32 %v2352, %v2352
  %v2549 = vmul.f32 %v2353, %v2353
  %v2550 = vmul.f32 %v2354, %v2354
  %v2551 = vmul.f32 %v2355, %v2355
  %v2552 = vmul.f32 %v2356, %v2356
  %v2553 = vmul.f32 %v2357, %v2357
  %v2554 = vmul.f32 %v2358, %v2358
  %v2555 = vmul.f32 %v2359, %v2359
  %v2556 = vmul.f32 %v2360, %v2360
  %v2557 = vmul.f32 %v2361, %v2361
  %v2558 = vmul.f32 %v2362, %v2362
  %v2559 = vmul.f32 %v2363, %v2363
  %v2560 = vmul.f32 %v2364, %v2364
  %v2561 = vmul.f32 %v2365, %v2365
  %v2562 = vmul.f32 %v2366, %v2366
  %v2563 = vmul.f32 %v2367, %v2367
  %v2564 = vmul.f32 %v2368, %v2368
  %v2565 = vmul.f32 %v2369, %v2369
  %v2566 = vmul.f32 %v2370, %v2370
  %v2567 = vmul.f32 %v2371, %v2371
  %v2568 = vmul.f32 %v2372, %v2372
  %v2569 = vmul.f32 %v2373, %v2373
  %v2570 = vmul.f32 %v2374, %v2374
  %v2571 = vmul.f32 %v2375, %v2375
  %v2572 = vmul.f32 %v2376, %v2376
  %v2573 = vmul.f32 %v2377, %v2377
  %v2574 = vmul.f32 %v2378, %v2378
  %v2575 = vmul.f32 %v2379, %v2379
  %v2576 = vmul.f32 %v2380, %v2380
  %v2577 = vmul.f32 %v2381, %v2381
  %v2578 = vmul.f32 %v2382, %v2382
  %v2579 = vmul.f32 %v2383, %v2383
  %v2580 = vmul.f32 %v2384, %v2384
  %v2581 = vmul.f32 %v2385, %v2385
  %v2582 = vmul.f32 %v2386, %v2386
  %v2583 = vmul.f32 %v2387, %v2387
  %v2584 = vmul.f32 %v2388, %v2388
  %v2585 = vmul.f32 %v2389, %v2389
  %v2586 = vmul.f32 %v2390, %v2390
  %v2587 = vmul.f32 %v2391, %v2391
  %v2588 = vmul.f32 %v2392, %v2392
  %v2589 = vmul.f32 %v2393, %v2393
  %v2590 = vmul.f32 %v2394, %v2394
  %v2591 = vmul.f32 %v2395, %v2395
  %v2592 = vmul.f32 %v2396, %v2396
  %v2593 = vmul.f32 %v2397, %v2397
  %v2594 = vmul.f32 %v2398, %v2398
  %v2595 = vmul.f32 %v2399, %v2399
  %v2596 = vmul.f32 %v2400, %v2400
  %v2597 = vmul.f32 %v2401, %v2401
  %v2598 = vmul.f32 %v2402, %v2402
  %v2599 = vmul.f32 %v2403, %v2403
  %v2600 = vmul.f32 %v2404, %v2404
  %v2601 = vmul.f32 %v2405, %v2405
  %v2602 = vmul.f32 %v2406, %v2406
  %v2603 = vmul.f32 %v2407, %v2407
  %v2604 = vmul.f32 %v2408, %v2408
  %v2605 = vmul.f32 %v2409, %v2409
  %v2606 = vmul.f32 %v2410, %v2410
  %v2607 = vmul.f32 %v2411, %v2411
  %v2608 = vmul.f32 %v2412, %v2412
  %v2609 = vmul.f32 %v2413, %v2413
  %v2610 = vmul.f32 %v2414, %v2414
  %v2611 = vmul.f32 %v2415, %v2415
  %v2612 = vmul.f32 %v2416, %v2416
  %v2613 = vmul.f32 %v2417, %v2417
  %v2614 = vmul.f32 %v2418, %v2418
  %v2615 = vmul.f32 %v2419, %v2419
  %v2616 = vmul.f32 %v2420, %v2420
  %v2617 = vmul.f32 %v2421, %v2421
  %v2618 = vmul.f32 %v2422, %v2422
  %v2619 = vmul.f32 %v2423, %v2423
  %v2620 = vmul.f32 %v2424, %v2424
  %v2621 = vmul.f32 %v2425, %v2425
  %v2622 = vmul.f32 %v2426, %v2426
  %v2623 = vmul.f32 %v2427, %v2427
  %v2624 = vmul.f32 %v2428, %v2428
  %v2625 = vmul.f32 %v2429, %v2429
  %v2626 = vmul.f32 %v2430, %v2430
  %v2627 = vmul.f32 %v2431, %v2431
  %v2628 = vmul.f32 %v2432, %v2432
  %v2629 = vmul.f32 %v2433, %v2433
  %v2630 = vmul.f32 %v2434, %v2434
  %v2631 = vmul.f32 %v2435, %v2435
  %v2632 = vmul.f32 %v2436, %v2436
  %v2633 = vmul.f32 %v2437, %v2437
  %v2634 = vmul.f32 %v2438, %v2438
  %v2635 = vmul.f32 %v2439, %v2439
  %v2636 = vmul.f32 %v2440, %v2440
  %v2637 = vmul.f32 %v2441, %v2441
  %v2638 = vmul.f32 %v2442, %v2442
  %v2639 = vmul.f32 %v2443, %v2443
  %v2640 = vmul.f32 %v2444, %v2444
  %v2641 = vmul.f32 %v2445, %v2445
  %v2642 = vmul.f32 %v2446, %v2446
  %v2643 = vmul.f32 %v2447, %v2447
  %v2644 = vmul.f32 %v2448, %v2448
  %v2645 = vmul.f32 %v2449, %v2449
  %v2646 = vmul.f32 %v2450, %v2450
  %v2647 = vmul.f32 %v2451, %v2451
  %v2648 = vmul.f32 %v2452, %v2452
  %v2649 = vmul.f32 %v2453, %v2453
  %v2650 = vmul.f32 %v2454, %v2454
  %v2651 = vmul.f32 %v2455, %v2455
  %v2652 = vmul.f32 %v2456, %v2456
  %v2653 = vmul.f32 %v2457, %v2457
  %v2654 = vmul.f32 %v2458, %v2458
  %v2655 = vmul.f32 %v2459, %v2459
  %v2656 = vmul.f32 %v2460, %v2460
  %v2657 = vmul.f32 %v2461, %v2461
  %v2658 = vmul.f32 %v2462, %v2462
  %v2659 = vmul.f32 %v2463, %v2463
  %v2660 = vmul.f32 %v2464, %v2464
  %v2661 = vmul.f32 %v2465, %v2465
  %v2662 = vmul.f32 %v2466, %v2466
  %v2663 = vmul.f32 %v2467, %v2467
  %v2664 = vmul.f32 %v2468, %v2468
  %v2665 = vmul.f32 %v2469, %v2469
  %v2666 = vmul.f32 %v2470, %v2470
  %v2667 = vsel %vm241, %v2471, 0.0
  %v2668 = vsel %vm241, %v2472, 0.0
  %v2669 = vadd.f32 %v2667, %v2668
  %v2670 = vsel %vm241, %v2473, 0.0
  %v2671 = vadd.f32 %v2669, %v2670
  %v2672 = vsel %vm241, %v2474, 0.0
  %v2673 = vadd.f32 %v2671, %v2672
  %v2674 = vsel %vm241, %v2475, 0.0
  %v2675 = vadd.f32 %v2673, %v2674
  %v2676 = vsel %vm241, %v2476, 0.0
  %v2677 = vadd.f32 %v2675, %v2676
  %v2678 = vsel %vm241, %v2477, 0.0
  %v2679 = vadd.f32 %v2677, %v2678
  %v2680 = vsel %vm241, %v2478, 0.0
  %v2681 = vadd.f32 %v2679, %v2680
  %v2682 = vsel %vm241, %v2479, 0.0
  %v2683 = vadd.f32 %v2681, %v2682
  %v2684 = vsel %vm241, %v2480, 0.0
  %v2685 = vadd.f32 %v2683, %v2684
  %v2686 = vsel %vm241, %v2481, 0.0
  %v2687 = vadd.f32 %v2685, %v2686
  %v2688 = vsel %vm241, %v2482, 0.0
  %v2689 = vadd.f32 %v2687, %v2688
  %v2690 = vsel %vm241, %v2483, 0.0
  %v2691 = vadd.f32 %v2689, %v2690
  %v2692 = vsel %vm241, %v2484, 0.0
  %v2693 = vadd.f32 %v2691, %v2692
  %v2694 = vsel %vm241, %v2485, 0.0
  %v2695 = vadd.f32 %v2693, %v2694
  %v2696 = vsel %vm241, %v2486, 0.0
  %v2697 = vadd.f32 %v2695, %v2696
  %v2698 = vsel %vm241, %v2487, 0.0
  %v2699 = vadd.f32 %v2697, %v2698
  %v2700 = vsel %vm241, %v2488, 0.0
  %v2701 = vadd.f32 %v2699, %v2700
  %v2702 = vsel %vm241, %v2489, 0.0
  %v2703 = vadd.f32 %v2701, %v2702
  %v2704 = vsel %vm241, %v2490, 0.0
  %v2705 = vadd.f32 %v2703, %v2704
  %v2706 = vsel %vm241, %v2491, 0.0
  %v2707 = vadd.f32 %v2705, %v2706
  %v2708 = vsel %vm241, %v2492, 0.0
  %v2709 = vadd.f32 %v2707, %v2708
  %v2710 = vsel %vm241, %v2493, 0.0
  %v2711 = vadd.f32 %v2709, %v2710
  %v2712 = vsel %vm241, %v2494, 0.0
  %v2713 = vadd.f32 %v2711, %v2712
  %v2714 = vsel %vm241, %v2495, 0.0
  %v2715 = vadd.f32 %v2713, %v2714
  %v2716 = vsel %vm241, %v2496, 0.0
  %v2717 = vadd.f32 %v2715, %v2716
  %v2718 = vsel %vm241, %v2497, 0.0
  %v2719 = vadd.f32 %v2717, %v2718
  %v2720 = vsel %vm241, %v2498, 0.0
  %v2721 = vadd.f32 %v2719, %v2720
  %v2722 = vsel %vm241, %v2499, 0.0
  %v2723 = vadd.f32 %v2721, %v2722
  %v2724 = vsel %vm241, %v2500, 0.0
  %v2725 = vadd.f32 %v2723, %v2724
  %v2726 = vsel %vm241, %v2501, 0.0
  %v2727 = vadd.f32 %v2725, %v2726
  %v2728 = vsel %vm241, %v2502, 0.0
  %v2729 = vadd.f32 %v2727, %v2728
  %v2730 = vsel %vm241, %v2503, 0.0
  %v2731 = vadd.f32 %v2729, %v2730
  %v2732 = vsel %vm241, %v2504, 0.0
  %v2733 = vadd.f32 %v2731, %v2732
  %v2734 = vsel %vm241, %v2505, 0.0
  %v2735 = vadd.f32 %v2733, %v2734
  %v2736 = vsel %vm241, %v2506, 0.0
  %v2737 = vadd.f32 %v2735, %v2736
  %v2738 = vsel %vm241, %v2507, 0.0
  %v2739 = vadd.f32 %v2737, %v2738
  %v2740 = vsel %vm241, %v2508, 0.0
  %v2741 = vadd.f32 %v2739, %v2740
  %v2742 = vsel %vm241, %v2509, 0.0
  %v2743 = vadd.f32 %v2741, %v2742
  %v2744 = vsel %vm241, %v2510, 0.0
  %v2745 = vadd.f32 %v2743, %v2744
  %v2746 = vsel %vm241, %v2511, 0.0
  %v2747 = vadd.f32 %v2745, %v2746
  %v2748 = vsel %vm241, %v2512, 0.0
  %v2749 = vadd.f32 %v2747, %v2748
  %v2750 = vsel %vm241, %v2513, 0.0
  %v2751 = vadd.f32 %v2749, %v2750
  %v2752 = vsel %vm241, %v2514, 0.0
  %v2753 = vadd.f32 %v2751, %v2752
  %v2754 = vsel %vm241, %v2515, 0.0
  %v2755 = vadd.f32 %v2753, %v2754
  %v2756 = vsel %vm241, %v2516, 0.0
  %v2757 = vadd.f32 %v2755, %v2756
  %v2758 = vsel %vm241, %v2517, 0.0
  %v2759 = vadd.f32 %v2757, %v2758
  %v2760 = vsel %vm241, %v2518, 0.0
  %v2761 = vadd.f32 %v2759, %v2760
  %v2762 = vsel %vm241, %v2519, 0.0
  %v2763 = vadd.f32 %v2761, %v2762
  %v2764 = vsel %vm241, %v2520, 0.0
  %v2765 = vadd.f32 %v2763, %v2764
  %v2766 = vsel %vm241, %v2521, 0.0
  %v2767 = vadd.f32 %v2765, %v2766
  %v2768 = vsel %vm241, %v2522, 0.0
  %v2769 = vadd.f32 %v2767, %v2768
  %v2770 = vsel %vm241, %v2523, 0.0
  %v2771 = vadd.f32 %v2769, %v2770
  %v2772 = vsel %vm241, %v2524, 0.0
  %v2773 = vadd.f32 %v2771, %v2772
  %v2774 = vsel %vm241, %v2525, 0.0
  %v2775 = vadd.f32 %v2773, %v2774
  %v2776 = vsel %vm241, %v2526, 0.0
  %v2777 = vadd.f32 %v2775, %v2776
  %v2778 = vsel %vm241, %v2527, 0.0
  %v2779 = vadd.f32 %v2777, %v2778
  %v2780 = vsel %vm241, %v2528, 0.0
  %v2781 = vadd.f32 %v2779, %v2780
  %v2782 = vsel %vm241, %v2529, 0.0
  %v2783 = vadd.f32 %v2781, %v2782
  %v2784 = vsel %vm241, %v2530, 0.0
  %v2785 = vadd.f32 %v2783, %v2784
  %v2786 = vsel %vm241, %v2531, 0.0
  %v2787 = vadd.f32 %v2785, %v2786
  %v2788 = vsel %vm241, %v2532, 0.0
  %v2789 = vadd.f32 %v2787, %v2788
  %v2790 = vsel %vm241, %v2533, 0.0
  %v2791 = vadd.f32 %v2789, %v2790
  %v2792 = vsel %vm241, %v2534, 0.0
  %v2793 = vadd.f32 %v2791, %v2792
  %v2794 = vsel %vm241, %v2535, 0.0
  %v2795 = vadd.f32 %v2793, %v2794
  %v2796 = vsel %vm241, %v2536, 0.0
  %v2797 = vadd.f32 %v2795, %v2796
  %v2798 = vsel %vm241, %v2537, 0.0
  %v2799 = vadd.f32 %v2797, %v2798
  %v2800 = vsel %vm241, %v2538, 0.0
  %v2801 = vadd.f32 %v2799, %v2800
  %v2802 = vsel %vm241, %v2539, 0.0
  %v2803 = vadd.f32 %v2801, %v2802
  %v2804 = vsel %vm241, %v2540, 0.0
  %v2805 = vadd.f32 %v2803, %v2804
  %v2806 = vsel %vm241, %v2541, 0.0
  %v2807 = vadd.f32 %v2805, %v2806
  %v2808 = vsel %vm241, %v2542, 0.0
  %v2809 = vadd.f32 %v2807, %v2808
  %v2810 = vsel %vm241, %v2543, 0.0
  %v2811 = vadd.f32 %v2809, %v2810
  %v2812 = vsel %vm241, %v2544, 0.0
  %v2813 = vadd.f32 %v2811, %v2812
  %v2814 = vsel %vm241, %v2545, 0.0
  %v2815 = vadd.f32 %v2813, %v2814
  %v2816 = vsel %vm241, %v2546, 0.0
  %v2817 = vadd.f32 %v2815, %v2816
  %v2818 = vsel %vm241, %v2547, 0.0
  %v2819 = vadd.f32 %v2817, %v2818
  %v2820 = vsel %vm241, %v2548, 0.0
  %v2821 = vadd.f32 %v2819, %v2820
  %v2822 = vsel %vm241, %v2549, 0.0
  %v2823 = vadd.f32 %v2821, %v2822
  %v2824 = vsel %vm241, %v2550, 0.0
  %v2825 = vadd.f32 %v2823, %v2824
  %v2826 = vsel %vm241, %v2551, 0.0
  %v2827 = vadd.f32 %v2825, %v2826
  %v2828 = vsel %vm241, %v2552, 0.0
  %v2829 = vadd.f32 %v2827, %v2828
  %v2830 = vsel %vm241, %v2553, 0.0
  %v2831 = vadd.f32 %v2829, %v2830
  %v2832 = vsel %vm241, %v2554, 0.0
  %v2833 = vadd.f32 %v2831, %v2832
  %v2834 = vsel %vm241, %v2555, 0.0
  %v2835 = vadd.f32 %v2833, %v2834
  %v2836 = vsel %vm241, %v2556, 0.0
  %v2837 = vadd.f32 %v2835, %v2836
  %v2838 = vsel %vm241, %v2557, 0.0
  %v2839 = vadd.f32 %v2837, %v2838
  %v2840 = vsel %vm241, %v2558, 0.0
  %v2841 = vadd.f32 %v2839, %v2840
  %v2842 = vsel %vm241, %v2559, 0.0
  %v2843 = vadd.f32 %v2841, %v2842
  %v2844 = vsel %vm241, %v2560, 0.0
  %v2845 = vadd.f32 %v2843, %v2844
  %v2846 = vsel %vm241, %v2561, 0.0
  %v2847 = vadd.f32 %v2845, %v2846
  %v2848 = vsel %vm241, %v2562, 0.0
  %v2849 = vadd.f32 %v2847, %v2848
  %v2850 = vsel %vm241, %v2563, 0.0
  %v2851 = vadd.f32 %v2849, %v2850
  %v2852 = vsel %vm241, %v2564, 0.0
  %v2853 = vadd.f32 %v2851, %v2852
  %v2854 = vsel %vm241, %v2565, 0.0
  %v2855 = vadd.f32 %v2853, %v2854
  %v2856 = vsel %vm241, %v2566, 0.0
  %v2857 = vadd.f32 %v2855, %v2856
  %v2858 = vsel %vm241, %v2567, 0.0
  %v2859 = vadd.f32 %v2857, %v2858
  %v2860 = vsel %vm241, %v2568, 0.0
  %v2861 = vadd.f32 %v2859, %v2860
  %v2862 = vsel %vm241, %v2569, 0.0
  %v2863 = vadd.f32 %v2861, %v2862
  %v2864 = vsel %vm241, %v2570, 0.0
  %v2865 = vadd.f32 %v2863, %v2864
  %v2866 = vsel %vm241, %v2571, 0.0
  %v2867 = vadd.f32 %v2865, %v2866
  %v2868 = vsel %vm241, %v2572, 0.0
  %v2869 = vadd.f32 %v2867, %v2868
  %v2870 = vsel %vm241, %v2573, 0.0
  %v2871 = vadd.f32 %v2869, %v2870
  %v2872 = vsel %vm241, %v2574, 0.0
  %v2873 = vadd.f32 %v2871, %v2872
  %v2874 = vsel %vm241, %v2575, 0.0
  %v2875 = vadd.f32 %v2873, %v2874
  %v2876 = vsel %vm241, %v2576, 0.0
  %v2877 = vadd.f32 %v2875, %v2876
  %v2878 = vsel %vm241, %v2577, 0.0
  %v2879 = vadd.f32 %v2877, %v2878
  %v2880 = vsel %vm241, %v2578, 0.0
  %v2881 = vadd.f32 %v2879, %v2880
  %v2882 = vsel %vm241, %v2579, 0.0
  %v2883 = vadd.f32 %v2881, %v2882
  %v2884 = vsel %vm241, %v2580, 0.0
  %v2885 = vadd.f32 %v2883, %v2884
  %v2886 = vsel %vm241, %v2581, 0.0
  %v2887 = vadd.f32 %v2885, %v2886
  %v2888 = vsel %vm241, %v2582, 0.0
  %v2889 = vadd.f32 %v2887, %v2888
  %v2890 = vsel %vm241, %v2583, 0.0
  %v2891 = vadd.f32 %v2889, %v2890
  %v2892 = vsel %vm241, %v2584, 0.0
  %v2893 = vadd.f32 %v2891, %v2892
  %v2894 = vsel %vm241, %v2585, 0.0
  %v2895 = vadd.f32 %v2893, %v2894
  %v2896 = vsel %vm241, %v2586, 0.0
  %v2897 = vadd.f32 %v2895, %v2896
  %v2898 = vsel %vm241, %v2587, 0.0
  %v2899 = vadd.f32 %v2897, %v2898
  %v2900 = vsel %vm241, %v2588, 0.0
  %v2901 = vadd.f32 %v2899, %v2900
  %v2902 = vsel %vm241, %v2589, 0.0
  %v2903 = vadd.f32 %v2901, %v2902
  %v2904 = vsel %vm241, %v2590, 0.0
  %v2905 = vadd.f32 %v2903, %v2904
  %v2906 = vsel %vm241, %v2591, 0.0
  %v2907 = vadd.f32 %v2905, %v2906
  %v2908 = vsel %vm241, %v2592, 0.0
  %v2909 = vadd.f32 %v2907, %v2908
  %v2910 = vsel %vm241, %v2593, 0.0
  %v2911 = vadd.f32 %v2909, %v2910
  %v2912 = vsel %vm241, %v2594, 0.0
  %v2913 = vadd.f32 %v2911, %v2912
  %v2914 = vsel %vm241, %v2595, 0.0
  %v2915 = vadd.f32 %v2913, %v2914
  %v2916 = vsel %vm241, %v2596, 0.0
  %v2917 = vadd.f32 %v2915, %v2916
  %v2918 = vsel %vm241, %v2597, 0.0
  %v2919 = vadd.f32 %v2917, %v2918
  %v2920 = vsel %vm241, %v2598, 0.0
  %v2921 = vadd.f32 %v2919, %v2920
  %v2922 = vsel %vm241, %v2599, 0.0
  %v2923 = vadd.f32 %v2921, %v2922
  %v2924 = vsel %vm241, %v2600, 0.0
  %v2925 = vadd.f32 %v2923, %v2924
  %v2926 = vsel %vm241, %v2601, 0.0
  %v2927 = vadd.f32 %v2925, %v2926
  %v2928 = vsel %vm241, %v2602, 0.0
  %v2929 = vadd.f32 %v2927, %v2928
  %v2930 = vsel %vm241, %v2603, 0.0
  %v2931 = vadd.f32 %v2929, %v2930
  %v2932 = vsel %vm241, %v2604, 0.0
  %v2933 = vadd.f32 %v2931, %v2932
  %v2934 = vsel %vm241, %v2605, 0.0
  %v2935 = vadd.f32 %v2933, %v2934
  %v2936 = vsel %vm241, %v2606, 0.0
  %v2937 = vadd.f32 %v2935, %v2936
  %v2938 = vsel %vm241, %v2607, 0.0
  %v2939 = vadd.f32 %v2937, %v2938
  %v2940 = vsel %vm241, %v2608, 0.0
  %v2941 = vadd.f32 %v2939, %v2940
  %v2942 = vsel %vm241, %v2609, 0.0
  %v2943 = vadd.f32 %v2941, %v2942
  %v2944 = vsel %vm241, %v2610, 0.0
  %v2945 = vadd.f32 %v2943, %v2944
  %v2946 = vsel %vm241, %v2611, 0.0
  %v2947 = vadd.f32 %v2945, %v2946
  %v2948 = vsel %vm241, %v2612, 0.0
  %v2949 = vadd.f32 %v2947, %v2948
  %v2950 = vsel %vm241, %v2613, 0.0
  %v2951 = vadd.f32 %v2949, %v2950
  %v2952 = vsel %vm241, %v2614, 0.0
  %v2953 = vadd.f32 %v2951, %v2952
  %v2954 = vsel %vm241, %v2615, 0.0
  %v2955 = vadd.f32 %v2953, %v2954
  %v2956 = vsel %vm241, %v2616, 0.0
  %v2957 = vadd.f32 %v2955, %v2956
  %v2958 = vsel %vm241, %v2617, 0.0
  %v2959 = vadd.f32 %v2957, %v2958
  %v2960 = vsel %vm241, %v2618, 0.0
  %v2961 = vadd.f32 %v2959, %v2960
  %v2962 = vsel %vm241, %v2619, 0.0
  %v2963 = vadd.f32 %v2961, %v2962
  %v2964 = vsel %vm241, %v2620, 0.0
  %v2965 = vadd.f32 %v2963, %v2964
  %v2966 = vsel %vm241, %v2621, 0.0
  %v2967 = vadd.f32 %v2965, %v2966
  %v2968 = vsel %vm241, %v2622, 0.0
  %v2969 = vadd.f32 %v2967, %v2968
  %v2970 = vsel %vm241, %v2623, 0.0
  %v2971 = vadd.f32 %v2969, %v2970
  %v2972 = vsel %vm241, %v2624, 0.0
  %v2973 = vadd.f32 %v2971, %v2972
  %v2974 = vsel %vm241, %v2625, 0.0
  %v2975 = vadd.f32 %v2973, %v2974
  %v2976 = vsel %vm241, %v2626, 0.0
  %v2977 = vadd.f32 %v2975, %v2976
  %v2978 = vsel %vm241, %v2627, 0.0
  %v2979 = vadd.f32 %v2977, %v2978
  %v2980 = vsel %vm241, %v2628, 0.0
  %v2981 = vadd.f32 %v2979, %v2980
  %v2982 = vsel %vm241, %v2629, 0.0
  %v2983 = vadd.f32 %v2981, %v2982
  %v2984 = vsel %vm241, %v2630, 0.0
  %v2985 = vadd.f32 %v2983, %v2984
  %v2986 = vsel %vm241, %v2631, 0.0
  %v2987 = vadd.f32 %v2985, %v2986
  %v2988 = vsel %vm241, %v2632, 0.0
  %v2989 = vadd.f32 %v2987, %v2988
  %v2990 = vsel %vm241, %v2633, 0.0
  %v2991 = vadd.f32 %v2989, %v2990
  %v2992 = vsel %vm241, %v2634, 0.0
  %v2993 = vadd.f32 %v2991, %v2992
  %v2994 = vsel %vm241, %v2635, 0.0
  %v2995 = vadd.f32 %v2993, %v2994
  %v2996 = vsel %vm241, %v2636, 0.0
  %v2997 = vadd.f32 %v2995, %v2996
  %v2998 = vsel %vm241, %v2637, 0.0
  %v2999 = vadd.f32 %v2997, %v2998
  %v3000 = vsel %vm241, %v2638, 0.0
  %v3001 = vadd.f32 %v2999, %v3000
  %v3002 = vsel %vm241, %v2639, 0.0
  %v3003 = vadd.f32 %v3001, %v3002
  %v3004 = vsel %vm241, %v2640, 0.0
  %v3005 = vadd.f32 %v3003, %v3004
  %v3006 = vsel %vm241, %v2641, 0.0
  %v3007 = vadd.f32 %v3005, %v3006
  %v3008 = vsel %vm241, %v2642, 0.0
  %v3009 = vadd.f32 %v3007, %v3008
  %v3010 = vsel %vm241, %v2643, 0.0
  %v3011 = vadd.f32 %v3009, %v3010
  %v3012 = vsel %vm241, %v2644, 0.0
  %v3013 = vadd.f32 %v3011, %v3012
  %v3014 = vsel %vm241, %v2645, 0.0
  %v3015 = vadd.f32 %v3013, %v3014
  %v3016 = vsel %vm241, %v2646, 0.0
  %v3017 = vadd.f32 %v3015, %v3016
  %v3018 = vsel %vm241, %v2647, 0.0
  %v3019 = vadd.f32 %v3017, %v3018
  %v3020 = vsel %vm241, %v2648, 0.0
  %v3021 = vadd.f32 %v3019, %v3020
  %v3022 = vsel %vm241, %v2649, 0.0
  %v3023 = vadd.f32 %v3021, %v3022
  %v3024 = vsel %vm241, %v2650, 0.0
  %v3025 = vadd.f32 %v3023, %v3024
  %v3026 = vsel %vm241, %v2651, 0.0
  %v3027 = vadd.f32 %v3025, %v3026
  %v3028 = vsel %vm241, %v2652, 0.0
  %v3029 = vadd.f32 %v3027, %v3028
  %v3030 = vsel %vm241, %v2653, 0.0
  %v3031 = vadd.f32 %v3029, %v3030
  %v3032 = vsel %vm241, %v2654, 0.0
  %v3033 = vadd.f32 %v3031, %v3032
  %v3034 = vsel %vm241, %v2655, 0.0
  %v3035 = vadd.f32 %v3033, %v3034
  %v3036 = vsel %vm241, %v2656, 0.0
  %v3037 = vadd.f32 %v3035, %v3036
  %v3038 = vsel %vm241, %v2657, 0.0
  %v3039 = vadd.f32 %v3037, %v3038
  %v3040 = vsel %vm241, %v2658, 0.0
  %v3041 = vadd.f32 %v3039, %v3040
  %v3042 = vsel %vm241, %v2659, 0.0
  %v3043 = vadd.f32 %v3041, %v3042
  %v3044 = vsel %vm241, %v2660, 0.0
  %v3045 = vadd.f32 %v3043, %v3044
  %v3046 = vsel %vm241, %v2661, 0.0
  %v3047 = vadd.f32 %v3045, %v3046
  %v3048 = vsel %vm241, %v2662, 0.0
  %v3049 = vadd.f32 %v3047, %v3048
  %v3050 = vsel %vm241, %v2663, 0.0
  %v3051 = vadd.f32 %v3049, %v3050
  %v3052 = vsel %vm241, %v2664, 0.0
  %v3053 = vadd.f32 %v3051, %v3052
  %v3054 = vsel %vm241, %v2665, 0.0
  %v3055 = vadd.f32 %v3053, %v3054
  %v3056 = vsel %vm241, %v2666, 0.0
  %v3057 = vadd.f32 %v3055, %v3056
  %v3058 = vrot.slane %v3057, 4
  %v3059 = vadd.f32 %v3057, %v3058
  %v3060 = vrot.slane %v3059, 2
  %v3061 = vadd.f32 %v3059, %v3060
  %v3062 = vrot.slane %v3061, 1
  %v3063 = vadd.f32 %v3061, %v3062
  %v3064 = vmul.f32 %v2274, %v2274
  %v3065 = vmul.f32 %v3064, 216.0
  %v3066 = vsub.f32 %v3063, %v3065
  %v3067 = vmul.f32 %v3066, 0.000739645
  %v3068 = vadd.f32 %v3067, 1e-05
  %v3069 = vrsqrt.pop %v3068
  %v3070 = vmul.f32 %v1875, %v3069
  %v3071 = vmul.f32 %v2274, %v3070
  %v3072 = vsub.f32 %v1876, %v3071
  %v3074 = vlaneseq
  %v3075 = vshrl.u32 %v3074, 7
  %v3076 = vsub.s32 0, %v3075
  %v3077 = vrot.slane %v3070, %v3076
  %v3079 = vmul.f32 %v897, %v3077
  %v3080 = vmul.f32 %v902, %v3077
  %v3081 = vmul.f32 %v907, %v3077
  %v3082 = vmul.f32 %v912, %v3077
  %v3083 = vmul.f32 %v917, %v3077
  %v3084 = vmul.f32 %v922, %v3077
  %v3085 = vmul.f32 %v927, %v3077
  %v3086 = vmul.f32 %v932, %v3077
  %v3087 = vmul.f32 %v937, %v3077
  %v3088 = vmul.f32 %v942, %v3077
  %v3089 = vmul.f32 %v947, %v3077
  %v3090 = vmul.f32 %v952, %v3077
  %v3091 = vmul.f32 %v957, %v3077
  %v3092 = vmul.f32 %v962, %v3077
  %v3093 = vmul.f32 %v967, %v3077
  %v3094 = vmul.f32 %v972, %v3077
  %v3095 = vmul.f32 %v977, %v3077
  %v3096 = vmul.f32 %v982, %v3077
  %v3097 = vmul.f32 %v987, %v3077
  %v3098 = vmul.f32 %v992, %v3077
  %v3099 = vmul.f32 %v997, %v3077
  %v3100 = vmul.f32 %v1002, %v3077
  %v3101 = vmul.f32 %v1007, %v3077
  %v3102 = vmul.f32 %v1012, %v3077
  %v3103 = vmul.f32 %v1017, %v3077
  %v3104 = vmul.f32 %v1022, %v3077
  %v3105 = vmul.f32 %v1027, %v3077
  %v3106 = vmul.f32 %v1032, %v3077
  %v3107 = vmul.f32 %v1037, %v3077
  %v3108 = vmul.f32 %v1042, %v3077
  %v3109 = vmul.f32 %v1047, %v3077
  %v3110 = vmul.f32 %v1052, %v3077
  %v3111 = vmul.f32 %v1057, %v3077
  %v3112 = vmul.f32 %v1062, %v3077
  %v3113 = vmul.f32 %v1067, %v3077
  %v3114 = vmul.f32 %v1072, %v3077
  %v3115 = vmul.f32 %v1077, %v3077
  %v3116 = vmul.f32 %v1082, %v3077
  %v3117 = vmul.f32 %v1087, %v3077
  %v3118 = vmul.f32 %v1092, %v3077
  %v3119 = vmul.f32 %v1097, %v3077
  %v3120 = vmul.f32 %v1102, %v3077
  %v3121 = vmul.f32 %v1107, %v3077
  %v3122 = vmul.f32 %v1112, %v3077
  %v3123 = vmul.f32 %v1117, %v3077
  %v3124 = vmul.f32 %v1122, %v3077
  %v3125 = vmul.f32 %v1127, %v3077
  %v3126 = vmul.f32 %v1132, %v3077
  %v3127 = vmul.f32 %v1137, %v3077
  %v3128 = vmul.f32 %v1142, %v3077
  %v3129 = vmul.f32 %v1147, %v3077
  %v3130 = vmul.f32 %v1152, %v3077
  %v3131 = vmul.f32 %v1157, %v3077
  %v3132 = vmul.f32 %v1162, %v3077
  %v3133 = vmul.f32 %v1167, %v3077
  %v3134 = vmul.f32 %v1172, %v3077
  %v3135 = vmul.f32 %v1177, %v3077
  %v3136 = vmul.f32 %v1182, %v3077
  %v3137 = vmul.f32 %v1187, %v3077
  %v3138 = vmul.f32 %v1192, %v3077
  %v3139 = vmul.f32 %v1197, %v3077
  %v3140 = vmul.f32 %v1202, %v3077
  %v3141 = vmul.f32 %v1207, %v3077
  %v3142 = vmul.f32 %v1212, %v3077
  %v3143 = vmul.f32 %v1217, %v3077
  %v3144 = vmul.f32 %v1222, %v3077
  %v3145 = vmul.f32 %v1227, %v3077
  %v3146 = vmul.f32 %v1232, %v3077
  %v3147 = vmul.f32 %v1237, %v3077
  %v3148 = vmul.f32 %v1242, %v3077
  %v3149 = vmul.f32 %v1247, %v3077
  %v3150 = vmul.f32 %v1252, %v3077
  %v3151 = vmul.f32 %v1257, %v3077
  %v3152 = vmul.f32 %v1262, %v3077
  %v3153 = vmul.f32 %v1267, %v3077
  %v3154 = vmul.f32 %v1272, %v3077
  %v3155 = vmul.f32 %v1277, %v3077
  %v3156 = vmul.f32 %v1282, %v3077
  %v3157 = vmul.f32 %v1287, %v3077
  %v3158 = vmul.f32 %v1292, %v3077
  %v3159 = vmul.f32 %v1297, %v3077
  %v3160 = vmul.f32 %v1302, %v3077
  %v3161 = vmul.f32 %v1307, %v3077
  %v3162 = vmul.f32 %v1312, %v3077
  %v3163 = vmul.f32 %v1317, %v3077
  %v3164 = vmul.f32 %v1322, %v3077
  %v3165 = vmul.f32 %v1327, %v3077
  %v3166 = vmul.f32 %v1332, %v3077
  %v3167 = vmul.f32 %v1337, %v3077
  %v3168 = vmul.f32 %v1342, %v3077
  %v3169 = vmul.f32 %v1347, %v3077
  %v3170 = vmul.f32 %v1352, %v3077
  %v3171 = vmul.f32 %v1357, %v3077
  %v3172 = vmul.f32 %v1362, %v3077
  %v3173 = vmul.f32 %v1367, %v3077
  %v3174 = vmul.f32 %v1372, %v3077
  %v3175 = vmul.f32 %v1377, %v3077
  %v3176 = vmul.f32 %v1382, %v3077
  %v3177 = vmul.f32 %v1387, %v3077
  %v3178 = vmul.f32 %v1392, %v3077
  %v3179 = vmul.f32 %v1397, %v3077
  %v3180 = vmul.f32 %v1402, %v3077
  %v3181 = vmul.f32 %v1407, %v3077
  %v3182 = vmul.f32 %v1412, %v3077
  %v3183 = vmul.f32 %v1417, %v3077
  %v3184 = vmul.f32 %v1422, %v3077
  %v3185 = vmul.f32 %v1427, %v3077
  %v3186 = vmul.f32 %v1432, %v3077
  %v3187 = vmul.f32 %v1437, %v3077
  %v3188 = vmul.f32 %v1442, %v3077
  %v3189 = vmul.f32 %v1447, %v3077
  %v3190 = vmul.f32 %v1452, %v3077
  %v3191 = vmul.f32 %v1457, %v3077
  %v3192 = vmul.f32 %v1462, %v3077
  %v3193 = vmul.f32 %v1467, %v3077
  %v3194 = vmul.f32 %v1472, %v3077
  %v3195 = vmul.f32 %v1477, %v3077
  %v3196 = vmul.f32 %v1482, %v3077
  %v3197 = vmul.f32 %v1487, %v3077
  %v3198 = vmul.f32 %v1492, %v3077
  %v3199 = vmul.f32 %v1497, %v3077
  %v3200 = vmul.f32 %v1502, %v3077
  %v3201 = vmul.f32 %v1507, %v3077
  %v3202 = vmul.f32 %v1512, %v3077
  %v3203 = vmul.f32 %v1517, %v3077
  %v3204 = vmul.f32 %v1522, %v3077
  %v3205 = vmul.f32 %v1527, %v3077
  %v3206 = vmul.f32 %v1532, %v3077
  %v3207 = vmul.f32 %v1537, %v3077
  %v3208 = vmul.f32 %v1542, %v3077
  %v3209 = vmul.f32 %v1547, %v3077
  %v3210 = vmul.f32 %v1552, %v3077
  %v3211 = vmul.f32 %v1557, %v3077
  %v3212 = vmul.f32 %v1562, %v3077
  %v3213 = vmul.f32 %v1567, %v3077
  %v3214 = vmul.f32 %v1572, %v3077
  %v3215 = vmul.f32 %v1577, %v3077
  %v3216 = vmul.f32 %v1582, %v3077
  %v3217 = vmul.f32 %v1587, %v3077
  %v3218 = vmul.f32 %v1592, %v3077
  %v3219 = vmul.f32 %v1597, %v3077
  %v3220 = vmul.f32 %v1602, %v3077
  %v3221 = vmul.f32 %v1607, %v3077
  %v3222 = vmul.f32 %v1612, %v3077
  %v3223 = vmul.f32 %v1617, %v3077
  %v3224 = vmul.f32 %v1622, %v3077
  %v3225 = vmul.f32 %v1627, %v3077
  %v3226 = vmul.f32 %v1632, %v3077
  %v3227 = vmul.f32 %v1637, %v3077
  %v3228 = vmul.f32 %v1642, %v3077
  %v3229 = vmul.f32 %v1647, %v3077
  %v3230 = vmul.f32 %v1652, %v3077
  %v3231 = vmul.f32 %v1657, %v3077
  %v3232 = vmul.f32 %v1662, %v3077
  %v3233 = vmul.f32 %v1667, %v3077
  %v3234 = vmul.f32 %v1672, %v3077
  %v3235 = vmul.f32 %v1677, %v3077
  %v3236 = vmul.f32 %v1682, %v3077
  %v3237 = vmul.f32 %v1687, %v3077
  %v3238 = vmul.f32 %v1692, %v3077
  %v3239 = vmul.f32 %v1697, %v3077
  %v3240 = vmul.f32 %v1702, %v3077
  %v3241 = vmul.f32 %v1707, %v3077
  %v3242 = vmul.f32 %v1712, %v3077
  %v3243 = vmul.f32 %v1717, %v3077
  %v3244 = vmul.f32 %v1722, %v3077
  %v3245 = vmul.f32 %v1727, %v3077
  %v3246 = vmul.f32 %v1732, %v3077
  %v3247 = vmul.f32 %v1737, %v3077
  %v3248 = vmul.f32 %v1742, %v3077
  %v3249 = vmul.f32 %v1747, %v3077
  %v3250 = vmul.f32 %v1752, %v3077
  %v3251 = vmul.f32 %v1757, %v3077
  %v3252 = vmul.f32 %v1762, %v3077
  %v3253 = vmul.f32 %v1767, %v3077
  %v3254 = vmul.f32 %v1772, %v3077
  %v3255 = vmul.f32 %v1777, %v3077
  %v3256 = vmul.f32 %v1782, %v3077
  %v3257 = vmul.f32 %v1787, %v3077
  %v3258 = vmul.f32 %v1792, %v3077
  %v3259 = vmul.f32 %v1797, %v3077
  %v3260 = vmul.f32 %v1802, %v3077
  %v3261 = vmul.f32 %v1807, %v3077
  %v3262 = vmul.f32 %v1812, %v3077
  %v3263 = vmul.f32 %v1817, %v3077
  %v3264 = vmul.f32 %v1822, %v3077
  %v3265 = vmul.f32 %v1827, %v3077
  %v3266 = vmul.f32 %v1832, %v3077
  %v3267 = vmul.f32 %v1837, %v3077
  %v3268 = vmul.f32 %v1842, %v3077
  %v3269 = vmul.f32 %v1847, %v3077
  %v3270 = vmul.f32 %v1852, %v3077
  %v3271 = vmul.f32 %v1857, %v3077
  %v3272 = vmul.f32 %v1862, %v3077
  %v3273 = vmul.f32 %v1867, %v3077
  %v3274 = vmul.f32 %v1872, %v3077
  %v3276 = vlaneseq
  %v3277 = vshrl.u32 %v3276, 7
  %v3278 = vsub.s32 0, %v3277
  %v3279 = vrot.slane %v3072, %v3278
  %v3281 = vadd.f32 %v3079, %v3279
  %v3282 = vadd.f32 %v3080, %v3279
  %v3283 = vadd.f32 %v3081, %v3279
  %v3284 = vadd.f32 %v3082, %v3279
  %v3285 = vadd.f32 %v3083, %v3279
  %v3286 = vadd.f32 %v3084, %v3279
  %v3287 = vadd.f32 %v3085, %v3279
  %v3288 = vadd.f32 %v3086, %v3279
  %v3289 = vadd.f32 %v3087, %v3279
  %v3290 = vadd.f32 %v3088, %v3279
  %v3291 = vadd.f32 %v3089, %v3279
  %v3292 = vadd.f32 %v3090, %v3279
  %v3293 = vadd.f32 %v3091, %v3279
  %v3294 = vadd.f32 %v3092, %v3279
  %v3295 = vadd.f32 %v3093, %v3279
  %v3296 = vadd.f32 %v3094, %v3279
  %v3297 = vadd.f32 %v3095, %v3279
  %v3298 = vadd.f32 %v3096, %v3279
  %v3299 = vadd.f32 %v3097, %v3279
  %v3300 = vadd.f32 %v3098, %v3279
  %v3301 = vadd.f32 %v3099, %v3279
  %v3302 = vadd.f32 %v3100, %v3279
  %v3303 = vadd.f32 %v3101, %v3279
  %v3304 = vadd.f32 %v3102, %v3279
  %v3305 = vadd.f32 %v3103, %v3279
  %v3306 = vadd.f32 %v3104, %v3279
  %v3307 = vadd.f32 %v3105, %v3279
  %v3308 = vadd.f32 %v3106, %v3279
  %v3309 = vadd.f32 %v3107, %v3279
  %v3310 = vadd.f32 %v3108, %v3279
  %v3311 = vadd.f32 %v3109, %v3279
  %v3312 = vadd.f32 %v3110, %v3279
  %v3313 = vadd.f32 %v3111, %v3279
  %v3314 = vadd.f32 %v3112, %v3279
  %v3315 = vadd.f32 %v3113, %v3279
  %v3316 = vadd.f32 %v3114, %v3279
  %v3317 = vadd.f32 %v3115, %v3279
  %v3318 = vadd.f32 %v3116, %v3279
  %v3319 = vadd.f32 %v3117, %v3279
  %v3320 = vadd.f32 %v3118, %v3279
  %v3321 = vadd.f32 %v3119, %v3279
  %v3322 = vadd.f32 %v3120, %v3279
  %v3323 = vadd.f32 %v3121, %v3279
  %v3324 = vadd.f32 %v3122, %v3279
  %v3325 = vadd.f32 %v3123, %v3279
  %v3326 = vadd.f32 %v3124, %v3279
  %v3327 = vadd.f32 %v3125, %v3279
  %v3328 = vadd.f32 %v3126, %v3279
  %v3329 = vadd.f32 %v3127, %v3279
  %v3330 = vadd.f32 %v3128, %v3279
  %v3331 = vadd.f32 %v3129, %v3279
  %v3332 = vadd.f32 %v3130, %v3279
  %v3333 = vadd.f32 %v3131, %v3279
  %v3334 = vadd.f32 %v3132, %v3279
  %v3335 = vadd.f32 %v3133, %v3279
  %v3336 = vadd.f32 %v3134, %v3279
  %v3337 = vadd.f32 %v3135, %v3279
  %v3338 = vadd.f32 %v3136, %v3279
  %v3339 = vadd.f32 %v3137, %v3279
  %v3340 = vadd.f32 %v3138, %v3279
  %v3341 = vadd.f32 %v3139, %v3279
  %v3342 = vadd.f32 %v3140, %v3279
  %v3343 = vadd.f32 %v3141, %v3279
  %v3344 = vadd.f32 %v3142, %v3279
  %v3345 = vadd.f32 %v3143, %v3279
  %v3346 = vadd.f32 %v3144, %v3279
  %v3347 = vadd.f32 %v3145, %v3279
  %v3348 = vadd.f32 %v3146, %v3279
  %v3349 = vadd.f32 %v3147, %v3279
  %v3350 = vadd.f32 %v3148, %v3279
  %v3351 = vadd.f32 %v3149, %v3279
  %v3352 = vadd.f32 %v3150, %v3279
  %v3353 = vadd.f32 %v3151, %v3279
  %v3354 = vadd.f32 %v3152, %v3279
  %v3355 = vadd.f32 %v3153, %v3279
  %v3356 = vadd.f32 %v3154, %v3279
  %v3357 = vadd.f32 %v3155, %v3279
  %v3358 = vadd.f32 %v3156, %v3279
  %v3359 = vadd.f32 %v3157, %v3279
  %v3360 = vadd.f32 %v3158, %v3279
  %v3361 = vadd.f32 %v3159, %v3279
  %v3362 = vadd.f32 %v3160, %v3279
  %v3363 = vadd.f32 %v3161, %v3279
  %v3364 = vadd.f32 %v3162, %v3279
  %v3365 = vadd.f32 %v3163, %v3279
  %v3366 = vadd.f32 %v3164, %v3279
  %v3367 = vadd.f32 %v3165, %v3279
  %v3368 = vadd.f32 %v3166, %v3279
  %v3369 = vadd.f32 %v3167, %v3279
  %v3370 = vadd.f32 %v3168, %v3279
  %v3371 = vadd.f32 %v3169, %v3279
  %v3372 = vadd.f32 %v3170, %v3279
  %v3373 = vadd.f32 %v3171, %v3279
  %v3374 = vadd.f32 %v3172, %v3279
  %v3375 = vadd.f32 %v3173, %v3279
  %v3376 = vadd.f32 %v3174, %v3279
  %v3377 = vadd.f32 %v3175, %v3279
  %v3378 = vadd.f32 %v3176, %v3279
  %v3379 = vadd.f32 %v3177, %v3279
  %v3380 = vadd.f32 %v3178, %v3279
  %v3381 = vadd.f32 %v3179, %v3279
  %v3382 = vadd.f32 %v3180, %v3279
  %v3383 = vadd.f32 %v3181, %v3279
  %v3384 = vadd.f32 %v3182, %v3279
  %v3385 = vadd.f32 %v3183, %v3279
  %v3386 = vadd.f32 %v3184, %v3279
  %v3387 = vadd.f32 %v3185, %v3279
  %v3388 = vadd.f32 %v3186, %v3279
  %v3389 = vadd.f32 %v3187, %v3279
  %v3390 = vadd.f32 %v3188, %v3279
  %v3391 = vadd.f32 %v3189, %v3279
  %v3392 = vadd.f32 %v3190, %v3279
  %v3393 = vadd.f32 %v3191, %v3279
  %v3394 = vadd.f32 %v3192, %v3279
  %v3395 = vadd.f32 %v3193, %v3279
  %v3396 = vadd.f32 %v3194, %v3279
  %v3397 = vadd.f32 %v3195, %v3279
  %v3398 = vadd.f32 %v3196, %v3279
  %v3399 = vadd.f32 %v3197, %v3279
  %v3400 = vadd.f32 %v3198, %v3279
  %v3401 = vadd.f32 %v3199, %v3279
  %v3402 = vadd.f32 %v3200, %v3279
  %v3403 = vadd.f32 %v3201, %v3279
  %v3404 = vadd.f32 %v3202, %v3279
  %v3405 = vadd.f32 %v3203, %v3279
  %v3406 = vadd.f32 %v3204, %v3279
  %v3407 = vadd.f32 %v3205, %v3279
  %v3408 = vadd.f32 %v3206, %v3279
  %v3409 = vadd.f32 %v3207, %v3279
  %v3410 = vadd.f32 %v3208, %v3279
  %v3411 = vadd.f32 %v3209, %v3279
  %v3412 = vadd.f32 %v3210, %v3279
  %v3413 = vadd.f32 %v3211, %v3279
  %v3414 = vadd.f32 %v3212, %v3279
  %v3415 = vadd.f32 %v3213, %v3279
  %v3416 = vadd.f32 %v3214, %v3279
  %v3417 = vadd.f32 %v3215, %v3279
  %v3418 = vadd.f32 %v3216, %v3279
  %v3419 = vadd.f32 %v3217, %v3279
  %v3420 = vadd.f32 %v3218, %v3279
  %v3421 = vadd.f32 %v3219, %v3279
  %v3422 = vadd.f32 %v3220, %v3279
  %v3423 = vadd.f32 %v3221, %v3279
  %v3424 = vadd.f32 %v3222, %v3279
  %v3425 = vadd.f32 %v3223, %v3279
  %v3426 = vadd.f32 %v3224, %v3279
  %v3427 = vadd.f32 %v3225, %v3279
  %v3428 = vadd.f32 %v3226, %v3279
  %v3429 = vadd.f32 %v3227, %v3279
  %v3430 = vadd.f32 %v3228, %v3279
  %v3431 = vadd.f32 %v3229, %v3279
  %v3432 = vadd.f32 %v3230, %v3279
  %v3433 = vadd.f32 %v3231, %v3279
  %v3434 = vadd.f32 %v3232, %v3279
  %v3435 = vadd.f32 %v3233, %v3279
  %v3436 = vadd.f32 %v3234, %v3279
  %v3437 = vadd.f32 %v3235, %v3279
  %v3438 = vadd.f32 %v3236, %v3279
  %v3439 = vadd.f32 %v3237, %v3279
  %v3440 = vadd.f32 %v3238, %v3279
  %v3441 = vadd.f32 %v3239, %v3279
  %v3442 = vadd.f32 %v3240, %v3279
  %v3443 = vadd.f32 %v3241, %v3279
  %v3444 = vadd.f32 %v3242, %v3279
  %v3445 = vadd.f32 %v3243, %v3279
  %v3446 = vadd.f32 %v3244, %v3279
  %v3447 = vadd.f32 %v3245, %v3279
  %v3448 = vadd.f32 %v3246, %v3279
  %v3449 = vadd.f32 %v3247, %v3279
  %v3450 = vadd.f32 %v3248, %v3279
  %v3451 = vadd.f32 %v3249, %v3279
  %v3452 = vadd.f32 %v3250, %v3279
  %v3453 = vadd.f32 %v3251, %v3279
  %v3454 = vadd.f32 %v3252, %v3279
  %v3455 = vadd.f32 %v3253, %v3279
  %v3456 = vadd.f32 %v3254, %v3279
  %v3457 = vadd.f32 %v3255, %v3279
  %v3458 = vadd.f32 %v3256, %v3279
  %v3459 = vadd.f32 %v3257, %v3279
  %v3460 = vadd.f32 %v3258, %v3279
  %v3461 = vadd.f32 %v3259, %v3279
  %v3462 = vadd.f32 %v3260, %v3279
  %v3463 = vadd.f32 %v3261, %v3279
  %v3464 = vadd.f32 %v3262, %v3279
  %v3465 = vadd.f32 %v3263, %v3279
  %v3466 = vadd.f32 %v3264, %v3279
  %v3467 = vadd.f32 %v3265, %v3279
  %v3468 = vadd.f32 %v3266, %v3279
  %v3469 = vadd.f32 %v3267, %v3279
  %v3470 = vadd.f32 %v3268, %v3279
  %v3471 = vadd.f32 %v3269, %v3279
  %v3472 = vadd.f32 %v3270, %v3279
  %v3473 = vadd.f32 %v3271, %v3279
  %v3474 = vadd.f32 %v3272, %v3279
  %v3475 = vadd.f32 %v3273, %v3279
  %v3476 = vadd.f32 %v3274, %v3279
  %vm3477 = vcmp.ge.f32.partialorder %v3281, 0.0
  %vm3478 = vcmp.ge.f32.partialorder %v3282, 0.0
  %vm3479 = vcmp.ge.f32.partialorder %v3283, 0.0
  %vm3480 = vcmp.ge.f32.partialorder %v3284, 0.0
  %vm3481 = vcmp.ge.f32.partialorder %v3285, 0.0
  %vm3482 = vcmp.ge.f32.partialorder %v3286, 0.0
  %vm3483 = vcmp.ge.f32.partialorder %v3287, 0.0
  %vm3484 = vcmp.ge.f32.partialorder %v3288, 0.0
  %vm3485 = vcmp.ge.f32.partialorder %v3289, 0.0
  %vm3486 = vcmp.ge.f32.partialorder %v3290, 0.0
  %vm3487 = vcmp.ge.f32.partialorder %v3291, 0.0
  %vm3488 = vcmp.ge.f32.partialorder %v3292, 0.0
  %vm3489 = vcmp.ge.f32.partialorder %v3293, 0.0
  %vm3490 = vcmp.ge.f32.partialorder %v3294, 0.0
  %vm3491 = vcmp.ge.f32.partialorder %v3295, 0.0
  %vm3492 = vcmp.ge.f32.partialorder %v3296, 0.0
  %vm3493 = vcmp.ge.f32.partialorder %v3297, 0.0
  %vm3494 = vcmp.ge.f32.partialorder %v3298, 0.0
  %vm3495 = vcmp.ge.f32.partialorder %v3299, 0.0
  %vm3496 = vcmp.ge.f32.partialorder %v3300, 0.0
  %vm3497 = vcmp.ge.f32.partialorder %v3301, 0.0
  %vm3498 = vcmp.ge.f32.partialorder %v3302, 0.0
  %vm3499 = vcmp.ge.f32.partialorder %v3303, 0.0
  %vm3500 = vcmp.ge.f32.partialorder %v3304, 0.0
  %vm3501 = vcmp.ge.f32.partialorder %v3305, 0.0
  %vm3502 = vcmp.ge.f32.partialorder %v3306, 0.0
  %vm3503 = vcmp.ge.f32.partialorder %v3307, 0.0
  %vm3504 = vcmp.ge.f32.partialorder %v3308, 0.0
  %vm3505 = vcmp.ge.f32.partialorder %v3309, 0.0
  %vm3506 = vcmp.ge.f32.partialorder %v3310, 0.0
  %vm3507 = vcmp.ge.f32.partialorder %v3311, 0.0
  %vm3508 = vcmp.ge.f32.partialorder %v3312, 0.0
  %vm3509 = vcmp.ge.f32.partialorder %v3313, 0.0
  %vm3510 = vcmp.ge.f32.partialorder %v3314, 0.0
  %vm3511 = vcmp.ge.f32.partialorder %v3315, 0.0
  %vm3512 = vcmp.ge.f32.partialorder %v3316, 0.0
  %vm3513 = vcmp.ge.f32.partialorder %v3317, 0.0
  %vm3514 = vcmp.ge.f32.partialorder %v3318, 0.0
  %vm3515 = vcmp.ge.f32.partialorder %v3319, 0.0
  %vm3516 = vcmp.ge.f32.partialorder %v3320, 0.0
  %vm3517 = vcmp.ge.f32.partialorder %v3321, 0.0
  %vm3518 = vcmp.ge.f32.partialorder %v3322, 0.0
  %vm3519 = vcmp.ge.f32.partialorder %v3323, 0.0
  %vm3520 = vcmp.ge.f32.partialorder %v3324, 0.0
  %vm3521 = vcmp.ge.f32.partialorder %v3325, 0.0
  %vm3522 = vcmp.ge.f32.partialorder %v3326, 0.0
  %vm3523 = vcmp.ge.f32.partialorder %v3327, 0.0
  %vm3524 = vcmp.ge.f32.partialorder %v3328, 0.0
  %vm3525 = vcmp.ge.f32.partialorder %v3329, 0.0
  %vm3526 = vcmp.ge.f32.partialorder %v3330, 0.0
  %vm3527 = vcmp.ge.f32.partialorder %v3331, 0.0
  %vm3528 = vcmp.ge.f32.partialorder %v3332, 0.0
  %vm3529 = vcmp.ge.f32.partialorder %v3333, 0.0
  %vm3530 = vcmp.ge.f32.partialorder %v3334, 0.0
  %vm3531 = vcmp.ge.f32.partialorder %v3335, 0.0
  %vm3532 = vcmp.ge.f32.partialorder %v3336, 0.0
  %vm3533 = vcmp.ge.f32.partialorder %v3337, 0.0
  %vm3534 = vcmp.ge.f32.partialorder %v3338, 0.0
  %vm3535 = vcmp.ge.f32.partialorder %v3339, 0.0
  %vm3536 = vcmp.ge.f32.partialorder %v3340, 0.0
  %vm3537 = vcmp.ge.f32.partialorder %v3341, 0.0
  %vm3538 = vcmp.ge.f32.partialorder %v3342, 0.0
  %vm3539 = vcmp.ge.f32.partialorder %v3343, 0.0
  %vm3540 = vcmp.ge.f32.partialorder %v3344, 0.0
  %vm3541 = vcmp.ge.f32.partialorder %v3345, 0.0
  %vm3542 = vcmp.ge.f32.partialorder %v3346, 0.0
  %vm3543 = vcmp.ge.f32.partialorder %v3347, 0.0
  %vm3544 = vcmp.ge.f32.partialorder %v3348, 0.0
  %vm3545 = vcmp.ge.f32.partialorder %v3349, 0.0
  %vm3546 = vcmp.ge.f32.partialorder %v3350, 0.0
  %vm3547 = vcmp.ge.f32.partialorder %v3351, 0.0
  %vm3548 = vcmp.ge.f32.partialorder %v3352, 0.0
  %vm3549 = vcmp.ge.f32.partialorder %v3353, 0.0
  %vm3550 = vcmp.ge.f32.partialorder %v3354, 0.0
  %vm3551 = vcmp.ge.f32.partialorder %v3355, 0.0
  %vm3552 = vcmp.ge.f32.partialorder %v3356, 0.0
  %vm3553 = vcmp.ge.f32.partialorder %v3357, 0.0
  %vm3554 = vcmp.ge.f32.partialorder %v3358, 0.0
  %vm3555 = vcmp.ge.f32.partialorder %v3359, 0.0
  %vm3556 = vcmp.ge.f32.partialorder %v3360, 0.0
  %vm3557 = vcmp.ge.f32.partialorder %v3361, 0.0
  %vm3558 = vcmp.ge.f32.partialorder %v3362, 0.0
  %vm3559 = vcmp.ge.f32.partialorder %v3363, 0.0
  %vm3560 = vcmp.ge.f32.partialorder %v3364, 0.0
  %vm3561 = vcmp.ge.f32.partialorder %v3365, 0.0
  %vm3562 = vcmp.ge.f32.partialorder %v3366, 0.0
  %vm3563 = vcmp.ge.f32.partialorder %v3367, 0.0
  %vm3564 = vcmp.ge.f32.partialorder %v3368, 0.0
  %vm3565 = vcmp.ge.f32.partialorder %v3369, 0.0
  %vm3566 = vcmp.ge.f32.partialorder %v3370, 0.0
  %vm3567 = vcmp.ge.f32.partialorder %v3371, 0.0
  %vm3568 = vcmp.ge.f32.partialorder %v3372, 0.0
  %vm3569 = vcmp.ge.f32.partialorder %v3373, 0.0
  %vm3570 = vcmp.ge.f32.partialorder %v3374, 0.0
  %vm3571 = vcmp.ge.f32.partialorder %v3375, 0.0
  %vm3572 = vcmp.ge.f32.partialorder %v3376, 0.0
  %vm3573 = vcmp.ge.f32.partialorder %v3377, 0.0
  %vm3574 = vcmp.ge.f32.partialorder %v3378, 0.0
  %vm3575 = vcmp.ge.f32.partialorder %v3379, 0.0
  %vm3576 = vcmp.ge.f32.partialorder %v3380, 0.0
  %vm3577 = vcmp.ge.f32.partialorder %v3381, 0.0
  %vm3578 = vcmp.ge.f32.partialorder %v3382, 0.0
  %vm3579 = vcmp.ge.f32.partialorder %v3383, 0.0
  %vm3580 = vcmp.ge.f32.partialorder %v3384, 0.0
  %vm3581 = vcmp.ge.f32.partialorder %v3385, 0.0
  %vm3582 = vcmp.ge.f32.partialorder %v3386, 0.0
  %vm3583 = vcmp.ge.f32.partialorder %v3387, 0.0
  %vm3584 = vcmp.ge.f32.partialorder %v3388, 0.0
  %vm3585 = vcmp.ge.f32.partialorder %v3389, 0.0
  %vm3586 = vcmp.ge.f32.partialorder %v3390, 0.0
  %vm3587 = vcmp.ge.f32.partialorder %v3391, 0.0
  %vm3588 = vcmp.ge.f32.partialorder %v3392, 0.0
  %vm3589 = vcmp.ge.f32.partialorder %v3393, 0.0
  %vm3590 = vcmp.ge.f32.partialorder %v3394, 0.0
  %vm3591 = vcmp.ge.f32.partialorder %v3395, 0.0
  %vm3592 = vcmp.ge.f32.partialorder %v3396, 0.0
  %vm3593 = vcmp.ge.f32.partialorder %v3397, 0.0
  %vm3594 = vcmp.ge.f32.partialorder %v3398, 0.0
  %vm3595 = vcmp.ge.f32.partialorder %v3399, 0.0
  %vm3596 = vcmp.ge.f32.partialorder %v3400, 0.0
  %vm3597 = vcmp.ge.f32.partialorder %v3401, 0.0
  %vm3598 = vcmp.ge.f32.partialorder %v3402, 0.0
  %vm3599 = vcmp.ge.f32.partialorder %v3403, 0.0
  %vm3600 = vcmp.ge.f32.partialorder %v3404, 0.0
  %vm3601 = vcmp.ge.f32.partialorder %v3405, 0.0
  %vm3602 = vcmp.ge.f32.partialorder %v3406, 0.0
  %vm3603 = vcmp.ge.f32.partialorder %v3407, 0.0
  %vm3604 = vcmp.ge.f32.partialorder %v3408, 0.0
  %vm3605 = vcmp.ge.f32.partialorder %v3409, 0.0
  %vm3606 = vcmp.ge.f32.partialorder %v3410, 0.0
  %vm3607 = vcmp.ge.f32.partialorder %v3411, 0.0
  %vm3608 = vcmp.ge.f32.partialorder %v3412, 0.0
  %vm3609 = vcmp.ge.f32.partialorder %v3413, 0.0
  %vm3610 = vcmp.ge.f32.partialorder %v3414, 0.0
  %vm3611 = vcmp.ge.f32.partialorder %v3415, 0.0
  %vm3612 = vcmp.ge.f32.partialorder %v3416, 0.0
  %vm3613 = vcmp.ge.f32.partialorder %v3417, 0.0
  %vm3614 = vcmp.ge.f32.partialorder %v3418, 0.0
  %vm3615 = vcmp.ge.f32.partialorder %v3419, 0.0
  %vm3616 = vcmp.ge.f32.partialorder %v3420, 0.0
  %vm3617 = vcmp.ge.f32.partialorder %v3421, 0.0
  %vm3618 = vcmp.ge.f32.partialorder %v3422, 0.0
  %vm3619 = vcmp.ge.f32.partialorder %v3423, 0.0
  %vm3620 = vcmp.ge.f32.partialorder %v3424, 0.0
  %vm3621 = vcmp.ge.f32.partialorder %v3425, 0.0
  %vm3622 = vcmp.ge.f32.partialorder %v3426, 0.0
  %vm3623 = vcmp.ge.f32.partialorder %v3427, 0.0
  %vm3624 = vcmp.ge.f32.partialorder %v3428, 0.0
  %vm3625 = vcmp.ge.f32.partialorder %v3429, 0.0
  %vm3626 = vcmp.ge.f32.partialorder %v3430, 0.0
  %vm3627 = vcmp.ge.f32.partialorder %v3431, 0.0
  %vm3628 = vcmp.ge.f32.partialorder %v3432, 0.0
  %vm3629 = vcmp.ge.f32.partialorder %v3433, 0.0
  %vm3630 = vcmp.ge.f32.partialorder %v3434, 0.0
  %vm3631 = vcmp.ge.f32.partialorder %v3435, 0.0
  %vm3632 = vcmp.ge.f32.partialorder %v3436, 0.0
  %vm3633 = vcmp.ge.f32.partialorder %v3437, 0.0
  %vm3634 = vcmp.ge.f32.partialorder %v3438, 0.0
  %vm3635 = vcmp.ge.f32.partialorder %v3439, 0.0
  %vm3636 = vcmp.ge.f32.partialorder %v3440, 0.0
  %vm3637 = vcmp.ge.f32.partialorder %v3441, 0.0
  %vm3638 = vcmp.ge.f32.partialorder %v3442, 0.0
  %vm3639 = vcmp.ge.f32.partialorder %v3443, 0.0
  %vm3640 = vcmp.ge.f32.partialorder %v3444, 0.0
  %vm3641 = vcmp.ge.f32.partialorder %v3445, 0.0
  %vm3642 = vcmp.ge.f32.partialorder %v3446, 0.0
  %vm3643 = vcmp.ge.f32.partialorder %v3447, 0.0
  %vm3644 = vcmp.ge.f32.partialorder %v3448, 0.0
  %vm3645 = vcmp.ge.f32.partialorder %v3449, 0.0
  %vm3646 = vcmp.ge.f32.partialorder %v3450, 0.0
  %vm3647 = vcmp.ge.f32.partialorder %v3451, 0.0
  %vm3648 = vcmp.ge.f32.partialorder %v3452, 0.0
  %vm3649 = vcmp.ge.f32.partialorder %v3453, 0.0
  %vm3650 = vcmp.ge.f32.partialorder %v3454, 0.0
  %vm3651 = vcmp.ge.f32.partialorder %v3455, 0.0
  %vm3652 = vcmp.ge.f32.partialorder %v3456, 0.0
  %vm3653 = vcmp.ge.f32.partialorder %v3457, 0.0
  %vm3654 = vcmp.ge.f32.partialorder %v3458, 0.0
  %vm3655 = vcmp.ge.f32.partialorder %v3459, 0.0
  %vm3656 = vcmp.ge.f32.partialorder %v3460, 0.0
  %vm3657 = vcmp.ge.f32.partialorder %v3461, 0.0
  %vm3658 = vcmp.ge.f32.partialorder %v3462, 0.0
  %vm3659 = vcmp.ge.f32.partialorder %v3463, 0.0
  %vm3660 = vcmp.ge.f32.partialorder %v3464, 0.0
  %vm3661 = vcmp.ge.f32.partialorder %v3465, 0.0
  %vm3662 = vcmp.ge.f32.partialorder %v3466, 0.0
  %vm3663 = vcmp.ge.f32.partialorder %v3467, 0.0
  %vm3664 = vcmp.ge.f32.partialorder %v3468, 0.0
  %vm3665 = vcmp.ge.f32.partialorder %v3469, 0.0
  %vm3666 = vcmp.ge.f32.partialorder %v3470, 0.0
  %vm3667 = vcmp.ge.f32.partialorder %v3471, 0.0
  %vm3668 = vcmp.ge.f32.partialorder %v3472, 0.0
  %vm3669 = vcmp.ge.f32.partialorder %v3473, 0.0
  %vm3670 = vcmp.ge.f32.partialorder %v3474, 0.0
  %vm3671 = vcmp.ge.f32.partialorder %v3475, 0.0
  %vm3672 = vcmp.ge.f32.partialorder %v3476, 0.0
  %v3673 = vmul.f32 %v3281, 0.2
  %v3674 = vmul.f32 %v3282, 0.2
  %v3675 = vmul.f32 %v3283, 0.2
  %v3676 = vmul.f32 %v3284, 0.2
  %v3677 = vmul.f32 %v3285, 0.2
  %v3678 = vmul.f32 %v3286, 0.2
  %v3679 = vmul.f32 %v3287, 0.2
  %v3680 = vmul.f32 %v3288, 0.2
  %v3681 = vmul.f32 %v3289, 0.2
  %v3682 = vmul.f32 %v3290, 0.2
  %v3683 = vmul.f32 %v3291, 0.2
  %v3684 = vmul.f32 %v3292, 0.2
  %v3685 = vmul.f32 %v3293, 0.2
  %v3686 = vmul.f32 %v3294, 0.2
  %v3687 = vmul.f32 %v3295, 0.2
  %v3688 = vmul.f32 %v3296, 0.2
  %v3689 = vmul.f32 %v3297, 0.2
  %v3690 = vmul.f32 %v3298, 0.2
  %v3691 = vmul.f32 %v3299, 0.2
  %v3692 = vmul.f32 %v3300, 0.2
  %v3693 = vmul.f32 %v3301, 0.2
  %v3694 = vmul.f32 %v3302, 0.2
  %v3695 = vmul.f32 %v3303, 0.2
  %v3696 = vmul.f32 %v3304, 0.2
  %v3697 = vmul.f32 %v3305, 0.2
  %v3698 = vmul.f32 %v3306, 0.2
  %v3699 = vmul.f32 %v3307, 0.2
  %v3700 = vmul.f32 %v3308, 0.2
  %v3701 = vmul.f32 %v3309, 0.2
  %v3702 = vmul.f32 %v3310, 0.2
  %v3703 = vmul.f32 %v3311, 0.2
  %v3704 = vmul.f32 %v3312, 0.2
  %v3705 = vmul.f32 %v3313, 0.2
  %v3706 = vmul.f32 %v3314, 0.2
  %v3707 = vmul.f32 %v3315, 0.2
  %v3708 = vmul.f32 %v3316, 0.2
  %v3709 = vmul.f32 %v3317, 0.2
  %v3710 = vmul.f32 %v3318, 0.2
  %v3711 = vmul.f32 %v3319, 0.2
  %v3712 = vmul.f32 %v3320, 0.2
  %v3713 = vmul.f32 %v3321, 0.2
  %v3714 = vmul.f32 %v3322, 0.2
  %v3715 = vmul.f32 %v3323, 0.2
  %v3716 = vmul.f32 %v3324, 0.2
  %v3717 = vmul.f32 %v3325, 0.2
  %v3718 = vmul.f32 %v3326, 0.2
  %v3719 = vmul.f32 %v3327, 0.2
  %v3720 = vmul.f32 %v3328, 0.2
  %v3721 = vmul.f32 %v3329, 0.2
  %v3722 = vmul.f32 %v3330, 0.2
  %v3723 = vmul.f32 %v3331, 0.2
  %v3724 = vmul.f32 %v3332, 0.2
  %v3725 = vmul.f32 %v3333, 0.2
  %v3726 = vmul.f32 %v3334, 0.2
  %v3727 = vmul.f32 %v3335, 0.2
  %v3728 = vmul.f32 %v3336, 0.2
  %v3729 = vmul.f32 %v3337, 0.2
  %v3730 = vmul.f32 %v3338, 0.2
  %v3731 = vmul.f32 %v3339, 0.2
  %v3732 = vmul.f32 %v3340, 0.2
  %v3733 = vmul.f32 %v3341, 0.2
  %v3734 = vmul.f32 %v3342, 0.2
  %v3735 = vmul.f32 %v3343, 0.2
  %v3736 = vmul.f32 %v3344, 0.2
  %v3737 = vmul.f32 %v3345, 0.2
  %v3738 = vmul.f32 %v3346, 0.2
  %v3739 = vmul.f32 %v3347, 0.2
  %v3740 = vmul.f32 %v3348, 0.2
  %v3741 = vmul.f32 %v3349, 0.2
  %v3742 = vmul.f32 %v3350, 0.2
  %v3743 = vmul.f32 %v3351, 0.2
  %v3744 = vmul.f32 %v3352, 0.2
  %v3745 = vmul.f32 %v3353, 0.2
  %v3746 = vmul.f32 %v3354, 0.2
  %v3747 = vmul.f32 %v3355, 0.2
  %v3748 = vmul.f32 %v3356, 0.2
  %v3749 = vmul.f32 %v3357, 0.2
  %v3750 = vmul.f32 %v3358, 0.2
  %v3751 = vmul.f32 %v3359, 0.2
  %v3752 = vmul.f32 %v3360, 0.2
  %v3753 = vmul.f32 %v3361, 0.2
  %v3754 = vmul.f32 %v3362, 0.2
  %v3755 = vmul.f32 %v3363, 0.2
  %v3756 = vmul.f32 %v3364, 0.2
  %v3757 = vmul.f32 %v3365, 0.2
  %v3758 = vmul.f32 %v3366, 0.2
  %v3759 = vmul.f32 %v3367, 0.2
  %v3760 = vmul.f32 %v3368, 0.2
  %v3761 = vmul.f32 %v3369, 0.2
  %v3762 = vmul.f32 %v3370, 0.2
  %v3763 = vmul.f32 %v3371, 0.2
  %v3764 = vmul.f32 %v3372, 0.2
  %v3765 = vmul.f32 %v3373, 0.2
  %v3766 = vmul.f32 %v3374, 0.2
  %v3767 = vmul.f32 %v3375, 0.2
  %v3768 = vmul.f32 %v3376, 0.2
  %v3769 = vmul.f32 %v3377, 0.2
  %v3770 = vmul.f32 %v3378, 0.2
  %v3771 = vmul.f32 %v3379, 0.2
  %v3772 = vmul.f32 %v3380, 0.2
  %v3773 = vmul.f32 %v3381, 0.2
  %v3774 = vmul.f32 %v3382, 0.2
  %v3775 = vmul.f32 %v3383, 0.2
  %v3776 = vmul.f32 %v3384, 0.2
  %v3777 = vmul.f32 %v3385, 0.2
  %v3778 = vmul.f32 %v3386, 0.2
  %v3779 = vmul.f32 %v3387, 0.2
  %v3780 = vmul.f32 %v3388, 0.2
  %v3781 = vmul.f32 %v3389, 0.2
  %v3782 = vmul.f32 %v3390, 0.2
  %v3783 = vmul.f32 %v3391, 0.2
  %v3784 = vmul.f32 %v3392, 0.2
  %v3785 = vmul.f32 %v3393, 0.2
  %v3786 = vmul.f32 %v3394, 0.2
  %v3787 = vmul.f32 %v3395, 0.2
  %v3788 = vmul.f32 %v3396, 0.2
  %v3789 = vmul.f32 %v3397, 0.2
  %v3790 = vmul.f32 %v3398, 0.2
  %v3791 = vmul.f32 %v3399, 0.2
  %v3792 = vmul.f32 %v3400, 0.2
  %v3793 = vmul.f32 %v3401, 0.2
  %v3794 = vmul.f32 %v3402, 0.2
  %v3795 = vmul.f32 %v3403, 0.2
  %v3796 = vmul.f32 %v3404, 0.2
  %v3797 = vmul.f32 %v3405, 0.2
  %v3798 = vmul.f32 %v3406, 0.2
  %v3799 = vmul.f32 %v3407, 0.2
  %v3800 = vmul.f32 %v3408, 0.2
  %v3801 = vmul.f32 %v3409, 0.2
  %v3802 = vmul.f32 %v3410, 0.2
  %v3803 = vmul.f32 %v3411, 0.2
  %v3804 = vmul.f32 %v3412, 0.2
  %v3805 = vmul.f32 %v3413, 0.2
  %v3806 = vmul.f32 %v3414, 0.2
  %v3807 = vmul.f32 %v3415, 0.2
  %v3808 = vmul.f32 %v3416, 0.2
  %v3809 = vmul.f32 %v3417, 0.2
  %v3810 = vmul.f32 %v3418, 0.2
  %v3811 = vmul.f32 %v3419, 0.2
  %v3812 = vmul.f32 %v3420, 0.2
  %v3813 = vmul.f32 %v3421, 0.2
  %v3814 = vmul.f32 %v3422, 0.2
  %v3815 = vmul.f32 %v3423, 0.2
  %v3816 = vmul.f32 %v3424, 0.2
  %v3817 = vmul.f32 %v3425, 0.2
  %v3818 = vmul.f32 %v3426, 0.2
  %v3819 = vmul.f32 %v3427, 0.2
  %v3820 = vmul.f32 %v3428, 0.2
  %v3821 = vmul.f32 %v3429, 0.2
  %v3822 = vmul.f32 %v3430, 0.2
  %v3823 = vmul.f32 %v3431, 0.2
  %v3824 = vmul.f32 %v3432, 0.2
  %v3825 = vmul.f32 %v3433, 0.2
  %v3826 = vmul.f32 %v3434, 0.2
  %v3827 = vmul.f32 %v3435, 0.2
  %v3828 = vmul.f32 %v3436, 0.2
  %v3829 = vmul.f32 %v3437, 0.2
  %v3830 = vmul.f32 %v3438, 0.2
  %v3831 = vmul.f32 %v3439, 0.2
  %v3832 = vmul.f32 %v3440, 0.2
  %v3833 = vmul.f32 %v3441, 0.2
  %v3834 = vmul.f32 %v3442, 0.2
  %v3835 = vmul.f32 %v3443, 0.2
  %v3836 = vmul.f32 %v3444, 0.2
  %v3837 = vmul.f32 %v3445, 0.2
  %v3838 = vmul.f32 %v3446, 0.2
  %v3839 = vmul.f32 %v3447, 0.2
  %v3840 = vmul.f32 %v3448, 0.2
  %v3841 = vmul.f32 %v3449, 0.2
  %v3842 = vmul.f32 %v3450, 0.2
  %v3843 = vmul.f32 %v3451, 0.2
  %v3844 = vmul.f32 %v3452, 0.2
  %v3845 = vmul.f32 %v3453, 0.2
  %v3846 = vmul.f32 %v3454, 0.2
  %v3847 = vmul.f32 %v3455, 0.2
  %v3848 = vmul.f32 %v3456, 0.2
  %v3849 = vmul.f32 %v3457, 0.2
  %v3850 = vmul.f32 %v3458, 0.2
  %v3851 = vmul.f32 %v3459, 0.2
  %v3852 = vmul.f32 %v3460, 0.2
  %v3853 = vmul.f32 %v3461, 0.2
  %v3854 = vmul.f32 %v3462, 0.2
  %v3855 = vmul.f32 %v3463, 0.2
  %v3856 = vmul.f32 %v3464, 0.2
  %v3857 = vmul.f32 %v3465, 0.2
  %v3858 = vmul.f32 %v3466, 0.2
  %v3859 = vmul.f32 %v3467, 0.2
  %v3860 = vmul.f32 %v3468, 0.2
  %v3861 = vmul.f32 %v3469, 0.2
  %v3862 = vmul.f32 %v3470, 0.2
  %v3863 = vmul.f32 %v3471, 0.2
  %v3864 = vmul.f32 %v3472, 0.2
  %v3865 = vmul.f32 %v3473, 0.2
  %v3866 = vmul.f32 %v3474, 0.2
  %v3867 = vmul.f32 %v3475, 0.2
  %v3868 = vmul.f32 %v3476, 0.2
  %v3869 = vsel %vm3477, %v3281, %v3673
  %v3870 = vsel %vm3478, %v3282, %v3674
  %v3871 = vsel %vm3479, %v3283, %v3675
  %v3872 = vsel %vm3480, %v3284, %v3676
  %v3873 = vsel %vm3481, %v3285, %v3677
  %v3874 = vsel %vm3482, %v3286, %v3678
  %v3875 = vsel %vm3483, %v3287, %v3679
  %v3876 = vsel %vm3484, %v3288, %v3680
  %v3877 = vsel %vm3485, %v3289, %v3681
  %v3878 = vsel %vm3486, %v3290, %v3682
  %v3879 = vsel %vm3487, %v3291, %v3683
  %v3880 = vsel %vm3488, %v3292, %v3684
  %v3881 = vsel %vm3489, %v3293, %v3685
  %v3882 = vsel %vm3490, %v3294, %v3686
  %v3883 = vsel %vm3491, %v3295, %v3687
  %v3884 = vsel %vm3492, %v3296, %v3688
  %v3885 = vsel %vm3493, %v3297, %v3689
  %v3886 = vsel %vm3494, %v3298, %v3690
  %v3887 = vsel %vm3495, %v3299, %v3691
  %v3888 = vsel %vm3496, %v3300, %v3692
  %v3889 = vsel %vm3497, %v3301, %v3693
  %v3890 = vsel %vm3498, %v3302, %v3694
  %v3891 = vsel %vm3499, %v3303, %v3695
  %v3892 = vsel %vm3500, %v3304, %v3696
  %v3893 = vsel %vm3501, %v3305, %v3697
  %v3894 = vsel %vm3502, %v3306, %v3698
  %v3895 = vsel %vm3503, %v3307, %v3699
  %v3896 = vsel %vm3504, %v3308, %v3700
  %v3897 = vsel %vm3505, %v3309, %v3701
  %v3898 = vsel %vm3506, %v3310, %v3702
  %v3899 = vsel %vm3507, %v3311, %v3703
  %v3900 = vsel %vm3508, %v3312, %v3704
  %v3901 = vsel %vm3509, %v3313, %v3705
  %v3902 = vsel %vm3510, %v3314, %v3706
  %v3903 = vsel %vm3511, %v3315, %v3707
  %v3904 = vsel %vm3512, %v3316, %v3708
  %v3905 = vsel %vm3513, %v3317, %v3709
  %v3906 = vsel %vm3514, %v3318, %v3710
  %v3907 = vsel %vm3515, %v3319, %v3711
  %v3908 = vsel %vm3516, %v3320, %v3712
  %v3909 = vsel %vm3517, %v3321, %v3713
  %v3910 = vsel %vm3518, %v3322, %v3714
  %v3911 = vsel %vm3519, %v3323, %v3715
  %v3912 = vsel %vm3520, %v3324, %v3716
  %v3913 = vsel %vm3521, %v3325, %v3717
  %v3914 = vsel %vm3522, %v3326, %v3718
  %v3915 = vsel %vm3523, %v3327, %v3719
  %v3916 = vsel %vm3524, %v3328, %v3720
  %v3917 = vsel %vm3525, %v3329, %v3721
  %v3918 = vsel %vm3526, %v3330, %v3722
  %v3919 = vsel %vm3527, %v3331, %v3723
  %v3920 = vsel %vm3528, %v3332, %v3724
  %v3921 = vsel %vm3529, %v3333, %v3725
  %v3922 = vsel %vm3530, %v3334, %v3726
  %v3923 = vsel %vm3531, %v3335, %v3727
  %v3924 = vsel %vm3532, %v3336, %v3728
  %v3925 = vsel %vm3533, %v3337, %v3729
  %v3926 = vsel %vm3534, %v3338, %v3730
  %v3927 = vsel %vm3535, %v3339, %v3731
  %v3928 = vsel %vm3536, %v3340, %v3732
  %v3929 = vsel %vm3537, %v3341, %v3733
  %v3930 = vsel %vm3538, %v3342, %v3734
  %v3931 = vsel %vm3539, %v3343, %v3735
  %v3932 = vsel %vm3540, %v3344, %v3736
  %v3933 = vsel %vm3541, %v3345, %v3737
  %v3934 = vsel %vm3542, %v3346, %v3738
  %v3935 = vsel %vm3543, %v3347, %v3739
  %v3936 = vsel %vm3544, %v3348, %v3740
  %v3937 = vsel %vm3545, %v3349, %v3741
  %v3938 = vsel %vm3546, %v3350, %v3742
  %v3939 = vsel %vm3547, %v3351, %v3743
  %v3940 = vsel %vm3548, %v3352, %v3744
  %v3941 = vsel %vm3549, %v3353, %v3745
  %v3942 = vsel %vm3550, %v3354, %v3746
  %v3943 = vsel %vm3551, %v3355, %v3747
  %v3944 = vsel %vm3552, %v3356, %v3748
  %v3945 = vsel %vm3553, %v3357, %v3749
  %v3946 = vsel %vm3554, %v3358, %v3750
  %v3947 = vsel %vm3555, %v3359, %v3751
  %v3948 = vsel %vm3556, %v3360, %v3752
  %v3949 = vsel %vm3557, %v3361, %v3753
  %v3950 = vsel %vm3558, %v3362, %v3754
  %v3951 = vsel %vm3559, %v3363, %v3755
  %v3952 = vsel %vm3560, %v3364, %v3756
  %v3953 = vsel %vm3561, %v3365, %v3757
  %v3954 = vsel %vm3562, %v3366, %v3758
  %v3955 = vsel %vm3563, %v3367, %v3759
  %v3956 = vsel %vm3564, %v3368, %v3760
  %v3957 = vsel %vm3565, %v3369, %v3761
  %v3958 = vsel %vm3566, %v3370, %v3762
  %v3959 = vsel %vm3567, %v3371, %v3763
  %v3960 = vsel %vm3568, %v3372, %v3764
  %v3961 = vsel %vm3569, %v3373, %v3765
  %v3962 = vsel %vm3570, %v3374, %v3766
  %v3963 = vsel %vm3571, %v3375, %v3767
  %v3964 = vsel %vm3572, %v3376, %v3768
  %v3965 = vsel %vm3573, %v3377, %v3769
  %v3966 = vsel %vm3574, %v3378, %v3770
  %v3967 = vsel %vm3575, %v3379, %v3771
  %v3968 = vsel %vm3576, %v3380, %v3772
  %v3969 = vsel %vm3577, %v3381, %v3773
  %v3970 = vsel %vm3578, %v3382, %v3774
  %v3971 = vsel %vm3579, %v3383, %v3775
  %v3972 = vsel %vm3580, %v3384, %v3776
  %v3973 = vsel %vm3581, %v3385, %v3777
  %v3974 = vsel %vm3582, %v3386, %v3778
  %v3975 = vsel %vm3583, %v3387, %v3779
  %v3976 = vsel %vm3584, %v3388, %v3780
  %v3977 = vsel %vm3585, %v3389, %v3781
  %v3978 = vsel %vm3586, %v3390, %v3782
  %v3979 = vsel %vm3587, %v3391, %v3783
  %v3980 = vsel %vm3588, %v3392, %v3784
  %v3981 = vsel %vm3589, %v3393, %v3785
  %v3982 = vsel %vm3590, %v3394, %v3786
  %v3983 = vsel %vm3591, %v3395, %v3787
  %v3984 = vsel %vm3592, %v3396, %v3788
  %v3985 = vsel %vm3593, %v3397, %v3789
  %v3986 = vsel %vm3594, %v3398, %v3790
  %v3987 = vsel %vm3595, %v3399, %v3791
  %v3988 = vsel %vm3596, %v3400, %v3792
  %v3989 = vsel %vm3597, %v3401, %v3793
  %v3990 = vsel %vm3598, %v3402, %v3794
  %v3991 = vsel %vm3599, %v3403, %v3795
  %v3992 = vsel %vm3600, %v3404, %v3796
  %v3993 = vsel %vm3601, %v3405, %v3797
  %v3994 = vsel %vm3602, %v3406, %v3798
  %v3995 = vsel %vm3603, %v3407, %v3799
  %v3996 = vsel %vm3604, %v3408, %v3800
  %v3997 = vsel %vm3605, %v3409, %v3801
  %v3998 = vsel %vm3606, %v3410, %v3802
  %v3999 = vsel %vm3607, %v3411, %v3803
  %v4000 = vsel %vm3608, %v3412, %v3804
  %v4001 = vsel %vm3609, %v3413, %v3805
  %v4002 = vsel %vm3610, %v3414, %v3806
  %v4003 = vsel %vm3611, %v3415, %v3807
  %v4004 = vsel %vm3612, %v3416, %v3808
  %v4005 = vsel %vm3613, %v3417, %v3809
  %v4006 = vsel %vm3614, %v3418, %v3810
  %v4007 = vsel %vm3615, %v3419, %v3811
  %v4008 = vsel %vm3616, %v3420, %v3812
  %v4009 = vsel %vm3617, %v3421, %v3813
  %v4010 = vsel %vm3618, %v3422, %v3814
  %v4011 = vsel %vm3619, %v3423, %v3815
  %v4012 = vsel %vm3620, %v3424, %v3816
  %v4013 = vsel %vm3621, %v3425, %v3817
  %v4014 = vsel %vm3622, %v3426, %v3818
  %v4015 = vsel %vm3623, %v3427, %v3819
  %v4016 = vsel %vm3624, %v3428, %v3820
  %v4017 = vsel %vm3625, %v3429, %v3821
  %v4018 = vsel %vm3626, %v3430, %v3822
  %v4019 = vsel %vm3627, %v3431, %v3823
  %v4020 = vsel %vm3628, %v3432, %v3824
  %v4021 = vsel %vm3629, %v3433, %v3825
  %v4022 = vsel %vm3630, %v3434, %v3826
  %v4023 = vsel %vm3631, %v3435, %v3827
  %v4024 = vsel %vm3632, %v3436, %v3828
  %v4025 = vsel %vm3633, %v3437, %v3829
  %v4026 = vsel %vm3634, %v3438, %v3830
  %v4027 = vsel %vm3635, %v3439, %v3831
  %v4028 = vsel %vm3636, %v3440, %v3832
  %v4029 = vsel %vm3637, %v3441, %v3833
  %v4030 = vsel %vm3638, %v3442, %v3834
  %v4031 = vsel %vm3639, %v3443, %v3835
  %v4032 = vsel %vm3640, %v3444, %v3836
  %v4033 = vsel %vm3641, %v3445, %v3837
  %v4034 = vsel %vm3642, %v3446, %v3838
  %v4035 = vsel %vm3643, %v3447, %v3839
  %v4036 = vsel %vm3644, %v3448, %v3840
  %v4037 = vsel %vm3645, %v3449, %v3841
  %v4038 = vsel %vm3646, %v3450, %v3842
  %v4039 = vsel %vm3647, %v3451, %v3843
  %v4040 = vsel %vm3648, %v3452, %v3844
  %v4041 = vsel %vm3649, %v3453, %v3845
  %v4042 = vsel %vm3650, %v3454, %v3846
  %v4043 = vsel %vm3651, %v3455, %v3847
  %v4044 = vsel %vm3652, %v3456, %v3848
  %v4045 = vsel %vm3653, %v3457, %v3849
  %v4046 = vsel %vm3654, %v3458, %v3850
  %v4047 = vsel %vm3655, %v3459, %v3851
  %v4048 = vsel %vm3656, %v3460, %v3852
  %v4049 = vsel %vm3657, %v3461, %v3853
  %v4050 = vsel %vm3658, %v3462, %v3854
  %v4051 = vsel %vm3659, %v3463, %v3855
  %v4052 = vsel %vm3660, %v3464, %v3856
  %v4053 = vsel %vm3661, %v3465, %v3857
  %v4054 = vsel %vm3662, %v3466, %v3858
  %v4055 = vsel %vm3663, %v3467, %v3859
  %v4056 = vsel %vm3664, %v3468, %v3860
  %v4057 = vsel %vm3665, %v3469, %v3861
  %v4058 = vsel %vm3666, %v3470, %v3862
  %v4059 = vsel %vm3667, %v3471, %v3863
  %v4060 = vsel %vm3668, %v3472, %v3864
  %v4061 = vsel %vm3669, %v3473, %v3865
  %v4062 = vsel %vm3670, %v3474, %v3866
  %v4063 = vsel %vm3671, %v3475, %v3867
  %v4064 = vsel %vm3672, %v3476, %v3868
  %4065 = vst.msk [vmem:[#allocation2] sm:$0xff] %vm241, %v3869
  %4066 = vst.msk [vmem:[#allocation2 + $0x8] sm:$0xff] %vm241, %v3870
  %4067 = vst.msk [vmem:[#allocation2 + $0x10] sm:$0xff] %vm241, %v3871
  %4068 = vst.msk [vmem:[#allocation2 + $0x18] sm:$0xff] %vm241, %v3872
  %4069 = vst.msk [vmem:[#allocation2 + $0x20] sm:$0xff] %vm241, %v3873
  %4070 = vst.msk [vmem:[#allocation2 + $0x28] sm:$0xff] %vm241, %v3874
  %4071 = vst.msk [vmem:[#allocation2 + $0x30] sm:$0xff] %vm241, %v3875
  %4072 = vst.msk [vmem:[#allocation2 + $0x38] sm:$0xff] %vm241, %v3876
  %4073 = vst.msk [vmem:[#allocation2 + $0x40] sm:$0xff] %vm241, %v3877
  %4074 = vst.msk [vmem:[#allocation2 + $0x48] sm:$0xff] %vm241, %v3878
  %4075 = vst.msk [vmem:[#allocation2 + $0x50] sm:$0xff] %vm241, %v3879
  %4076 = vst.msk [vmem:[#allocation2 + $0x58] sm:$0xff] %vm241, %v3880
  %4077 = vst.msk [vmem:[#allocation2 + $0x60] sm:$0xff] %vm241, %v3881
  %4078 = vst.msk [vmem:[#allocation2 + $0x68] sm:$0xff] %vm241, %v3882
  %4079 = vst.msk [vmem:[#allocation2 + $0x70] sm:$0xff] %vm241, %v3883
  %4080 = vst.msk [vmem:[#allocation2 + $0x78] sm:$0xff] %vm241, %v3884
  %4081 = vst.msk [vmem:[#allocation2 + $0x80] sm:$0xff] %vm241, %v3885
  %4082 = vst.msk [vmem:[#allocation2 + $0x88] sm:$0xff] %vm241, %v3886
  %4083 = vst.msk [vmem:[#allocation2 + $0x90] sm:$0xff] %vm241, %v3887
  %4084 = vst.msk [vmem:[#allocation2 + $0x98] sm:$0xff] %vm241, %v3888
  %4085 = vst.msk [vmem:[#allocation2 + $0xa0] sm:$0xff] %vm241, %v3889
  %4086 = vst.msk [vmem:[#allocation2 + $0xa8] sm:$0xff] %vm241, %v3890
  %4087 = vst.msk [vmem:[#allocation2 + $0xb0] sm:$0xff] %vm241, %v3891
  %4088 = vst.msk [vmem:[#allocation2 + $0xb8] sm:$0xff] %vm241, %v3892
  %4089 = vst.msk [vmem:[#allocation2 + $0xc0] sm:$0xff] %vm241, %v3893
  %4090 = vst.msk [vmem:[#allocation2 + $0xc8] sm:$0xff] %vm241, %v3894
  %4091 = vst.msk [vmem:[#allocation2 + $0xd0] sm:$0xff] %vm241, %v3895
  %4092 = vst.msk [vmem:[#allocation2 + $0xd8] sm:$0xff] %vm241, %v3896
  %4093 = vst.msk [vmem:[#allocation2 + $0xe0] sm:$0xff] %vm241, %v3897
  %4094 = vst.msk [vmem:[#allocation2 + $0xe8] sm:$0xff] %vm241, %v3898
  %4095 = vst.msk [vmem:[#allocation2 + $0xf0] sm:$0xff] %vm241, %v3899
  %4096 = vst.msk [vmem:[#allocation2 + $0xf8] sm:$0xff] %vm241, %v3900
  %4097 = vst.msk [vmem:[#allocation2 + $0x100] sm:$0xff] %vm241, %v3901
  %4098 = vst.msk [vmem:[#allocation2 + $0x108] sm:$0xff] %vm241, %v3902
  %4099 = vst.msk [vmem:[#allocation2 + $0x110] sm:$0xff] %vm241, %v3903
  %4100 = vst.msk [vmem:[#allocation2 + $0x118] sm:$0xff] %vm241, %v3904
  %4101 = vst.msk [vmem:[#allocation2 + $0x120] sm:$0xff] %vm241, %v3905
  %4102 = vst.msk [vmem:[#allocation2 + $0x128] sm:$0xff] %vm241, %v3906
  %4103 = vst.msk [vmem:[#allocation2 + $0x130] sm:$0xff] %vm241, %v3907
  %4104 = vst.msk [vmem:[#allocation2 + $0x138] sm:$0xff] %vm241, %v3908
  %4105 = vst.msk [vmem:[#allocation2 + $0x140] sm:$0xff] %vm241, %v3909
  %4106 = vst.msk [vmem:[#allocation2 + $0x148] sm:$0xff] %vm241, %v3910
  %4107 = vst.msk [vmem:[#allocation2 + $0x150] sm:$0xff] %vm241, %v3911
  %4108 = vst.msk [vmem:[#allocation2 + $0x158] sm:$0xff] %vm241, %v3912
  %4109 = vst.msk [vmem:[#allocation2 + $0x160] sm:$0xff] %vm241, %v3913
  %4110 = vst.msk [vmem:[#allocation2 + $0x168] sm:$0xff] %vm241, %v3914
  %4111 = vst.msk [vmem:[#allocation2 + $0x170] sm:$0xff] %vm241, %v3915
  %4112 = vst.msk [vmem:[#allocation2 + $0x178] sm:$0xff] %vm241, %v3916
  %4113 = vst.msk [vmem:[#allocation2 + $0x180] sm:$0xff] %vm241, %v3917
  %4114 = vst.msk [vmem:[#allocation2 + $0x188] sm:$0xff] %vm241, %v3918
  %4115 = vst.msk [vmem:[#allocation2 + $0x190] sm:$0xff] %vm241, %v3919
  %4116 = vst.msk [vmem:[#allocation2 + $0x198] sm:$0xff] %vm241, %v3920
  %4117 = vst.msk [vmem:[#allocation2 + $0x1a0] sm:$0xff] %vm241, %v3921
  %4118 = vst.msk [vmem:[#allocation2 + $0x1a8] sm:$0xff] %vm241, %v3922
  %4119 = vst.msk [vmem:[#allocation2 + $0x1b0] sm:$0xff] %vm241, %v3923
  %4120 = vst.msk [vmem:[#allocation2 + $0x1b8] sm:$0xff] %vm241, %v3924
  %4121 = vst.msk [vmem:[#allocation2 + $0x1c0] sm:$0xff] %vm241, %v3925
  %4122 = vst.msk [vmem:[#allocation2 + $0x1c8] sm:$0xff] %vm241, %v3926
  %4123 = vst.msk [vmem:[#allocation2 + $0x1d0] sm:$0xff] %vm241, %v3927
  %4124 = vst.msk [vmem:[#allocation2 + $0x1d8] sm:$0xff] %vm241, %v3928
  %4125 = vst.msk [vmem:[#allocation2 + $0x1e0] sm:$0xff] %vm241, %v3929
  %4126 = vst.msk [vmem:[#allocation2 + $0x1e8] sm:$0xff] %vm241, %v3930
  %4127 = vst.msk [vmem:[#allocation2 + $0x1f0] sm:$0xff] %vm241, %v3931
  %4128 = vst.msk [vmem:[#allocation2 + $0x1f8] sm:$0xff] %vm241, %v3932
  %4129 = vst.msk [vmem:[#allocation2 + $0x200] sm:$0xff] %vm241, %v3933
  %4130 = vst.msk [vmem:[#allocation2 + $0x208] sm:$0xff] %vm241, %v3934
  %4131 = vst.msk [vmem:[#allocation2 + $0x210] sm:$0xff] %vm241, %v3935
  %4132 = vst.msk [vmem:[#allocation2 + $0x218] sm:$0xff] %vm241, %v3936
  %4133 = vst.msk [vmem:[#allocation2 + $0x220] sm:$0xff] %vm241, %v3937
  %4134 = vst.msk [vmem:[#allocation2 + $0x228] sm:$0xff] %vm241, %v3938
  %4135 = vst.msk [vmem:[#allocation2 + $0x230] sm:$0xff] %vm241, %v3939
  %4136 = vst.msk [vmem:[#allocation2 + $0x238] sm:$0xff] %vm241, %v3940
  %4137 = vst.msk [vmem:[#allocation2 + $0x240] sm:$0xff] %vm241, %v3941
  %4138 = vst.msk [vmem:[#allocation2 + $0x248] sm:$0xff] %vm241, %v3942
  %4139 = vst.msk [vmem:[#allocation2 + $0x250] sm:$0xff] %vm241, %v3943
  %4140 = vst.msk [vmem:[#allocation2 + $0x258] sm:$0xff] %vm241, %v3944
  %4141 = vst.msk [vmem:[#allocation2 + $0x260] sm:$0xff] %vm241, %v3945
  %4142 = vst.msk [vmem:[#allocation2 + $0x268] sm:$0xff] %vm241, %v3946
  %4143 = vst.msk [vmem:[#allocation2 + $0x270] sm:$0xff] %vm241, %v3947
  %4144 = vst.msk [vmem:[#allocation2 + $0x278] sm:$0xff] %vm241, %v3948
  %4145 = vst.msk [vmem:[#allocation2 + $0x280] sm:$0xff] %vm241, %v3949
  %4146 = vst.msk [vmem:[#allocation2 + $0x288] sm:$0xff] %vm241, %v3950
  %4147 = vst.msk [vmem:[#allocation2 + $0x290] sm:$0xff] %vm241, %v3951
  %4148 = vst.msk [vmem:[#allocation2 + $0x298] sm:$0xff] %vm241, %v3952
  %4149 = vst.msk [vmem:[#allocation2 + $0x2a0] sm:$0xff] %vm241, %v3953
  %4150 = vst.msk [vmem:[#allocation2 + $0x2a8] sm:$0xff] %vm241, %v3954
  %4151 = vst.msk [vmem:[#allocation2 + $0x2b0] sm:$0xff] %vm241, %v3955
  %4152 = vst.msk [vmem:[#allocation2 + $0x2b8] sm:$0xff] %vm241, %v3956
  %4153 = vst.msk [vmem:[#allocation2 + $0x2c0] sm:$0xff] %vm241, %v3957
  %4154 = vst.msk [vmem:[#allocation2 + $0x2c8] sm:$0xff] %vm241, %v3958
  %4155 = vst.msk [vmem:[#allocation2 + $0x2d0] sm:$0xff] %vm241, %v3959
  %4156 = vst.msk [vmem:[#allocation2 + $0x2d8] sm:$0xff] %vm241, %v3960
  %4157 = vst.msk [vmem:[#allocation2 + $0x2e0] sm:$0xff] %vm241, %v3961
  %4158 = vst.msk [vmem:[#allocation2 + $0x2e8] sm:$0xff] %vm241, %v3962
  %4159 = vst.msk [vmem:[#allocation2 + $0x2f0] sm:$0xff] %vm241, %v3963
  %4160 = vst.msk [vmem:[#allocation2 + $0x2f8] sm:$0xff] %vm241, %v3964
  %4161 = vst.msk [vmem:[#allocation2 + $0x300] sm:$0xff] %vm241, %v3965
  %4162 = vst.msk [vmem:[#allocation2 + $0x308] sm:$0xff] %vm241, %v3966
  %4163 = vst.msk [vmem:[#allocation2 + $0x310] sm:$0xff] %vm241, %v3967
  %4164 = vst.msk [vmem:[#allocation2 + $0x318] sm:$0xff] %vm241, %v3968
  %4165 = vst.msk [vmem:[#allocation2 + $0x320] sm:$0xff] %vm241, %v3969
  %4166 = vst.msk [vmem:[#allocation2 + $0x328] sm:$0xff] %vm241, %v3970
  %4167 = vst.msk [vmem:[#allocation2 + $0x330] sm:$0xff] %vm241, %v3971
  %4168 = vst.msk [vmem:[#allocation2 + $0x338] sm:$0xff] %vm241, %v3972
  %4169 = vst.msk [vmem:[#allocation2 + $0x340] sm:$0xff] %vm241, %v3973
  %4170 = vst.msk [vmem:[#allocation2 + $0x348] sm:$0xff] %vm241, %v3974
  %4171 = vst.msk [vmem:[#allocation2 + $0x350] sm:$0xff] %vm241, %v3975
  %4172 = vst.msk [vmem:[#allocation2 + $0x358] sm:$0xff] %vm241, %v3976
  %4173 = vst.msk [vmem:[#allocation2 + $0x360] sm:$0xff] %vm241, %v3977
  %4174 = vst.msk [vmem:[#allocation2 + $0x368] sm:$0xff] %vm241, %v3978
  %4175 = vst.msk [vmem:[#allocation2 + $0x370] sm:$0xff] %vm241, %v3979
  %4176 = vst.msk [vmem:[#allocation2 + $0x378] sm:$0xff] %vm241, %v3980
  %4177 = vst.msk [vmem:[#allocation2 + $0x380] sm:$0xff] %vm241, %v3981
  %4178 = vst.msk [vmem:[#allocation2 + $0x388] sm:$0xff] %vm241, %v3982
  %4179 = vst.msk [vmem:[#allocation2 + $0x390] sm:$0xff] %vm241, %v3983
  %4180 = vst.msk [vmem:[#allocation2 + $0x398] sm:$0xff] %vm241, %v3984
  %4181 = vst.msk [vmem:[#allocation2 + $0x3a0] sm:$0xff] %vm241, %v3985
  %4182 = vst.msk [vmem:[#allocation2 + $0x3a8] sm:$0xff] %vm241, %v3986
  %4183 = vst.msk [vmem:[#allocation2 + $0x3b0] sm:$0xff] %vm241, %v3987
  %4184 = vst.msk [vmem:[#allocation2 + $0x3b8] sm:$0xff] %vm241, %v3988
  %4185 = vst.msk [vmem:[#allocation2 + $0x3c0] sm:$0xff] %vm241, %v3989
  %4186 = vst.msk [vmem:[#allocation2 + $0x3c8] sm:$0xff] %vm241, %v3990
  %4187 = vst.msk [vmem:[#allocation2 + $0x3d0] sm:$0xff] %vm241, %v3991
  %4188 = vst.msk [vmem:[#allocation2 + $0x3d8] sm:$0xff] %vm241, %v3992
  %4189 = vst.msk [vmem:[#allocation2 + $0x3e0] sm:$0xff] %vm241, %v3993
  %4190 = vst.msk [vmem:[#allocation2 + $0x3e8] sm:$0xff] %vm241, %v3994
  %4191 = vst.msk [vmem:[#allocation2 + $0x3f0] sm:$0xff] %vm241, %v3995
  %4192 = vst.msk [vmem:[#allocation2 + $0x3f8] sm:$0xff] %vm241, %v3996
  %4193 = vst.msk [vmem:[#allocation2 + $0x400] sm:$0xff] %vm241, %v3997
  %4194 = vst.msk [vmem:[#allocation2 + $0x408] sm:$0xff] %vm241, %v3998
  %4195 = vst.msk [vmem:[#allocation2 + $0x410] sm:$0xff] %vm241, %v3999
  %4196 = vst.msk [vmem:[#allocation2 + $0x418] sm:$0xff] %vm241, %v4000
  %4197 = vst.msk [vmem:[#allocation2 + $0x420] sm:$0xff] %vm241, %v4001
  %4198 = vst.msk [vmem:[#allocation2 + $0x428] sm:$0xff] %vm241, %v4002
  %4199 = vst.msk [vmem:[#allocation2 + $0x430] sm:$0xff] %vm241, %v4003
  %4200 = vst.msk [vmem:[#allocation2 + $0x438] sm:$0xff] %vm241, %v4004
  %4201 = vst.msk [vmem:[#allocation2 + $0x440] sm:$0xff] %vm241, %v4005
  %4202 = vst.msk [vmem:[#allocation2 + $0x448] sm:$0xff] %vm241, %v4006
  %4203 = vst.msk [vmem:[#allocation2 + $0x450] sm:$0xff] %vm241, %v4007
  %4204 = vst.msk [vmem:[#allocation2 + $0x458] sm:$0xff] %vm241, %v4008
  %4205 = vst.msk [vmem:[#allocation2 + $0x460] sm:$0xff] %vm241, %v4009
  %4206 = vst.msk [vmem:[#allocation2 + $0x468] sm:$0xff] %vm241, %v4010
  %4207 = vst.msk [vmem:[#allocation2 + $0x470] sm:$0xff] %vm241, %v4011
  %4208 = vst.msk [vmem:[#allocation2 + $0x478] sm:$0xff] %vm241, %v4012
  %4209 = vst.msk [vmem:[#allocation2 + $0x480] sm:$0xff] %vm241, %v4013
  %4210 = vst.msk [vmem:[#allocation2 + $0x488] sm:$0xff] %vm241, %v4014
  %4211 = vst.msk [vmem:[#allocation2 + $0x490] sm:$0xff] %vm241, %v4015
  %4212 = vst.msk [vmem:[#allocation2 + $0x498] sm:$0xff] %vm241, %v4016
  %4213 = vst.msk [vmem:[#allocation2 + $0x4a0] sm:$0xff] %vm241, %v4017
  %4214 = vst.msk [vmem:[#allocation2 + $0x4a8] sm:$0xff] %vm241, %v4018
  %4215 = vst.msk [vmem:[#allocation2 + $0x4b0] sm:$0xff] %vm241, %v4019
  %4216 = vst.msk [vmem:[#allocation2 + $0x4b8] sm:$0xff] %vm241, %v4020
  %4217 = vst.msk [vmem:[#allocation2 + $0x4c0] sm:$0xff] %vm241, %v4021
  %4218 = vst.msk [vmem:[#allocation2 + $0x4c8] sm:$0xff] %vm241, %v4022
  %4219 = vst.msk [vmem:[#allocation2 + $0x4d0] sm:$0xff] %vm241, %v4023
  %4220 = vst.msk [vmem:[#allocation2 + $0x4d8] sm:$0xff] %vm241, %v4024
  %4221 = vst.msk [vmem:[#allocation2 + $0x4e0] sm:$0xff] %vm241, %v4025
  %4222 = vst.msk [vmem:[#allocation2 + $0x4e8] sm:$0xff] %vm241, %v4026
  %4223 = vst.msk [vmem:[#allocation2 + $0x4f0] sm:$0xff] %vm241, %v4027
  %4224 = vst.msk [vmem:[#allocation2 + $0x4f8] sm:$0xff] %vm241, %v4028
  %4225 = vst.msk [vmem:[#allocation2 + $0x500] sm:$0xff] %vm241, %v4029
  %4226 = vst.msk [vmem:[#allocation2 + $0x508] sm:$0xff] %vm241, %v4030
  %4227 = vst.msk [vmem:[#allocation2 + $0x510] sm:$0xff] %vm241, %v4031
  %4228 = vst.msk [vmem:[#allocation2 + $0x518] sm:$0xff] %vm241, %v4032
  %4229 = vst.msk [vmem:[#allocation2 + $0x520] sm:$0xff] %vm241, %v4033
  %4230 = vst.msk [vmem:[#allocation2 + $0x528] sm:$0xff] %vm241, %v4034
  %4231 = vst.msk [vmem:[#allocation2 + $0x530] sm:$0xff] %vm241, %v4035
  %4232 = vst.msk [vmem:[#allocation2 + $0x538] sm:$0xff] %vm241, %v4036
  %4233 = vst.msk [vmem:[#allocation2 + $0x540] sm:$0xff] %vm241, %v4037
  %4234 = vst.msk [vmem:[#allocation2 + $0x548] sm:$0xff] %vm241, %v4038
  %4235 = vst.msk [vmem:[#allocation2 + $0x550] sm:$0xff] %vm241, %v4039
  %4236 = vst.msk [vmem:[#allocation2 + $0x558] sm:$0xff] %vm241, %v4040
  %4237 = vst.msk [vmem:[#allocation2 + $0x560] sm:$0xff] %vm241, %v4041
  %4238 = vst.msk [vmem:[#allocation2 + $0x568] sm:$0xff] %vm241, %v4042
  %4239 = vst.msk [vmem:[#allocation2 + $0x570] sm:$0xff] %vm241, %v4043
  %4240 = vst.msk [vmem:[#allocation2 + $0x578] sm:$0xff] %vm241, %v4044
  %4241 = vst.msk [vmem:[#allocation2 + $0x580] sm:$0xff] %vm241, %v4045
  %4242 = vst.msk [vmem:[#allocation2 + $0x588] sm:$0xff] %vm241, %v4046
  %4243 = vst.msk [vmem:[#allocation2 + $0x590] sm:$0xff] %vm241, %v4047
  %4244 = vst.msk [vmem:[#allocation2 + $0x598] sm:$0xff] %vm241, %v4048
  %4245 = vst.msk [vmem:[#allocation2 + $0x5a0] sm:$0xff] %vm241, %v4049
  %4246 = vst.msk [vmem:[#allocation2 + $0x5a8] sm:$0xff] %vm241, %v4050
  %4247 = vst.msk [vmem:[#allocation2 + $0x5b0] sm:$0xff] %vm241, %v4051
  %4248 = vst.msk [vmem:[#allocation2 + $0x5b8] sm:$0xff] %vm241, %v4052
  %4249 = vst.msk [vmem:[#allocation2 + $0x5c0] sm:$0xff] %vm241, %v4053
  %4250 = vst.msk [vmem:[#allocation2 + $0x5c8] sm:$0xff] %vm241, %v4054
  %4251 = vst.msk [vmem:[#allocation2 + $0x5d0] sm:$0xff] %vm241, %v4055
  %4252 = vst.msk [vmem:[#allocation2 + $0x5d8] sm:$0xff] %vm241, %v4056
  %4253 = vst.msk [vmem:[#allocation2 + $0x5e0] sm:$0xff] %vm241, %v4057
  %4254 = vst.msk [vmem:[#allocation2 + $0x5e8] sm:$0xff] %vm241, %v4058
  %4255 = vst.msk [vmem:[#allocation2 + $0x5f0] sm:$0xff] %vm241, %v4059
  %4256 = vst.msk [vmem:[#allocation2 + $0x5f8] sm:$0xff] %vm241, %v4060
  %4257 = vst.msk [vmem:[#allocation2 + $0x600] sm:$0xff] %vm241, %v4061
  %4258 = vst.msk [vmem:[#allocation2 + $0x608] sm:$0xff] %vm241, %v4062
  %4259 = vst.msk [vmem:[#allocation2 + $0x610] sm:$0xff] %vm241, %v4063
  %4260 = vst.msk [vmem:[#allocation2 + $0x618] sm:$0xff] %vm241, %v4064
  %v4261 = vld [vmem:[#allocation2] sm:$0xff]
  %v4262 = vld [vmem:[#allocation2 + $0x8] sm:$0xff]
  %v4263 = vld [vmem:[#allocation2 + $0x10] sm:$0xff]
  %v4264 = vld [vmem:[#allocation2 + $0x18] sm:$0xff]
  %v4265 = vld [vmem:[#allocation2 + $0x20] sm:$0xff]
  %4266 = vst.msk [vmem:[#allocation3] sm:$0xff] %vm241, %v4261
  %4267 = vst.msk [vmem:[#allocation3 + $0x20] sm:$0xff] %vm241, %v4262
  %4268 = vst.msk [vmem:[#allocation3 + $0x40] sm:$0xff] %vm241, %v4263
  %4269 = vst.msk [vmem:[#allocation3 + $0x60] sm:$0xff] %vm241, %v4264
  %4270 = vst.msk [vmem:[#allocation3 + $0x80] sm:$0xff] %vm241, %v4265
  %v4271 = vld [vmem:[#allocation2 + $0x38] sm:$0xff]
  %v4272 = vld [vmem:[#allocation2 + $0x40] sm:$0xff]
  %v4273 = vld [vmem:[#allocation2 + $0x48] sm:$0xff]
  %v4274 = vld [vmem:[#allocation2 + $0x50] sm:$0xff]
  %v4275 = vld [vmem:[#allocation2 + $0x58] sm:$0xff]
  %4276 = vst.msk [vmem:[#allocation3 + $0xa0] sm:$0xff] %vm241, %v4271
  %4277 = vst.msk [vmem:[#allocation3 + $0xc0] sm:$0xff] %vm241, %v4272
  %4278 = vst.msk [vmem:[#allocation3 + $0xe0] sm:$0xff] %vm241, %v4273
  %4279 = vst.msk [vmem:[#allocation3 + $0x100] sm:$0xff] %vm241, %v4274
  %4280 = vst.msk [vmem:[#allocation3 + $0x120] sm:$0xff] %vm241, %v4275
  %v4281 = vld [vmem:[#allocation2 + $0x70] sm:$0xff]
  %v4282 = vld [vmem:[#allocation2 + $0x78] sm:$0xff]
  %v4283 = vld [vmem:[#allocation2 + $0x80] sm:$0xff]
  %v4284 = vld [vmem:[#allocation2 + $0x88] sm:$0xff]
  %v4285 = vld [vmem:[#allocation2 + $0x90] sm:$0xff]
  %4286 = vst.msk [vmem:[#allocation3 + $0x140] sm:$0xff] %vm241, %v4281
  %4287 = vst.msk [vmem:[#allocation3 + $0x160] sm:$0xff] %vm241, %v4282
  %4288 = vst.msk [vmem:[#allocation3 + $0x180] sm:$0xff] %vm241, %v4283
  %4289 = vst.msk [vmem:[#allocation3 + $0x1a0] sm:$0xff] %vm241, %v4284
  %4290 = vst.msk [vmem:[#allocation3 + $0x1c0] sm:$0xff] %vm241, %v4285
  %v4291 = vld [vmem:[#allocation2 + $0xa8] sm:$0xff]
  %v4292 = vld [vmem:[#allocation2 + $0xb0] sm:$0xff]
  %v4293 = vld [vmem:[#allocation2 + $0xb8] sm:$0xff]
  %v4294 = vld [vmem:[#allocation2 + $0xc0] sm:$0xff]
  %v4295 = vld [vmem:[#allocation2 + $0xc8] sm:$0xff]
  %4296 = vst.msk [vmem:[#allocation3 + $0x1e0] sm:$0xff] %vm241, %v4291
  %4297 = vst.msk [vmem:[#allocation3 + $0x200] sm:$0xff] %vm241, %v4292
  %4298 = vst.msk [vmem:[#allocation3 + $0x220] sm:$0xff] %vm241, %v4293
  %4299 = vst.msk [vmem:[#allocation3 + $0x240] sm:$0xff] %vm241, %v4294
  %4300 = vst.msk [vmem:[#allocation3 + $0x260] sm:$0xff] %vm241, %v4295
  %v4301 = vld [vmem:[#allocation2 + $0xe0] sm:$0xff]
  %v4302 = vld [vmem:[#allocation2 + $0xe8] sm:$0xff]
  %v4303 = vld [vmem:[#allocation2 + $0xf0] sm:$0xff]
  %v4304 = vld [vmem:[#allocation2 + $0xf8] sm:$0xff]
  %v4305 = vld [vmem:[#allocation2 + $0x100] sm:$0xff]
  %4306 = vst.msk [vmem:[#allocation3 + $0x280] sm:$0xff] %vm241, %v4301
  %4307 = vst.msk [vmem:[#allocation3 + $0x2a0] sm:$0xff] %vm241, %v4302
  %4308 = vst.msk [vmem:[#allocation3 + $0x2c0] sm:$0xff] %vm241, %v4303
  %4309 = vst.msk [vmem:[#allocation3 + $0x2e0] sm:$0xff] %vm241, %v4304
  %4310 = vst.msk [vmem:[#allocation3 + $0x300] sm:$0xff] %vm241, %v4305
  %v4311 = vld [vmem:[#allocation2 + $0x188] sm:$0xff]
  %v4312 = vld [vmem:[#allocation2 + $0x190] sm:$0xff]
  %v4313 = vld [vmem:[#allocation2 + $0x198] sm:$0xff]
  %v4314 = vld [vmem:[#allocation2 + $0x1a0] sm:$0xff]
  %v4315 = vld [vmem:[#allocation2 + $0x1a8] sm:$0xff]
  %4321 = vrot.lane.b32.xlu0 %v4311, 16
  %v4322 = vpop.permute.xlu0 %4321
  %4323 = vrot.lane.b32.xlu0 %v4312, 16
  %v4324 = vpop.permute.xlu0 %4323
  %4325 = vrot.lane.b32.xlu0 %v4313, 16
  %v4326 = vpop.permute.xlu0 %4325
  %4327 = vrot.lane.b32.xlu0 %v4314, 16
  %v4328 = vpop.permute.xlu0 %4327
  %4329 = vrot.lane.b32.xlu0 %v4315, 16
  %v4330 = vpop.permute.xlu0 %4329
  %vm4336 = vcmask 261248
  %4337 = vst.msk [vmem:[#allocation3] sm:$0xff] %vm4336, %v4322
  %4338 = vst.msk [vmem:[#allocation3 + $0x20] sm:$0xff] %vm4336, %v4324
  %4339 = vst.msk [vmem:[#allocation3 + $0x40] sm:$0xff] %vm4336, %v4326
  %4340 = vst.msk [vmem:[#allocation3 + $0x60] sm:$0xff] %vm4336, %v4328
  %4341 = vst.msk [vmem:[#allocation3 + $0x80] sm:$0xff] %vm4336, %v4330
  %v4342 = vld [vmem:[#allocation2 + $0x1c0] sm:$0xff]
  %v4343 = vld [vmem:[#allocation2 + $0x1c8] sm:$0xff]
  %v4344 = vld [vmem:[#allocation2 + $0x1d0] sm:$0xff]
  %v4345 = vld [vmem:[#allocation2 + $0x1d8] sm:$0xff]
  %v4346 = vld [vmem:[#allocation2 + $0x1e0] sm:$0xff]
  %4352 = vrot.lane.b32.xlu0 %v4342, 16
  %v4353 = vpop.permute.xlu0 %4352
  %4354 = vrot.lane.b32.xlu0 %v4343, 16
  %v4355 = vpop.permute.xlu0 %4354
  %4356 = vrot.lane.b32.xlu0 %v4344, 16
  %v4357 = vpop.permute.xlu0 %4356
  %4358 = vrot.lane.b32.xlu0 %v4345, 16
  %v4359 = vpop.permute.xlu0 %4358
  %4360 = vrot.lane.b32.xlu0 %v4346, 16
  %v4361 = vpop.permute.xlu0 %4360
  %4367 = vst.msk [vmem:[#allocation3 + $0xa0] sm:$0xff] %vm4336, %v4353
  %4368 = vst.msk [vmem:[#allocation3 + $0xc0] sm:$0xff] %vm4336, %v4355
  %4369 = vst.msk [vmem:[#allocation3 + $0xe0] sm:$0xff] %vm4336, %v4357
  %4370 = vst.msk [vmem:[#allocation3 + $0x100] sm:$0xff] %vm4336, %v4359
  %4371 = vst.msk [vmem:[#allocation3 + $0x120] sm:$0xff] %vm4336, %v4361
  %v4372 = vld [vmem:[#allocation2 + $0x1f8] sm:$0xff]
  %v4373 = vld [vmem:[#allocation2 + $0x200] sm:$0xff]
  %v4374 = vld [vmem:[#allocation2 + $0x208] sm:$0xff]
  %v4375 = vld [vmem:[#allocation2 + $0x210] sm:$0xff]
  %v4376 = vld [vmem:[#allocation2 + $0x218] sm:$0xff]
  %4382 = vrot.lane.b32.xlu0 %v4372, 16
  %v4383 = vpop.permute.xlu0 %4382
  %4384 = vrot.lane.b32.xlu0 %v4373, 16
  %v4385 = vpop.permute.xlu0 %4384
  %4386 = vrot.lane.b32.xlu0 %v4374, 16
  %v4387 = vpop.permute.xlu0 %4386
  %4388 = vrot.lane.b32.xlu0 %v4375, 16
  %v4389 = vpop.permute.xlu0 %4388
  %4390 = vrot.lane.b32.xlu0 %v4376, 16
  %v4391 = vpop.permute.xlu0 %4390
  %4397 = vst.msk [vmem:[#allocation3 + $0x140] sm:$0xff] %vm4336, %v4383
  %4398 = vst.msk [vmem:[#allocation3 + $0x160] sm:$0xff] %vm4336, %v4385
  %4399 = vst.msk [vmem:[#allocation3 + $0x180] sm:$0xff] %vm4336, %v4387
  %4400 = vst.msk [vmem:[#allocation3 + $0x1a0] sm:$0xff] %vm4336, %v4389
  %4401 = vst.msk [vmem:[#allocation3 + $0x1c0] sm:$0xff] %vm4336, %v4391
  %v4402 = vld [vmem:[#allocation2 + $0x230] sm:$0xff]
  %v4403 = vld [vmem:[#allocation2 + $0x238] sm:$0xff]
  %v4404 = vld [vmem:[#allocation2 + $0x240] sm:$0xff]
  %v4405 = vld [vmem:[#allocation2 + $0x248] sm:$0xff]
  %v4406 = vld [vmem:[#allocation2 + $0x250] sm:$0xff]
  %4412 = vrot.lane.b32.xlu0 %v4402, 16
  %v4413 = vpop.permute.xlu0 %4412
  %4414 = vrot.lane.b32.xlu0 %v4403, 16
  %v4415 = vpop.permute.xlu0 %4414
  %4416 = vrot.lane.b32.xlu0 %v4404, 16
  %v4417 = vpop.permute.xlu0 %4416
  %4418 = vrot.lane.b32.xlu0 %v4405, 16
  %v4419 = vpop.permute.xlu0 %4418
  %4420 = vrot.lane.b32.xlu0 %v4406, 16
  %v4421 = vpop.permute.xlu0 %4420
  %4427 = vst.msk [vmem:[#allocation3 + $0x1e0] sm:$0xff] %vm4336, %v4413
  %4428 = vst.msk [vmem:[#allocation3 + $0x200] sm:$0xff] %vm4336, %v4415
  %4429 = vst.msk [vmem:[#allocation3 + $0x220] sm:$0xff] %vm4336, %v4417
  %4430 = vst.msk [vmem:[#allocation3 + $0x240] sm:$0xff] %vm4336, %v4419
  %4431 = vst.msk [vmem:[#allocation3 + $0x260] sm:$0xff] %vm4336, %v4421
  %v4432 = vld [vmem:[#allocation2 + $0x268] sm:$0xff]
  %v4433 = vld [vmem:[#allocation2 + $0x270] sm:$0xff]
  %v4434 = vld [vmem:[#allocation2 + $0x278] sm:$0xff]
  %v4435 = vld [vmem:[#allocation2 + $0x280] sm:$0xff]
  %v4436 = vld [vmem:[#allocation2 + $0x288] sm:$0xff]
  %4442 = vrot.lane.b32.xlu0 %v4432, 16
  %v4443 = vpop.permute.xlu0 %4442
  %4444 = vrot.lane.b32.xlu0 %v4433, 16
  %v4445 = vpop.permute.xlu0 %4444
  %4446 = vrot.lane.b32.xlu0 %v4434, 16
  %v4447 = vpop.permute.xlu0 %4446
  %4448 = vrot.lane.b32.xlu0 %v4435, 16
  %v4449 = vpop.permute.xlu0 %4448
  %4450 = vrot.lane.b32.xlu0 %v4436, 16
  %v4451 = vpop.permute.xlu0 %4450
  %4457 = vst.msk [vmem:[#allocation3 + $0x280] sm:$0xff] %vm4336, %v4443
  %4458 = vst.msk [vmem:[#allocation3 + $0x2a0] sm:$0xff] %vm4336, %v4445
  %4459 = vst.msk [vmem:[#allocation3 + $0x2c0] sm:$0xff] %vm4336, %v4447
  %4460 = vst.msk [vmem:[#allocation3 + $0x2e0] sm:$0xff] %vm4336, %v4449
  %4461 = vst.msk [vmem:[#allocation3 + $0x300] sm:$0xff] %vm4336, %v4451
  %v4462 = vld [vmem:[#allocation2 + $0x8] sm:$0xff]
  %v4463 = vld [vmem:[#allocation2 + $0x10] sm:$0xff]
  %v4464 = vld [vmem:[#allocation2 + $0x18] sm:$0xff]
  %v4465 = vld [vmem:[#allocation2 + $0x20] sm:$0xff]
  %v4466 = vld [vmem:[#allocation2 + $0x28] sm:$0xff]
  %4472 = vrot.lane.b32.xlu0 %v4462, 32
  %v4473 = vpop.permute.xlu0 %4472
  %4474 = vrot.lane.b32.xlu0 %v4463, 32
  %v4475 = vpop.permute.xlu0 %4474
  %4476 = vrot.lane.b32.xlu0 %v4464, 32
  %v4477 = vpop.permute.xlu0 %4476
  %4478 = vrot.lane.b32.xlu0 %v4465, 32
  %v4479 = vpop.permute.xlu0 %4478
  %4480 = vrot.lane.b32.xlu0 %v4466, 32
  %v4481 = vpop.permute.xlu0 %4480
  %vm4487 = vcmask 392448
  %4488 = vst.msk [vmem:[#allocation3] sm:$0xff] %vm4487, %v4473
  %4489 = vst.msk [vmem:[#allocation3 + $0x20] sm:$0xff] %vm4487, %v4475
  %4490 = vst.msk [vmem:[#allocation3 + $0x40] sm:$0xff] %vm4487, %v4477
  %4491 = vst.msk [vmem:[#allocation3 + $0x60] sm:$0xff] %vm4487, %v4479
  %4492 = vst.msk [vmem:[#allocation3 + $0x80] sm:$0xff] %vm4487, %v4481
  %v4493 = vld [vmem:[#allocation2 + $0x40] sm:$0xff]
  %v4494 = vld [vmem:[#allocation2 + $0x48] sm:$0xff]
  %v4495 = vld [vmem:[#allocation2 + $0x50] sm:$0xff]
  %v4496 = vld [vmem:[#allocation2 + $0x58] sm:$0xff]
  %v4497 = vld [vmem:[#allocation2 + $0x60] sm:$0xff]
  %4503 = vrot.lane.b32.xlu0 %v4493, 32
  %v4504 = vpop.permute.xlu0 %4503
  %4505 = vrot.lane.b32.xlu0 %v4494, 32
  %v4506 = vpop.permute.xlu0 %4505
  %4507 = vrot.lane.b32.xlu0 %v4495, 32
  %v4508 = vpop.permute.xlu0 %4507
  %4509 = vrot.lane.b32.xlu0 %v4496, 32
  %v4510 = vpop.permute.xlu0 %4509
  %4511 = vrot.lane.b32.xlu0 %v4497, 32
  %v4512 = vpop.permute.xlu0 %4511
  %4518 = vst.msk [vmem:[#allocation3 + $0xa0] sm:$0xff] %vm4487, %v4504
  %4519 = vst.msk [vmem:[#allocation3 + $0xc0] sm:$0xff] %vm4487, %v4506
  %4520 = vst.msk [vmem:[#allocation3 + $0xe0] sm:$0xff] %vm4487, %v4508
  %4521 = vst.msk [vmem:[#allocation3 + $0x100] sm:$0xff] %vm4487, %v4510
  %4522 = vst.msk [vmem:[#allocation3 + $0x120] sm:$0xff] %vm4487, %v4512
  %v4523 = vld [vmem:[#allocation2 + $0x78] sm:$0xff]
  %v4524 = vld [vmem:[#allocation2 + $0x80] sm:$0xff]
  %v4525 = vld [vmem:[#allocation2 + $0x88] sm:$0xff]
  %v4526 = vld [vmem:[#allocation2 + $0x90] sm:$0xff]
  %v4527 = vld [vmem:[#allocation2 + $0x98] sm:$0xff]
  %4533 = vrot.lane.b32.xlu0 %v4523, 32
  %v4534 = vpop.permute.xlu0 %4533
  %4535 = vrot.lane.b32.xlu0 %v4524, 32
  %v4536 = vpop.permute.xlu0 %4535
  %4537 = vrot.lane.b32.xlu0 %v4525, 32
  %v4538 = vpop.permute.xlu0 %4537
  %4539 = vrot.lane.b32.xlu0 %v4526, 32
  %v4540 = vpop.permute.xlu0 %4539
  %4541 = vrot.lane.b32.xlu0 %v4527, 32
  %v4542 = vpop.permute.xlu0 %4541
  %4548 = vst.msk [vmem:[#allocation3 + $0x140] sm:$0xff] %vm4487, %v4534
  %4549 = vst.msk [vmem:[#allocation3 + $0x160] sm:$0xff] %vm4487, %v4536
  %4550 = vst.msk [vmem:[#allocation3 + $0x180] sm:$0xff] %vm4487, %v4538
  %4551 = vst.msk [vmem:[#allocation3 + $0x1a0] sm:$0xff] %vm4487, %v4540
  %4552 = vst.msk [vmem:[#allocation3 + $0x1c0] sm:$0xff] %vm4487, %v4542
  %v4553 = vld [vmem:[#allocation2 + $0xb0] sm:$0xff]
  %v4554 = vld [vmem:[#allocation2 + $0xb8] sm:$0xff]
  %v4555 = vld [vmem:[#allocation2 + $0xc0] sm:$0xff]
  %v4556 = vld [vmem:[#allocation2 + $0xc8] sm:$0xff]
  %v4557 = vld [vmem:[#allocation2 + $0xd0] sm:$0xff]
  %4563 = vrot.lane.b32.xlu0 %v4553, 32
  %v4564 = vpop.permute.xlu0 %4563
  %4565 = vrot.lane.b32.xlu0 %v4554, 32
  %v4566 = vpop.permute.xlu0 %4565
  %4567 = vrot.lane.b32.xlu0 %v4555, 32
  %v4568 = vpop.permute.xlu0 %4567
  %4569 = vrot.lane.b32.xlu0 %v4556, 32
  %v4570 = vpop.permute.xlu0 %4569
  %4571 = vrot.lane.b32.xlu0 %v4557, 32
  %v4572 = vpop.permute.xlu0 %4571
  %4578 = vst.msk [vmem:[#allocation3 + $0x1e0] sm:$0xff] %vm4487, %v4564
  %4579 = vst.msk [vmem:[#allocation3 + $0x200] sm:$0xff] %vm4487, %v4566
  %4580 = vst.msk [vmem:[#allocation3 + $0x220] sm:$0xff] %vm4487, %v4568
  %4581 = vst.msk [vmem:[#allocation3 + $0x240] sm:$0xff] %vm4487, %v4570
  %4582 = vst.msk [vmem:[#allocation3 + $0x260] sm:$0xff] %vm4487, %v4572
  %v4583 = vld [vmem:[#allocation2 + $0xe8] sm:$0xff]
  %v4584 = vld [vmem:[#allocation2 + $0xf0] sm:$0xff]
  %v4585 = vld [vmem:[#allocation2 + $0xf8] sm:$0xff]
  %v4586 = vld [vmem:[#allocation2 + $0x100] sm:$0xff]
  %v4587 = vld [vmem:[#allocation2 + $0x108] sm:$0xff]
  %4593 = vrot.lane.b32.xlu0 %v4583, 32
  %v4594 = vpop.permute.xlu0 %4593
  %4595 = vrot.lane.b32.xlu0 %v4584, 32
  %v4596 = vpop.permute.xlu0 %4595
  %4597 = vrot.lane.b32.xlu0 %v4585, 32
  %v4598 = vpop.permute.xlu0 %4597
  %4599 = vrot.lane.b32.xlu0 %v4586, 32
  %v4600 = vpop.permute.xlu0 %4599
  %4601 = vrot.lane.b32.xlu0 %v4587, 32
  %v4602 = vpop.permute.xlu0 %4601
  %4608 = vst.msk [vmem:[#allocation3 + $0x280] sm:$0xff] %vm4487, %v4594
  %4609 = vst.msk [vmem:[#allocation3 + $0x2a0] sm:$0xff] %vm4487, %v4596
  %4610 = vst.msk [vmem:[#allocation3 + $0x2c0] sm:$0xff] %vm4487, %v4598
  %4611 = vst.msk [vmem:[#allocation3 + $0x2e0] sm:$0xff] %vm4487, %v4600
  %4612 = vst.msk [vmem:[#allocation3 + $0x300] sm:$0xff] %vm4487, %v4602
  %v4613 = vld [vmem:[#allocation2 + $0x190] sm:$0xff]
  %v4614 = vld [vmem:[#allocation2 + $0x198] sm:$0xff]
  %v4615 = vld [vmem:[#allocation2 + $0x1a0] sm:$0xff]
  %v4616 = vld [vmem:[#allocation2 + $0x1a8] sm:$0xff]
  %v4617 = vld [vmem:[#allocation2 + $0x1b0] sm:$0xff]
  %4623 = vrot.lane.b32.xlu0 %v4613, 48
  %v4624 = vpop.permute.xlu0 %4623
  %4625 = vrot.lane.b32.xlu0 %v4614, 48
  %v4626 = vpop.permute.xlu0 %4625
  %4627 = vrot.lane.b32.xlu0 %v4615, 48
  %v4628 = vpop.permute.xlu0 %4627
  %4629 = vrot.lane.b32.xlu0 %v4616, 48
  %v4630 = vpop.permute.xlu0 %4629
  %4631 = vrot.lane.b32.xlu0 %v4617, 48
  %v4632 = vpop.permute.xlu0 %4631
  %vm4638 = vcmask 523648
  %4639 = vst.msk [vmem:[#allocation3] sm:$0xff] %vm4638, %v4624
  %4640 = vst.msk [vmem:[#allocation3 + $0x20] sm:$0xff] %vm4638, %v4626
  %4641 = vst.msk [vmem:[#allocation3 + $0x40] sm:$0xff] %vm4638, %v4628
  %4642 = vst.msk [vmem:[#allocation3 + $0x60] sm:$0xff] %vm4638, %v4630
  %4643 = vst.msk [vmem:[#allocation3 + $0x80] sm:$0xff] %vm4638, %v4632
  %v4644 = vld [vmem:[#allocation2 + $0x1c8] sm:$0xff]
  %v4645 = vld [vmem:[#allocation2 + $0x1d0] sm:$0xff]
  %v4646 = vld [vmem:[#allocation2 + $0x1d8] sm:$0xff]
  %v4647 = vld [vmem:[#allocation2 + $0x1e0] sm:$0xff]
  %v4648 = vld [vmem:[#allocation2 + $0x1e8] sm:$0xff]
  %4654 = vrot.lane.b32.xlu0 %v4644, 48
  %v4655 = vpop.permute.xlu0 %4654
  %4656 = vrot.lane.b32.xlu0 %v4645, 48
  %v4657 = vpop.permute.xlu0 %4656
  %4658 = vrot.lane.b32.xlu0 %v4646, 48
  %v4659 = vpop.permute.xlu0 %4658
  %4660 = vrot.lane.b32.xlu0 %v4647, 48
  %v4661 = vpop.permute.xlu0 %4660
  %4662 = vrot.lane.b32.xlu0 %v4648, 48
  %v4663 = vpop.permute.xlu0 %4662
  %4669 = vst.msk [vmem:[#allocation3 + $0xa0] sm:$0xff] %vm4638, %v4655
  %4670 = vst.msk [vmem:[#allocation3 + $0xc0] sm:$0xff] %vm4638, %v4657
  %4671 = vst.msk [vmem:[#allocation3 + $0xe0] sm:$0xff] %vm4638, %v4659
  %4672 = vst.msk [vmem:[#allocation3 + $0x100] sm:$0xff] %vm4638, %v4661
  %4673 = vst.msk [vmem:[#allocation3 + $0x120] sm:$0xff] %vm4638, %v4663
  %v4674 = vld [vmem:[#allocation2 + $0x200] sm:$0xff]
  %v4675 = vld [vmem:[#allocation2 + $0x208] sm:$0xff]
  %v4676 = vld [vmem:[#allocation2 + $0x210] sm:$0xff]
  %v4677 = vld [vmem:[#allocation2 + $0x218] sm:$0xff]
  %v4678 = vld [vmem:[#allocation2 + $0x220] sm:$0xff]
  %4684 = vrot.lane.b32.xlu0 %v4674, 48
  %v4685 = vpop.permute.xlu0 %4684
  %4686 = vrot.lane.b32.xlu0 %v4675, 48
  %v4687 = vpop.permute.xlu0 %4686
  %4688 = vrot.lane.b32.xlu0 %v4676, 48
  %v4689 = vpop.permute.xlu0 %4688
  %4690 = vrot.lane.b32.xlu0 %v4677, 48
  %v4691 = vpop.permute.xlu0 %4690
  %4692 = vrot.lane.b32.xlu0 %v4678, 48
  %v4693 = vpop.permute.xlu0 %4692
  %4699 = vst.msk [vmem:[#allocation3 + $0x140] sm:$0xff] %vm4638, %v4685
  %4700 = vst.msk [vmem:[#allocation3 + $0x160] sm:$0xff] %vm4638, %v4687
  %4701 = vst.msk [vmem:[#allocation3 + $0x180] sm:$0xff] %vm4638, %v4689
  %4702 = vst.msk [vmem:[#allocation3 + $0x1a0] sm:$0xff] %vm4638, %v4691
  %4703 = vst.msk [vmem:[#allocation3 + $0x1c0] sm:$0xff] %vm4638, %v4693
  %v4704 = vld [vmem:[#allocation2 + $0x238] sm:$0xff]
  %v4705 = vld [vmem:[#allocation2 + $0x240] sm:$0xff]
  %v4706 = vld [vmem:[#allocation2 + $0x248] sm:$0xff]
  %v4707 = vld [vmem:[#allocation2 + $0x250] sm:$0xff]
  %v4708 = vld [vmem:[#allocation2 + $0x258] sm:$0xff]
  %4714 = vrot.lane.b32.xlu0 %v4704, 48
  %v4715 = vpop.permute.xlu0 %4714
  %4716 = vrot.lane.b32.xlu0 %v4705, 48
  %v4717 = vpop.permute.xlu0 %4716
  %4718 = vrot.lane.b32.xlu0 %v4706, 48
  %v4719 = vpop.permute.xlu0 %4718
  %4720 = vrot.lane.b32.xlu0 %v4707, 48
  %v4721 = vpop.permute.xlu0 %4720
  %4722 = vrot.lane.b32.xlu0 %v4708, 48
  %v4723 = vpop.permute.xlu0 %4722
  %4729 = vst.msk [vmem:[#allocation3 + $0x1e0] sm:$0xff] %vm4638, %v4715
  %4730 = vst.msk [vmem:[#allocation3 + $0x200] sm:$0xff] %vm4638, %v4717
  %4731 = vst.msk [vmem:[#allocation3 + $0x220] sm:$0xff] %vm4638, %v4719
  %4732 = vst.msk [vmem:[#allocation3 + $0x240] sm:$0xff] %vm4638, %v4721
  %4733 = vst.msk [vmem:[#allocation3 + $0x260] sm:$0xff] %vm4638, %v4723
  %v4734 = vld [vmem:[#allocation2 + $0x270] sm:$0xff]
  %v4735 = vld [vmem:[#allocation2 + $0x278] sm:$0xff]
  %v4736 = vld [vmem:[#allocation2 + $0x280] sm:$0xff]
  %v4737 = vld [vmem:[#allocation2 + $0x288] sm:$0xff]
  %v4738 = vld [vmem:[#allocation2 + $0x290] sm:$0xff]
  %4744 = vrot.lane.b32.xlu0 %v4734, 48
  %v4745 = vpop.permute.xlu0 %4744
  %4746 = vrot.lane.b32.xlu0 %v4735, 48
  %v4747 = vpop.permute.xlu0 %4746
  %4748 = vrot.lane.b32.xlu0 %v4736, 48
  %v4749 = vpop.permute.xlu0 %4748
  %4750 = vrot.lane.b32.xlu0 %v4737, 48
  %v4751 = vpop.permute.xlu0 %4750
  %4752 = vrot.lane.b32.xlu0 %v4738, 48
  %v4753 = vpop.permute.xlu0 %4752
  %4759 = vst.msk [vmem:[#allocation3 + $0x280] sm:$0xff] %vm4638, %v4745
  %4760 = vst.msk [vmem:[#allocation3 + $0x2a0] sm:$0xff] %vm4638, %v4747
  %4761 = vst.msk [vmem:[#allocation3 + $0x2c0] sm:$0xff] %vm4638, %v4749
  %4762 = vst.msk [vmem:[#allocation3 + $0x2e0] sm:$0xff] %vm4638, %v4751
  %4763 = vst.msk [vmem:[#allocation3 + $0x300] sm:$0xff] %vm4638, %v4753
  %v4764 = vld [vmem:[#allocation2 + $0x10] sm:$0xff]
  %v4765 = vld [vmem:[#allocation2 + $0x18] sm:$0xff]
  %v4766 = vld [vmem:[#allocation2 + $0x20] sm:$0xff]
  %v4767 = vld [vmem:[#allocation2 + $0x28] sm:$0xff]
  %v4768 = vld [vmem:[#allocation2 + $0x30] sm:$0xff]
  %4774 = vrot.lane.b32.xlu0 %v4764, 64
  %v4775 = vpop.permute.xlu0 %4774
  %4776 = vrot.lane.b32.xlu0 %v4765, 64
  %v4777 = vpop.permute.xlu0 %4776
  %4778 = vrot.lane.b32.xlu0 %v4766, 64
  %v4779 = vpop.permute.xlu0 %4778
  %4780 = vrot.lane.b32.xlu0 %v4767, 64
  %v4781 = vpop.permute.xlu0 %4780
  %4782 = vrot.lane.b32.xlu0 %v4768, 64
  %v4783 = vpop.permute.xlu0 %4782
  %vm4789 = vcmask 654848
  %4790 = vst.msk [vmem:[#allocation3] sm:$0xff] %vm4789, %v4775
  %4791 = vst.msk [vmem:[#allocation3 + $0x20] sm:$0xff] %vm4789, %v4777
  %4792 = vst.msk [vmem:[#allocation3 + $0x40] sm:$0xff] %vm4789, %v4779
  %4793 = vst.msk [vmem:[#allocation3 + $0x60] sm:$0xff] %vm4789, %v4781
  %4794 = vst.msk [vmem:[#allocation3 + $0x80] sm:$0xff] %vm4789, %v4783
  %v4795 = vld [vmem:[#allocation2 + $0x48] sm:$0xff]
  %v4796 = vld [vmem:[#allocation2 + $0x50] sm:$0xff]
  %v4797 = vld [vmem:[#allocation2 + $0x58] sm:$0xff]
  %v4798 = vld [vmem:[#allocation2 + $0x60] sm:$0xff]
  %v4799 = vld [vmem:[#allocation2 + $0x68] sm:$0xff]
  %4805 = vrot.lane.b32.xlu0 %v4795, 64
  %v4806 = vpop.permute.xlu0 %4805
  %4807 = vrot.lane.b32.xlu0 %v4796, 64
  %v4808 = vpop.permute.xlu0 %4807
  %4809 = vrot.lane.b32.xlu0 %v4797, 64
  %v4810 = vpop.permute.xlu0 %4809
  %4811 = vrot.lane.b32.xlu0 %v4798, 64
  %v4812 = vpop.permute.xlu0 %4811
  %4813 = vrot.lane.b32.xlu0 %v4799, 64
  %v4814 = vpop.permute.xlu0 %4813
  %4820 = vst.msk [vmem:[#allocation3 + $0xa0] sm:$0xff] %vm4789, %v4806
  %4821 = vst.msk [vmem:[#allocation3 + $0xc0] sm:$0xff] %vm4789, %v4808
  %4822 = vst.msk [vmem:[#allocation3 + $0xe0] sm:$0xff] %vm4789, %v4810
  %4823 = vst.msk [vmem:[#allocation3 + $0x100] sm:$0xff] %vm4789, %v4812
  %4824 = vst.msk [vmem:[#allocation3 + $0x120] sm:$0xff] %vm4789, %v4814
  %v4825 = vld [vmem:[#allocation2 + $0x80] sm:$0xff]
  %v4826 = vld [vmem:[#allocation2 + $0x88] sm:$0xff]
  %v4827 = vld [vmem:[#allocation2 + $0x90] sm:$0xff]
  %v4828 = vld [vmem:[#allocation2 + $0x98] sm:$0xff]
  %v4829 = vld [vmem:[#allocation2 + $0xa0] sm:$0xff]
  %4835 = vrot.lane.b32.xlu0 %v4825, 64
  %v4836 = vpop.permute.xlu0 %4835
  %4837 = vrot.lane.b32.xlu0 %v4826, 64
  %v4838 = vpop.permute.xlu0 %4837
  %4839 = vrot.lane.b32.xlu0 %v4827, 64
  %v4840 = vpop.permute.xlu0 %4839
  %4841 = vrot.lane.b32.xlu0 %v4828, 64
  %v4842 = vpop.permute.xlu0 %4841
  %4843 = vrot.lane.b32.xlu0 %v4829, 64
  %v4844 = vpop.permute.xlu0 %4843
  %4850 = vst.msk [vmem:[#allocation3 + $0x140] sm:$0xff] %vm4789, %v4836
  %4851 = vst.msk [vmem:[#allocation3 + $0x160] sm:$0xff] %vm4789, %v4838
  %4852 = vst.msk [vmem:[#allocation3 + $0x180] sm:$0xff] %vm4789, %v4840
  %4853 = vst.msk [vmem:[#allocation3 + $0x1a0] sm:$0xff] %vm4789, %v4842
  %4854 = vst.msk [vmem:[#allocation3 + $0x1c0] sm:$0xff] %vm4789, %v4844
  %v4855 = vld [vmem:[#allocation2 + $0xb8] sm:$0xff]
  %v4856 = vld [vmem:[#allocation2 + $0xc0] sm:$0xff]
  %v4857 = vld [vmem:[#allocation2 + $0xc8] sm:$0xff]
  %v4858 = vld [vmem:[#allocation2 + $0xd0] sm:$0xff]
  %v4859 = vld [vmem:[#allocation2 + $0xd8] sm:$0xff]
  %4865 = vrot.lane.b32.xlu0 %v4855, 64
  %v4866 = vpop.permute.xlu0 %4865
  %4867 = vrot.lane.b32.xlu0 %v4856, 64
  %v4868 = vpop.permute.xlu0 %4867
  %4869 = vrot.lane.b32.xlu0 %v4857, 64
  %v4870 = vpop.permute.xlu0 %4869
  %4871 = vrot.lane.b32.xlu0 %v4858, 64
  %v4872 = vpop.permute.xlu0 %4871
  %4873 = vrot.lane.b32.xlu0 %v4859, 64
  %v4874 = vpop.permute.xlu0 %4873
  %4880 = vst.msk [vmem:[#allocation3 + $0x1e0] sm:$0xff] %vm4789, %v4866
  %4881 = vst.msk [vmem:[#allocation3 + $0x200] sm:$0xff] %vm4789, %v4868
  %4882 = vst.msk [vmem:[#allocation3 + $0x220] sm:$0xff] %vm4789, %v4870
  %4883 = vst.msk [vmem:[#allocation3 + $0x240] sm:$0xff] %vm4789, %v4872
  %4884 = vst.msk [vmem:[#allocation3 + $0x260] sm:$0xff] %vm4789, %v4874
  %v4885 = vld [vmem:[#allocation2 + $0xf0] sm:$0xff]
  %v4886 = vld [vmem:[#allocation2 + $0xf8] sm:$0xff]
  %v4887 = vld [vmem:[#allocation2 + $0x100] sm:$0xff]
  %v4888 = vld [vmem:[#allocation2 + $0x108] sm:$0xff]
  %v4889 = vld [vmem:[#allocation2 + $0x110] sm:$0xff]
  %4895 = vrot.lane.b32.xlu0 %v4885, 64
  %v4896 = vpop.permute.xlu0 %4895
  %4897 = vrot.lane.b32.xlu0 %v4886, 64
  %v4898 = vpop.permute.xlu0 %4897
  %4899 = vrot.lane.b32.xlu0 %v4887, 64
  %v4900 = vpop.permute.xlu0 %4899
  %4901 = vrot.lane.b32.xlu0 %v4888, 64
  %v4902 = vpop.permute.xlu0 %4901
  %4903 = vrot.lane.b32.xlu0 %v4889, 64
  %v4904 = vpop.permute.xlu0 %4903
  %4910 = vst.msk [vmem:[#allocation3 + $0x280] sm:$0xff] %vm4789, %v4896
  %4911 = vst.msk [vmem:[#allocation3 + $0x2a0] sm:$0xff] %vm4789, %v4898
  %4912 = vst.msk [vmem:[#allocation3 + $0x2c0] sm:$0xff] %vm4789, %v4900
  %4913 = vst.msk [vmem:[#allocation3 + $0x2e0] sm:$0xff] %vm4789, %v4902
  %4914 = vst.msk [vmem:[#allocation3 + $0x300] sm:$0xff] %vm4789, %v4904
  %v4915 = vld [vmem:[#allocation2 + $0x310] sm:$0xff]
  %v4916 = vld [vmem:[#allocation2 + $0x318] sm:$0xff]
  %v4917 = vld [vmem:[#allocation2 + $0x320] sm:$0xff]
  %v4918 = vld [vmem:[#allocation2 + $0x328] sm:$0xff]
  %v4919 = vld [vmem:[#allocation2 + $0x330] sm:$0xff]
  %4925 = vrot.lane.b32.xlu0 %v4915, 80
  %v4926 = vpop.permute.xlu0 %4925
  %4927 = vrot.lane.b32.xlu0 %v4916, 80
  %v4928 = vpop.permute.xlu0 %4927
  %4929 = vrot.lane.b32.xlu0 %v4917, 80
  %v4930 = vpop.permute.xlu0 %4929
  %4931 = vrot.lane.b32.xlu0 %v4918, 80
  %v4932 = vpop.permute.xlu0 %4931
  %4933 = vrot.lane.b32.xlu0 %v4919, 80
  %v4934 = vpop.permute.xlu0 %4933
  %vm4940 = vcmask 786048
  %4941 = vst.msk [vmem:[#allocation3] sm:$0xff] %vm4940, %v4926
  %4942 = vst.msk [vmem:[#allocation3 + $0x20] sm:$0xff] %vm4940, %v4928
  %4943 = vst.msk [vmem:[#allocation3 + $0x40] sm:$0xff] %vm4940, %v4930
  %4944 = vst.msk [vmem:[#allocation3 + $0x60] sm:$0xff] %vm4940, %v4932
  %4945 = vst.msk [vmem:[#allocation3 + $0x80] sm:$0xff] %vm4940, %v4934
  %v4946 = vld [vmem:[#allocation2 + $0x348] sm:$0xff]
  %v4947 = vld [vmem:[#allocation2 + $0x350] sm:$0xff]
  %v4948 = vld [vmem:[#allocation2 + $0x358] sm:$0xff]
  %v4949 = vld [vmem:[#allocation2 + $0x360] sm:$0xff]
  %v4950 = vld [vmem:[#allocation2 + $0x368] sm:$0xff]
  %4956 = vrot.lane.b32.xlu0 %v4946, 80
  %v4957 = vpop.permute.xlu0 %4956
  %4958 = vrot.lane.b32.xlu0 %v4947, 80
  %v4959 = vpop.permute.xlu0 %4958
  %4960 = vrot.lane.b32.xlu0 %v4948, 80
  %v4961 = vpop.permute.xlu0 %4960
  %4962 = vrot.lane.b32.xlu0 %v4949, 80
  %v4963 = vpop.permute.xlu0 %4962
  %4964 = vrot.lane.b32.xlu0 %v4950, 80
  %v4965 = vpop.permute.xlu0 %4964
  %4971 = vst.msk [vmem:[#allocation3 + $0xa0] sm:$0xff] %vm4940, %v4957
  %4972 = vst.msk [vmem:[#allocation3 + $0xc0] sm:$0xff] %vm4940, %v4959
  %4973 = vst.msk [vmem:[#allocation3 + $0xe0] sm:$0xff] %vm4940, %v4961
  %4974 = vst.msk [vmem:[#allocation3 + $0x100] sm:$0xff] %vm4940, %v4963
  %4975 = vst.msk [vmem:[#allocation3 + $0x120] sm:$0xff] %vm4940, %v4965
  %v4976 = vld [vmem:[#allocation2 + $0x380] sm:$0xff]
  %v4977 = vld [vmem:[#allocation2 + $0x388] sm:$0xff]
  %v4978 = vld [vmem:[#allocation2 + $0x390] sm:$0xff]
  %v4979 = vld [vmem:[#allocation2 + $0x398] sm:$0xff]
  %v4980 = vld [vmem:[#allocation2 + $0x3a0] sm:$0xff]
  %4986 = vrot.lane.b32.xlu0 %v4976, 80
  %v4987 = vpop.permute.xlu0 %4986
  %4988 = vrot.lane.b32.xlu0 %v4977, 80
  %v4989 = vpop.permute.xlu0 %4988
  %4990 = vrot.lane.b32.xlu0 %v4978, 80
  %v4991 = vpop.permute.xlu0 %4990
  %4992 = vrot.lane.b32.xlu0 %v4979, 80
  %v4993 = vpop.permute.xlu0 %4992
  %4994 = vrot.lane.b32.xlu0 %v4980, 80
  %v4995 = vpop.permute.xlu0 %4994
  %5001 = vst.msk [vmem:[#allocation3 + $0x140] sm:$0xff] %vm4940, %v4987
  %5002 = vst.msk [vmem:[#allocation3 + $0x160] sm:$0xff] %vm4940, %v4989
  %5003 = vst.msk [vmem:[#allocation3 + $0x180] sm:$0xff] %vm4940, %v4991
  %5004 = vst.msk [vmem:[#allocation3 + $0x1a0] sm:$0xff] %vm4940, %v4993
  %5005 = vst.msk [vmem:[#allocation3 + $0x1c0] sm:$0xff] %vm4940, %v4995
  %v5006 = vld [vmem:[#allocation2 + $0x3b8] sm:$0xff]
  %v5007 = vld [vmem:[#allocation2 + $0x3c0] sm:$0xff]
  %v5008 = vld [vmem:[#allocation2 + $0x3c8] sm:$0xff]
  %v5009 = vld [vmem:[#allocation2 + $0x3d0] sm:$0xff]
  %v5010 = vld [vmem:[#allocation2 + $0x3d8] sm:$0xff]
  %5016 = vrot.lane.b32.xlu0 %v5006, 80
  %v5017 = vpop.permute.xlu0 %5016
  %5018 = vrot.lane.b32.xlu0 %v5007, 80
  %v5019 = vpop.permute.xlu0 %5018
  %5020 = vrot.lane.b32.xlu0 %v5008, 80
  %v5021 = vpop.permute.xlu0 %5020
  %5022 = vrot.lane.b32.xlu0 %v5009, 80
  %v5023 = vpop.permute.xlu0 %5022
  %5024 = vrot.lane.b32.xlu0 %v5010, 80
  %v5025 = vpop.permute.xlu0 %5024
  %5031 = vst.msk [vmem:[#allocation3 + $0x1e0] sm:$0xff] %vm4940, %v5017
  %5032 = vst.msk [vmem:[#allocation3 + $0x200] sm:$0xff] %vm4940, %v5019
  %5033 = vst.msk [vmem:[#allocation3 + $0x220] sm:$0xff] %vm4940, %v5021
  %5034 = vst.msk [vmem:[#allocation3 + $0x240] sm:$0xff] %vm4940, %v5023
  %5035 = vst.msk [vmem:[#allocation3 + $0x260] sm:$0xff] %vm4940, %v5025
  %v5036 = vld [vmem:[#allocation2 + $0x3f0] sm:$0xff]
  %v5037 = vld [vmem:[#allocation2 + $0x3f8] sm:$0xff]
  %v5038 = vld [vmem:[#allocation2 + $0x400] sm:$0xff]
  %v5039 = vld [vmem:[#allocation2 + $0x408] sm:$0xff]
  %v5040 = vld [vmem:[#allocation2 + $0x410] sm:$0xff]
  %5046 = vrot.lane.b32.xlu0 %v5036, 80
  %v5047 = vpop.permute.xlu0 %5046
  %5048 = vrot.lane.b32.xlu0 %v5037, 80
  %v5049 = vpop.permute.xlu0 %5048
  %5050 = vrot.lane.b32.xlu0 %v5038, 80
  %v5051 = vpop.permute.xlu0 %5050
  %5052 = vrot.lane.b32.xlu0 %v5039, 80
  %v5053 = vpop.permute.xlu0 %5052
  %5054 = vrot.lane.b32.xlu0 %v5040, 80
  %v5055 = vpop.permute.xlu0 %5054
  %5061 = vst.msk [vmem:[#allocation3 + $0x280] sm:$0xff] %vm4940, %v5047
  %5062 = vst.msk [vmem:[#allocation3 + $0x2a0] sm:$0xff] %vm4940, %v5049
  %5063 = vst.msk [vmem:[#allocation3 + $0x2c0] sm:$0xff] %vm4940, %v5051
  %5064 = vst.msk [vmem:[#allocation3 + $0x2e0] sm:$0xff] %vm4940, %v5053
  %5065 = vst.msk [vmem:[#allocation3 + $0x300] sm:$0xff] %vm4940, %v5055
  %v5066 = vld [vmem:[#allocation2 + $0x498] sm:$0xff]
  %v5067 = vld [vmem:[#allocation2 + $0x4a0] sm:$0xff]
  %v5068 = vld [vmem:[#allocation2 + $0x4a8] sm:$0xff]
  %v5069 = vld [vmem:[#allocation2 + $0x4b0] sm:$0xff]
  %v5070 = vld [vmem:[#allocation2 + $0x4b8] sm:$0xff]
  %5076 = vrot.lane.b32.xlu0 %v5066, 96
  %v5077 = vpop.permute.xlu0 %5076
  %5078 = vrot.lane.b32.xlu0 %v5067, 96
  %v5079 = vpop.permute.xlu0 %5078
  %5080 = vrot.lane.b32.xlu0 %v5068, 96
  %v5081 = vpop.permute.xlu0 %5080
  %5082 = vrot.lane.b32.xlu0 %v5069, 96
  %v5083 = vpop.permute.xlu0 %5082
  %5084 = vrot.lane.b32.xlu0 %v5070, 96
  %v5085 = vpop.permute.xlu0 %5084
  %vm5091 = vcmask 917248
  %5092 = vst.msk [vmem:[#allocation3] sm:$0xff] %vm5091, %v5077
  %5093 = vst.msk [vmem:[#allocation3 + $0x20] sm:$0xff] %vm5091, %v5079
  %5094 = vst.msk [vmem:[#allocation3 + $0x40] sm:$0xff] %vm5091, %v5081
  %5095 = vst.msk [vmem:[#allocation3 + $0x60] sm:$0xff] %vm5091, %v5083
  %5096 = vst.msk [vmem:[#allocation3 + $0x80] sm:$0xff] %vm5091, %v5085
  %v5097 = vld [vmem:[#allocation2 + $0x4d0] sm:$0xff]
  %v5098 = vld [vmem:[#allocation2 + $0x4d8] sm:$0xff]
  %v5099 = vld [vmem:[#allocation2 + $0x4e0] sm:$0xff]
  %v5100 = vld [vmem:[#allocation2 + $0x4e8] sm:$0xff]
  %v5101 = vld [vmem:[#allocation2 + $0x4f0] sm:$0xff]
  %5107 = vrot.lane.b32.xlu0 %v5097, 96
  %v5108 = vpop.permute.xlu0 %5107
  %5109 = vrot.lane.b32.xlu0 %v5098, 96
  %v5110 = vpop.permute.xlu0 %5109
  %5111 = vrot.lane.b32.xlu0 %v5099, 96
  %v5112 = vpop.permute.xlu0 %5111
  %5113 = vrot.lane.b32.xlu0 %v5100, 96
  %v5114 = vpop.permute.xlu0 %5113
  %5115 = vrot.lane.b32.xlu0 %v5101, 96
  %v5116 = vpop.permute.xlu0 %5115
  %5122 = vst.msk [vmem:[#allocation3 + $0xa0] sm:$0xff] %vm5091, %v5108
  %5123 = vst.msk [vmem:[#allocation3 + $0xc0] sm:$0xff] %vm5091, %v5110
  %5124 = vst.msk [vmem:[#allocation3 + $0xe0] sm:$0xff] %vm5091, %v5112
  %5125 = vst.msk [vmem:[#allocation3 + $0x100] sm:$0xff] %vm5091, %v5114
  %5126 = vst.msk [vmem:[#allocation3 + $0x120] sm:$0xff] %vm5091, %v5116
  %v5127 = vld [vmem:[#allocation2 + $0x508] sm:$0xff]
  %v5128 = vld [vmem:[#allocation2 + $0x510] sm:$0xff]
  %v5129 = vld [vmem:[#allocation2 + $0x518] sm:$0xff]
  %v5130 = vld [vmem:[#allocation2 + $0x520] sm:$0xff]
  %v5131 = vld [vmem:[#allocation2 + $0x528] sm:$0xff]
  %5137 = vrot.lane.b32.xlu0 %v5127, 96
  %v5138 = vpop.permute.xlu0 %5137
  %5139 = vrot.lane.b32.xlu0 %v5128, 96
  %v5140 = vpop.permute.xlu0 %5139
  %5141 = vrot.lane.b32.xlu0 %v5129, 96
  %v5142 = vpop.permute.xlu0 %5141
  %5143 = vrot.lane.b32.xlu0 %v5130, 96
  %v5144 = vpop.permute.xlu0 %5143
  %5145 = vrot.lane.b32.xlu0 %v5131, 96
  %v5146 = vpop.permute.xlu0 %5145
  %5152 = vst.msk [vmem:[#allocation3 + $0x140] sm:$0xff] %vm5091, %v5138
  %5153 = vst.msk [vmem:[#allocation3 + $0x160] sm:$0xff] %vm5091, %v5140
  %5154 = vst.msk [vmem:[#allocation3 + $0x180] sm:$0xff] %vm5091, %v5142
  %5155 = vst.msk [vmem:[#allocation3 + $0x1a0] sm:$0xff] %vm5091, %v5144
  %5156 = vst.msk [vmem:[#allocation3 + $0x1c0] sm:$0xff] %vm5091, %v5146
  %v5157 = vld [vmem:[#allocation2 + $0x540] sm:$0xff]
  %v5158 = vld [vmem:[#allocation2 + $0x548] sm:$0xff]
  %v5159 = vld [vmem:[#allocation2 + $0x550] sm:$0xff]
  %v5160 = vld [vmem:[#allocation2 + $0x558] sm:$0xff]
  %v5161 = vld [vmem:[#allocation2 + $0x560] sm:$0xff]
  %5167 = vrot.lane.b32.xlu0 %v5157, 96
  %v5168 = vpop.permute.xlu0 %5167
  %5169 = vrot.lane.b32.xlu0 %v5158, 96
  %v5170 = vpop.permute.xlu0 %5169
  %5171 = vrot.lane.b32.xlu0 %v5159, 96
  %v5172 = vpop.permute.xlu0 %5171
  %5173 = vrot.lane.b32.xlu0 %v5160, 96
  %v5174 = vpop.permute.xlu0 %5173
  %5175 = vrot.lane.b32.xlu0 %v5161, 96
  %v5176 = vpop.permute.xlu0 %5175
  %5182 = vst.msk [vmem:[#allocation3 + $0x1e0] sm:$0xff] %vm5091, %v5168
  %5183 = vst.msk [vmem:[#allocation3 + $0x200] sm:$0xff] %vm5091, %v5170
  %5184 = vst.msk [vmem:[#allocation3 + $0x220] sm:$0xff] %vm5091, %v5172
  %5185 = vst.msk [vmem:[#allocation3 + $0x240] sm:$0xff] %vm5091, %v5174
  %5186 = vst.msk [vmem:[#allocation3 + $0x260] sm:$0xff] %vm5091, %v5176
  %v5187 = vld [vmem:[#allocation2 + $0x578] sm:$0xff]
  %v5188 = vld [vmem:[#allocation2 + $0x580] sm:$0xff]
  %v5189 = vld [vmem:[#allocation2 + $0x588] sm:$0xff]
  %v5190 = vld [vmem:[#allocation2 + $0x590] sm:$0xff]
  %v5191 = vld [vmem:[#allocation2 + $0x598] sm:$0xff]
  %5197 = vrot.lane.b32.xlu0 %v5187, 96
  %v5198 = vpop.permute.xlu0 %5197
  %5199 = vrot.lane.b32.xlu0 %v5188, 96
  %v5200 = vpop.permute.xlu0 %5199
  %5201 = vrot.lane.b32.xlu0 %v5189, 96
  %v5202 = vpop.permute.xlu0 %5201
  %5203 = vrot.lane.b32.xlu0 %v5190, 96
  %v5204 = vpop.permute.xlu0 %5203
  %5205 = vrot.lane.b32.xlu0 %v5191, 96
  %v5206 = vpop.permute.xlu0 %5205
  %5212 = vst.msk [vmem:[#allocation3 + $0x280] sm:$0xff] %vm5091, %v5198
  %5213 = vst.msk [vmem:[#allocation3 + $0x2a0] sm:$0xff] %vm5091, %v5200
  %5214 = vst.msk [vmem:[#allocation3 + $0x2c0] sm:$0xff] %vm5091, %v5202
  %5215 = vst.msk [vmem:[#allocation3 + $0x2e0] sm:$0xff] %vm5091, %v5204
  %5216 = vst.msk [vmem:[#allocation3 + $0x300] sm:$0xff] %vm5091, %v5206
  %v5217 = vld [vmem:[#allocation2 + $0x318] sm:$0xff]
  %v5218 = vld [vmem:[#allocation2 + $0x320] sm:$0xff]
  %v5219 = vld [vmem:[#allocation2 + $0x328] sm:$0xff]
  %v5220 = vld [vmem:[#allocation2 + $0x330] sm:$0xff]
  %v5221 = vld [vmem:[#allocation2 + $0x338] sm:$0xff]
  %5227 = vrot.lane.b32.xlu0 %v5217, 112
  %v5228 = vpop.permute.xlu0 %5227
  %5229 = vrot.lane.b32.xlu0 %v5218, 112
  %v5230 = vpop.permute.xlu0 %5229
  %5231 = vrot.lane.b32.xlu0 %v5219, 112
  %v5232 = vpop.permute.xlu0 %5231
  %5233 = vrot.lane.b32.xlu0 %v5220, 112
  %v5234 = vpop.permute.xlu0 %5233
  %5235 = vrot.lane.b32.xlu0 %v5221, 112
  %v5236 = vpop.permute.xlu0 %5235
  %vm5242 = vcmask 1048448
  %5243 = vst.msk [vmem:[#allocation3] sm:$0xff] %vm5242, %v5228
  %5244 = vst.msk [vmem:[#allocation3 + $0x20] sm:$0xff] %vm5242, %v5230
  %5245 = vst.msk [vmem:[#allocation3 + $0x40] sm:$0xff] %vm5242, %v5232
  %5246 = vst.msk [vmem:[#allocation3 + $0x60] sm:$0xff] %vm5242, %v5234
  %5247 = vst.msk [vmem:[#allocation3 + $0x80] sm:$0xff] %vm5242, %v5236
  %v5248 = vld [vmem:[#allocation2 + $0x350] sm:$0xff]
  %v5249 = vld [vmem:[#allocation2 + $0x358] sm:$0xff]
  %v5250 = vld [vmem:[#allocation2 + $0x360] sm:$0xff]
  %v5251 = vld [vmem:[#allocation2 + $0x368] sm:$0xff]
  %v5252 = vld [vmem:[#allocation2 + $0x370] sm:$0xff]
  %5258 = vrot.lane.b32.xlu0 %v5248, 112
  %v5259 = vpop.permute.xlu0 %5258
  %5260 = vrot.lane.b32.xlu0 %v5249, 112
  %v5261 = vpop.permute.xlu0 %5260
  %5262 = vrot.lane.b32.xlu0 %v5250, 112
  %v5263 = vpop.permute.xlu0 %5262
  %5264 = vrot.lane.b32.xlu0 %v5251, 112
  %v5265 = vpop.permute.xlu0 %5264
  %5266 = vrot.lane.b32.xlu0 %v5252, 112
  %v5267 = vpop.permute.xlu0 %5266
  %5273 = vst.msk [vmem:[#allocation3 + $0xa0] sm:$0xff] %vm5242, %v5259
  %5274 = vst.msk [vmem:[#allocation3 + $0xc0] sm:$0xff] %vm5242, %v5261
  %5275 = vst.msk [vmem:[#allocation3 + $0xe0] sm:$0xff] %vm5242, %v5263
  %5276 = vst.msk [vmem:[#allocation3 + $0x100] sm:$0xff] %vm5242, %v5265
  %5277 = vst.msk [vmem:[#allocation3 + $0x120] sm:$0xff] %vm5242, %v5267
  %v5278 = vld [vmem:[#allocation2 + $0x388] sm:$0xff]
  %v5279 = vld [vmem:[#allocation2 + $0x390] sm:$0xff]
  %v5280 = vld [vmem:[#allocation2 + $0x398] sm:$0xff]
  %v5281 = vld [vmem:[#allocation2 + $0x3a0] sm:$0xff]
  %v5282 = vld [vmem:[#allocation2 + $0x3a8] sm:$0xff]
  %5288 = vrot.lane.b32.xlu0 %v5278, 112
  %v5289 = vpop.permute.xlu0 %5288
  %5290 = vrot.lane.b32.xlu0 %v5279, 112
  %v5291 = vpop.permute.xlu0 %5290
  %5292 = vrot.lane.b32.xlu0 %v5280, 112
  %v5293 = vpop.permute.xlu0 %5292
  %5294 = vrot.lane.b32.xlu0 %v5281, 112
  %v5295 = vpop.permute.xlu0 %5294
  %5296 = vrot.lane.b32.xlu0 %v5282, 112
  %v5297 = vpop.permute.xlu0 %5296
  %5303 = vst.msk [vmem:[#allocation3 + $0x140] sm:$0xff] %vm5242, %v5289
  %5304 = vst.msk [vmem:[#allocation3 + $0x160] sm:$0xff] %vm5242, %v5291
  %5305 = vst.msk [vmem:[#allocation3 + $0x180] sm:$0xff] %vm5242, %v5293
  %5306 = vst.msk [vmem:[#allocation3 + $0x1a0] sm:$0xff] %vm5242, %v5295
  %5307 = vst.msk [vmem:[#allocation3 + $0x1c0] sm:$0xff] %vm5242, %v5297
  %v5308 = vld [vmem:[#allocation2 + $0x3c0] sm:$0xff]
  %v5309 = vld [vmem:[#allocation2 + $0x3c8] sm:$0xff]
  %v5310 = vld [vmem:[#allocation2 + $0x3d0] sm:$0xff]
  %v5311 = vld [vmem:[#allocation2 + $0x3d8] sm:$0xff]
  %v5312 = vld [vmem:[#allocation2 + $0x3e0] sm:$0xff]
  %5318 = vrot.lane.b32.xlu0 %v5308, 112
  %v5319 = vpop.permute.xlu0 %5318
  %5320 = vrot.lane.b32.xlu0 %v5309, 112
  %v5321 = vpop.permute.xlu0 %5320
  %5322 = vrot.lane.b32.xlu0 %v5310, 112
  %v5323 = vpop.permute.xlu0 %5322
  %5324 = vrot.lane.b32.xlu0 %v5311, 112
  %v5325 = vpop.permute.xlu0 %5324
  %5326 = vrot.lane.b32.xlu0 %v5312, 112
  %v5327 = vpop.permute.xlu0 %5326
  %5333 = vst.msk [vmem:[#allocation3 + $0x1e0] sm:$0xff] %vm5242, %v5319
  %5334 = vst.msk [vmem:[#allocation3 + $0x200] sm:$0xff] %vm5242, %v5321
  %5335 = vst.msk [vmem:[#allocation3 + $0x220] sm:$0xff] %vm5242, %v5323
  %5336 = vst.msk [vmem:[#allocation3 + $0x240] sm:$0xff] %vm5242, %v5325
  %5337 = vst.msk [vmem:[#allocation3 + $0x260] sm:$0xff] %vm5242, %v5327
  %v5338 = vld [vmem:[#allocation2 + $0x3f8] sm:$0xff]
  %v5339 = vld [vmem:[#allocation2 + $0x400] sm:$0xff]
  %v5340 = vld [vmem:[#allocation2 + $0x408] sm:$0xff]
  %v5341 = vld [vmem:[#allocation2 + $0x410] sm:$0xff]
  %v5342 = vld [vmem:[#allocation2 + $0x418] sm:$0xff]
  %5348 = vrot.lane.b32.xlu0 %v5338, 112
  %v5349 = vpop.permute.xlu0 %5348
  %5350 = vrot.lane.b32.xlu0 %v5339, 112
  %v5351 = vpop.permute.xlu0 %5350
  %5352 = vrot.lane.b32.xlu0 %v5340, 112
  %v5353 = vpop.permute.xlu0 %5352
  %5354 = vrot.lane.b32.xlu0 %v5341, 112
  %v5355 = vpop.permute.xlu0 %5354
  %5356 = vrot.lane.b32.xlu0 %v5342, 112
  %v5357 = vpop.permute.xlu0 %5356
  %5363 = vst.msk [vmem:[#allocation3 + $0x280] sm:$0xff] %vm5242, %v5349
  %5364 = vst.msk [vmem:[#allocation3 + $0x2a0] sm:$0xff] %vm5242, %v5351
  %5365 = vst.msk [vmem:[#allocation3 + $0x2c0] sm:$0xff] %vm5242, %v5353
  %5366 = vst.msk [vmem:[#allocation3 + $0x2e0] sm:$0xff] %vm5242, %v5355
  %5367 = vst.msk [vmem:[#allocation3 + $0x300] sm:$0xff] %vm5242, %v5357
  %v5368 = vld [vmem:[#allocation2 + $0x4a0] sm:$0xff]
  %v5369 = vld [vmem:[#allocation2 + $0x4a8] sm:$0xff]
  %v5370 = vld [vmem:[#allocation2 + $0x4b0] sm:$0xff]
  %v5371 = vld [vmem:[#allocation2 + $0x4b8] sm:$0xff]
  %v5372 = vld [vmem:[#allocation2 + $0x4c0] sm:$0xff]
  %5373 = vst.msk [vmem:[#allocation3 + $0x8] sm:$0xff] %vm241, %v5368
  %5374 = vst.msk [vmem:[#allocation3 + $0x28] sm:$0xff] %vm241, %v5369
  %5375 = vst.msk [vmem:[#allocation3 + $0x48] sm:$0xff] %vm241, %v5370
  %5376 = vst.msk [vmem:[#allocation3 + $0x68] sm:$0xff] %vm241, %v5371
  %5377 = vst.msk [vmem:[#allocation3 + $0x88] sm:$0xff] %vm241, %v5372
  %v5378 = vld [vmem:[#allocation2 + $0x4d8] sm:$0xff]
  %v5379 = vld [vmem:[#allocation2 + $0x4e0] sm:$0xff]
  %v5380 = vld [vmem:[#allocation2 + $0x4e8] sm:$0xff]
  %v5381 = vld [vmem:[#allocation2 + $0x4f0] sm:$0xff]
  %v5382 = vld [vmem:[#allocation2 + $0x4f8] sm:$0xff]
  %5383 = vst.msk [vmem:[#allocation3 + $0xa8] sm:$0xff] %vm241, %v5378
  %5384 = vst.msk [vmem:[#allocation3 + $0xc8] sm:$0xff] %vm241, %v5379
  %5385 = vst.msk [vmem:[#allocation3 + $0xe8] sm:$0xff] %vm241, %v5380
  %5386 = vst.msk [vmem:[#allocation3 + $0x108] sm:$0xff] %vm241, %v5381
  %5387 = vst.msk [vmem:[#allocation3 + $0x128] sm:$0xff] %vm241, %v5382
  %v5388 = vld [vmem:[#allocation2 + $0x510] sm:$0xff]
  %v5389 = vld [vmem:[#allocation2 + $0x518] sm:$0xff]
  %v5390 = vld [vmem:[#allocation2 + $0x520] sm:$0xff]
  %v5391 = vld [vmem:[#allocation2 + $0x528] sm:$0xff]
  %v5392 = vld [vmem:[#allocation2 + $0x530] sm:$0xff]
  %5393 = vst.msk [vmem:[#allocation3 + $0x148] sm:$0xff] %vm241, %v5388
  %5394 = vst.msk [vmem:[#allocation3 + $0x168] sm:$0xff] %vm241, %v5389
  %5395 = vst.msk [vmem:[#allocation3 + $0x188] sm:$0xff] %vm241, %v5390
  %5396 = vst.msk [vmem:[#allocation3 + $0x1a8] sm:$0xff] %vm241, %v5391
  %5397 = vst.msk [vmem:[#allocation3 + $0x1c8] sm:$0xff] %vm241, %v5392
  %v5398 = vld [vmem:[#allocation2 + $0x548] sm:$0xff]
  %v5399 = vld [vmem:[#allocation2 + $0x550] sm:$0xff]
  %v5400 = vld [vmem:[#allocation2 + $0x558] sm:$0xff]
  %v5401 = vld [vmem:[#allocation2 + $0x560] sm:$0xff]
  %v5402 = vld [vmem:[#allocation2 + $0x568] sm:$0xff]
  %5403 = vst.msk [vmem:[#allocation3 + $0x1e8] sm:$0xff] %vm241, %v5398
  %5404 = vst.msk [vmem:[#allocation3 + $0x208] sm:$0xff] %vm241, %v5399
  %5405 = vst.msk [vmem:[#allocation3 + $0x228] sm:$0xff] %vm241, %v5400
  %5406 = vst.msk [vmem:[#allocation3 + $0x248] sm:$0xff] %vm241, %v5401
  %5407 = vst.msk [vmem:[#allocation3 + $0x268] sm:$0xff] %vm241, %v5402
  %v5408 = vld [vmem:[#allocation2 + $0x580] sm:$0xff]
  %v5409 = vld [vmem:[#allocation2 + $0x588] sm:$0xff]
  %v5410 = vld [vmem:[#allocation2 + $0x590] sm:$0xff]
  %v5411 = vld [vmem:[#allocation2 + $0x598] sm:$0xff]
  %v5412 = vld [vmem:[#allocation2 + $0x5a0] sm:$0xff]
  %5413 = vst.msk [vmem:[#allocation3 + $0x288] sm:$0xff] %vm241, %v5408
  %5414 = vst.msk [vmem:[#allocation3 + $0x2a8] sm:$0xff] %vm241, %v5409
  %5415 = vst.msk [vmem:[#allocation3 + $0x2c8] sm:$0xff] %vm241, %v5410
  %5416 = vst.msk [vmem:[#allocation3 + $0x2e8] sm:$0xff] %vm241, %v5411
  %5417 = vst.msk [vmem:[#allocation3 + $0x308] sm:$0xff] %vm241, %v5412
  %v5418 = vld [vmem:[#allocation2 + $0x320] sm:$0xff]
  %v5419 = vld [vmem:[#allocation2 + $0x328] sm:$0xff]
  %v5420 = vld [vmem:[#allocation2 + $0x330] sm:$0xff]
  %v5421 = vld [vmem:[#allocation2 + $0x338] sm:$0xff]
  %v5422 = vld [vmem:[#allocation2 + $0x340] sm:$0xff]
  %5428 = vrot.lane.b32.xlu0 %v5418, 16
  %v5429 = vpop.permute.xlu0 %5428
  %5430 = vrot.lane.b32.xlu0 %v5419, 16
  %v5431 = vpop.permute.xlu0 %5430
  %5432 = vrot.lane.b32.xlu0 %v5420, 16
  %v5433 = vpop.permute.xlu0 %5432
  %5434 = vrot.lane.b32.xlu0 %v5421, 16
  %v5435 = vpop.permute.xlu0 %5434
  %5436 = vrot.lane.b32.xlu0 %v5422, 16
  %v5437 = vpop.permute.xlu0 %5436
  %5443 = vst.msk [vmem:[#allocation3 + $0x8] sm:$0xff] %vm4336, %v5429
  %5444 = vst.msk [vmem:[#allocation3 + $0x28] sm:$0xff] %vm4336, %v5431
  %5445 = vst.msk [vmem:[#allocation3 + $0x48] sm:$0xff] %vm4336, %v5433
  %5446 = vst.msk [vmem:[#allocation3 + $0x68] sm:$0xff] %vm4336, %v5435
  %5447 = vst.msk [vmem:[#allocation3 + $0x88] sm:$0xff] %vm4336, %v5437
  %v5448 = vld [vmem:[#allocation2 + $0x358] sm:$0xff]
  %v5449 = vld [vmem:[#allocation2 + $0x360] sm:$0xff]
  %v5450 = vld [vmem:[#allocation2 + $0x368] sm:$0xff]
  %v5451 = vld [vmem:[#allocation2 + $0x370] sm:$0xff]
  %v5452 = vld [vmem:[#allocation2 + $0x378] sm:$0xff]
  %5458 = vrot.lane.b32.xlu0 %v5448, 16
  %v5459 = vpop.permute.xlu0 %5458
  %5460 = vrot.lane.b32.xlu0 %v5449, 16
  %v5461 = vpop.permute.xlu0 %5460
  %5462 = vrot.lane.b32.xlu0 %v5450, 16
  %v5463 = vpop.permute.xlu0 %5462
  %5464 = vrot.lane.b32.xlu0 %v5451, 16
  %v5465 = vpop.permute.xlu0 %5464
  %5466 = vrot.lane.b32.xlu0 %v5452, 16
  %v5467 = vpop.permute.xlu0 %5466
  %5473 = vst.msk [vmem:[#allocation3 + $0xa8] sm:$0xff] %vm4336, %v5459
  %5474 = vst.msk [vmem:[#allocation3 + $0xc8] sm:$0xff] %vm4336, %v5461
  %5475 = vst.msk [vmem:[#allocation3 + $0xe8] sm:$0xff] %vm4336, %v5463
  %5476 = vst.msk [vmem:[#allocation3 + $0x108] sm:$0xff] %vm4336, %v5465
  %5477 = vst.msk [vmem:[#allocation3 + $0x128] sm:$0xff] %vm4336, %v5467
  %v5478 = vld [vmem:[#allocation2 + $0x390] sm:$0xff]
  %v5479 = vld [vmem:[#allocation2 + $0x398] sm:$0xff]
  %v5480 = vld [vmem:[#allocation2 + $0x3a0] sm:$0xff]
  %v5481 = vld [vmem:[#allocation2 + $0x3a8] sm:$0xff]
  %v5482 = vld [vmem:[#allocation2 + $0x3b0] sm:$0xff]
  %5488 = vrot.lane.b32.xlu0 %v5478, 16
  %v5489 = vpop.permute.xlu0 %5488
  %5490 = vrot.lane.b32.xlu0 %v5479, 16
  %v5491 = vpop.permute.xlu0 %5490
  %5492 = vrot.lane.b32.xlu0 %v5480, 16
  %v5493 = vpop.permute.xlu0 %5492
  %5494 = vrot.lane.b32.xlu0 %v5481, 16
  %v5495 = vpop.permute.xlu0 %5494
  %5496 = vrot.lane.b32.xlu0 %v5482, 16
  %v5497 = vpop.permute.xlu0 %5496
  %5503 = vst.msk [vmem:[#allocation3 + $0x148] sm:$0xff] %vm4336, %v5489
  %5504 = vst.msk [vmem:[#allocation3 + $0x168] sm:$0xff] %vm4336, %v5491
  %5505 = vst.msk [vmem:[#allocation3 + $0x188] sm:$0xff] %vm4336, %v5493
  %5506 = vst.msk [vmem:[#allocation3 + $0x1a8] sm:$0xff] %vm4336, %v5495
  %5507 = vst.msk [vmem:[#allocation3 + $0x1c8] sm:$0xff] %vm4336, %v5497
  %v5508 = vld [vmem:[#allocation2 + $0x3c8] sm:$0xff]
  %v5509 = vld [vmem:[#allocation2 + $0x3d0] sm:$0xff]
  %v5510 = vld [vmem:[#allocation2 + $0x3d8] sm:$0xff]
  %v5511 = vld [vmem:[#allocation2 + $0x3e0] sm:$0xff]
  %v5512 = vld [vmem:[#allocation2 + $0x3e8] sm:$0xff]
  %5518 = vrot.lane.b32.xlu0 %v5508, 16
  %v5519 = vpop.permute.xlu0 %5518
  %5520 = vrot.lane.b32.xlu0 %v5509, 16
  %v5521 = vpop.permute.xlu0 %5520
  %5522 = vrot.lane.b32.xlu0 %v5510, 16
  %v5523 = vpop.permute.xlu0 %5522
  %5524 = vrot.lane.b32.xlu0 %v5511, 16
  %v5525 = vpop.permute.xlu0 %5524
  %5526 = vrot.lane.b32.xlu0 %v5512, 16
  %v5527 = vpop.permute.xlu0 %5526
  %5533 = vst.msk [vmem:[#allocation3 + $0x1e8] sm:$0xff] %vm4336, %v5519
  %5534 = vst.msk [vmem:[#allocation3 + $0x208] sm:$0xff] %vm4336, %v5521
  %5535 = vst.msk [vmem:[#allocation3 + $0x228] sm:$0xff] %vm4336, %v5523
  %5536 = vst.msk [vmem:[#allocation3 + $0x248] sm:$0xff] %vm4336, %v5525
  %5537 = vst.msk [vmem:[#allocation3 + $0x268] sm:$0xff] %vm4336, %v5527
  %v5538 = vld [vmem:[#allocation2 + $0x400] sm:$0xff]
  %v5539 = vld [vmem:[#allocation2 + $0x408] sm:$0xff]
  %v5540 = vld [vmem:[#allocation2 + $0x410] sm:$0xff]
  %v5541 = vld [vmem:[#allocation2 + $0x418] sm:$0xff]
  %v5542 = vld [vmem:[#allocation2 + $0x420] sm:$0xff]
  %5548 = vrot.lane.b32.xlu0 %v5538, 16
  %v5549 = vpop.permute.xlu0 %5548
  %5550 = vrot.lane.b32.xlu0 %v5539, 16
  %v5551 = vpop.permute.xlu0 %5550
  %5552 = vrot.lane.b32.xlu0 %v5540, 16
  %v5553 = vpop.permute.xlu0 %5552
  %5554 = vrot.lane.b32.xlu0 %v5541, 16
  %v5555 = vpop.permute.xlu0 %5554
  %5556 = vrot.lane.b32.xlu0 %v5542, 16
  %v5557 = vpop.permute.xlu0 %5556
  %5563 = vst.msk [vmem:[#allocation3 + $0x288] sm:$0xff] %vm4336, %v5549
  %5564 = vst.msk [vmem:[#allocation3 + $0x2a8] sm:$0xff] %vm4336, %v5551
  %5565 = vst.msk [vmem:[#allocation3 + $0x2c8] sm:$0xff] %vm4336, %v5553
  %5566 = vst.msk [vmem:[#allocation3 + $0x2e8] sm:$0xff] %vm4336, %v5555
  %5567 = vst.msk [vmem:[#allocation3 + $0x308] sm:$0xff] %vm4336, %v5557
  %v5568 = vld [vmem:[#allocation2 + $0x38] sm:$0xff]
  %v5569 = vld [vmem:[#allocation2 + $0x40] sm:$0xff]
  %v5570 = vld [vmem:[#allocation2 + $0x48] sm:$0xff]
  %v5571 = vld [vmem:[#allocation2 + $0x50] sm:$0xff]
  %v5572 = vld [vmem:[#allocation2 + $0x58] sm:$0xff]
  %5578 = vrot.lane.b32.xlu0 %v5568, 32
  %v5579 = vpop.permute.xlu0 %5578
  %5580 = vrot.lane.b32.xlu0 %v5569, 32
  %v5581 = vpop.permute.xlu0 %5580
  %5582 = vrot.lane.b32.xlu0 %v5570, 32
  %v5583 = vpop.permute.xlu0 %5582
  %5584 = vrot.lane.b32.xlu0 %v5571, 32
  %v5585 = vpop.permute.xlu0 %5584
  %5586 = vrot.lane.b32.xlu0 %v5572, 32
  %v5587 = vpop.permute.xlu0 %5586
  %5593 = vst.msk [vmem:[#allocation3 + $0x8] sm:$0xff] %vm4487, %v5579
  %5594 = vst.msk [vmem:[#allocation3 + $0x28] sm:$0xff] %vm4487, %v5581
  %5595 = vst.msk [vmem:[#allocation3 + $0x48] sm:$0xff] %vm4487, %v5583
  %5596 = vst.msk [vmem:[#allocation3 + $0x68] sm:$0xff] %vm4487, %v5585
  %5597 = vst.msk [vmem:[#allocation3 + $0x88] sm:$0xff] %vm4487, %v5587
  %v5598 = vld [vmem:[#allocation2 + $0x70] sm:$0xff]
  %v5599 = vld [vmem:[#allocation2 + $0x78] sm:$0xff]
  %v5600 = vld [vmem:[#allocation2 + $0x80] sm:$0xff]
  %v5601 = vld [vmem:[#allocation2 + $0x88] sm:$0xff]
  %v5602 = vld [vmem:[#allocation2 + $0x90] sm:$0xff]
  %5608 = vrot.lane.b32.xlu0 %v5598, 32
  %v5609 = vpop.permute.xlu0 %5608
  %5610 = vrot.lane.b32.xlu0 %v5599, 32
  %v5611 = vpop.permute.xlu0 %5610
  %5612 = vrot.lane.b32.xlu0 %v5600, 32
  %v5613 = vpop.permute.xlu0 %5612
  %5614 = vrot.lane.b32.xlu0 %v5601, 32
  %v5615 = vpop.permute.xlu0 %5614
  %5616 = vrot.lane.b32.xlu0 %v5602, 32
  %v5617 = vpop.permute.xlu0 %5616
  %5623 = vst.msk [vmem:[#allocation3 + $0xa8] sm:$0xff] %vm4487, %v5609
  %5624 = vst.msk [vmem:[#allocation3 + $0xc8] sm:$0xff] %vm4487, %v5611
  %5625 = vst.msk [vmem:[#allocation3 + $0xe8] sm:$0xff] %vm4487, %v5613
  %5626 = vst.msk [vmem:[#allocation3 + $0x108] sm:$0xff] %vm4487, %v5615
  %5627 = vst.msk [vmem:[#allocation3 + $0x128] sm:$0xff] %vm4487, %v5617
  %v5628 = vld [vmem:[#allocation2 + $0xa8] sm:$0xff]
  %v5629 = vld [vmem:[#allocation2 + $0xb0] sm:$0xff]
  %v5630 = vld [vmem:[#allocation2 + $0xb8] sm:$0xff]
  %v5631 = vld [vmem:[#allocation2 + $0xc0] sm:$0xff]
  %v5632 = vld [vmem:[#allocation2 + $0xc8] sm:$0xff]
  %5638 = vrot.lane.b32.xlu0 %v5628, 32
  %v5639 = vpop.permute.xlu0 %5638
  %5640 = vrot.lane.b32.xlu0 %v5629, 32
  %v5641 = vpop.permute.xlu0 %5640
  %5642 = vrot.lane.b32.xlu0 %v5630, 32
  %v5643 = vpop.permute.xlu0 %5642
  %5644 = vrot.lane.b32.xlu0 %v5631, 32
  %v5645 = vpop.permute.xlu0 %5644
  %5646 = vrot.lane.b32.xlu0 %v5632, 32
  %v5647 = vpop.permute.xlu0 %5646
  %5653 = vst.msk [vmem:[#allocation3 + $0x148] sm:$0xff] %vm4487, %v5639
  %5654 = vst.msk [vmem:[#allocation3 + $0x168] sm:$0xff] %vm4487, %v5641
  %5655 = vst.msk [vmem:[#allocation3 + $0x188] sm:$0xff] %vm4487, %v5643
  %5656 = vst.msk [vmem:[#allocation3 + $0x1a8] sm:$0xff] %vm4487, %v5645
  %5657 = vst.msk [vmem:[#allocation3 + $0x1c8] sm:$0xff] %vm4487, %v5647
  %v5658 = vld [vmem:[#allocation2 + $0xe0] sm:$0xff]
  %v5659 = vld [vmem:[#allocation2 + $0xe8] sm:$0xff]
  %v5660 = vld [vmem:[#allocation2 + $0xf0] sm:$0xff]
  %v5661 = vld [vmem:[#allocation2 + $0xf8] sm:$0xff]
  %v5662 = vld [vmem:[#allocation2 + $0x100] sm:$0xff]
  %5668 = vrot.lane.b32.xlu0 %v5658, 32
  %v5669 = vpop.permute.xlu0 %5668
  %5670 = vrot.lane.b32.xlu0 %v5659, 32
  %v5671 = vpop.permute.xlu0 %5670
  %5672 = vrot.lane.b32.xlu0 %v5660, 32
  %v5673 = vpop.permute.xlu0 %5672
  %5674 = vrot.lane.b32.xlu0 %v5661, 32
  %v5675 = vpop.permute.xlu0 %5674
  %5676 = vrot.lane.b32.xlu0 %v5662, 32
  %v5677 = vpop.permute.xlu0 %5676
  %5683 = vst.msk [vmem:[#allocation3 + $0x1e8] sm:$0xff] %vm4487, %v5669
  %5684 = vst.msk [vmem:[#allocation3 + $0x208] sm:$0xff] %vm4487, %v5671
  %5685 = vst.msk [vmem:[#allocation3 + $0x228] sm:$0xff] %vm4487, %v5673
  %5686 = vst.msk [vmem:[#allocation3 + $0x248] sm:$0xff] %vm4487, %v5675
  %5687 = vst.msk [vmem:[#allocation3 + $0x268] sm:$0xff] %vm4487, %v5677
  %v5688 = vld [vmem:[#allocation2 + $0x118] sm:$0xff]
  %v5689 = vld [vmem:[#allocation2 + $0x120] sm:$0xff]
  %v5690 = vld [vmem:[#allocation2 + $0x128] sm:$0xff]
  %v5691 = vld [vmem:[#allocation2 + $0x130] sm:$0xff]
  %v5692 = vld [vmem:[#allocation2 + $0x138] sm:$0xff]
  %5698 = vrot.lane.b32.xlu0 %v5688, 32
  %v5699 = vpop.permute.xlu0 %5698
  %5700 = vrot.lane.b32.xlu0 %v5689, 32
  %v5701 = vpop.permute.xlu0 %5700
  %5702 = vrot.lane.b32.xlu0 %v5690, 32
  %v5703 = vpop.permute.xlu0 %5702
  %5704 = vrot.lane.b32.xlu0 %v5691, 32
  %v5705 = vpop.permute.xlu0 %5704
  %5706 = vrot.lane.b32.xlu0 %v5692, 32
  %v5707 = vpop.permute.xlu0 %5706
  %5713 = vst.msk [vmem:[#allocation3 + $0x288] sm:$0xff] %vm4487, %v5699
  %5714 = vst.msk [vmem:[#allocation3 + $0x2a8] sm:$0xff] %vm4487, %v5701
  %5715 = vst.msk [vmem:[#allocation3 + $0x2c8] sm:$0xff] %vm4487, %v5703
  %5716 = vst.msk [vmem:[#allocation3 + $0x2e8] sm:$0xff] %vm4487, %v5705
  %5717 = vst.msk [vmem:[#allocation3 + $0x308] sm:$0xff] %vm4487, %v5707
  %v5718 = vld [vmem:[#allocation2 + $0x1c0] sm:$0xff]
  %v5719 = vld [vmem:[#allocation2 + $0x1c8] sm:$0xff]
  %v5720 = vld [vmem:[#allocation2 + $0x1d0] sm:$0xff]
  %v5721 = vld [vmem:[#allocation2 + $0x1d8] sm:$0xff]
  %v5722 = vld [vmem:[#allocation2 + $0x1e0] sm:$0xff]
  %5728 = vrot.lane.b32.xlu0 %v5718, 48
  %v5729 = vpop.permute.xlu0 %5728
  %5730 = vrot.lane.b32.xlu0 %v5719, 48
  %v5731 = vpop.permute.xlu0 %5730
  %5732 = vrot.lane.b32.xlu0 %v5720, 48
  %v5733 = vpop.permute.xlu0 %5732
  %5734 = vrot.lane.b32.xlu0 %v5721, 48
  %v5735 = vpop.permute.xlu0 %5734
  %5736 = vrot.lane.b32.xlu0 %v5722, 48
  %v5737 = vpop.permute.xlu0 %5736
  %5743 = vst.msk [vmem:[#allocation3 + $0x8] sm:$0xff] %vm4638, %v5729
  %5744 = vst.msk [vmem:[#allocation3 + $0x28] sm:$0xff] %vm4638, %v5731
  %5745 = vst.msk [vmem:[#allocation3 + $0x48] sm:$0xff] %vm4638, %v5733
  %5746 = vst.msk [vmem:[#allocation3 + $0x68] sm:$0xff] %vm4638, %v5735
  %5747 = vst.msk [vmem:[#allocation3 + $0x88] sm:$0xff] %vm4638, %v5737
  %v5748 = vld [vmem:[#allocation2 + $0x1f8] sm:$0xff]
  %v5749 = vld [vmem:[#allocation2 + $0x200] sm:$0xff]
  %v5750 = vld [vmem:[#allocation2 + $0x208] sm:$0xff]
  %v5751 = vld [vmem:[#allocation2 + $0x210] sm:$0xff]
  %v5752 = vld [vmem:[#allocation2 + $0x218] sm:$0xff]
  %5758 = vrot.lane.b32.xlu0 %v5748, 48
  %v5759 = vpop.permute.xlu0 %5758
  %5760 = vrot.lane.b32.xlu0 %v5749, 48
  %v5761 = vpop.permute.xlu0 %5760
  %5762 = vrot.lane.b32.xlu0 %v5750, 48
  %v5763 = vpop.permute.xlu0 %5762
  %5764 = vrot.lane.b32.xlu0 %v5751, 48
  %v5765 = vpop.permute.xlu0 %5764
  %5766 = vrot.lane.b32.xlu0 %v5752, 48
  %v5767 = vpop.permute.xlu0 %5766
  %5773 = vst.msk [vmem:[#allocation3 + $0xa8] sm:$0xff] %vm4638, %v5759
  %5774 = vst.msk [vmem:[#allocation3 + $0xc8] sm:$0xff] %vm4638, %v5761
  %5775 = vst.msk [vmem:[#allocation3 + $0xe8] sm:$0xff] %vm4638, %v5763
  %5776 = vst.msk [vmem:[#allocation3 + $0x108] sm:$0xff] %vm4638, %v5765
  %5777 = vst.msk [vmem:[#allocation3 + $0x128] sm:$0xff] %vm4638, %v5767
  %v5778 = vld [vmem:[#allocation2 + $0x230] sm:$0xff]
  %v5779 = vld [vmem:[#allocation2 + $0x238] sm:$0xff]
  %v5780 = vld [vmem:[#allocation2 + $0x240] sm:$0xff]
  %v5781 = vld [vmem:[#allocation2 + $0x248] sm:$0xff]
  %v5782 = vld [vmem:[#allocation2 + $0x250] sm:$0xff]
  %5788 = vrot.lane.b32.xlu0 %v5778, 48
  %v5789 = vpop.permute.xlu0 %5788
  %5790 = vrot.lane.b32.xlu0 %v5779, 48
  %v5791 = vpop.permute.xlu0 %5790
  %5792 = vrot.lane.b32.xlu0 %v5780, 48
  %v5793 = vpop.permute.xlu0 %5792
  %5794 = vrot.lane.b32.xlu0 %v5781, 48
  %v5795 = vpop.permute.xlu0 %5794
  %5796 = vrot.lane.b32.xlu0 %v5782, 48
  %v5797 = vpop.permute.xlu0 %5796
  %5803 = vst.msk [vmem:[#allocation3 + $0x148] sm:$0xff] %vm4638, %v5789
  %5804 = vst.msk [vmem:[#allocation3 + $0x168] sm:$0xff] %vm4638, %v5791
  %5805 = vst.msk [vmem:[#allocation3 + $0x188] sm:$0xff] %vm4638, %v5793
  %5806 = vst.msk [vmem:[#allocation3 + $0x1a8] sm:$0xff] %vm4638, %v5795
  %5807 = vst.msk [vmem:[#allocation3 + $0x1c8] sm:$0xff] %vm4638, %v5797
  %v5808 = vld [vmem:[#allocation2 + $0x268] sm:$0xff]
  %v5809 = vld [vmem:[#allocation2 + $0x270] sm:$0xff]
  %v5810 = vld [vmem:[#allocation2 + $0x278] sm:$0xff]
  %v5811 = vld [vmem:[#allocation2 + $0x280] sm:$0xff]
  %v5812 = vld [vmem:[#allocation2 + $0x288] sm:$0xff]
  %5818 = vrot.lane.b32.xlu0 %v5808, 48
  %v5819 = vpop.permute.xlu0 %5818
  %5820 = vrot.lane.b32.xlu0 %v5809, 48
  %v5821 = vpop.permute.xlu0 %5820
  %5822 = vrot.lane.b32.xlu0 %v5810, 48
  %v5823 = vpop.permute.xlu0 %5822
  %5824 = vrot.lane.b32.xlu0 %v5811, 48
  %v5825 = vpop.permute.xlu0 %5824
  %5826 = vrot.lane.b32.xlu0 %v5812, 48
  %v5827 = vpop.permute.xlu0 %5826
  %5833 = vst.msk [vmem:[#allocation3 + $0x1e8] sm:$0xff] %vm4638, %v5819
  %5834 = vst.msk [vmem:[#allocation3 + $0x208] sm:$0xff] %vm4638, %v5821
  %5835 = vst.msk [vmem:[#allocation3 + $0x228] sm:$0xff] %vm4638, %v5823
  %5836 = vst.msk [vmem:[#allocation3 + $0x248] sm:$0xff] %vm4638, %v5825
  %5837 = vst.msk [vmem:[#allocation3 + $0x268] sm:$0xff] %vm4638, %v5827
  %v5838 = vld [vmem:[#allocation2 + $0x2a0] sm:$0xff]
  %v5839 = vld [vmem:[#allocation2 + $0x2a8] sm:$0xff]
  %v5840 = vld [vmem:[#allocation2 + $0x2b0] sm:$0xff]
  %v5841 = vld [vmem:[#allocation2 + $0x2b8] sm:$0xff]
  %v5842 = vld [vmem:[#allocation2 + $0x2c0] sm:$0xff]
  %5848 = vrot.lane.b32.xlu0 %v5838, 48
  %v5849 = vpop.permute.xlu0 %5848
  %5850 = vrot.lane.b32.xlu0 %v5839, 48
  %v5851 = vpop.permute.xlu0 %5850
  %5852 = vrot.lane.b32.xlu0 %v5840, 48
  %v5853 = vpop.permute.xlu0 %5852
  %5854 = vrot.lane.b32.xlu0 %v5841, 48
  %v5855 = vpop.permute.xlu0 %5854
  %5856 = vrot.lane.b32.xlu0 %v5842, 48
  %v5857 = vpop.permute.xlu0 %5856
  %5863 = vst.msk [vmem:[#allocation3 + $0x288] sm:$0xff] %vm4638, %v5849
  %5864 = vst.msk [vmem:[#allocation3 + $0x2a8] sm:$0xff] %vm4638, %v5851
  %5865 = vst.msk [vmem:[#allocation3 + $0x2c8] sm:$0xff] %vm4638, %v5853
  %5866 = vst.msk [vmem:[#allocation3 + $0x2e8] sm:$0xff] %vm4638, %v5855
  %5867 = vst.msk [vmem:[#allocation3 + $0x308] sm:$0xff] %vm4638, %v5857
  %v5868 = vld [vmem:[#allocation2 + $0x40] sm:$0xff]
  %v5869 = vld [vmem:[#allocation2 + $0x48] sm:$0xff]
  %v5870 = vld [vmem:[#allocation2 + $0x50] sm:$0xff]
  %v5871 = vld [vmem:[#allocation2 + $0x58] sm:$0xff]
  %v5872 = vld [vmem:[#allocation2 + $0x60] sm:$0xff]
  %5878 = vrot.lane.b32.xlu0 %v5868, 64
  %v5879 = vpop.permute.xlu0 %5878
  %5880 = vrot.lane.b32.xlu0 %v5869, 64
  %v5881 = vpop.permute.xlu0 %5880
  %5882 = vrot.lane.b32.xlu0 %v5870, 64
  %v5883 = vpop.permute.xlu0 %5882
  %5884 = vrot.lane.b32.xlu0 %v5871, 64
  %v5885 = vpop.permute.xlu0 %5884
  %5886 = vrot.lane.b32.xlu0 %v5872, 64
  %v5887 = vpop.permute.xlu0 %5886
  %5893 = vst.msk [vmem:[#allocation3 + $0x8] sm:$0xff] %vm4789, %v5879
  %5894 = vst.msk [vmem:[#allocation3 + $0x28] sm:$0xff] %vm4789, %v5881
  %5895 = vst.msk [vmem:[#allocation3 + $0x48] sm:$0xff] %vm4789, %v5883
  %5896 = vst.msk [vmem:[#allocation3 + $0x68] sm:$0xff] %vm4789, %v5885
  %5897 = vst.msk [vmem:[#allocation3 + $0x88] sm:$0xff] %vm4789, %v5887
  %v5898 = vld [vmem:[#allocation2 + $0x78] sm:$0xff]
  %v5899 = vld [vmem:[#allocation2 + $0x80] sm:$0xff]
  %v5900 = vld [vmem:[#allocation2 + $0x88] sm:$0xff]
  %v5901 = vld [vmem:[#allocation2 + $0x90] sm:$0xff]
  %v5902 = vld [vmem:[#allocation2 + $0x98] sm:$0xff]
  %5908 = vrot.lane.b32.xlu0 %v5898, 64
  %v5909 = vpop.permute.xlu0 %5908
  %5910 = vrot.lane.b32.xlu0 %v5899, 64
  %v5911 = vpop.permute.xlu0 %5910
  %5912 = vrot.lane.b32.xlu0 %v5900, 64
  %v5913 = vpop.permute.xlu0 %5912
  %5914 = vrot.lane.b32.xlu0 %v5901, 64
  %v5915 = vpop.permute.xlu0 %5914
  %5916 = vrot.lane.b32.xlu0 %v5902, 64
  %v5917 = vpop.permute.xlu0 %5916
  %5923 = vst.msk [vmem:[#allocation3 + $0xa8] sm:$0xff] %vm4789, %v5909
  %5924 = vst.msk [vmem:[#allocation3 + $0xc8] sm:$0xff] %vm4789, %v5911
  %5925 = vst.msk [vmem:[#allocation3 + $0xe8] sm:$0xff] %vm4789, %v5913
  %5926 = vst.msk [vmem:[#allocation3 + $0x108] sm:$0xff] %vm4789, %v5915
  %5927 = vst.msk [vmem:[#allocation3 + $0x128] sm:$0xff] %vm4789, %v5917
  %v5928 = vld [vmem:[#allocation2 + $0xb0] sm:$0xff]
  %v5929 = vld [vmem:[#allocation2 + $0xb8] sm:$0xff]
  %v5930 = vld [vmem:[#allocation2 + $0xc0] sm:$0xff]
  %v5931 = vld [vmem:[#allocation2 + $0xc8] sm:$0xff]
  %v5932 = vld [vmem:[#allocation2 + $0xd0] sm:$0xff]
  %5938 = vrot.lane.b32.xlu0 %v5928, 64
  %v5939 = vpop.permute.xlu0 %5938
  %5940 = vrot.lane.b32.xlu0 %v5929, 64
  %v5941 = vpop.permute.xlu0 %5940
  %5942 = vrot.lane.b32.xlu0 %v5930, 64
  %v5943 = vpop.permute.xlu0 %5942
  %5944 = vrot.lane.b32.xlu0 %v5931, 64
  %v5945 = vpop.permute.xlu0 %5944
  %5946 = vrot.lane.b32.xlu0 %v5932, 64
  %v5947 = vpop.permute.xlu0 %5946
  %5953 = vst.msk [vmem:[#allocation3 + $0x148] sm:$0xff] %vm4789, %v5939
  %5954 = vst.msk [vmem:[#allocation3 + $0x168] sm:$0xff] %vm4789, %v5941
  %5955 = vst.msk [vmem:[#allocation3 + $0x188] sm:$0xff] %vm4789, %v5943
  %5956 = vst.msk [vmem:[#allocation3 + $0x1a8] sm:$0xff] %vm4789, %v5945
  %5957 = vst.msk [vmem:[#allocation3 + $0x1c8] sm:$0xff] %vm4789, %v5947
  %v5958 = vld [vmem:[#allocation2 + $0xe8] sm:$0xff]
  %v5959 = vld [vmem:[#allocation2 + $0xf0] sm:$0xff]
  %v5960 = vld [vmem:[#allocation2 + $0xf8] sm:$0xff]
  %v5961 = vld [vmem:[#allocation2 + $0x100] sm:$0xff]
  %v5962 = vld [vmem:[#allocation2 + $0x108] sm:$0xff]
  %5968 = vrot.lane.b32.xlu0 %v5958, 64
  %v5969 = vpop.permute.xlu0 %5968
  %5970 = vrot.lane.b32.xlu0 %v5959, 64
  %v5971 = vpop.permute.xlu0 %5970
  %5972 = vrot.lane.b32.xlu0 %v5960, 64
  %v5973 = vpop.permute.xlu0 %5972
  %5974 = vrot.lane.b32.xlu0 %v5961, 64
  %v5975 = vpop.permute.xlu0 %5974
  %5976 = vrot.lane.b32.xlu0 %v5962, 64
  %v5977 = vpop.permute.xlu0 %5976
  %5983 = vst.msk [vmem:[#allocation3 + $0x1e8] sm:$0xff] %vm4789, %v5969
  %5984 = vst.msk [vmem:[#allocation3 + $0x208] sm:$0xff] %vm4789, %v5971
  %5985 = vst.msk [vmem:[#allocation3 + $0x228] sm:$0xff] %vm4789, %v5973
  %5986 = vst.msk [vmem:[#allocation3 + $0x248] sm:$0xff] %vm4789, %v5975
  %5987 = vst.msk [vmem:[#allocation3 + $0x268] sm:$0xff] %vm4789, %v5977
  %v5988 = vld [vmem:[#allocation2 + $0x120] sm:$0xff]
  %v5989 = vld [vmem:[#allocation2 + $0x128] sm:$0xff]
  %v5990 = vld [vmem:[#allocation2 + $0x130] sm:$0xff]
  %v5991 = vld [vmem:[#allocation2 + $0x138] sm:$0xff]
  %v5992 = vld [vmem:[#allocation2 + $0x140] sm:$0xff]
  %5998 = vrot.lane.b32.xlu0 %v5988, 64
  %v5999 = vpop.permute.xlu0 %5998
  %6000 = vrot.lane.b32.xlu0 %v5989, 64
  %v6001 = vpop.permute.xlu0 %6000
  %6002 = vrot.lane.b32.xlu0 %v5990, 64
  %v6003 = vpop.permute.xlu0 %6002
  %6004 = vrot.lane.b32.xlu0 %v5991, 64
  %v6005 = vpop.permute.xlu0 %6004
  %6006 = vrot.lane.b32.xlu0 %v5992, 64
  %v6007 = vpop.permute.xlu0 %6006
  %6013 = vst.msk [vmem:[#allocation3 + $0x288] sm:$0xff] %vm4789, %v5999
  %6014 = vst.msk [vmem:[#allocation3 + $0x2a8] sm:$0xff] %vm4789, %v6001
  %6015 = vst.msk [vmem:[#allocation3 + $0x2c8] sm:$0xff] %vm4789, %v6003
  %6016 = vst.msk [vmem:[#allocation3 + $0x2e8] sm:$0xff] %vm4789, %v6005
  %6017 = vst.msk [vmem:[#allocation3 + $0x308] sm:$0xff] %vm4789, %v6007
  %v6018 = vld [vmem:[#allocation2 + $0x1c8] sm:$0xff]
  %v6019 = vld [vmem:[#allocation2 + $0x1d0] sm:$0xff]
  %v6020 = vld [vmem:[#allocation2 + $0x1d8] sm:$0xff]
  %v6021 = vld [vmem:[#allocation2 + $0x1e0] sm:$0xff]
  %v6022 = vld [vmem:[#allocation2 + $0x1e8] sm:$0xff]
  %6028 = vrot.lane.b32.xlu0 %v6018, 80
  %v6029 = vpop.permute.xlu0 %6028
  %6030 = vrot.lane.b32.xlu0 %v6019, 80
  %v6031 = vpop.permute.xlu0 %6030
  %6032 = vrot.lane.b32.xlu0 %v6020, 80
  %v6033 = vpop.permute.xlu0 %6032
  %6034 = vrot.lane.b32.xlu0 %v6021, 80
  %v6035 = vpop.permute.xlu0 %6034
  %6036 = vrot.lane.b32.xlu0 %v6022, 80
  %v6037 = vpop.permute.xlu0 %6036
  %6043 = vst.msk [vmem:[#allocation3 + $0x8] sm:$0xff] %vm4940, %v6029
  %6044 = vst.msk [vmem:[#allocation3 + $0x28] sm:$0xff] %vm4940, %v6031
  %6045 = vst.msk [vmem:[#allocation3 + $0x48] sm:$0xff] %vm4940, %v6033
  %6046 = vst.msk [vmem:[#allocation3 + $0x68] sm:$0xff] %vm4940, %v6035
  %6047 = vst.msk [vmem:[#allocation3 + $0x88] sm:$0xff] %vm4940, %v6037
  %v6048 = vld [vmem:[#allocation2 + $0x200] sm:$0xff]
  %v6049 = vld [vmem:[#allocation2 + $0x208] sm:$0xff]
  %v6050 = vld [vmem:[#allocation2 + $0x210] sm:$0xff]
  %v6051 = vld [vmem:[#allocation2 + $0x218] sm:$0xff]
  %v6052 = vld [vmem:[#allocation2 + $0x220] sm:$0xff]
  %6058 = vrot.lane.b32.xlu0 %v6048, 80
  %v6059 = vpop.permute.xlu0 %6058
  %6060 = vrot.lane.b32.xlu0 %v6049, 80
  %v6061 = vpop.permute.xlu0 %6060
  %6062 = vrot.lane.b32.xlu0 %v6050, 80
  %v6063 = vpop.permute.xlu0 %6062
  %6064 = vrot.lane.b32.xlu0 %v6051, 80
  %v6065 = vpop.permute.xlu0 %6064
  %6066 = vrot.lane.b32.xlu0 %v6052, 80
  %v6067 = vpop.permute.xlu0 %6066
  %6073 = vst.msk [vmem:[#allocation3 + $0xa8] sm:$0xff] %vm4940, %v6059
  %6074 = vst.msk [vmem:[#allocation3 + $0xc8] sm:$0xff] %vm4940, %v6061
  %6075 = vst.msk [vmem:[#allocation3 + $0xe8] sm:$0xff] %vm4940, %v6063
  %6076 = vst.msk [vmem:[#allocation3 + $0x108] sm:$0xff] %vm4940, %v6065
  %6077 = vst.msk [vmem:[#allocation3 + $0x128] sm:$0xff] %vm4940, %v6067
  %v6078 = vld [vmem:[#allocation2 + $0x238] sm:$0xff]
  %v6079 = vld [vmem:[#allocation2 + $0x240] sm:$0xff]
  %v6080 = vld [vmem:[#allocation2 + $0x248] sm:$0xff]
  %v6081 = vld [vmem:[#allocation2 + $0x250] sm:$0xff]
  %v6082 = vld [vmem:[#allocation2 + $0x258] sm:$0xff]
  %6088 = vrot.lane.b32.xlu0 %v6078, 80
  %v6089 = vpop.permute.xlu0 %6088
  %6090 = vrot.lane.b32.xlu0 %v6079, 80
  %v6091 = vpop.permute.xlu0 %6090
  %6092 = vrot.lane.b32.xlu0 %v6080, 80
  %v6093 = vpop.permute.xlu0 %6092
  %6094 = vrot.lane.b32.xlu0 %v6081, 80
  %v6095 = vpop.permute.xlu0 %6094
  %6096 = vrot.lane.b32.xlu0 %v6082, 80
  %v6097 = vpop.permute.xlu0 %6096
  %6103 = vst.msk [vmem:[#allocation3 + $0x148] sm:$0xff] %vm4940, %v6089
  %6104 = vst.msk [vmem:[#allocation3 + $0x168] sm:$0xff] %vm4940, %v6091
  %6105 = vst.msk [vmem:[#allocation3 + $0x188] sm:$0xff] %vm4940, %v6093
  %6106 = vst.msk [vmem:[#allocation3 + $0x1a8] sm:$0xff] %vm4940, %v6095
  %6107 = vst.msk [vmem:[#allocation3 + $0x1c8] sm:$0xff] %vm4940, %v6097
  %v6108 = vld [vmem:[#allocation2 + $0x270] sm:$0xff]
  %v6109 = vld [vmem:[#allocation2 + $0x278] sm:$0xff]
  %v6110 = vld [vmem:[#allocation2 + $0x280] sm:$0xff]
  %v6111 = vld [vmem:[#allocation2 + $0x288] sm:$0xff]
  %v6112 = vld [vmem:[#allocation2 + $0x290] sm:$0xff]
  %6118 = vrot.lane.b32.xlu0 %v6108, 80
  %v6119 = vpop.permute.xlu0 %6118
  %6120 = vrot.lane.b32.xlu0 %v6109, 80
  %v6121 = vpop.permute.xlu0 %6120
  %6122 = vrot.lane.b32.xlu0 %v6110, 80
  %v6123 = vpop.permute.xlu0 %6122
  %6124 = vrot.lane.b32.xlu0 %v6111, 80
  %v6125 = vpop.permute.xlu0 %6124
  %6126 = vrot.lane.b32.xlu0 %v6112, 80
  %v6127 = vpop.permute.xlu0 %6126
  %6133 = vst.msk [vmem:[#allocation3 + $0x1e8] sm:$0xff] %vm4940, %v6119
  %6134 = vst.msk [vmem:[#allocation3 + $0x208] sm:$0xff] %vm4940, %v6121
  %6135 = vst.msk [vmem:[#allocation3 + $0x228] sm:$0xff] %vm4940, %v6123
  %6136 = vst.msk [vmem:[#allocation3 + $0x248] sm:$0xff] %vm4940, %v6125
  %6137 = vst.msk [vmem:[#allocation3 + $0x268] sm:$0xff] %vm4940, %v6127
  %v6138 = vld [vmem:[#allocation2 + $0x2a8] sm:$0xff]
  %v6139 = vld [vmem:[#allocation2 + $0x2b0] sm:$0xff]
  %v6140 = vld [vmem:[#allocation2 + $0x2b8] sm:$0xff]
  %v6141 = vld [vmem:[#allocation2 + $0x2c0] sm:$0xff]
  %v6142 = vld [vmem:[#allocation2 + $0x2c8] sm:$0xff]
  %6148 = vrot.lane.b32.xlu0 %v6138, 80
  %v6149 = vpop.permute.xlu0 %6148
  %6150 = vrot.lane.b32.xlu0 %v6139, 80
  %v6151 = vpop.permute.xlu0 %6150
  %6152 = vrot.lane.b32.xlu0 %v6140, 80
  %v6153 = vpop.permute.xlu0 %6152
  %6154 = vrot.lane.b32.xlu0 %v6141, 80
  %v6155 = vpop.permute.xlu0 %6154
  %6156 = vrot.lane.b32.xlu0 %v6142, 80
  %v6157 = vpop.permute.xlu0 %6156
  %6163 = vst.msk [vmem:[#allocation3 + $0x288] sm:$0xff] %vm4940, %v6149
  %6164 = vst.msk [vmem:[#allocation3 + $0x2a8] sm:$0xff] %vm4940, %v6151
  %6165 = vst.msk [vmem:[#allocation3 + $0x2c8] sm:$0xff] %vm4940, %v6153
  %6166 = vst.msk [vmem:[#allocation3 + $0x2e8] sm:$0xff] %vm4940, %v6155
  %6167 = vst.msk [vmem:[#allocation3 + $0x308] sm:$0xff] %vm4940, %v6157
  %v6168 = vld [vmem:[#allocation2 + $0x48] sm:$0xff]
  %v6169 = vld [vmem:[#allocation2 + $0x50] sm:$0xff]
  %v6170 = vld [vmem:[#allocation2 + $0x58] sm:$0xff]
  %v6171 = vld [vmem:[#allocation2 + $0x60] sm:$0xff]
  %v6172 = vld [vmem:[#allocation2 + $0x68] sm:$0xff]
  %6178 = vrot.lane.b32.xlu0 %v6168, 96
  %v6179 = vpop.permute.xlu0 %6178
  %6180 = vrot.lane.b32.xlu0 %v6169, 96
  %v6181 = vpop.permute.xlu0 %6180
  %6182 = vrot.lane.b32.xlu0 %v6170, 96
  %v6183 = vpop.permute.xlu0 %6182
  %6184 = vrot.lane.b32.xlu0 %v6171, 96
  %v6185 = vpop.permute.xlu0 %6184
  %6186 = vrot.lane.b32.xlu0 %v6172, 96
  %v6187 = vpop.permute.xlu0 %6186
  %6193 = vst.msk [vmem:[#allocation3 + $0x8] sm:$0xff] %vm5091, %v6179
  %6194 = vst.msk [vmem:[#allocation3 + $0x28] sm:$0xff] %vm5091, %v6181
  %6195 = vst.msk [vmem:[#allocation3 + $0x48] sm:$0xff] %vm5091, %v6183
  %6196 = vst.msk [vmem:[#allocation3 + $0x68] sm:$0xff] %vm5091, %v6185
  %6197 = vst.msk [vmem:[#allocation3 + $0x88] sm:$0xff] %vm5091, %v6187
  %v6198 = vld [vmem:[#allocation2 + $0x80] sm:$0xff]
  %v6199 = vld [vmem:[#allocation2 + $0x88] sm:$0xff]
  %v6200 = vld [vmem:[#allocation2 + $0x90] sm:$0xff]
  %v6201 = vld [vmem:[#allocation2 + $0x98] sm:$0xff]
  %v6202 = vld [vmem:[#allocation2 + $0xa0] sm:$0xff]
  %6208 = vrot.lane.b32.xlu0 %v6198, 96
  %v6209 = vpop.permute.xlu0 %6208
  %6210 = vrot.lane.b32.xlu0 %v6199, 96
  %v6211 = vpop.permute.xlu0 %6210
  %6212 = vrot.lane.b32.xlu0 %v6200, 96
  %v6213 = vpop.permute.xlu0 %6212
  %6214 = vrot.lane.b32.xlu0 %v6201, 96
  %v6215 = vpop.permute.xlu0 %6214
  %6216 = vrot.lane.b32.xlu0 %v6202, 96
  %v6217 = vpop.permute.xlu0 %6216
  %6223 = vst.msk [vmem:[#allocation3 + $0xa8] sm:$0xff] %vm5091, %v6209
  %6224 = vst.msk [vmem:[#allocation3 + $0xc8] sm:$0xff] %vm5091, %v6211
  %6225 = vst.msk [vmem:[#allocation3 + $0xe8] sm:$0xff] %vm5091, %v6213
  %6226 = vst.msk [vmem:[#allocation3 + $0x108] sm:$0xff] %vm5091, %v6215
  %6227 = vst.msk [vmem:[#allocation3 + $0x128] sm:$0xff] %vm5091, %v6217
  %v6228 = vld [vmem:[#allocation2 + $0xb8] sm:$0xff]
  %v6229 = vld [vmem:[#allocation2 + $0xc0] sm:$0xff]
  %v6230 = vld [vmem:[#allocation2 + $0xc8] sm:$0xff]
  %v6231 = vld [vmem:[#allocation2 + $0xd0] sm:$0xff]
  %v6232 = vld [vmem:[#allocation2 + $0xd8] sm:$0xff]
  %6238 = vrot.lane.b32.xlu0 %v6228, 96
  %v6239 = vpop.permute.xlu0 %6238
  %6240 = vrot.lane.b32.xlu0 %v6229, 96
  %v6241 = vpop.permute.xlu0 %6240
  %6242 = vrot.lane.b32.xlu0 %v6230, 96
  %v6243 = vpop.permute.xlu0 %6242
  %6244 = vrot.lane.b32.xlu0 %v6231, 96
  %v6245 = vpop.permute.xlu0 %6244
  %6246 = vrot.lane.b32.xlu0 %v6232, 96
  %v6247 = vpop.permute.xlu0 %6246
  %6253 = vst.msk [vmem:[#allocation3 + $0x148] sm:$0xff] %vm5091, %v6239
  %6254 = vst.msk [vmem:[#allocation3 + $0x168] sm:$0xff] %vm5091, %v6241
  %6255 = vst.msk [vmem:[#allocation3 + $0x188] sm:$0xff] %vm5091, %v6243
  %6256 = vst.msk [vmem:[#allocation3 + $0x1a8] sm:$0xff] %vm5091, %v6245
  %6257 = vst.msk [vmem:[#allocation3 + $0x1c8] sm:$0xff] %vm5091, %v6247
  %v6258 = vld [vmem:[#allocation2 + $0xf0] sm:$0xff]
  %v6259 = vld [vmem:[#allocation2 + $0xf8] sm:$0xff]
  %v6260 = vld [vmem:[#allocation2 + $0x100] sm:$0xff]
  %v6261 = vld [vmem:[#allocation2 + $0x108] sm:$0xff]
  %v6262 = vld [vmem:[#allocation2 + $0x110] sm:$0xff]
  %6268 = vrot.lane.b32.xlu0 %v6258, 96
  %v6269 = vpop.permute.xlu0 %6268
  %6270 = vrot.lane.b32.xlu0 %v6259, 96
  %v6271 = vpop.permute.xlu0 %6270
  %6272 = vrot.lane.b32.xlu0 %v6260, 96
  %v6273 = vpop.permute.xlu0 %6272
  %6274 = vrot.lane.b32.xlu0 %v6261, 96
  %v6275 = vpop.permute.xlu0 %6274
  %6276 = vrot.lane.b32.xlu0 %v6262, 96
  %v6277 = vpop.permute.xlu0 %6276
  %6283 = vst.msk [vmem:[#allocation3 + $0x1e8] sm:$0xff] %vm5091, %v6269
  %6284 = vst.msk [vmem:[#allocation3 + $0x208] sm:$0xff] %vm5091, %v6271
  %6285 = vst.msk [vmem:[#allocation3 + $0x228] sm:$0xff] %vm5091, %v6273
  %6286 = vst.msk [vmem:[#allocation3 + $0x248] sm:$0xff] %vm5091, %v6275
  %6287 = vst.msk [vmem:[#allocation3 + $0x268] sm:$0xff] %vm5091, %v6277
  %v6288 = vld [vmem:[#allocation2 + $0x128] sm:$0xff]
  %v6289 = vld [vmem:[#allocation2 + $0x130] sm:$0xff]
  %v6290 = vld [vmem:[#allocation2 + $0x138] sm:$0xff]
  %v6291 = vld [vmem:[#allocation2 + $0x140] sm:$0xff]
  %v6292 = vld [vmem:[#allocation2 + $0x148] sm:$0xff]
  %6298 = vrot.lane.b32.xlu0 %v6288, 96
  %v6299 = vpop.permute.xlu0 %6298
  %6300 = vrot.lane.b32.xlu0 %v6289, 96
  %v6301 = vpop.permute.xlu0 %6300
  %6302 = vrot.lane.b32.xlu0 %v6290, 96
  %v6303 = vpop.permute.xlu0 %6302
  %6304 = vrot.lane.b32.xlu0 %v6291, 96
  %v6305 = vpop.permute.xlu0 %6304
  %6306 = vrot.lane.b32.xlu0 %v6292, 96
  %v6307 = vpop.permute.xlu0 %6306
  %6313 = vst.msk [vmem:[#allocation3 + $0x288] sm:$0xff] %vm5091, %v6299
  %6314 = vst.msk [vmem:[#allocation3 + $0x2a8] sm:$0xff] %vm5091, %v6301
  %6315 = vst.msk [vmem:[#allocation3 + $0x2c8] sm:$0xff] %vm5091, %v6303
  %6316 = vst.msk [vmem:[#allocation3 + $0x2e8] sm:$0xff] %vm5091, %v6305
  %6317 = vst.msk [vmem:[#allocation3 + $0x308] sm:$0xff] %vm5091, %v6307
  %v6318 = vld [vmem:[#allocation2 + $0x348] sm:$0xff]
  %v6319 = vld [vmem:[#allocation2 + $0x350] sm:$0xff]
  %v6320 = vld [vmem:[#allocation2 + $0x358] sm:$0xff]
  %v6321 = vld [vmem:[#allocation2 + $0x360] sm:$0xff]
  %v6322 = vld [vmem:[#allocation2 + $0x368] sm:$0xff]
  %6328 = vrot.lane.b32.xlu0 %v6318, 112
  %v6329 = vpop.permute.xlu0 %6328
  %6330 = vrot.lane.b32.xlu0 %v6319, 112
  %v6331 = vpop.permute.xlu0 %6330
  %6332 = vrot.lane.b32.xlu0 %v6320, 112
  %v6333 = vpop.permute.xlu0 %6332
  %6334 = vrot.lane.b32.xlu0 %v6321, 112
  %v6335 = vpop.permute.xlu0 %6334
  %6336 = vrot.lane.b32.xlu0 %v6322, 112
  %v6337 = vpop.permute.xlu0 %6336
  %6343 = vst.msk [vmem:[#allocation3 + $0x8] sm:$0xff] %vm5242, %v6329
  %6344 = vst.msk [vmem:[#allocation3 + $0x28] sm:$0xff] %vm5242, %v6331
  %6345 = vst.msk [vmem:[#allocation3 + $0x48] sm:$0xff] %vm5242, %v6333
  %6346 = vst.msk [vmem:[#allocation3 + $0x68] sm:$0xff] %vm5242, %v6335
  %6347 = vst.msk [vmem:[#allocation3 + $0x88] sm:$0xff] %vm5242, %v6337
  %v6348 = vld [vmem:[#allocation2 + $0x380] sm:$0xff]
  %v6349 = vld [vmem:[#allocation2 + $0x388] sm:$0xff]
  %v6350 = vld [vmem:[#allocation2 + $0x390] sm:$0xff]
  %v6351 = vld [vmem:[#allocation2 + $0x398] sm:$0xff]
  %v6352 = vld [vmem:[#allocation2 + $0x3a0] sm:$0xff]
  %6358 = vrot.lane.b32.xlu0 %v6348, 112
  %v6359 = vpop.permute.xlu0 %6358
  %6360 = vrot.lane.b32.xlu0 %v6349, 112
  %v6361 = vpop.permute.xlu0 %6360
  %6362 = vrot.lane.b32.xlu0 %v6350, 112
  %v6363 = vpop.permute.xlu0 %6362
  %6364 = vrot.lane.b32.xlu0 %v6351, 112
  %v6365 = vpop.permute.xlu0 %6364
  %6366 = vrot.lane.b32.xlu0 %v6352, 112
  %v6367 = vpop.permute.xlu0 %6366
  %6373 = vst.msk [vmem:[#allocation3 + $0xa8] sm:$0xff] %vm5242, %v6359
  %6374 = vst.msk [vmem:[#allocation3 + $0xc8] sm:$0xff] %vm5242, %v6361
  %6375 = vst.msk [vmem:[#allocation3 + $0xe8] sm:$0xff] %vm5242, %v6363
  %6376 = vst.msk [vmem:[#allocation3 + $0x108] sm:$0xff] %vm5242, %v6365
  %6377 = vst.msk [vmem:[#allocation3 + $0x128] sm:$0xff] %vm5242, %v6367
  %v6378 = vld [vmem:[#allocation2 + $0x3b8] sm:$0xff]
  %v6379 = vld [vmem:[#allocation2 + $0x3c0] sm:$0xff]
  %v6380 = vld [vmem:[#allocation2 + $0x3c8] sm:$0xff]
  %v6381 = vld [vmem:[#allocation2 + $0x3d0] sm:$0xff]
  %v6382 = vld [vmem:[#allocation2 + $0x3d8] sm:$0xff]
  %6388 = vrot.lane.b32.xlu0 %v6378, 112
  %v6389 = vpop.permute.xlu0 %6388
  %6390 = vrot.lane.b32.xlu0 %v6379, 112
  %v6391 = vpop.permute.xlu0 %6390
  %6392 = vrot.lane.b32.xlu0 %v6380, 112
  %v6393 = vpop.permute.xlu0 %6392
  %6394 = vrot.lane.b32.xlu0 %v6381, 112
  %v6395 = vpop.permute.xlu0 %6394
  %6396 = vrot.lane.b32.xlu0 %v6382, 112
  %v6397 = vpop.permute.xlu0 %6396
  %6403 = vst.msk [vmem:[#allocation3 + $0x148] sm:$0xff] %vm5242, %v6389
  %6404 = vst.msk [vmem:[#allocation3 + $0x168] sm:$0xff] %vm5242, %v6391
  %6405 = vst.msk [vmem:[#allocation3 + $0x188] sm:$0xff] %vm5242, %v6393
  %6406 = vst.msk [vmem:[#allocation3 + $0x1a8] sm:$0xff] %vm5242, %v6395
  %6407 = vst.msk [vmem:[#allocation3 + $0x1c8] sm:$0xff] %vm5242, %v6397
  %v6408 = vld [vmem:[#allocation2 + $0x3f0] sm:$0xff]
  %v6409 = vld [vmem:[#allocation2 + $0x3f8] sm:$0xff]
  %v6410 = vld [vmem:[#allocation2 + $0x400] sm:$0xff]
  %v6411 = vld [vmem:[#allocation2 + $0x408] sm:$0xff]
  %v6412 = vld [vmem:[#allocation2 + $0x410] sm:$0xff]
  %6418 = vrot.lane.b32.xlu0 %v6408, 112
  %v6419 = vpop.permute.xlu0 %6418
  %6420 = vrot.lane.b32.xlu0 %v6409, 112
  %v6421 = vpop.permute.xlu0 %6420
  %6422 = vrot.lane.b32.xlu0 %v6410, 112
  %v6423 = vpop.permute.xlu0 %6422
  %6424 = vrot.lane.b32.xlu0 %v6411, 112
  %v6425 = vpop.permute.xlu0 %6424
  %6426 = vrot.lane.b32.xlu0 %v6412, 112
  %v6427 = vpop.permute.xlu0 %6426
  %6433 = vst.msk [vmem:[#allocation3 + $0x1e8] sm:$0xff] %vm5242, %v6419
  %6434 = vst.msk [vmem:[#allocation3 + $0x208] sm:$0xff] %vm5242, %v6421
  %6435 = vst.msk [vmem:[#allocation3 + $0x228] sm:$0xff] %vm5242, %v6423
  %6436 = vst.msk [vmem:[#allocation3 + $0x248] sm:$0xff] %vm5242, %v6425
  %6437 = vst.msk [vmem:[#allocation3 + $0x268] sm:$0xff] %vm5242, %v6427
  %v6438 = vld [vmem:[#allocation2 + $0x428] sm:$0xff]
  %v6439 = vld [vmem:[#allocation2 + $0x430] sm:$0xff]
  %v6440 = vld [vmem:[#allocation2 + $0x438] sm:$0xff]
  %v6441 = vld [vmem:[#allocation2 + $0x440] sm:$0xff]
  %v6442 = vld [vmem:[#allocation2 + $0x448] sm:$0xff]
  %6448 = vrot.lane.b32.xlu0 %v6438, 112
  %v6449 = vpop.permute.xlu0 %6448
  %6450 = vrot.lane.b32.xlu0 %v6439, 112
  %v6451 = vpop.permute.xlu0 %6450
  %6452 = vrot.lane.b32.xlu0 %v6440, 112
  %v6453 = vpop.permute.xlu0 %6452
  %6454 = vrot.lane.b32.xlu0 %v6441, 112
  %v6455 = vpop.permute.xlu0 %6454
  %6456 = vrot.lane.b32.xlu0 %v6442, 112
  %v6457 = vpop.permute.xlu0 %6456
  %6463 = vst.msk [vmem:[#allocation3 + $0x288] sm:$0xff] %vm5242, %v6449
  %6464 = vst.msk [vmem:[#allocation3 + $0x2a8] sm:$0xff] %vm5242, %v6451
  %6465 = vst.msk [vmem:[#allocation3 + $0x2c8] sm:$0xff] %vm5242, %v6453
  %6466 = vst.msk [vmem:[#allocation3 + $0x2e8] sm:$0xff] %vm5242, %v6455
  %6467 = vst.msk [vmem:[#allocation3 + $0x308] sm:$0xff] %vm5242, %v6457
  %v6468 = vld [vmem:[#allocation2 + $0x4d0] sm:$0xff]
  %v6469 = vld [vmem:[#allocation2 + $0x4d8] sm:$0xff]
  %v6470 = vld [vmem:[#allocation2 + $0x4e0] sm:$0xff]
  %v6471 = vld [vmem:[#allocation2 + $0x4e8] sm:$0xff]
  %v6472 = vld [vmem:[#allocation2 + $0x4f0] sm:$0xff]
  %6473 = vst.msk [vmem:[#allocation3 + $0x10] sm:$0xff] %vm241, %v6468
  %6474 = vst.msk [vmem:[#allocation3 + $0x30] sm:$0xff] %vm241, %v6469
  %6475 = vst.msk [vmem:[#allocation3 + $0x50] sm:$0xff] %vm241, %v6470
  %6476 = vst.msk [vmem:[#allocation3 + $0x70] sm:$0xff] %vm241, %v6471
  %6477 = vst.msk [vmem:[#allocation3 + $0x90] sm:$0xff] %vm241, %v6472
  %v6478 = vld [vmem:[#allocation2 + $0x508] sm:$0xff]
  %v6479 = vld [vmem:[#allocation2 + $0x510] sm:$0xff]
  %v6480 = vld [vmem:[#allocation2 + $0x518] sm:$0xff]
  %v6481 = vld [vmem:[#allocation2 + $0x520] sm:$0xff]
  %v6482 = vld [vmem:[#allocation2 + $0x528] sm:$0xff]
  %6483 = vst.msk [vmem:[#allocation3 + $0xb0] sm:$0xff] %vm241, %v6478
  %6484 = vst.msk [vmem:[#allocation3 + $0xd0] sm:$0xff] %vm241, %v6479
  %6485 = vst.msk [vmem:[#allocation3 + $0xf0] sm:$0xff] %vm241, %v6480
  %6486 = vst.msk [vmem:[#allocation3 + $0x110] sm:$0xff] %vm241, %v6481
  %6487 = vst.msk [vmem:[#allocation3 + $0x130] sm:$0xff] %vm241, %v6482
  %v6488 = vld [vmem:[#allocation2 + $0x540] sm:$0xff]
  %v6489 = vld [vmem:[#allocation2 + $0x548] sm:$0xff]
  %v6490 = vld [vmem:[#allocation2 + $0x550] sm:$0xff]
  %v6491 = vld [vmem:[#allocation2 + $0x558] sm:$0xff]
  %v6492 = vld [vmem:[#allocation2 + $0x560] sm:$0xff]
  %6493 = vst.msk [vmem:[#allocation3 + $0x150] sm:$0xff] %vm241, %v6488
  %6494 = vst.msk [vmem:[#allocation3 + $0x170] sm:$0xff] %vm241, %v6489
  %6495 = vst.msk [vmem:[#allocation3 + $0x190] sm:$0xff] %vm241, %v6490
  %6496 = vst.msk [vmem:[#allocation3 + $0x1b0] sm:$0xff] %vm241, %v6491
  %6497 = vst.msk [vmem:[#allocation3 + $0x1d0] sm:$0xff] %vm241, %v6492
  %v6498 = vld [vmem:[#allocation2 + $0x578] sm:$0xff]
  %v6499 = vld [vmem:[#allocation2 + $0x580] sm:$0xff]
  %v6500 = vld [vmem:[#allocation2 + $0x588] sm:$0xff]
  %v6501 = vld [vmem:[#allocation2 + $0x590] sm:$0xff]
  %v6502 = vld [vmem:[#allocation2 + $0x598] sm:$0xff]
  %6503 = vst.msk [vmem:[#allocation3 + $0x1f0] sm:$0xff] %vm241, %v6498
  %6504 = vst.msk [vmem:[#allocation3 + $0x210] sm:$0xff] %vm241, %v6499
  %6505 = vst.msk [vmem:[#allocation3 + $0x230] sm:$0xff] %vm241, %v6500
  %6506 = vst.msk [vmem:[#allocation3 + $0x250] sm:$0xff] %vm241, %v6501
  %6507 = vst.msk [vmem:[#allocation3 + $0x270] sm:$0xff] %vm241, %v6502
  %v6508 = vld [vmem:[#allocation2 + $0x5b0] sm:$0xff]
  %v6509 = vld [vmem:[#allocation2 + $0x5b8] sm:$0xff]
  %v6510 = vld [vmem:[#allocation2 + $0x5c0] sm:$0xff]
  %v6511 = vld [vmem:[#allocation2 + $0x5c8] sm:$0xff]
  %v6512 = vld [vmem:[#allocation2 + $0x5d0] sm:$0xff]
  %6513 = vst.msk [vmem:[#allocation3 + $0x290] sm:$0xff] %vm241, %v6508
  %6514 = vst.msk [vmem:[#allocation3 + $0x2b0] sm:$0xff] %vm241, %v6509
  %6515 = vst.msk [vmem:[#allocation3 + $0x2d0] sm:$0xff] %vm241, %v6510
  %6516 = vst.msk [vmem:[#allocation3 + $0x2f0] sm:$0xff] %vm241, %v6511
  %6517 = vst.msk [vmem:[#allocation3 + $0x310] sm:$0xff] %vm241, %v6512
  %v6518 = vld [vmem:[#allocation2 + $0x350] sm:$0xff]
  %v6519 = vld [vmem:[#allocation2 + $0x358] sm:$0xff]
  %v6520 = vld [vmem:[#allocation2 + $0x360] sm:$0xff]
  %v6521 = vld [vmem:[#allocation2 + $0x368] sm:$0xff]
  %v6522 = vld [vmem:[#allocation2 + $0x370] sm:$0xff]
  %6528 = vrot.lane.b32.xlu0 %v6518, 16
  %v6529 = vpop.permute.xlu0 %6528
  %6530 = vrot.lane.b32.xlu0 %v6519, 16
  %v6531 = vpop.permute.xlu0 %6530
  %6532 = vrot.lane.b32.xlu0 %v6520, 16
  %v6533 = vpop.permute.xlu0 %6532
  %6534 = vrot.lane.b32.xlu0 %v6521, 16
  %v6535 = vpop.permute.xlu0 %6534
  %6536 = vrot.lane.b32.xlu0 %v6522, 16
  %v6537 = vpop.permute.xlu0 %6536
  %6543 = vst.msk [vmem:[#allocation3 + $0x10] sm:$0xff] %vm4336, %v6529
  %6544 = vst.msk [vmem:[#allocation3 + $0x30] sm:$0xff] %vm4336, %v6531
  %6545 = vst.msk [vmem:[#allocation3 + $0x50] sm:$0xff] %vm4336, %v6533
  %6546 = vst.msk [vmem:[#allocation3 + $0x70] sm:$0xff] %vm4336, %v6535
  %6547 = vst.msk [vmem:[#allocation3 + $0x90] sm:$0xff] %vm4336, %v6537
  %v6548 = vld [vmem:[#allocation2 + $0x388] sm:$0xff]
  %v6549 = vld [vmem:[#allocation2 + $0x390] sm:$0xff]
  %v6550 = vld [vmem:[#allocation2 + $0x398] sm:$0xff]
  %v6551 = vld [vmem:[#allocation2 + $0x3a0] sm:$0xff]
  %v6552 = vld [vmem:[#allocation2 + $0x3a8] sm:$0xff]
  %6558 = vrot.lane.b32.xlu0 %v6548, 16
  %v6559 = vpop.permute.xlu0 %6558
  %6560 = vrot.lane.b32.xlu0 %v6549, 16
  %v6561 = vpop.permute.xlu0 %6560
  %6562 = vrot.lane.b32.xlu0 %v6550, 16
  %v6563 = vpop.permute.xlu0 %6562
  %6564 = vrot.lane.b32.xlu0 %v6551, 16
  %v6565 = vpop.permute.xlu0 %6564
  %6566 = vrot.lane.b32.xlu0 %v6552, 16
  %v6567 = vpop.permute.xlu0 %6566
  %6573 = vst.msk [vmem:[#allocation3 + $0xb0] sm:$0xff] %vm4336, %v6559
  %6574 = vst.msk [vmem:[#allocation3 + $0xd0] sm:$0xff] %vm4336, %v6561
  %6575 = vst.msk [vmem:[#allocation3 + $0xf0] sm:$0xff] %vm4336, %v6563
  %6576 = vst.msk [vmem:[#allocation3 + $0x110] sm:$0xff] %vm4336, %v6565
  %6577 = vst.msk [vmem:[#allocation3 + $0x130] sm:$0xff] %vm4336, %v6567
  %v6578 = vld [vmem:[#allocation2 + $0x3c0] sm:$0xff]
  %v6579 = vld [vmem:[#allocation2 + $0x3c8] sm:$0xff]
  %v6580 = vld [vmem:[#allocation2 + $0x3d0] sm:$0xff]
  %v6581 = vld [vmem:[#allocation2 + $0x3d8] sm:$0xff]
  %v6582 = vld [vmem:[#allocation2 + $0x3e0] sm:$0xff]
  %6588 = vrot.lane.b32.xlu0 %v6578, 16
  %v6589 = vpop.permute.xlu0 %6588
  %6590 = vrot.lane.b32.xlu0 %v6579, 16
  %v6591 = vpop.permute.xlu0 %6590
  %6592 = vrot.lane.b32.xlu0 %v6580, 16
  %v6593 = vpop.permute.xlu0 %6592
  %6594 = vrot.lane.b32.xlu0 %v6581, 16
  %v6595 = vpop.permute.xlu0 %6594
  %6596 = vrot.lane.b32.xlu0 %v6582, 16
  %v6597 = vpop.permute.xlu0 %6596
  %6603 = vst.msk [vmem:[#allocation3 + $0x150] sm:$0xff] %vm4336, %v6589
  %6604 = vst.msk [vmem:[#allocation3 + $0x170] sm:$0xff] %vm4336, %v6591
  %6605 = vst.msk [vmem:[#allocation3 + $0x190] sm:$0xff] %vm4336, %v6593
  %6606 = vst.msk [vmem:[#allocation3 + $0x1b0] sm:$0xff] %vm4336, %v6595
  %6607 = vst.msk [vmem:[#allocation3 + $0x1d0] sm:$0xff] %vm4336, %v6597
  %v6608 = vld [vmem:[#allocation2 + $0x3f8] sm:$0xff]
  %v6609 = vld [vmem:[#allocation2 + $0x400] sm:$0xff]
  %v6610 = vld [vmem:[#allocation2 + $0x408] sm:$0xff]
  %v6611 = vld [vmem:[#allocation2 + $0x410] sm:$0xff]
  %v6612 = vld [vmem:[#allocation2 + $0x418] sm:$0xff]
  %6618 = vrot.lane.b32.xlu0 %v6608, 16
  %v6619 = vpop.permute.xlu0 %6618
  %6620 = vrot.lane.b32.xlu0 %v6609, 16
  %v6621 = vpop.permute.xlu0 %6620
  %6622 = vrot.lane.b32.xlu0 %v6610, 16
  %v6623 = vpop.permute.xlu0 %6622
  %6624 = vrot.lane.b32.xlu0 %v6611, 16
  %v6625 = vpop.permute.xlu0 %6624
  %6626 = vrot.lane.b32.xlu0 %v6612, 16
  %v6627 = vpop.permute.xlu0 %6626
  %6633 = vst.msk [vmem:[#allocation3 + $0x1f0] sm:$0xff] %vm4336, %v6619
  %6634 = vst.msk [vmem:[#allocation3 + $0x210] sm:$0xff] %vm4336, %v6621
  %6635 = vst.msk [vmem:[#allocation3 + $0x230] sm:$0xff] %vm4336, %v6623
  %6636 = vst.msk [vmem:[#allocation3 + $0x250] sm:$0xff] %vm4336, %v6625
  %6637 = vst.msk [vmem:[#allocation3 + $0x270] sm:$0xff] %vm4336, %v6627
  %v6638 = vld [vmem:[#allocation2 + $0x430] sm:$0xff]
  %v6639 = vld [vmem:[#allocation2 + $0x438] sm:$0xff]
  %v6640 = vld [vmem:[#allocation2 + $0x440] sm:$0xff]
  %v6641 = vld [vmem:[#allocation2 + $0x448] sm:$0xff]
  %v6642 = vld [vmem:[#allocation2 + $0x450] sm:$0xff]
  %6648 = vrot.lane.b32.xlu0 %v6638, 16
  %v6649 = vpop.permute.xlu0 %6648
  %6650 = vrot.lane.b32.xlu0 %v6639, 16
  %v6651 = vpop.permute.xlu0 %6650
  %6652 = vrot.lane.b32.xlu0 %v6640, 16
  %v6653 = vpop.permute.xlu0 %6652
  %6654 = vrot.lane.b32.xlu0 %v6641, 16
  %v6655 = vpop.permute.xlu0 %6654
  %6656 = vrot.lane.b32.xlu0 %v6642, 16
  %v6657 = vpop.permute.xlu0 %6656
  %6663 = vst.msk [vmem:[#allocation3 + $0x290] sm:$0xff] %vm4336, %v6649
  %6664 = vst.msk [vmem:[#allocation3 + $0x2b0] sm:$0xff] %vm4336, %v6651
  %6665 = vst.msk [vmem:[#allocation3 + $0x2d0] sm:$0xff] %vm4336, %v6653
  %6666 = vst.msk [vmem:[#allocation3 + $0x2f0] sm:$0xff] %vm4336, %v6655
  %6667 = vst.msk [vmem:[#allocation3 + $0x310] sm:$0xff] %vm4336, %v6657
  %v6668 = vld [vmem:[#allocation2 + $0x4d8] sm:$0xff]
  %v6669 = vld [vmem:[#allocation2 + $0x4e0] sm:$0xff]
  %v6670 = vld [vmem:[#allocation2 + $0x4e8] sm:$0xff]
  %v6671 = vld [vmem:[#allocation2 + $0x4f0] sm:$0xff]
  %v6672 = vld [vmem:[#allocation2 + $0x4f8] sm:$0xff]
  %6678 = vrot.lane.b32.xlu0 %v6668, 32
  %v6679 = vpop.permute.xlu0 %6678
  %6680 = vrot.lane.b32.xlu0 %v6669, 32
  %v6681 = vpop.permute.xlu0 %6680
  %6682 = vrot.lane.b32.xlu0 %v6670, 32
  %v6683 = vpop.permute.xlu0 %6682
  %6684 = vrot.lane.b32.xlu0 %v6671, 32
  %v6685 = vpop.permute.xlu0 %6684
  %6686 = vrot.lane.b32.xlu0 %v6672, 32
  %v6687 = vpop.permute.xlu0 %6686
  %6693 = vst.msk [vmem:[#allocation3 + $0x10] sm:$0xff] %vm4487, %v6679
  %6694 = vst.msk [vmem:[#allocation3 + $0x30] sm:$0xff] %vm4487, %v6681
  %6695 = vst.msk [vmem:[#allocation3 + $0x50] sm:$0xff] %vm4487, %v6683
  %6696 = vst.msk [vmem:[#allocation3 + $0x70] sm:$0xff] %vm4487, %v6685
  %6697 = vst.msk [vmem:[#allocation3 + $0x90] sm:$0xff] %vm4487, %v6687
  %v6698 = vld [vmem:[#allocation2 + $0x510] sm:$0xff]
  %v6699 = vld [vmem:[#allocation2 + $0x518] sm:$0xff]
  %v6700 = vld [vmem:[#allocation2 + $0x520] sm:$0xff]
  %v6701 = vld [vmem:[#allocation2 + $0x528] sm:$0xff]
  %v6702 = vld [vmem:[#allocation2 + $0x530] sm:$0xff]
  %6708 = vrot.lane.b32.xlu0 %v6698, 32
  %v6709 = vpop.permute.xlu0 %6708
  %6710 = vrot.lane.b32.xlu0 %v6699, 32
  %v6711 = vpop.permute.xlu0 %6710
  %6712 = vrot.lane.b32.xlu0 %v6700, 32
  %v6713 = vpop.permute.xlu0 %6712
  %6714 = vrot.lane.b32.xlu0 %v6701, 32
  %v6715 = vpop.permute.xlu0 %6714
  %6716 = vrot.lane.b32.xlu0 %v6702, 32
  %v6717 = vpop.permute.xlu0 %6716
  %6723 = vst.msk [vmem:[#allocation3 + $0xb0] sm:$0xff] %vm4487, %v6709
  %6724 = vst.msk [vmem:[#allocation3 + $0xd0] sm:$0xff] %vm4487, %v6711
  %6725 = vst.msk [vmem:[#allocation3 + $0xf0] sm:$0xff] %vm4487, %v6713
  %6726 = vst.msk [vmem:[#allocation3 + $0x110] sm:$0xff] %vm4487, %v6715
  %6727 = vst.msk [vmem:[#allocation3 + $0x130] sm:$0xff] %vm4487, %v6717
  %v6728 = vld [vmem:[#allocation2 + $0x548] sm:$0xff]
  %v6729 = vld [vmem:[#allocation2 + $0x550] sm:$0xff]
  %v6730 = vld [vmem:[#allocation2 + $0x558] sm:$0xff]
  %v6731 = vld [vmem:[#allocation2 + $0x560] sm:$0xff]
  %v6732 = vld [vmem:[#allocation2 + $0x568] sm:$0xff]
  %6738 = vrot.lane.b32.xlu0 %v6728, 32
  %v6739 = vpop.permute.xlu0 %6738
  %6740 = vrot.lane.b32.xlu0 %v6729, 32
  %v6741 = vpop.permute.xlu0 %6740
  %6742 = vrot.lane.b32.xlu0 %v6730, 32
  %v6743 = vpop.permute.xlu0 %6742
  %6744 = vrot.lane.b32.xlu0 %v6731, 32
  %v6745 = vpop.permute.xlu0 %6744
  %6746 = vrot.lane.b32.xlu0 %v6732, 32
  %v6747 = vpop.permute.xlu0 %6746
  %6753 = vst.msk [vmem:[#allocation3 + $0x150] sm:$0xff] %vm4487, %v6739
  %6754 = vst.msk [vmem:[#allocation3 + $0x170] sm:$0xff] %vm4487, %v6741
  %6755 = vst.msk [vmem:[#allocation3 + $0x190] sm:$0xff] %vm4487, %v6743
  %6756 = vst.msk [vmem:[#allocation3 + $0x1b0] sm:$0xff] %vm4487, %v6745
  %6757 = vst.msk [vmem:[#allocation3 + $0x1d0] sm:$0xff] %vm4487, %v6747
  %v6758 = vld [vmem:[#allocation2 + $0x580] sm:$0xff]
  %v6759 = vld [vmem:[#allocation2 + $0x588] sm:$0xff]
  %v6760 = vld [vmem:[#allocation2 + $0x590] sm:$0xff]
  %v6761 = vld [vmem:[#allocation2 + $0x598] sm:$0xff]
  %v6762 = vld [vmem:[#allocation2 + $0x5a0] sm:$0xff]
  %6768 = vrot.lane.b32.xlu0 %v6758, 32
  %v6769 = vpop.permute.xlu0 %6768
  %6770 = vrot.lane.b32.xlu0 %v6759, 32
  %v6771 = vpop.permute.xlu0 %6770
  %6772 = vrot.lane.b32.xlu0 %v6760, 32
  %v6773 = vpop.permute.xlu0 %6772
  %6774 = vrot.lane.b32.xlu0 %v6761, 32
  %v6775 = vpop.permute.xlu0 %6774
  %6776 = vrot.lane.b32.xlu0 %v6762, 32
  %v6777 = vpop.permute.xlu0 %6776
  %6783 = vst.msk [vmem:[#allocation3 + $0x1f0] sm:$0xff] %vm4487, %v6769
  %6784 = vst.msk [vmem:[#allocation3 + $0x210] sm:$0xff] %vm4487, %v6771
  %6785 = vst.msk [vmem:[#allocation3 + $0x230] sm:$0xff] %vm4487, %v6773
  %6786 = vst.msk [vmem:[#allocation3 + $0x250] sm:$0xff] %vm4487, %v6775
  %6787 = vst.msk [vmem:[#allocation3 + $0x270] sm:$0xff] %vm4487, %v6777
  %v6788 = vld [vmem:[#allocation2 + $0x5b8] sm:$0xff]
  %v6789 = vld [vmem:[#allocation2 + $0x5c0] sm:$0xff]
  %v6790 = vld [vmem:[#allocation2 + $0x5c8] sm:$0xff]
  %v6791 = vld [vmem:[#allocation2 + $0x5d0] sm:$0xff]
  %v6792 = vld [vmem:[#allocation2 + $0x5d8] sm:$0xff]
  %6798 = vrot.lane.b32.xlu0 %v6788, 32
  %v6799 = vpop.permute.xlu0 %6798
  %6800 = vrot.lane.b32.xlu0 %v6789, 32
  %v6801 = vpop.permute.xlu0 %6800
  %6802 = vrot.lane.b32.xlu0 %v6790, 32
  %v6803 = vpop.permute.xlu0 %6802
  %6804 = vrot.lane.b32.xlu0 %v6791, 32
  %v6805 = vpop.permute.xlu0 %6804
  %6806 = vrot.lane.b32.xlu0 %v6792, 32
  %v6807 = vpop.permute.xlu0 %6806
  %6813 = vst.msk [vmem:[#allocation3 + $0x290] sm:$0xff] %vm4487, %v6799
  %6814 = vst.msk [vmem:[#allocation3 + $0x2b0] sm:$0xff] %vm4487, %v6801
  %6815 = vst.msk [vmem:[#allocation3 + $0x2d0] sm:$0xff] %vm4487, %v6803
  %6816 = vst.msk [vmem:[#allocation3 + $0x2f0] sm:$0xff] %vm4487, %v6805
  %6817 = vst.msk [vmem:[#allocation3 + $0x310] sm:$0xff] %vm4487, %v6807
  %v6818 = vld [vmem:[#allocation2 + $0x358] sm:$0xff]
  %v6819 = vld [vmem:[#allocation2 + $0x360] sm:$0xff]
  %v6820 = vld [vmem:[#allocation2 + $0x368] sm:$0xff]
  %v6821 = vld [vmem:[#allocation2 + $0x370] sm:$0xff]
  %v6822 = vld [vmem:[#allocation2 + $0x378] sm:$0xff]
  %6828 = vrot.lane.b32.xlu0 %v6818, 48
  %v6829 = vpop.permute.xlu0 %6828
  %6830 = vrot.lane.b32.xlu0 %v6819, 48
  %v6831 = vpop.permute.xlu0 %6830
  %6832 = vrot.lane.b32.xlu0 %v6820, 48
  %v6833 = vpop.permute.xlu0 %6832
  %6834 = vrot.lane.b32.xlu0 %v6821, 48
  %v6835 = vpop.permute.xlu0 %6834
  %6836 = vrot.lane.b32.xlu0 %v6822, 48
  %v6837 = vpop.permute.xlu0 %6836
  %6843 = vst.msk [vmem:[#allocation3 + $0x10] sm:$0xff] %vm4638, %v6829
  %6844 = vst.msk [vmem:[#allocation3 + $0x30] sm:$0xff] %vm4638, %v6831
  %6845 = vst.msk [vmem:[#allocation3 + $0x50] sm:$0xff] %vm4638, %v6833
  %6846 = vst.msk [vmem:[#allocation3 + $0x70] sm:$0xff] %vm4638, %v6835
  %6847 = vst.msk [vmem:[#allocation3 + $0x90] sm:$0xff] %vm4638, %v6837
  %v6848 = vld [vmem:[#allocation2 + $0x390] sm:$0xff]
  %v6849 = vld [vmem:[#allocation2 + $0x398] sm:$0xff]
  %v6850 = vld [vmem:[#allocation2 + $0x3a0] sm:$0xff]
  %v6851 = vld [vmem:[#allocation2 + $0x3a8] sm:$0xff]
  %v6852 = vld [vmem:[#allocation2 + $0x3b0] sm:$0xff]
  %6858 = vrot.lane.b32.xlu0 %v6848, 48
  %v6859 = vpop.permute.xlu0 %6858
  %6860 = vrot.lane.b32.xlu0 %v6849, 48
  %v6861 = vpop.permute.xlu0 %6860
  %6862 = vrot.lane.b32.xlu0 %v6850, 48
  %v6863 = vpop.permute.xlu0 %6862
  %6864 = vrot.lane.b32.xlu0 %v6851, 48
  %v6865 = vpop.permute.xlu0 %6864
  %6866 = vrot.lane.b32.xlu0 %v6852, 48
  %v6867 = vpop.permute.xlu0 %6866
  %6873 = vst.msk [vmem:[#allocation3 + $0xb0] sm:$0xff] %vm4638, %v6859
  %6874 = vst.msk [vmem:[#allocation3 + $0xd0] sm:$0xff] %vm4638, %v6861
  %6875 = vst.msk [vmem:[#allocation3 + $0xf0] sm:$0xff] %vm4638, %v6863
  %6876 = vst.msk [vmem:[#allocation3 + $0x110] sm:$0xff] %vm4638, %v6865
  %6877 = vst.msk [vmem:[#allocation3 + $0x130] sm:$0xff] %vm4638, %v6867
  %v6878 = vld [vmem:[#allocation2 + $0x3c8] sm:$0xff]
  %v6879 = vld [vmem:[#allocation2 + $0x3d0] sm:$0xff]
  %v6880 = vld [vmem:[#allocation2 + $0x3d8] sm:$0xff]
  %v6881 = vld [vmem:[#allocation2 + $0x3e0] sm:$0xff]
  %v6882 = vld [vmem:[#allocation2 + $0x3e8] sm:$0xff]
  %6888 = vrot.lane.b32.xlu0 %v6878, 48
  %v6889 = vpop.permute.xlu0 %6888
  %6890 = vrot.lane.b32.xlu0 %v6879, 48
  %v6891 = vpop.permute.xlu0 %6890
  %6892 = vrot.lane.b32.xlu0 %v6880, 48
  %v6893 = vpop.permute.xlu0 %6892
  %6894 = vrot.lane.b32.xlu0 %v6881, 48
  %v6895 = vpop.permute.xlu0 %6894
  %6896 = vrot.lane.b32.xlu0 %v6882, 48
  %v6897 = vpop.permute.xlu0 %6896
  %6903 = vst.msk [vmem:[#allocation3 + $0x150] sm:$0xff] %vm4638, %v6889
  %6904 = vst.msk [vmem:[#allocation3 + $0x170] sm:$0xff] %vm4638, %v6891
  %6905 = vst.msk [vmem:[#allocation3 + $0x190] sm:$0xff] %vm4638, %v6893
  %6906 = vst.msk [vmem:[#allocation3 + $0x1b0] sm:$0xff] %vm4638, %v6895
  %6907 = vst.msk [vmem:[#allocation3 + $0x1d0] sm:$0xff] %vm4638, %v6897
  %v6908 = vld [vmem:[#allocation2 + $0x400] sm:$0xff]
  %v6909 = vld [vmem:[#allocation2 + $0x408] sm:$0xff]
  %v6910 = vld [vmem:[#allocation2 + $0x410] sm:$0xff]
  %v6911 = vld [vmem:[#allocation2 + $0x418] sm:$0xff]
  %v6912 = vld [vmem:[#allocation2 + $0x420] sm:$0xff]
  %6918 = vrot.lane.b32.xlu0 %v6908, 48
  %v6919 = vpop.permute.xlu0 %6918
  %6920 = vrot.lane.b32.xlu0 %v6909, 48
  %v6921 = vpop.permute.xlu0 %6920
  %6922 = vrot.lane.b32.xlu0 %v6910, 48
  %v6923 = vpop.permute.xlu0 %6922
  %6924 = vrot.lane.b32.xlu0 %v6911, 48
  %v6925 = vpop.permute.xlu0 %6924
  %6926 = vrot.lane.b32.xlu0 %v6912, 48
  %v6927 = vpop.permute.xlu0 %6926
  %6933 = vst.msk [vmem:[#allocation3 + $0x1f0] sm:$0xff] %vm4638, %v6919
  %6934 = vst.msk [vmem:[#allocation3 + $0x210] sm:$0xff] %vm4638, %v6921
  %6935 = vst.msk [vmem:[#allocation3 + $0x230] sm:$0xff] %vm4638, %v6923
  %6936 = vst.msk [vmem:[#allocation3 + $0x250] sm:$0xff] %vm4638, %v6925
  %6937 = vst.msk [vmem:[#allocation3 + $0x270] sm:$0xff] %vm4638, %v6927
  %v6938 = vld [vmem:[#allocation2 + $0x438] sm:$0xff]
  %v6939 = vld [vmem:[#allocation2 + $0x440] sm:$0xff]
  %v6940 = vld [vmem:[#allocation2 + $0x448] sm:$0xff]
  %v6941 = vld [vmem:[#allocation2 + $0x450] sm:$0xff]
  %v6942 = vld [vmem:[#allocation2 + $0x458] sm:$0xff]
  %6948 = vrot.lane.b32.xlu0 %v6938, 48
  %v6949 = vpop.permute.xlu0 %6948
  %6950 = vrot.lane.b32.xlu0 %v6939, 48
  %v6951 = vpop.permute.xlu0 %6950
  %6952 = vrot.lane.b32.xlu0 %v6940, 48
  %v6953 = vpop.permute.xlu0 %6952
  %6954 = vrot.lane.b32.xlu0 %v6941, 48
  %v6955 = vpop.permute.xlu0 %6954
  %6956 = vrot.lane.b32.xlu0 %v6942, 48
  %v6957 = vpop.permute.xlu0 %6956
  %6963 = vst.msk [vmem:[#allocation3 + $0x290] sm:$0xff] %vm4638, %v6949
  %6964 = vst.msk [vmem:[#allocation3 + $0x2b0] sm:$0xff] %vm4638, %v6951
  %6965 = vst.msk [vmem:[#allocation3 + $0x2d0] sm:$0xff] %vm4638, %v6953
  %6966 = vst.msk [vmem:[#allocation3 + $0x2f0] sm:$0xff] %vm4638, %v6955
  %6967 = vst.msk [vmem:[#allocation3 + $0x310] sm:$0xff] %vm4638, %v6957
  %v6968 = vld [vmem:[#allocation2 + $0x70] sm:$0xff]
  %v6969 = vld [vmem:[#allocation2 + $0x78] sm:$0xff]
  %v6970 = vld [vmem:[#allocation2 + $0x80] sm:$0xff]
  %v6971 = vld [vmem:[#allocation2 + $0x88] sm:$0xff]
  %v6972 = vld [vmem:[#allocation2 + $0x90] sm:$0xff]
  %6978 = vrot.lane.b32.xlu0 %v6968, 64
  %v6979 = vpop.permute.xlu0 %6978
  %6980 = vrot.lane.b32.xlu0 %v6969, 64
  %v6981 = vpop.permute.xlu0 %6980
  %6982 = vrot.lane.b32.xlu0 %v6970, 64
  %v6983 = vpop.permute.xlu0 %6982
  %6984 = vrot.lane.b32.xlu0 %v6971, 64
  %v6985 = vpop.permute.xlu0 %6984
  %6986 = vrot.lane.b32.xlu0 %v6972, 64
  %v6987 = vpop.permute.xlu0 %6986
  %6993 = vst.msk [vmem:[#allocation3 + $0x10] sm:$0xff] %vm4789, %v6979
  %6994 = vst.msk [vmem:[#allocation3 + $0x30] sm:$0xff] %vm4789, %v6981
  %6995 = vst.msk [vmem:[#allocation3 + $0x50] sm:$0xff] %vm4789, %v6983
  %6996 = vst.msk [vmem:[#allocation3 + $0x70] sm:$0xff] %vm4789, %v6985
  %6997 = vst.msk [vmem:[#allocation3 + $0x90] sm:$0xff] %vm4789, %v6987
  %v6998 = vld [vmem:[#allocation2 + $0xa8] sm:$0xff]
  %v6999 = vld [vmem:[#allocation2 + $0xb0] sm:$0xff]
  %v7000 = vld [vmem:[#allocation2 + $0xb8] sm:$0xff]
  %v7001 = vld [vmem:[#allocation2 + $0xc0] sm:$0xff]
  %v7002 = vld [vmem:[#allocation2 + $0xc8] sm:$0xff]
  %7008 = vrot.lane.b32.xlu0 %v6998, 64
  %v7009 = vpop.permute.xlu0 %7008
  %7010 = vrot.lane.b32.xlu0 %v6999, 64
  %v7011 = vpop.permute.xlu0 %7010
  %7012 = vrot.lane.b32.xlu0 %v7000, 64
  %v7013 = vpop.permute.xlu0 %7012
  %7014 = vrot.lane.b32.xlu0 %v7001, 64
  %v7015 = vpop.permute.xlu0 %7014
  %7016 = vrot.lane.b32.xlu0 %v7002, 64
  %v7017 = vpop.permute.xlu0 %7016
  %7023 = vst.msk [vmem:[#allocation3 + $0xb0] sm:$0xff] %vm4789, %v7009
  %7024 = vst.msk [vmem:[#allocation3 + $0xd0] sm:$0xff] %vm4789, %v7011
  %7025 = vst.msk [vmem:[#allocation3 + $0xf0] sm:$0xff] %vm4789, %v7013
  %7026 = vst.msk [vmem:[#allocation3 + $0x110] sm:$0xff] %vm4789, %v7015
  %7027 = vst.msk [vmem:[#allocation3 + $0x130] sm:$0xff] %vm4789, %v7017
  %v7028 = vld [vmem:[#allocation2 + $0xe0] sm:$0xff]
  %v7029 = vld [vmem:[#allocation2 + $0xe8] sm:$0xff]
  %v7030 = vld [vmem:[#allocation2 + $0xf0] sm:$0xff]
  %v7031 = vld [vmem:[#allocation2 + $0xf8] sm:$0xff]
  %v7032 = vld [vmem:[#allocation2 + $0x100] sm:$0xff]
  %7038 = vrot.lane.b32.xlu0 %v7028, 64
  %v7039 = vpop.permute.xlu0 %7038
  %7040 = vrot.lane.b32.xlu0 %v7029, 64
  %v7041 = vpop.permute.xlu0 %7040
  %7042 = vrot.lane.b32.xlu0 %v7030, 64
  %v7043 = vpop.permute.xlu0 %7042
  %7044 = vrot.lane.b32.xlu0 %v7031, 64
  %v7045 = vpop.permute.xlu0 %7044
  %7046 = vrot.lane.b32.xlu0 %v7032, 64
  %v7047 = vpop.permute.xlu0 %7046
  %7053 = vst.msk [vmem:[#allocation3 + $0x150] sm:$0xff] %vm4789, %v7039
  %7054 = vst.msk [vmem:[#allocation3 + $0x170] sm:$0xff] %vm4789, %v7041
  %7055 = vst.msk [vmem:[#allocation3 + $0x190] sm:$0xff] %vm4789, %v7043
  %7056 = vst.msk [vmem:[#allocation3 + $0x1b0] sm:$0xff] %vm4789, %v7045
  %7057 = vst.msk [vmem:[#allocation3 + $0x1d0] sm:$0xff] %vm4789, %v7047
  %v7058 = vld [vmem:[#allocation2 + $0x118] sm:$0xff]
  %v7059 = vld [vmem:[#allocation2 + $0x120] sm:$0xff]
  %v7060 = vld [vmem:[#allocation2 + $0x128] sm:$0xff]
  %v7061 = vld [vmem:[#allocation2 + $0x130] sm:$0xff]
  %v7062 = vld [vmem:[#allocation2 + $0x138] sm:$0xff]
  %7068 = vrot.lane.b32.xlu0 %v7058, 64
  %v7069 = vpop.permute.xlu0 %7068
  %7070 = vrot.lane.b32.xlu0 %v7059, 64
  %v7071 = vpop.permute.xlu0 %7070
  %7072 = vrot.lane.b32.xlu0 %v7060, 64
  %v7073 = vpop.permute.xlu0 %7072
  %7074 = vrot.lane.b32.xlu0 %v7061, 64
  %v7075 = vpop.permute.xlu0 %7074
  %7076 = vrot.lane.b32.xlu0 %v7062, 64
  %v7077 = vpop.permute.xlu0 %7076
  %7083 = vst.msk [vmem:[#allocation3 + $0x1f0] sm:$0xff] %vm4789, %v7069
  %7084 = vst.msk [vmem:[#allocation3 + $0x210] sm:$0xff] %vm4789, %v7071
  %7085 = vst.msk [vmem:[#allocation3 + $0x230] sm:$0xff] %vm4789, %v7073
  %7086 = vst.msk [vmem:[#allocation3 + $0x250] sm:$0xff] %vm4789, %v7075
  %7087 = vst.msk [vmem:[#allocation3 + $0x270] sm:$0xff] %vm4789, %v7077
  %v7088 = vld [vmem:[#allocation2 + $0x150] sm:$0xff]
  %v7089 = vld [vmem:[#allocation2 + $0x158] sm:$0xff]
  %v7090 = vld [vmem:[#allocation2 + $0x160] sm:$0xff]
  %v7091 = vld [vmem:[#allocation2 + $0x168] sm:$0xff]
  %v7092 = vld [vmem:[#allocation2 + $0x170] sm:$0xff]
  %7098 = vrot.lane.b32.xlu0 %v7088, 64
  %v7099 = vpop.permute.xlu0 %7098
  %7100 = vrot.lane.b32.xlu0 %v7089, 64
  %v7101 = vpop.permute.xlu0 %7100
  %7102 = vrot.lane.b32.xlu0 %v7090, 64
  %v7103 = vpop.permute.xlu0 %7102
  %7104 = vrot.lane.b32.xlu0 %v7091, 64
  %v7105 = vpop.permute.xlu0 %7104
  %7106 = vrot.lane.b32.xlu0 %v7092, 64
  %v7107 = vpop.permute.xlu0 %7106
  %7113 = vst.msk [vmem:[#allocation3 + $0x290] sm:$0xff] %vm4789, %v7099
  %7114 = vst.msk [vmem:[#allocation3 + $0x2b0] sm:$0xff] %vm4789, %v7101
  %7115 = vst.msk [vmem:[#allocation3 + $0x2d0] sm:$0xff] %vm4789, %v7103
  %7116 = vst.msk [vmem:[#allocation3 + $0x2f0] sm:$0xff] %vm4789, %v7105
  %7117 = vst.msk [vmem:[#allocation3 + $0x310] sm:$0xff] %vm4789, %v7107
  %v7118 = vld [vmem:[#allocation2 + $0x1f8] sm:$0xff]
  %v7119 = vld [vmem:[#allocation2 + $0x200] sm:$0xff]
  %v7120 = vld [vmem:[#allocation2 + $0x208] sm:$0xff]
  %v7121 = vld [vmem:[#allocation2 + $0x210] sm:$0xff]
  %v7122 = vld [vmem:[#allocation2 + $0x218] sm:$0xff]
  %7128 = vrot.lane.b32.xlu0 %v7118, 80
  %v7129 = vpop.permute.xlu0 %7128
  %7130 = vrot.lane.b32.xlu0 %v7119, 80
  %v7131 = vpop.permute.xlu0 %7130
  %7132 = vrot.lane.b32.xlu0 %v7120, 80
  %v7133 = vpop.permute.xlu0 %7132
  %7134 = vrot.lane.b32.xlu0 %v7121, 80
  %v7135 = vpop.permute.xlu0 %7134
  %7136 = vrot.lane.b32.xlu0 %v7122, 80
  %v7137 = vpop.permute.xlu0 %7136
  %7143 = vst.msk [vmem:[#allocation3 + $0x10] sm:$0xff] %vm4940, %v7129
  %7144 = vst.msk [vmem:[#allocation3 + $0x30] sm:$0xff] %vm4940, %v7131
  %7145 = vst.msk [vmem:[#allocation3 + $0x50] sm:$0xff] %vm4940, %v7133
  %7146 = vst.msk [vmem:[#allocation3 + $0x70] sm:$0xff] %vm4940, %v7135
  %7147 = vst.msk [vmem:[#allocation3 + $0x90] sm:$0xff] %vm4940, %v7137
  %v7148 = vld [vmem:[#allocation2 + $0x230] sm:$0xff]
  %v7149 = vld [vmem:[#allocation2 + $0x238] sm:$0xff]
  %v7150 = vld [vmem:[#allocation2 + $0x240] sm:$0xff]
  %v7151 = vld [vmem:[#allocation2 + $0x248] sm:$0xff]
  %v7152 = vld [vmem:[#allocation2 + $0x250] sm:$0xff]
  %7158 = vrot.lane.b32.xlu0 %v7148, 80
  %v7159 = vpop.permute.xlu0 %7158
  %7160 = vrot.lane.b32.xlu0 %v7149, 80
  %v7161 = vpop.permute.xlu0 %7160
  %7162 = vrot.lane.b32.xlu0 %v7150, 80
  %v7163 = vpop.permute.xlu0 %7162
  %7164 = vrot.lane.b32.xlu0 %v7151, 80
  %v7165 = vpop.permute.xlu0 %7164
  %7166 = vrot.lane.b32.xlu0 %v7152, 80
  %v7167 = vpop.permute.xlu0 %7166
  %7173 = vst.msk [vmem:[#allocation3 + $0xb0] sm:$0xff] %vm4940, %v7159
  %7174 = vst.msk [vmem:[#allocation3 + $0xd0] sm:$0xff] %vm4940, %v7161
  %7175 = vst.msk [vmem:[#allocation3 + $0xf0] sm:$0xff] %vm4940, %v7163
  %7176 = vst.msk [vmem:[#allocation3 + $0x110] sm:$0xff] %vm4940, %v7165
  %7177 = vst.msk [vmem:[#allocation3 + $0x130] sm:$0xff] %vm4940, %v7167
  %v7178 = vld [vmem:[#allocation2 + $0x268] sm:$0xff]
  %v7179 = vld [vmem:[#allocation2 + $0x270] sm:$0xff]
  %v7180 = vld [vmem:[#allocation2 + $0x278] sm:$0xff]
  %v7181 = vld [vmem:[#allocation2 + $0x280] sm:$0xff]
  %v7182 = vld [vmem:[#allocation2 + $0x288] sm:$0xff]
  %7188 = vrot.lane.b32.xlu0 %v7178, 80
  %v7189 = vpop.permute.xlu0 %7188
  %7190 = vrot.lane.b32.xlu0 %v7179, 80
  %v7191 = vpop.permute.xlu0 %7190
  %7192 = vrot.lane.b32.xlu0 %v7180, 80
  %v7193 = vpop.permute.xlu0 %7192
  %7194 = vrot.lane.b32.xlu0 %v7181, 80
  %v7195 = vpop.permute.xlu0 %7194
  %7196 = vrot.lane.b32.xlu0 %v7182, 80
  %v7197 = vpop.permute.xlu0 %7196
  %7203 = vst.msk [vmem:[#allocation3 + $0x150] sm:$0xff] %vm4940, %v7189
  %7204 = vst.msk [vmem:[#allocation3 + $0x170] sm:$0xff] %vm4940, %v7191
  %7205 = vst.msk [vmem:[#allocation3 + $0x190] sm:$0xff] %vm4940, %v7193
  %7206 = vst.msk [vmem:[#allocation3 + $0x1b0] sm:$0xff] %vm4940, %v7195
  %7207 = vst.msk [vmem:[#allocation3 + $0x1d0] sm:$0xff] %vm4940, %v7197
  %v7208 = vld [vmem:[#allocation2 + $0x2a0] sm:$0xff]
  %v7209 = vld [vmem:[#allocation2 + $0x2a8] sm:$0xff]
  %v7210 = vld [vmem:[#allocation2 + $0x2b0] sm:$0xff]
  %v7211 = vld [vmem:[#allocation2 + $0x2b8] sm:$0xff]
  %v7212 = vld [vmem:[#allocation2 + $0x2c0] sm:$0xff]
  %7218 = vrot.lane.b32.xlu0 %v7208, 80
  %v7219 = vpop.permute.xlu0 %7218
  %7220 = vrot.lane.b32.xlu0 %v7209, 80
  %v7221 = vpop.permute.xlu0 %7220
  %7222 = vrot.lane.b32.xlu0 %v7210, 80
  %v7223 = vpop.permute.xlu0 %7222
  %7224 = vrot.lane.b32.xlu0 %v7211, 80
  %v7225 = vpop.permute.xlu0 %7224
  %7226 = vrot.lane.b32.xlu0 %v7212, 80
  %v7227 = vpop.permute.xlu0 %7226
  %7233 = vst.msk [vmem:[#allocation3 + $0x1f0] sm:$0xff] %vm4940, %v7219
  %7234 = vst.msk [vmem:[#allocation3 + $0x210] sm:$0xff] %vm4940, %v7221
  %7235 = vst.msk [vmem:[#allocation3 + $0x230] sm:$0xff] %vm4940, %v7223
  %7236 = vst.msk [vmem:[#allocation3 + $0x250] sm:$0xff] %vm4940, %v7225
  %7237 = vst.msk [vmem:[#allocation3 + $0x270] sm:$0xff] %vm4940, %v7227
  %v7238 = vld [vmem:[#allocation2 + $0x2d8] sm:$0xff]
  %v7239 = vld [vmem:[#allocation2 + $0x2e0] sm:$0xff]
  %v7240 = vld [vmem:[#allocation2 + $0x2e8] sm:$0xff]
  %v7241 = vld [vmem:[#allocation2 + $0x2f0] sm:$0xff]
  %v7242 = vld [vmem:[#allocation2 + $0x2f8] sm:$0xff]
  %7248 = vrot.lane.b32.xlu0 %v7238, 80
  %v7249 = vpop.permute.xlu0 %7248
  %7250 = vrot.lane.b32.xlu0 %v7239, 80
  %v7251 = vpop.permute.xlu0 %7250
  %7252 = vrot.lane.b32.xlu0 %v7240, 80
  %v7253 = vpop.permute.xlu0 %7252
  %7254 = vrot.lane.b32.xlu0 %v7241, 80
  %v7255 = vpop.permute.xlu0 %7254
  %7256 = vrot.lane.b32.xlu0 %v7242, 80
  %v7257 = vpop.permute.xlu0 %7256
  %7263 = vst.msk [vmem:[#allocation3 + $0x290] sm:$0xff] %vm4940, %v7249
  %7264 = vst.msk [vmem:[#allocation3 + $0x2b0] sm:$0xff] %vm4940, %v7251
  %7265 = vst.msk [vmem:[#allocation3 + $0x2d0] sm:$0xff] %vm4940, %v7253
  %7266 = vst.msk [vmem:[#allocation3 + $0x2f0] sm:$0xff] %vm4940, %v7255
  %7267 = vst.msk [vmem:[#allocation3 + $0x310] sm:$0xff] %vm4940, %v7257
  %v7268 = vld [vmem:[#allocation2 + $0x78] sm:$0xff]
  %v7269 = vld [vmem:[#allocation2 + $0x80] sm:$0xff]
  %v7270 = vld [vmem:[#allocation2 + $0x88] sm:$0xff]
  %v7271 = vld [vmem:[#allocation2 + $0x90] sm:$0xff]
  %v7272 = vld [vmem:[#allocation2 + $0x98] sm:$0xff]
  %7278 = vrot.lane.b32.xlu0 %v7268, 96
  %v7279 = vpop.permute.xlu0 %7278
  %7280 = vrot.lane.b32.xlu0 %v7269, 96
  %v7281 = vpop.permute.xlu0 %7280
  %7282 = vrot.lane.b32.xlu0 %v7270, 96
  %v7283 = vpop.permute.xlu0 %7282
  %7284 = vrot.lane.b32.xlu0 %v7271, 96
  %v7285 = vpop.permute.xlu0 %7284
  %7286 = vrot.lane.b32.xlu0 %v7272, 96
  %v7287 = vpop.permute.xlu0 %7286
  %7293 = vst.msk [vmem:[#allocation3 + $0x10] sm:$0xff] %vm5091, %v7279
  %7294 = vst.msk [vmem:[#allocation3 + $0x30] sm:$0xff] %vm5091, %v7281
  %7295 = vst.msk [vmem:[#allocation3 + $0x50] sm:$0xff] %vm5091, %v7283
  %7296 = vst.msk [vmem:[#allocation3 + $0x70] sm:$0xff] %vm5091, %v7285
  %7297 = vst.msk [vmem:[#allocation3 + $0x90] sm:$0xff] %vm5091, %v7287
  %v7298 = vld [vmem:[#allocation2 + $0xb0] sm:$0xff]
  %v7299 = vld [vmem:[#allocation2 + $0xb8] sm:$0xff]
  %v7300 = vld [vmem:[#allocation2 + $0xc0] sm:$0xff]
  %v7301 = vld [vmem:[#allocation2 + $0xc8] sm:$0xff]
  %v7302 = vld [vmem:[#allocation2 + $0xd0] sm:$0xff]
  %7308 = vrot.lane.b32.xlu0 %v7298, 96
  %v7309 = vpop.permute.xlu0 %7308
  %7310 = vrot.lane.b32.xlu0 %v7299, 96
  %v7311 = vpop.permute.xlu0 %7310
  %7312 = vrot.lane.b32.xlu0 %v7300, 96
  %v7313 = vpop.permute.xlu0 %7312
  %7314 = vrot.lane.b32.xlu0 %v7301, 96
  %v7315 = vpop.permute.xlu0 %7314
  %7316 = vrot.lane.b32.xlu0 %v7302, 96
  %v7317 = vpop.permute.xlu0 %7316
  %7323 = vst.msk [vmem:[#allocation3 + $0xb0] sm:$0xff] %vm5091, %v7309
  %7324 = vst.msk [vmem:[#allocation3 + $0xd0] sm:$0xff] %vm5091, %v7311
  %7325 = vst.msk [vmem:[#allocation3 + $0xf0] sm:$0xff] %vm5091, %v7313
  %7326 = vst.msk [vmem:[#allocation3 + $0x110] sm:$0xff] %vm5091, %v7315
  %7327 = vst.msk [vmem:[#allocation3 + $0x130] sm:$0xff] %vm5091, %v7317
  %v7328 = vld [vmem:[#allocation2 + $0xe8] sm:$0xff]
  %v7329 = vld [vmem:[#allocation2 + $0xf0] sm:$0xff]
  %v7330 = vld [vmem:[#allocation2 + $0xf8] sm:$0xff]
  %v7331 = vld [vmem:[#allocation2 + $0x100] sm:$0xff]
  %v7332 = vld [vmem:[#allocation2 + $0x108] sm:$0xff]
  %7338 = vrot.lane.b32.xlu0 %v7328, 96
  %v7339 = vpop.permute.xlu0 %7338
  %7340 = vrot.lane.b32.xlu0 %v7329, 96
  %v7341 = vpop.permute.xlu0 %7340
  %7342 = vrot.lane.b32.xlu0 %v7330, 96
  %v7343 = vpop.permute.xlu0 %7342
  %7344 = vrot.lane.b32.xlu0 %v7331, 96
  %v7345 = vpop.permute.xlu0 %7344
  %7346 = vrot.lane.b32.xlu0 %v7332, 96
  %v7347 = vpop.permute.xlu0 %7346
  %7353 = vst.msk [vmem:[#allocation3 + $0x150] sm:$0xff] %vm5091, %v7339
  %7354 = vst.msk [vmem:[#allocation3 + $0x170] sm:$0xff] %vm5091, %v7341
  %7355 = vst.msk [vmem:[#allocation3 + $0x190] sm:$0xff] %vm5091, %v7343
  %7356 = vst.msk [vmem:[#allocation3 + $0x1b0] sm:$0xff] %vm5091, %v7345
  %7357 = vst.msk [vmem:[#allocation3 + $0x1d0] sm:$0xff] %vm5091, %v7347
  %v7358 = vld [vmem:[#allocation2 + $0x120] sm:$0xff]
  %v7359 = vld [vmem:[#allocation2 + $0x128] sm:$0xff]
  %v7360 = vld [vmem:[#allocation2 + $0x130] sm:$0xff]
  %v7361 = vld [vmem:[#allocation2 + $0x138] sm:$0xff]
  %v7362 = vld [vmem:[#allocation2 + $0x140] sm:$0xff]
  %7368 = vrot.lane.b32.xlu0 %v7358, 96
  %v7369 = vpop.permute.xlu0 %7368
  %7370 = vrot.lane.b32.xlu0 %v7359, 96
  %v7371 = vpop.permute.xlu0 %7370
  %7372 = vrot.lane.b32.xlu0 %v7360, 96
  %v7373 = vpop.permute.xlu0 %7372
  %7374 = vrot.lane.b32.xlu0 %v7361, 96
  %v7375 = vpop.permute.xlu0 %7374
  %7376 = vrot.lane.b32.xlu0 %v7362, 96
  %v7377 = vpop.permute.xlu0 %7376
  %7383 = vst.msk [vmem:[#allocation3 + $0x1f0] sm:$0xff] %vm5091, %v7369
  %7384 = vst.msk [vmem:[#allocation3 + $0x210] sm:$0xff] %vm5091, %v7371
  %7385 = vst.msk [vmem:[#allocation3 + $0x230] sm:$0xff] %vm5091, %v7373
  %7386 = vst.msk [vmem:[#allocation3 + $0x250] sm:$0xff] %vm5091, %v7375
  %7387 = vst.msk [vmem:[#allocation3 + $0x270] sm:$0xff] %vm5091, %v7377
  %v7388 = vld [vmem:[#allocation2 + $0x158] sm:$0xff]
  %v7389 = vld [vmem:[#allocation2 + $0x160] sm:$0xff]
  %v7390 = vld [vmem:[#allocation2 + $0x168] sm:$0xff]
  %v7391 = vld [vmem:[#allocation2 + $0x170] sm:$0xff]
  %v7392 = vld [vmem:[#allocation2 + $0x178] sm:$0xff]
  %7398 = vrot.lane.b32.xlu0 %v7388, 96
  %v7399 = vpop.permute.xlu0 %7398
  %7400 = vrot.lane.b32.xlu0 %v7389, 96
  %v7401 = vpop.permute.xlu0 %7400
  %7402 = vrot.lane.b32.xlu0 %v7390, 96
  %v7403 = vpop.permute.xlu0 %7402
  %7404 = vrot.lane.b32.xlu0 %v7391, 96
  %v7405 = vpop.permute.xlu0 %7404
  %7406 = vrot.lane.b32.xlu0 %v7392, 96
  %v7407 = vpop.permute.xlu0 %7406
  %7413 = vst.msk [vmem:[#allocation3 + $0x290] sm:$0xff] %vm5091, %v7399
  %7414 = vst.msk [vmem:[#allocation3 + $0x2b0] sm:$0xff] %vm5091, %v7401
  %7415 = vst.msk [vmem:[#allocation3 + $0x2d0] sm:$0xff] %vm5091, %v7403
  %7416 = vst.msk [vmem:[#allocation3 + $0x2f0] sm:$0xff] %vm5091, %v7405
  %7417 = vst.msk [vmem:[#allocation3 + $0x310] sm:$0xff] %vm5091, %v7407
  %v7418 = vld [vmem:[#allocation2 + $0x200] sm:$0xff]
  %v7419 = vld [vmem:[#allocation2 + $0x208] sm:$0xff]
  %v7420 = vld [vmem:[#allocation2 + $0x210] sm:$0xff]
  %v7421 = vld [vmem:[#allocation2 + $0x218] sm:$0xff]
  %v7422 = vld [vmem:[#allocation2 + $0x220] sm:$0xff]
  %7428 = vrot.lane.b32.xlu0 %v7418, 112
  %v7429 = vpop.permute.xlu0 %7428
  %7430 = vrot.lane.b32.xlu0 %v7419, 112
  %v7431 = vpop.permute.xlu0 %7430
  %7432 = vrot.lane.b32.xlu0 %v7420, 112
  %v7433 = vpop.permute.xlu0 %7432
  %7434 = vrot.lane.b32.xlu0 %v7421, 112
  %v7435 = vpop.permute.xlu0 %7434
  %7436 = vrot.lane.b32.xlu0 %v7422, 112
  %v7437 = vpop.permute.xlu0 %7436
  %7443 = vst.msk [vmem:[#allocation3 + $0x10] sm:$0xff] %vm5242, %v7429
  %7444 = vst.msk [vmem:[#allocation3 + $0x30] sm:$0xff] %vm5242, %v7431
  %7445 = vst.msk [vmem:[#allocation3 + $0x50] sm:$0xff] %vm5242, %v7433
  %7446 = vst.msk [vmem:[#allocation3 + $0x70] sm:$0xff] %vm5242, %v7435
  %7447 = vst.msk [vmem:[#allocation3 + $0x90] sm:$0xff] %vm5242, %v7437
  %v7448 = vld [vmem:[#allocation2 + $0x238] sm:$0xff]
  %v7449 = vld [vmem:[#allocation2 + $0x240] sm:$0xff]
  %v7450 = vld [vmem:[#allocation2 + $0x248] sm:$0xff]
  %v7451 = vld [vmem:[#allocation2 + $0x250] sm:$0xff]
  %v7452 = vld [vmem:[#allocation2 + $0x258] sm:$0xff]
  %7458 = vrot.lane.b32.xlu0 %v7448, 112
  %v7459 = vpop.permute.xlu0 %7458
  %7460 = vrot.lane.b32.xlu0 %v7449, 112
  %v7461 = vpop.permute.xlu0 %7460
  %7462 = vrot.lane.b32.xlu0 %v7450, 112
  %v7463 = vpop.permute.xlu0 %7462
  %7464 = vrot.lane.b32.xlu0 %v7451, 112
  %v7465 = vpop.permute.xlu0 %7464
  %7466 = vrot.lane.b32.xlu0 %v7452, 112
  %v7467 = vpop.permute.xlu0 %7466
  %7473 = vst.msk [vmem:[#allocation3 + $0xb0] sm:$0xff] %vm5242, %v7459
  %7474 = vst.msk [vmem:[#allocation3 + $0xd0] sm:$0xff] %vm5242, %v7461
  %7475 = vst.msk [vmem:[#allocation3 + $0xf0] sm:$0xff] %vm5242, %v7463
  %7476 = vst.msk [vmem:[#allocation3 + $0x110] sm:$0xff] %vm5242, %v7465
  %7477 = vst.msk [vmem:[#allocation3 + $0x130] sm:$0xff] %vm5242, %v7467
  %v7478 = vld [vmem:[#allocation2 + $0x270] sm:$0xff]
  %v7479 = vld [vmem:[#allocation2 + $0x278] sm:$0xff]
  %v7480 = vld [vmem:[#allocation2 + $0x280] sm:$0xff]
  %v7481 = vld [vmem:[#allocation2 + $0x288] sm:$0xff]
  %v7482 = vld [vmem:[#allocation2 + $0x290] sm:$0xff]
  %7488 = vrot.lane.b32.xlu0 %v7478, 112
  %v7489 = vpop.permute.xlu0 %7488
  %7490 = vrot.lane.b32.xlu0 %v7479, 112
  %v7491 = vpop.permute.xlu0 %7490
  %7492 = vrot.lane.b32.xlu0 %v7480, 112
  %v7493 = vpop.permute.xlu0 %7492
  %7494 = vrot.lane.b32.xlu0 %v7481, 112
  %v7495 = vpop.permute.xlu0 %7494
  %7496 = vrot.lane.b32.xlu0 %v7482, 112
  %v7497 = vpop.permute.xlu0 %7496
  %7503 = vst.msk [vmem:[#allocation3 + $0x150] sm:$0xff] %vm5242, %v7489
  %7504 = vst.msk [vmem:[#allocation3 + $0x170] sm:$0xff] %vm5242, %v7491
  %7505 = vst.msk [vmem:[#allocation3 + $0x190] sm:$0xff] %vm5242, %v7493
  %7506 = vst.msk [vmem:[#allocation3 + $0x1b0] sm:$0xff] %vm5242, %v7495
  %7507 = vst.msk [vmem:[#allocation3 + $0x1d0] sm:$0xff] %vm5242, %v7497
  %v7508 = vld [vmem:[#allocation2 + $0x2a8] sm:$0xff]
  %v7509 = vld [vmem:[#allocation2 + $0x2b0] sm:$0xff]
  %v7510 = vld [vmem:[#allocation2 + $0x2b8] sm:$0xff]
  %v7511 = vld [vmem:[#allocation2 + $0x2c0] sm:$0xff]
  %v7512 = vld [vmem:[#allocation2 + $0x2c8] sm:$0xff]
  %7518 = vrot.lane.b32.xlu0 %v7508, 112
  %v7519 = vpop.permute.xlu0 %7518
  %7520 = vrot.lane.b32.xlu0 %v7509, 112
  %v7521 = vpop.permute.xlu0 %7520
  %7522 = vrot.lane.b32.xlu0 %v7510, 112
  %v7523 = vpop.permute.xlu0 %7522
  %7524 = vrot.lane.b32.xlu0 %v7511, 112
  %v7525 = vpop.permute.xlu0 %7524
  %7526 = vrot.lane.b32.xlu0 %v7512, 112
  %v7527 = vpop.permute.xlu0 %7526
  %7533 = vst.msk [vmem:[#allocation3 + $0x1f0] sm:$0xff] %vm5242, %v7519
  %7534 = vst.msk [vmem:[#allocation3 + $0x210] sm:$0xff] %vm5242, %v7521
  %7535 = vst.msk [vmem:[#allocation3 + $0x230] sm:$0xff] %vm5242, %v7523
  %7536 = vst.msk [vmem:[#allocation3 + $0x250] sm:$0xff] %vm5242, %v7525
  %7537 = vst.msk [vmem:[#allocation3 + $0x270] sm:$0xff] %vm5242, %v7527
  %v7538 = vld [vmem:[#allocation2 + $0x2e0] sm:$0xff]
  %v7539 = vld [vmem:[#allocation2 + $0x2e8] sm:$0xff]
  %v7540 = vld [vmem:[#allocation2 + $0x2f0] sm:$0xff]
  %v7541 = vld [vmem:[#allocation2 + $0x2f8] sm:$0xff]
  %v7542 = vld [vmem:[#allocation2 + $0x300] sm:$0xff]
  %7548 = vrot.lane.b32.xlu0 %v7538, 112
  %v7549 = vpop.permute.xlu0 %7548
  %7550 = vrot.lane.b32.xlu0 %v7539, 112
  %v7551 = vpop.permute.xlu0 %7550
  %7552 = vrot.lane.b32.xlu0 %v7540, 112
  %v7553 = vpop.permute.xlu0 %7552
  %7554 = vrot.lane.b32.xlu0 %v7541, 112
  %v7555 = vpop.permute.xlu0 %7554
  %7556 = vrot.lane.b32.xlu0 %v7542, 112
  %v7557 = vpop.permute.xlu0 %7556
  %7563 = vst.msk [vmem:[#allocation3 + $0x290] sm:$0xff] %vm5242, %v7549
  %7564 = vst.msk [vmem:[#allocation3 + $0x2b0] sm:$0xff] %vm5242, %v7551
  %7565 = vst.msk [vmem:[#allocation3 + $0x2d0] sm:$0xff] %vm5242, %v7553
  %7566 = vst.msk [vmem:[#allocation3 + $0x2f0] sm:$0xff] %vm5242, %v7555
  %7567 = vst.msk [vmem:[#allocation3 + $0x310] sm:$0xff] %vm5242, %v7557
  %v7568 = vld [vmem:[#allocation2 + $0x80] sm:$0xff]
  %v7569 = vld [vmem:[#allocation2 + $0x88] sm:$0xff]
  %v7570 = vld [vmem:[#allocation2 + $0x90] sm:$0xff]
  %v7571 = vld [vmem:[#allocation2 + $0x98] sm:$0xff]
  %v7572 = vld [vmem:[#allocation2 + $0xa0] sm:$0xff]
  %7573 = vst.msk [vmem:[#allocation3 + $0x18] sm:$0xff] %vm241, %v7568
  %7574 = vst.msk [vmem:[#allocation3 + $0x38] sm:$0xff] %vm241, %v7569
  %7575 = vst.msk [vmem:[#allocation3 + $0x58] sm:$0xff] %vm241, %v7570
  %7576 = vst.msk [vmem:[#allocation3 + $0x78] sm:$0xff] %vm241, %v7571
  %7577 = vst.msk [vmem:[#allocation3 + $0x98] sm:$0xff] %vm241, %v7572
  %v7578 = vld [vmem:[#allocation2 + $0xb8] sm:$0xff]
  %v7579 = vld [vmem:[#allocation2 + $0xc0] sm:$0xff]
  %v7580 = vld [vmem:[#allocation2 + $0xc8] sm:$0xff]
  %v7581 = vld [vmem:[#allocation2 + $0xd0] sm:$0xff]
  %v7582 = vld [vmem:[#allocation2 + $0xd8] sm:$0xff]
  %7583 = vst.msk [vmem:[#allocation3 + $0xb8] sm:$0xff] %vm241, %v7578
  %7584 = vst.msk [vmem:[#allocation3 + $0xd8] sm:$0xff] %vm241, %v7579
  %7585 = vst.msk [vmem:[#allocation3 + $0xf8] sm:$0xff] %vm241, %v7580
  %7586 = vst.msk [vmem:[#allocation3 + $0x118] sm:$0xff] %vm241, %v7581
  %7587 = vst.msk [vmem:[#allocation3 + $0x138] sm:$0xff] %vm241, %v7582
  %v7588 = vld [vmem:[#allocation2 + $0xf0] sm:$0xff]
  %v7589 = vld [vmem:[#allocation2 + $0xf8] sm:$0xff]
  %v7590 = vld [vmem:[#allocation2 + $0x100] sm:$0xff]
  %v7591 = vld [vmem:[#allocation2 + $0x108] sm:$0xff]
  %v7592 = vld [vmem:[#allocation2 + $0x110] sm:$0xff]
  %7593 = vst.msk [vmem:[#allocation3 + $0x158] sm:$0xff] %vm241, %v7588
  %7594 = vst.msk [vmem:[#allocation3 + $0x178] sm:$0xff] %vm241, %v7589
  %7595 = vst.msk [vmem:[#allocation3 + $0x198] sm:$0xff] %vm241, %v7590
  %7596 = vst.msk [vmem:[#allocation3 + $0x1b8] sm:$0xff] %vm241, %v7591
  %7597 = vst.msk [vmem:[#allocation3 + $0x1d8] sm:$0xff] %vm241, %v7592
  %v7598 = vld [vmem:[#allocation2 + $0x128] sm:$0xff]
  %v7599 = vld [vmem:[#allocation2 + $0x130] sm:$0xff]
  %v7600 = vld [vmem:[#allocation2 + $0x138] sm:$0xff]
  %v7601 = vld [vmem:[#allocation2 + $0x140] sm:$0xff]
  %v7602 = vld [vmem:[#allocation2 + $0x148] sm:$0xff]
  %7603 = vst.msk [vmem:[#allocation3 + $0x1f8] sm:$0xff] %vm241, %v7598
  %7604 = vst.msk [vmem:[#allocation3 + $0x218] sm:$0xff] %vm241, %v7599
  %7605 = vst.msk [vmem:[#allocation3 + $0x238] sm:$0xff] %vm241, %v7600
  %7606 = vst.msk [vmem:[#allocation3 + $0x258] sm:$0xff] %vm241, %v7601
  %7607 = vst.msk [vmem:[#allocation3 + $0x278] sm:$0xff] %vm241, %v7602
  %v7608 = vld [vmem:[#allocation2 + $0x160] sm:$0xff]
  %v7609 = vld [vmem:[#allocation2 + $0x168] sm:$0xff]
  %v7610 = vld [vmem:[#allocation2 + $0x170] sm:$0xff]
  %v7611 = vld [vmem:[#allocation2 + $0x178] sm:$0xff]
  %v7612 = vld [vmem:[#allocation2 + $0x180] sm:$0xff]
  %7613 = vst.msk [vmem:[#allocation3 + $0x298] sm:$0xff] %vm241, %v7608
  %7614 = vst.msk [vmem:[#allocation3 + $0x2b8] sm:$0xff] %vm241, %v7609
  %7615 = vst.msk [vmem:[#allocation3 + $0x2d8] sm:$0xff] %vm241, %v7610
  %7616 = vst.msk [vmem:[#allocation3 + $0x2f8] sm:$0xff] %vm241, %v7611
  %7617 = vst.msk [vmem:[#allocation3 + $0x318] sm:$0xff] %vm241, %v7612
  %v7618 = vld [vmem:[#allocation3] sm:$0xff]
  %v7619 = vld [vmem:[#allocation3 + $0x8] sm:$0xff]
  %v7620 = vld [vmem:[#allocation3 + $0x10] sm:$0xff]
  %v7621 = vld [vmem:[#allocation3 + $0x18] sm:$0xff]
  %v7622 = vld [vmem:[#allocation3 + $0x20] sm:$0xff]
  %v7623 = vld [vmem:[#allocation3 + $0x28] sm:$0xff]
  %v7624 = vld [vmem:[#allocation3 + $0x30] sm:$0xff]
  %v7625 = vld [vmem:[#allocation3 + $0x38] sm:$0xff]
  %v7626 = vld [vmem:[#allocation3 + $0x40] sm:$0xff]
  %v7627 = vld [vmem:[#allocation3 + $0x48] sm:$0xff]
  %v7628 = vld [vmem:[#allocation3 + $0x50] sm:$0xff]
  %v7629 = vld [vmem:[#allocation3 + $0x58] sm:$0xff]
  %v7630 = vld [vmem:[#allocation3 + $0x60] sm:$0xff]
  %v7631 = vld [vmem:[#allocation3 + $0x68] sm:$0xff]
  %v7632 = vld [vmem:[#allocation3 + $0x70] sm:$0xff]
  %v7633 = vld [vmem:[#allocation3 + $0x78] sm:$0xff]
  %v7634 = vld [vmem:[#allocation3 + $0x80] sm:$0xff]
  %v7635 = vld [vmem:[#allocation3 + $0x88] sm:$0xff]
  %v7636 = vld [vmem:[#allocation3 + $0x90] sm:$0xff]
  %v7637 = vld [vmem:[#allocation3 + $0x98] sm:$0xff]
  %v7638 = vld [vmem:[#allocation3 + $0xa0] sm:$0xff]
  %v7639 = vld [vmem:[#allocation3 + $0xa8] sm:$0xff]
  %v7640 = vld [vmem:[#allocation3 + $0xb0] sm:$0xff]
  %v7641 = vld [vmem:[#allocation3 + $0xb8] sm:$0xff]
  %v7642 = vld [vmem:[#allocation3 + $0xc0] sm:$0xff]
  %v7643 = vld [vmem:[#allocation3 + $0xc8] sm:$0xff]
  %v7644 = vld [vmem:[#allocation3 + $0xd0] sm:$0xff]
  %v7645 = vld [vmem:[#allocation3 + $0xd8] sm:$0xff]
  %v7646 = vld [vmem:[#allocation3 + $0xe0] sm:$0xff]
  %v7647 = vld [vmem:[#allocation3 + $0xe8] sm:$0xff]
  %v7648 = vld [vmem:[#allocation3 + $0xf0] sm:$0xff]
  %v7649 = vld [vmem:[#allocation3 + $0xf8] sm:$0xff]
  %v7650 = vld [vmem:[#allocation3 + $0x100] sm:$0xff]
  %v7651 = vld [vmem:[#allocation3 + $0x108] sm:$0xff]
  %v7652 = vld [vmem:[#allocation3 + $0x110] sm:$0xff]
  %v7653 = vld [vmem:[#allocation3 + $0x118] sm:$0xff]
  %v7654 = vld [vmem:[#allocation3 + $0x120] sm:$0xff]
  %v7655 = vld [vmem:[#allocation3 + $0x128] sm:$0xff]
  %v7656 = vld [vmem:[#allocation3 + $0x130] sm:$0xff]
  %v7657 = vld [vmem:[#allocation3 + $0x138] sm:$0xff]
  %v7658 = vld [vmem:[#allocation3 + $0x140] sm:$0xff]
  %v7659 = vld [vmem:[#allocation3 + $0x148] sm:$0xff]
  %v7660 = vld [vmem:[#allocation3 + $0x150] sm:$0xff]
  %v7661 = vld [vmem:[#allocation3 + $0x158] sm:$0xff]
  %v7662 = vld [vmem:[#allocation3 + $0x160] sm:$0xff]
  %v7663 = vld [vmem:[#allocation3 + $0x168] sm:$0xff]
  %v7664 = vld [vmem:[#allocation3 + $0x170] sm:$0xff]
  %v7665 = vld [vmem:[#allocation3 + $0x178] sm:$0xff]
  %v7666 = vld [vmem:[#allocation3 + $0x180] sm:$0xff]
  %v7667 = vld [vmem:[#allocation3 + $0x188] sm:$0xff]
  %v7668 = vld [vmem:[#allocation3 + $0x190] sm:$0xff]
  %v7669 = vld [vmem:[#allocation3 + $0x198] sm:$0xff]
  %v7670 = vld [vmem:[#allocation3 + $0x1a0] sm:$0xff]
  %v7671 = vld [vmem:[#allocation3 + $0x1a8] sm:$0xff]
  %v7672 = vld [vmem:[#allocation3 + $0x1b0] sm:$0xff]
  %v7673 = vld [vmem:[#allocation3 + $0x1b8] sm:$0xff]
  %v7674 = vld [vmem:[#allocation3 + $0x1c0] sm:$0xff]
  %v7675 = vld [vmem:[#allocation3 + $0x1c8] sm:$0xff]
  %v7676 = vld [vmem:[#allocation3 + $0x1d0] sm:$0xff]
  %v7677 = vld [vmem:[#allocation3 + $0x1d8] sm:$0xff]
  %v7678 = vld [vmem:[#allocation3 + $0x1e0] sm:$0xff]
  %v7679 = vld [vmem:[#allocation3 + $0x1e8] sm:$0xff]
  %v7680 = vld [vmem:[#allocation3 + $0x1f0] sm:$0xff]
  %v7681 = vld [vmem:[#allocation3 + $0x1f8] sm:$0xff]
  %v7682 = vld [vmem:[#allocation3 + $0x200] sm:$0xff]
  %v7683 = vld [vmem:[#allocation3 + $0x208] sm:$0xff]
  %v7684 = vld [vmem:[#allocation3 + $0x210] sm:$0xff]
  %v7685 = vld [vmem:[#allocation3 + $0x218] sm:$0xff]
  %v7686 = vld [vmem:[#allocation3 + $0x220] sm:$0xff]
  %v7687 = vld [vmem:[#allocation3 + $0x228] sm:$0xff]
  %v7688 = vld [vmem:[#allocation3 + $0x230] sm:$0xff]
  %v7689 = vld [vmem:[#allocation3 + $0x238] sm:$0xff]
  %v7690 = vld [vmem:[#allocation3 + $0x240] sm:$0xff]
  %v7691 = vld [vmem:[#allocation3 + $0x248] sm:$0xff]
  %v7692 = vld [vmem:[#allocation3 + $0x250] sm:$0xff]
  %v7693 = vld [vmem:[#allocation3 + $0x258] sm:$0xff]
  %v7694 = vld [vmem:[#allocation3 + $0x260] sm:$0xff]
  %v7695 = vld [vmem:[#allocation3 + $0x268] sm:$0xff]
  %v7696 = vld [vmem:[#allocation3 + $0x270] sm:$0xff]
  %v7697 = vld [vmem:[#allocation3 + $0x278] sm:$0xff]
  %v7698 = vld [vmem:[#allocation3 + $0x280] sm:$0xff]
  %v7699 = vld [vmem:[#allocation3 + $0x288] sm:$0xff]
  %v7700 = vld [vmem:[#allocation3 + $0x290] sm:$0xff]
  %v7701 = vld [vmem:[#allocation3 + $0x298] sm:$0xff]
  %v7702 = vld [vmem:[#allocation3 + $0x2a0] sm:$0xff]
  %v7703 = vld [vmem:[#allocation3 + $0x2a8] sm:$0xff]
  %v7704 = vld [vmem:[#allocation3 + $0x2b0] sm:$0xff]
  %v7705 = vld [vmem:[#allocation3 + $0x2b8] sm:$0xff]
  %v7706 = vld [vmem:[#allocation3 + $0x2c0] sm:$0xff]
  %v7707 = vld [vmem:[#allocation3 + $0x2c8] sm:$0xff]
  %v7708 = vld [vmem:[#allocation3 + $0x2d0] sm:$0xff]
  %v7709 = vld [vmem:[#allocation3 + $0x2d8] sm:$0xff]
  %v7710 = vld [vmem:[#allocation3 + $0x2e0] sm:$0xff]
  %v7711 = vld [vmem:[#allocation3 + $0x2e8] sm:$0xff]
  %v7712 = vld [vmem:[#allocation3 + $0x2f0] sm:$0xff]
  %v7713 = vld [vmem:[#allocation3 + $0x2f8] sm:$0xff]
  %v7714 = vld [vmem:[#allocation3 + $0x300] sm:$0xff]
  %v7715 = vld [vmem:[#allocation3 + $0x308] sm:$0xff]
  %v7716 = vld [vmem:[#allocation3 + $0x310] sm:$0xff]
  %v7717 = vld [vmem:[#allocation3 + $0x318] sm:$0xff]
  %v7718 = vld [vmem:[%s2] sm:$0xff]
  %v7719 = vld [vmem:[%s2 + $0x8] sm:$0xff]
  %v7720 = vld [vmem:[%s2 + $0x10] sm:$0xff]
  %v7721 = vld [vmem:[%s2 + $0x18] sm:$0xff]
  %v7722 = vld [vmem:[%s2 + $0x20] sm:$0xff]
  %v7723 = vld [vmem:[%s2 + $0x28] sm:$0xff]
  %v7724 = vld [vmem:[%s2 + $0x30] sm:$0xff]
  %v7725 = vld [vmem:[%s2 + $0x38] sm:$0xff]
  %v7726 = vld [vmem:[%s2 + $0x40] sm:$0xff]
  %v7727 = vld [vmem:[%s2 + $0x48] sm:$0xff]
  %v7728 = vld [vmem:[%s2 + $0x50] sm:$0xff]
  %v7729 = vld [vmem:[%s2 + $0x58] sm:$0xff]
  %v7730 = vld [vmem:[%s2 + $0x60] sm:$0xff]
  %v7731 = vld [vmem:[%s2 + $0x68] sm:$0xff]
  %v7732 = vld [vmem:[%s2 + $0x70] sm:$0xff]
  %v7733 = vld [vmem:[%s2 + $0x78] sm:$0xff]
  %v7734 = vld [vmem:[%s2 + $0x80] sm:$0xff]
  %v7735 = vld [vmem:[%s2 + $0x88] sm:$0xff]
  %v7736 = vld [vmem:[%s2 + $0x90] sm:$0xff]
  %v7737 = vld [vmem:[%s2 + $0x98] sm:$0xff]
  %v7738 = vld [vmem:[%s2 + $0xa0] sm:$0xff]
  %v7739 = vld [vmem:[%s2 + $0xa8] sm:$0xff]
  %v7740 = vld [vmem:[%s2 + $0xb0] sm:$0xff]
  %v7741 = vld [vmem:[%s2 + $0xb8] sm:$0xff]
  %v7742 = vld [vmem:[%s2 + $0xc0] sm:$0xff]
  %v7743 = vld [vmem:[%s2 + $0xc8] sm:$0xff]
  %v7744 = vld [vmem:[%s2 + $0xd0] sm:$0xff]
  %v7745 = vld [vmem:[%s2 + $0xd8] sm:$0xff]
  %v7746 = vld [vmem:[%s2 + $0xe0] sm:$0xff]
  %v7747 = vld [vmem:[%s2 + $0xe8] sm:$0xff]
  %v7748 = vld [vmem:[%s2 + $0xf0] sm:$0xff]
  %v7749 = vld [vmem:[%s2 + $0xf8] sm:$0xff]
  %v7750 = vld [vmem:[%s2 + $0x100] sm:$0xff]
  %v7751 = vld [vmem:[%s2 + $0x108] sm:$0xff]
  %v7752 = vld [vmem:[%s2 + $0x110] sm:$0xff]
  %v7753 = vld [vmem:[%s2 + $0x118] sm:$0xff]
  %v7754 = vld [vmem:[%s2 + $0x120] sm:$0xff]
  %v7755 = vld [vmem:[%s2 + $0x128] sm:$0xff]
  %v7756 = vld [vmem:[%s2 + $0x130] sm:$0xff]
  %v7757 = vld [vmem:[%s2 + $0x138] sm:$0xff]
  %v7758 = vld [vmem:[%s2 + $0x140] sm:$0xff]
  %v7759 = vld [vmem:[%s2 + $0x148] sm:$0xff]
  %v7760 = vld [vmem:[%s2 + $0x150] sm:$0xff]
  %v7761 = vld [vmem:[%s2 + $0x158] sm:$0xff]
  %v7762 = vld [vmem:[%s2 + $0x160] sm:$0xff]
  %v7763 = vld [vmem:[%s2 + $0x168] sm:$0xff]
  %v7764 = vld [vmem:[%s2 + $0x170] sm:$0xff]
  %v7765 = vld [vmem:[%s2 + $0x178] sm:$0xff]
  %v7766 = vld [vmem:[%s2 + $0x180] sm:$0xff]
  %v7767 = vld [vmem:[%s2 + $0x188] sm:$0xff]
  %v7769 = vsel %vm241, %v7621, 0
  %v7772 = vsel %vm241, %v7625, 0
  %v7775 = vsel %vm241, %v7629, 0
  %v7778 = vsel %vm241, %v7633, 0
  %v7781 = vsel %vm241, %v7637, 0
  %v7784 = vsel %vm241, %v7641, 0
  %v7787 = vsel %vm241, %v7645, 0
  %v7790 = vsel %vm241, %v7649, 0
  %v7793 = vsel %vm241, %v7653, 0
  %v7796 = vsel %vm241, %v7657, 0
  %v7799 = vsel %vm241, %v7661, 0
  %v7802 = vsel %vm241, %v7665, 0
  %v7805 = vsel %vm241, %v7669, 0
  %v7808 = vsel %vm241, %v7673, 0
  %v7811 = vsel %vm241, %v7677, 0
  %v7814 = vsel %vm241, %v7681, 0
  %v7817 = vsel %vm241, %v7685, 0
  %v7820 = vsel %vm241, %v7689, 0
  %v7823 = vsel %vm241, %v7693, 0
  %v7826 = vsel %vm241, %v7697, 0
  %v7829 = vsel %vm241, %v7701, 0
  %v7832 = vsel %vm241, %v7705, 0
  %v7835 = vsel %vm241, %v7709, 0
  %v7838 = vsel %vm241, %v7713, 0
  %v7841 = vsel %vm241, %v7717, 0
  %7843 = vmatprep.subr.mxu0 0.0
  %7844 = vmatpush1.msra.mxu0 %v7718
  %7845 = vmatprep.subr.mxu0 0.0
  %7846 = vmatpush1.msra.mxu0 %v7719
  %7847 = vmatprep.subr.mxu0 0.0
  %7848 = vmatpush1.msra.mxu0 %v7720
  %7849 = vmatprep.subr.mxu0 0.0
  %7850 = vmatpush1.msra.mxu0 %v7721
  %7851 = vmatprep.subr.mxu0 0.0
  %7852 = vmatpush1.msra.mxu0 %v7722
  %7853 = vmatprep.subr.mxu0 0.0
  %7854 = vmatpush1.msra.mxu0 %v7723
  %7855 = vmatprep.subr.mxu0 0.0
  %7856 = vmatpush1.msra.mxu0 %v7724
  %7857 = vmatprep.subr.mxu0 0.0
  %7858 = vmatpush1.msra.mxu0 %v7725
  %7859 = vmatprep.subr.mxu0 0.0
  %7860 = vmatpush1.msra.mxu0 %v7726
  %7861 = vmatprep.subr.mxu0 0.0
  %7862 = vmatpush1.msra.mxu0 %v7727
  %7863 = vmatprep.subr.mxu0 0.0
  %7864 = vmatpush1.msra.mxu0 %v7728
  %7865 = vmatprep.subr.mxu0 0.0
  %7866 = vmatpush1.msra.mxu0 %v7729
  %7867 = vmatprep.subr.mxu0 0.0
  %7868 = vmatpush1.msra.mxu0 %v7730
  %7869 = vmatprep.subr.mxu0 0.0
  %7870 = vmatpush1.msra.mxu0 %v7731
  %7871 = vmatprep.subr.mxu0 0.0
  %7872 = vmatpush1.msra.mxu0 %v7732
  %7873 = vmatprep.subr.mxu0 0.0
  %7874 = vmatpush1.msra.mxu0 %v7733
  %7875 = vmatprep.subr.mxu0 0.0
  %7876 = vmatpush1.msra.mxu0 %v7734
  %7877 = vmatprep.subr.mxu0 0.0
  %7878 = vmatpush1.msra.mxu0 %v7735
  %7879 = vmatprep.subr.mxu0 0.0
  %7880 = vmatpush1.msra.mxu0 %v7736
  %7881 = vmatprep.subr.mxu0 0.0
  %7882 = vmatpush1.msra.mxu0 %v7737
  %7883 = vmatprep.subr.mxu0 0.0
  %7884 = vmatpush1.msra.mxu0 %v7738
  %7885 = vmatprep.subr.mxu0 0.0
  %7886 = vmatpush1.msra.mxu0 %v7739
  %7887 = vmatprep.subr.mxu0 0.0
  %7888 = vmatpush1.msra.mxu0 %v7740
  %7889 = vmatprep.subr.mxu0 0.0
  %7890 = vmatpush1.msra.mxu0 %v7741
  %7891 = vmatprep.subr.mxu0 0.0
  %7892 = vmatpush1.msra.mxu0 %v7742
  %7893 = vmatprep.subr.mxu0 0.0
  %7894 = vmatpush1.msra.mxu0 %v7743
  %7895 = vmatprep.subr.mxu0 0.0
  %7896 = vmatpush1.msra.mxu0 %v7744
  %7897 = vmatprep.subr.mxu0 0.0
  %7898 = vmatpush1.msra.mxu0 %v7745
  %7899 = vmatprep.subr.mxu0 0.0
  %7900 = vmatpush1.msra.mxu0 %v7746
  %7901 = vmatprep.subr.mxu0 0.0
  %7902 = vmatpush1.msra.mxu0 %v7747
  %7903 = vmatprep.subr.mxu0 0.0
  %7904 = vmatpush1.msra.mxu0 %v7748
  %7905 = vmatprep.subr.mxu0 0.0
  %7906 = vmatpush1.msra.mxu0 %v7749
  %7907 = vmatprep.mubr.f32.mxu0 %v7619
  %7908 = vmatmul.mubr.f32.gmra.mrb[0].mxu0 %v7618
  %v7909 = vpop.f32.mrb[0].mxu0
  %v7910 = vadd.f32 0.0, %v7909
  %v7911 = vpop.f32.mrb[0].mxu0
  %7912 = vmatprep.mubr.f32.mxu0 %v7623
  %7913 = vmatmul.mubr.f32.gmra.mrb[0].mxu0 %v7622
  %v7914 = vpop.f32.mrb[0].mxu0
  %v7915 = vadd.f32 0.0, %v7914
  %v7916 = vpop.f32.mrb[0].mxu0
  %7917 = vmatprep.mubr.f32.mxu0 %v7627
  %7918 = vmatmul.mubr.f32.gmra.mrb[0].mxu0 %v7626
  %v7919 = vpop.f32.mrb[0].mxu0
  %v7920 = vadd.f32 0.0, %v7919
  %v7921 = vpop.f32.mrb[0].mxu0
  %7922 = vmatprep.mubr.f32.mxu0 %v7631
  %7923 = vmatmul.mubr.f32.gmra.mrb[0].mxu0 %v7630
  %v7924 = vpop.f32.mrb[0].mxu0
  %v7925 = vadd.f32 0.0, %v7924
  %v7926 = vpop.f32.mrb[0].mxu0
  %7927 = vmatprep.mubr.f32.mxu0 %v7635
  %7928 = vmatmul.mubr.f32.gmra.mrb[0].mxu0 %v7634
  %v7929 = vpop.f32.mrb[0].mxu0
  %v7930 = vadd.f32 0.0, %v7929
  %v7931 = vpop.f32.mrb[0].mxu0
  %7932 = vmatprep.mubr.f32.mxu0 %v7639
  %7933 = vmatmul.mubr.f32.gmra.mrb[0].mxu0 %v7638
  %v7934 = vpop.f32.mrb[0].mxu0
  %v7935 = vadd.f32 0.0, %v7934
  %v7936 = vpop.f32.mrb[0].mxu0
  %7937 = vmatprep.mubr.f32.mxu0 %v7643
  %7938 = vmatmul.mubr.f32.gmra.mrb[0].mxu0 %v7642
  %v7939 = vpop.f32.mrb[0].mxu0
  %v7940 = vadd.f32 0.0, %v7939
  %v7941 = vpop.f32.mrb[0].mxu0
  %7942 = vmatprep.mubr.f32.mxu0 %v7647
  %7943 = vmatmul.mubr.f32.gmra.mrb[0].mxu0 %v7646
  %v7944 = vpop.f32.mrb[0].mxu0
  %v7945 = vadd.f32 0.0, %v7944
  %v7946 = vpop.f32.mrb[0].mxu0
  %7947 = vmatprep.mubr.f32.mxu0 %v7651
  %7948 = vmatmul.mubr.f32.gmra.mrb[0].mxu0 %v7650
  %v7949 = vpop.f32.mrb[0].mxu0
  %v7950 = vadd.f32 0.0, %v7949
  %v7951 = vpop.f32.mrb[0].mxu0
  %7952 = vmatprep.mubr.f32.mxu0 %v7655
  %7953 = vmatmul.mubr.f32.gmra.mrb[0].mxu0 %v7654
  %v7954 = vpop.f32.mrb[0].mxu0
  %v7955 = vadd.f32 0.0, %v7954
  %v7956 = vpop.f32.mrb[0].mxu0
  %7957 = vmatprep.mubr.f32.mxu0 %v7659
  %7958 = vmatmul.mubr.f32.gmra.mrb[0].mxu0 %v7658
  %v7959 = vpop.f32.mrb[0].mxu0
  %v7960 = vadd.f32 0.0, %v7959
  %v7961 = vpop.f32.mrb[0].mxu0
  %7962 = vmatprep.mubr.f32.mxu0 %v7663
  %7963 = vmatmul.mubr.f32.gmra.mrb[0].mxu0 %v7662
  %v7964 = vpop.f32.mrb[0].mxu0
  %v7965 = vadd.f32 0.0, %v7964
  %v7966 = vpop.f32.mrb[0].mxu0
  %7967 = vmatprep.mubr.f32.mxu0 %v7667
  %7968 = vmatmul.mubr.f32.gmra.mrb[0].mxu0 %v7666
  %v7969 = vpop.f32.mrb[0].mxu0
  %v7970 = vadd.f32 0.0, %v7969
  %v7971 = vpop.f32.mrb[0].mxu0
  %7972 = vmatprep.mubr.f32.mxu0 %v7671
  %7973 = vmatmul.mubr.f32.gmra.mrb[0].mxu0 %v7670
  %v7974 = vpop.f32.mrb[0].mxu0
  %v7975 = vadd.f32 0.0, %v7974
  %v7976 = vpop.f32.mrb[0].mxu0
  %7977 = vmatprep.mubr.f32.mxu0 %v7675
  %7978 = vmatmul.mubr.f32.gmra.mrb[0].mxu0 %v7674
  %v7979 = vpop.f32.mrb[0].mxu0
  %v7980 = vadd.f32 0.0, %v7979
  %v7981 = vpop.f32.mrb[0].mxu0
  %7982 = vmatprep.mubr.f32.mxu0 %v7679
  %7983 = vmatmul.mubr.f32.gmra.mrb[0].mxu0 %v7678
  %v7984 = vpop.f32.mrb[0].mxu0
  %v7985 = vadd.f32 0.0, %v7984
  %v7986 = vpop.f32.mrb[0].mxu0
  %7987 = vmatprep.mubr.f32.mxu0 %v7683
  %7988 = vmatmul.mubr.f32.gmra.mrb[0].mxu0 %v7682
  %v7989 = vpop.f32.mrb[0].mxu0
  %v7990 = vadd.f32 0.0, %v7989
  %v7991 = vpop.f32.mrb[0].mxu0
  %7992 = vmatprep.mubr.f32.mxu0 %v7687
  %7993 = vmatmul.mubr.f32.gmra.mrb[0].mxu0 %v7686
  %v7994 = vpop.f32.mrb[0].mxu0
  %v7995 = vadd.f32 0.0, %v7994
  %v7996 = vpop.f32.mrb[0].mxu0
  %7997 = vmatprep.mubr.f32.mxu0 %v7691
  %7998 = vmatmul.mubr.f32.gmra.mrb[0].mxu0 %v7690
  %v7999 = vpop.f32.mrb[0].mxu0
  %v8000 = vadd.f32 0.0, %v7999
  %v8001 = vpop.f32.mrb[0].mxu0
  %8002 = vmatprep.mubr.f32.mxu0 %v7695
  %8003 = vmatmul.mubr.f32.gmra.mrb[0].mxu0 %v7694
  %v8004 = vpop.f32.mrb[0].mxu0
  %v8005 = vadd.f32 0.0, %v8004
  %v8006 = vpop.f32.mrb[0].mxu0
  %8007 = vmatprep.mubr.f32.mxu0 %v7699
  %8008 = vmatmul.mubr.f32.gmra.mrb[0].mxu0 %v7698
  %v8009 = vpop.f32.mrb[0].mxu0
  %v8010 = vadd.f32 0.0, %v8009
  %v8011 = vpop.f32.mrb[0].mxu0
  %8012 = vmatprep.mubr.f32.mxu0 %v7703
  %8013 = vmatmul.mubr.f32.gmra.mrb[0].mxu0 %v7702
  %v8014 = vpop.f32.mrb[0].mxu0
  %v8015 = vadd.f32 0.0, %v8014
  %v8016 = vpop.f32.mrb[0].mxu0
  %8017 = vmatprep.mubr.f32.mxu0 %v7707
  %8018 = vmatmul.mubr.f32.gmra.mrb[0].mxu0 %v7706
  %v8019 = vpop.f32.mrb[0].mxu0
  %v8020 = vadd.f32 0.0, %v8019
  %v8021 = vpop.f32.mrb[0].mxu0
  %8022 = vmatprep.mubr.f32.mxu0 %v7711
  %8023 = vmatmul.mubr.f32.gmra.mrb[0].mxu0 %v7710
  %v8024 = vpop.f32.mrb[0].mxu0
  %v8025 = vadd.f32 0.0, %v8024
  %v8026 = vpop.f32.mrb[0].mxu0
  %8027 = vmatprep.mubr.f32.mxu0 %v7715
  %8028 = vmatmul.mubr.f32.gmra.mrb[0].mxu0 %v7714
  %v8029 = vpop.f32.mrb[0].mxu0
  %v8030 = vadd.f32 0.0, %v8029
  %v8031 = vpop.f32.mrb[0].mxu0
  %8032 = vdwg.mxu0
  %8033 = vmatprep.subr.mxu0 0.0
  %8034 = vmatpush1.msra.mxu0 %v7750
  %8035 = vmatprep.subr.mxu0 0.0
  %8036 = vmatpush1.msra.mxu0 %v7751
  %8037 = vmatprep.subr.mxu0 0.0
  %8038 = vmatpush1.msra.mxu0 %v7752
  %8039 = vmatprep.subr.mxu0 0.0
  %8040 = vmatpush1.msra.mxu0 %v7753
  %8041 = vmatprep.subr.mxu0 0.0
  %8042 = vmatpush1.msra.mxu0 %v7754
  %8043 = vmatprep.subr.mxu0 0.0
  %8044 = vmatpush1.msra.mxu0 %v7755
  %8045 = vmatprep.subr.mxu0 0.0
  %8046 = vmatpush1.msra.mxu0 %v7756
  %8047 = vmatprep.subr.mxu0 0.0
  %8048 = vmatpush1.msra.mxu0 %v7757
  %8049 = vmatprep.subr.mxu0 0.0
  %8050 = vmatpush1.msra.mxu0 %v7758
  %8051 = vmatprep.subr.mxu0 0.0
  %8052 = vmatpush1.msra.mxu0 %v7759
  %8053 = vmatprep.subr.mxu0 0.0
  %8054 = vmatpush1.msra.mxu0 %v7760
  %8055 = vmatprep.subr.mxu0 0.0
  %8056 = vmatpush1.msra.mxu0 %v7761
  %8057 = vmatprep.subr.mxu0 0.0
  %8058 = vmatpush1.msra.mxu0 %v7762
  %8059 = vmatprep.subr.mxu0 0.0
  %8060 = vmatpush1.msra.mxu0 %v7763
  %8061 = vmatprep.subr.mxu0 0.0
  %8062 = vmatpush1.msra.mxu0 %v7764
  %8063 = vmatprep.subr.mxu0 0.0
  %8064 = vmatpush1.msra.mxu0 %v7765
  %8065 = vmatprep.subr.mxu0 0.0
  %8066 = vmatpush1.msra.mxu0 %v7766
  %8067 = vmatprep.subr.mxu0 0.0
  %8068 = vmatpush1.msra.mxu0 %v7767
  %8069 = vmatprep.subr.mxu0 0.0
  %8070 = vmatpush1.msra.mxu0 0.0
  %8071 = vmatprep.subr.mxu0 0.0
  %8072 = vmatpush1.msra.mxu0 0.0
  %8073 = vmatprep.subr.mxu0 0.0
  %8074 = vmatpush1.msra.mxu0 0.0
  %8075 = vmatprep.subr.mxu0 0.0
  %8076 = vmatpush1.msra.mxu0 0.0
  %8077 = vmatprep.subr.mxu0 0.0
  %8078 = vmatpush1.msra.mxu0 0.0
  %8079 = vmatprep.subr.mxu0 0.0
  %8080 = vmatpush1.msra.mxu0 0.0
  %8081 = vmatprep.subr.mxu0 0.0
  %8082 = vmatpush1.msra.mxu0 0.0
  %8083 = vmatprep.subr.mxu0 0.0
  %8084 = vmatpush1.msra.mxu0 0.0
  %8085 = vmatprep.subr.mxu0 0.0
  %8086 = vmatpush1.msra.mxu0 0.0
  %8087 = vmatprep.subr.mxu0 0.0
  %8088 = vmatpush1.msra.mxu0 0.0
  %8089 = vmatprep.subr.mxu0 0.0
  %8090 = vmatpush1.msra.mxu0 0.0
  %8091 = vmatprep.subr.mxu0 0.0
  %8092 = vmatpush1.msra.mxu0 0.0
  %8093 = vmatprep.subr.mxu0 0.0
  %8094 = vmatpush1.msra.mxu0 0.0
  %8095 = vmatprep.subr.mxu0 0.0
  %8096 = vmatpush1.msra.mxu0 0.0
  %8097 = vmatprep.mubr.f32.mxu0 %v7769
  %8098 = vmatmul.mubr.f32.gmra.mrb[0].mxu0 %v7620
  %v8099 = vpop.f32.mrb[0].mxu0
  %v8100 = vadd.f32 %v7910, %v8099
  %v8101 = vpop.f32.mrb[0].mxu0
  %8102 = vmatprep.mubr.f32.mxu0 %v7772
  %8103 = vmatmul.mubr.f32.gmra.mrb[0].mxu0 %v7624
  %v8104 = vpop.f32.mrb[0].mxu0
  %v8105 = vadd.f32 %v7915, %v8104
  %v8106 = vpop.f32.mrb[0].mxu0
  %8107 = vmatprep.mubr.f32.mxu0 %v7775
  %8108 = vmatmul.mubr.f32.gmra.mrb[0].mxu0 %v7628
  %v8109 = vpop.f32.mrb[0].mxu0
  %v8110 = vadd.f32 %v7920, %v8109
  %v8111 = vpop.f32.mrb[0].mxu0
  %8112 = vmatprep.mubr.f32.mxu0 %v7778
  %8113 = vmatmul.mubr.f32.gmra.mrb[0].mxu0 %v7632
  %v8114 = vpop.f32.mrb[0].mxu0
  %v8115 = vadd.f32 %v7925, %v8114
  %v8116 = vpop.f32.mrb[0].mxu0
  %8117 = vmatprep.mubr.f32.mxu0 %v7781
  %8118 = vmatmul.mubr.f32.gmra.mrb[0].mxu0 %v7636
  %v8119 = vpop.f32.mrb[0].mxu0
  %v8120 = vadd.f32 %v7930, %v8119
  %v8121 = vpop.f32.mrb[0].mxu0
  %8122 = vmatprep.mubr.f32.mxu0 %v7784
  %8123 = vmatmul.mubr.f32.gmra.mrb[0].mxu0 %v7640
  %v8124 = vpop.f32.mrb[0].mxu0
  %v8125 = vadd.f32 %v7935, %v8124
  %v8126 = vpop.f32.mrb[0].mxu0
  %8127 = vmatprep.mubr.f32.mxu0 %v7787
  %8128 = vmatmul.mubr.f32.gmra.mrb[0].mxu0 %v7644
  %v8129 = vpop.f32.mrb[0].mxu0
  %v8130 = vadd.f32 %v7940, %v8129
  %v8131 = vpop.f32.mrb[0].mxu0
  %8132 = vmatprep.mubr.f32.mxu0 %v7790
  %8133 = vmatmul.mubr.f32.gmra.mrb[0].mxu0 %v7648
  %v8134 = vpop.f32.mrb[0].mxu0
  %v8135 = vadd.f32 %v7945, %v8134
  %v8136 = vpop.f32.mrb[0].mxu0
  %8137 = vmatprep.mubr.f32.mxu0 %v7793
  %8138 = vmatmul.mubr.f32.gmra.mrb[0].mxu0 %v7652
  %v8139 = vpop.f32.mrb[0].mxu0
  %v8140 = vadd.f32 %v7950, %v8139
  %v8141 = vpop.f32.mrb[0].mxu0
  %8142 = vmatprep.mubr.f32.mxu0 %v7796
  %8143 = vmatmul.mubr.f32.gmra.mrb[0].mxu0 %v7656
  %v8144 = vpop.f32.mrb[0].mxu0
  %v8145 = vadd.f32 %v7955, %v8144
  %v8146 = vpop.f32.mrb[0].mxu0
  %8147 = vmatprep.mubr.f32.mxu0 %v7799
  %8148 = vmatmul.mubr.f32.gmra.mrb[0].mxu0 %v7660
  %v8149 = vpop.f32.mrb[0].mxu0
  %v8150 = vadd.f32 %v7960, %v8149
  %v8151 = vpop.f32.mrb[0].mxu0
  %8152 = vmatprep.mubr.f32.mxu0 %v7802
  %8153 = vmatmul.mubr.f32.gmra.mrb[0].mxu0 %v7664
  %v8154 = vpop.f32.mrb[0].mxu0
  %v8155 = vadd.f32 %v7965, %v8154
  %v8156 = vpop.f32.mrb[0].mxu0
  %8157 = vmatprep.mubr.f32.mxu0 %v7805
  %8158 = vmatmul.mubr.f32.gmra.mrb[0].mxu0 %v7668
  %v8159 = vpop.f32.mrb[0].mxu0
  %v8160 = vadd.f32 %v7970, %v8159
  %v8161 = vpop.f32.mrb[0].mxu0
  %8162 = vmatprep.mubr.f32.mxu0 %v7808
  %8163 = vmatmul.mubr.f32.gmra.mrb[0].mxu0 %v7672
  %v8164 = vpop.f32.mrb[0].mxu0
  %v8165 = vadd.f32 %v7975, %v8164
  %v8166 = vpop.f32.mrb[0].mxu0
  %8167 = vmatprep.mubr.f32.mxu0 %v7811
  %8168 = vmatmul.mubr.f32.gmra.mrb[0].mxu0 %v7676
  %v8169 = vpop.f32.mrb[0].mxu0
  %v8170 = vadd.f32 %v7980, %v8169
  %v8171 = vpop.f32.mrb[0].mxu0
  %8172 = vmatprep.mubr.f32.mxu0 %v7814
  %8173 = vmatmul.mubr.f32.gmra.mrb[0].mxu0 %v7680
  %v8174 = vpop.f32.mrb[0].mxu0
  %v8175 = vadd.f32 %v7985, %v8174
  %v8176 = vpop.f32.mrb[0].mxu0
  %8177 = vmatprep.mubr.f32.mxu0 %v7817
  %8178 = vmatmul.mubr.f32.gmra.mrb[0].mxu0 %v7684
  %v8179 = vpop.f32.mrb[0].mxu0
  %v8180 = vadd.f32 %v7990, %v8179
  %v8181 = vpop.f32.mrb[0].mxu0
  %8182 = vmatprep.mubr.f32.mxu0 %v7820
  %8183 = vmatmul.mubr.f32.gmra.mrb[0].mxu0 %v7688
  %v8184 = vpop.f32.mrb[0].mxu0
  %v8185 = vadd.f32 %v7995, %v8184
  %v8186 = vpop.f32.mrb[0].mxu0
  %8187 = vmatprep.mubr.f32.mxu0 %v7823
  %8188 = vmatmul.mubr.f32.gmra.mrb[0].mxu0 %v7692
  %v8189 = vpop.f32.mrb[0].mxu0
  %v8190 = vadd.f32 %v8000, %v8189
  %v8191 = vpop.f32.mrb[0].mxu0
  %8192 = vmatprep.mubr.f32.mxu0 %v7826
  %8193 = vmatmul.mubr.f32.gmra.mrb[0].mxu0 %v7696
  %v8194 = vpop.f32.mrb[0].mxu0
  %v8195 = vadd.f32 %v8005, %v8194
  %v8196 = vpop.f32.mrb[0].mxu0
  %8197 = vmatprep.mubr.f32.mxu0 %v7829
  %8198 = vmatmul.mubr.f32.gmra.mrb[0].mxu0 %v7700
  %v8199 = vpop.f32.mrb[0].mxu0
  %v8200 = vadd.f32 %v8010, %v8199
  %v8201 = vpop.f32.mrb[0].mxu0
  %8202 = vmatprep.mubr.f32.mxu0 %v7832
  %8203 = vmatmul.mubr.f32.gmra.mrb[0].mxu0 %v7704
  %v8204 = vpop.f32.mrb[0].mxu0
  %v8205 = vadd.f32 %v8015, %v8204
  %v8206 = vpop.f32.mrb[0].mxu0
  %8207 = vmatprep.mubr.f32.mxu0 %v7835
  %8208 = vmatmul.mubr.f32.gmra.mrb[0].mxu0 %v7708
  %v8209 = vpop.f32.mrb[0].mxu0
  %v8210 = vadd.f32 %v8020, %v8209
  %v8211 = vpop.f32.mrb[0].mxu0
  %8212 = vmatprep.mubr.f32.mxu0 %v7838
  %8213 = vmatmul.mubr.f32.gmra.mrb[0].mxu0 %v7712
  %v8214 = vpop.f32.mrb[0].mxu0
  %v8215 = vadd.f32 %v8025, %v8214
  %v8216 = vpop.f32.mrb[0].mxu0
  %8217 = vmatprep.mubr.f32.mxu0 %v7841
  %8218 = vmatmul.mubr.f32.gmra.mrb[0].mxu0 %v7716
  %v8219 = vpop.f32.mrb[0].mxu0
  %v8220 = vadd.f32 %v8030, %v8219
  %v8221 = vpop.f32.mrb[0].mxu0
  %8222 = vdwg.mxu0
  %v8223 = vld [vmem:[%s8] sm:$0x1]
  %v8224 = vld [vmem:[%s9] sm:$0x1]
  %vm8225 = vcmask 261120
  %v8226 = vsel %vm8225, %v8100, 0.0
  %v8227 = vsel %vm8225, %v8105, 0.0
  %v8228 = vadd.f32 %v8226, %v8227
  %v8229 = vsel %vm8225, %v8110, 0.0
  %v8230 = vadd.f32 %v8228, %v8229
  %v8231 = vsel %vm8225, %v8115, 0.0
  %v8232 = vadd.f32 %v8230, %v8231
  %v8233 = vsel %vm8225, %v8120, 0.0
  %v8234 = vadd.f32 %v8232, %v8233
  %v8235 = vsel %vm8225, %v8125, 0.0
  %v8236 = vadd.f32 %v8234, %v8235
  %v8237 = vsel %vm8225, %v8130, 0.0
  %v8238 = vadd.f32 %v8236, %v8237
  %v8239 = vsel %vm8225, %v8135, 0.0
  %v8240 = vadd.f32 %v8238, %v8239
  %v8241 = vsel %vm8225, %v8140, 0.0
  %v8242 = vadd.f32 %v8240, %v8241
  %v8243 = vsel %vm8225, %v8145, 0.0
  %v8244 = vadd.f32 %v8242, %v8243
  %v8245 = vsel %vm8225, %v8150, 0.0
  %v8246 = vadd.f32 %v8244, %v8245
  %v8247 = vsel %vm8225, %v8155, 0.0
  %v8248 = vadd.f32 %v8246, %v8247
  %v8249 = vsel %vm8225, %v8160, 0.0
  %v8250 = vadd.f32 %v8248, %v8249
  %v8251 = vsel %vm8225, %v8165, 0.0
  %v8252 = vadd.f32 %v8250, %v8251
  %v8253 = vsel %vm8225, %v8170, 0.0
  %v8254 = vadd.f32 %v8252, %v8253
  %v8255 = vsel %vm8225, %v8175, 0.0
  %v8256 = vadd.f32 %v8254, %v8255
  %v8257 = vsel %vm8225, %v8180, 0.0
  %v8258 = vadd.f32 %v8256, %v8257
  %v8259 = vsel %vm8225, %v8185, 0.0
  %v8260 = vadd.f32 %v8258, %v8259
  %v8261 = vsel %vm8225, %v8190, 0.0
  %v8262 = vadd.f32 %v8260, %v8261
  %v8263 = vsel %vm8225, %v8195, 0.0
  %v8264 = vadd.f32 %v8262, %v8263
  %v8265 = vsel %vm8225, %v8200, 0.0
  %v8266 = vadd.f32 %v8264, %v8265
  %v8267 = vsel %vm8225, %v8205, 0.0
  %v8268 = vadd.f32 %v8266, %v8267
  %v8269 = vsel %vm8225, %v8210, 0.0
  %v8270 = vadd.f32 %v8268, %v8269
  %v8271 = vsel %vm8225, %v8215, 0.0
  %v8272 = vadd.f32 %v8270, %v8271
  %v8273 = vsel %vm8225, %v8220, 0.0
  %v8274 = vadd.f32 %v8272, %v8273
  %v8275 = vrot.slane %v8274, 4
  %v8276 = vadd.f32 %v8274, %v8275
  %v8277 = vrot.slane %v8276, 2
  %v8278 = vadd.f32 %v8276, %v8277
  %v8279 = vrot.slane %v8278, 1
  %v8280 = vadd.f32 %v8278, %v8279
  %v8281 = vmul.f32 %v8280, 0.005
  %v8282 = vsub.f32 %v8100, %v8281
  %v8283 = vsub.f32 %v8105, %v8281
  %v8284 = vsub.f32 %v8110, %v8281
  %v8285 = vsub.f32 %v8115, %v8281
  %v8286 = vsub.f32 %v8120, %v8281
  %v8287 = vsub.f32 %v8125, %v8281
  %v8288 = vsub.f32 %v8130, %v8281
  %v8289 = vsub.f32 %v8135, %v8281
  %v8290 = vsub.f32 %v8140, %v8281
  %v8291 = vsub.f32 %v8145, %v8281
  %v8292 = vsub.f32 %v8150, %v8281
  %v8293 = vsub.f32 %v8155, %v8281
  %v8294 = vsub.f32 %v8160, %v8281
  %v8295 = vsub.f32 %v8165, %v8281
  %v8296 = vsub.f32 %v8170, %v8281
  %v8297 = vsub.f32 %v8175, %v8281
  %v8298 = vsub.f32 %v8180, %v8281
  %v8299 = vsub.f32 %v8185, %v8281
  %v8300 = vsub.f32 %v8190, %v8281
  %v8301 = vsub.f32 %v8195, %v8281
  %v8302 = vsub.f32 %v8200, %v8281
  %v8303 = vsub.f32 %v8205, %v8281
  %v8304 = vsub.f32 %v8210, %v8281
  %v8305 = vsub.f32 %v8215, %v8281
  %v8306 = vsub.f32 %v8220, %v8281
  %v8307 = vmul.f32 %v8282, %v8282
  %v8308 = vmul.f32 %v8283, %v8283
  %v8309 = vmul.f32 %v8284, %v8284
  %v8310 = vmul.f32 %v8285, %v8285
  %v8311 = vmul.f32 %v8286, %v8286
  %v8312 = vmul.f32 %v8287, %v8287
  %v8313 = vmul.f32 %v8288, %v8288
  %v8314 = vmul.f32 %v8289, %v8289
  %v8315 = vmul.f32 %v8290, %v8290
  %v8316 = vmul.f32 %v8291, %v8291
  %v8317 = vmul.f32 %v8292, %v8292
  %v8318 = vmul.f32 %v8293, %v8293
  %v8319 = vmul.f32 %v8294, %v8294
  %v8320 = vmul.f32 %v8295, %v8295
  %v8321 = vmul.f32 %v8296, %v8296
  %v8322 = vmul.f32 %v8297, %v8297
  %v8323 = vmul.f32 %v8298, %v8298
  %v8324 = vmul.f32 %v8299, %v8299
  %v8325 = vmul.f32 %v8300, %v8300
  %v8326 = vmul.f32 %v8301, %v8301
  %v8327 = vmul.f32 %v8302, %v8302
  %v8328 = vmul.f32 %v8303, %v8303
  %v8329 = vmul.f32 %v8304, %v8304
  %v8330 = vmul.f32 %v8305, %v8305
  %v8331 = vmul.f32 %v8306, %v8306
  %v8332 = vsel %vm8225, %v8307, 0.0
  %v8333 = vsel %vm8225, %v8308, 0.0
  %v8334 = vadd.f32 %v8332, %v8333
  %v8335 = vsel %vm8225, %v8309, 0.0
  %v8336 = vadd.f32 %v8334, %v8335
  %v8337 = vsel %vm8225, %v8310, 0.0
  %v8338 = vadd.f32 %v8336, %v8337
  %v8339 = vsel %vm8225, %v8311, 0.0
  %v8340 = vadd.f32 %v8338, %v8339
  %v8341 = vsel %vm8225, %v8312, 0.0
  %v8342 = vadd.f32 %v8340, %v8341
  %v8343 = vsel %vm8225, %v8313, 0.0
  %v8344 = vadd.f32 %v8342, %v8343
  %v8345 = vsel %vm8225, %v8314, 0.0
  %v8346 = vadd.f32 %v8344, %v8345
  %v8347 = vsel %vm8225, %v8315, 0.0
  %v8348 = vadd.f32 %v8346, %v8347
  %v8349 = vsel %vm8225, %v8316, 0.0
  %v8350 = vadd.f32 %v8348, %v8349
  %v8351 = vsel %vm8225, %v8317, 0.0
  %v8352 = vadd.f32 %v8350, %v8351
  %v8353 = vsel %vm8225, %v8318, 0.0
  %v8354 = vadd.f32 %v8352, %v8353
  %v8355 = vsel %vm8225, %v8319, 0.0
  %v8356 = vadd.f32 %v8354, %v8355
  %v8357 = vsel %vm8225, %v8320, 0.0
  %v8358 = vadd.f32 %v8356, %v8357
  %v8359 = vsel %vm8225, %v8321, 0.0
  %v8360 = vadd.f32 %v8358, %v8359
  %v8361 = vsel %vm8225, %v8322, 0.0
  %v8362 = vadd.f32 %v8360, %v8361
  %v8363 = vsel %vm8225, %v8323, 0.0
  %v8364 = vadd.f32 %v8362, %v8363
  %v8365 = vsel %vm8225, %v8324, 0.0
  %v8366 = vadd.f32 %v8364, %v8365
  %v8367 = vsel %vm8225, %v8325, 0.0
  %v8368 = vadd.f32 %v8366, %v8367
  %v8369 = vsel %vm8225, %v8326, 0.0
  %v8370 = vadd.f32 %v8368, %v8369
  %v8371 = vsel %vm8225, %v8327, 0.0
  %v8372 = vadd.f32 %v8370, %v8371
  %v8373 = vsel %vm8225, %v8328, 0.0
  %v8374 = vadd.f32 %v8372, %v8373
  %v8375 = vsel %vm8225, %v8329, 0.0
  %v8376 = vadd.f32 %v8374, %v8375
  %v8377 = vsel %vm8225, %v8330, 0.0
  %v8378 = vadd.f32 %v8376, %v8377
  %v8379 = vsel %vm8225, %v8331, 0.0
  %v8380 = vadd.f32 %v8378, %v8379
  %v8381 = vrot.slane %v8380, 4
  %v8382 = vadd.f32 %v8380, %v8381
  %v8383 = vrot.slane %v8382, 2
  %v8384 = vadd.f32 %v8382, %v8383
  %v8385 = vrot.slane %v8384, 1
  %v8386 = vadd.f32 %v8384, %v8385
  %v8387 = vmul.f32 %v8281, %v8281
  %v8388 = vmul.f32 %v8387, 0.0
  %v8389 = vsub.f32 %v8386, %v8388
  %v8390 = vmul.f32 %v8389, 0.005
  %v8391 = vadd.f32 %v8390, 1e-05
  %v8392 = vrsqrt.pop %v8391
  %v8393 = vmul.f32 %v8223, %v8392
  %v8394 = vmul.f32 %v8281, %v8393
  %v8395 = vsub.f32 %v8224, %v8394
  %v8397 = vlaneseq
  %v8398 = vshrl.u32 %v8397, 7
  %v8399 = vsub.s32 0, %v8398
  %v8400 = vrot.slane %v8393, %v8399
  %v8402 = vmul.f32 %v8100, %v8400
  %v8403 = vmul.f32 %v8105, %v8400
  %v8404 = vmul.f32 %v8110, %v8400
  %v8405 = vmul.f32 %v8115, %v8400
  %v8406 = vmul.f32 %v8120, %v8400
  %v8407 = vmul.f32 %v8125, %v8400
  %v8408 = vmul.f32 %v8130, %v8400
  %v8409 = vmul.f32 %v8135, %v8400
  %v8410 = vmul.f32 %v8140, %v8400
  %v8411 = vmul.f32 %v8145, %v8400
  %v8412 = vmul.f32 %v8150, %v8400
  %v8413 = vmul.f32 %v8155, %v8400
  %v8414 = vmul.f32 %v8160, %v8400
  %v8415 = vmul.f32 %v8165, %v8400
  %v8416 = vmul.f32 %v8170, %v8400
  %v8417 = vmul.f32 %v8175, %v8400
  %v8418 = vmul.f32 %v8180, %v8400
  %v8419 = vmul.f32 %v8185, %v8400
  %v8420 = vmul.f32 %v8190, %v8400
  %v8421 = vmul.f32 %v8195, %v8400
  %v8422 = vmul.f32 %v8200, %v8400
  %v8423 = vmul.f32 %v8205, %v8400
  %v8424 = vmul.f32 %v8210, %v8400
  %v8425 = vmul.f32 %v8215, %v8400
  %v8426 = vmul.f32 %v8220, %v8400
  %v8428 = vlaneseq
  %v8429 = vshrl.u32 %v8428, 7
  %v8430 = vsub.s32 0, %v8429
  %v8431 = vrot.slane %v8395, %v8430
  %v8433 = vadd.f32 %v8402, %v8431
  %v8434 = vadd.f32 %v8403, %v8431
  %v8435 = vadd.f32 %v8404, %v8431
  %v8436 = vadd.f32 %v8405, %v8431
  %v8437 = vadd.f32 %v8406, %v8431
  %v8438 = vadd.f32 %v8407, %v8431
  %v8439 = vadd.f32 %v8408, %v8431
  %v8440 = vadd.f32 %v8409, %v8431
  %v8441 = vadd.f32 %v8410, %v8431
  %v8442 = vadd.f32 %v8411, %v8431
  %v8443 = vadd.f32 %v8412, %v8431
  %v8444 = vadd.f32 %v8413, %v8431
  %v8445 = vadd.f32 %v8414, %v8431
  %v8446 = vadd.f32 %v8415, %v8431
  %v8447 = vadd.f32 %v8416, %v8431
  %v8448 = vadd.f32 %v8417, %v8431
  %v8449 = vadd.f32 %v8418, %v8431
  %v8450 = vadd.f32 %v8419, %v8431
  %v8451 = vadd.f32 %v8420, %v8431
  %v8452 = vadd.f32 %v8421, %v8431
  %v8453 = vadd.f32 %v8422, %v8431
  %v8454 = vadd.f32 %v8423, %v8431
  %v8455 = vadd.f32 %v8424, %v8431
  %v8456 = vadd.f32 %v8425, %v8431
  %v8457 = vadd.f32 %v8426, %v8431
  %vm8458 = vcmp.ge.f32.partialorder %v8433, 0.0
  %vm8459 = vcmp.ge.f32.partialorder %v8434, 0.0
  %vm8460 = vcmp.ge.f32.partialorder %v8435, 0.0
  %vm8461 = vcmp.ge.f32.partialorder %v8436, 0.0
  %vm8462 = vcmp.ge.f32.partialorder %v8437, 0.0
  %vm8463 = vcmp.ge.f32.partialorder %v8438, 0.0
  %vm8464 = vcmp.ge.f32.partialorder %v8439, 0.0
  %vm8465 = vcmp.ge.f32.partialorder %v8440, 0.0
  %vm8466 = vcmp.ge.f32.partialorder %v8441, 0.0
  %vm8467 = vcmp.ge.f32.partialorder %v8442, 0.0
  %vm8468 = vcmp.ge.f32.partialorder %v8443, 0.0
  %vm8469 = vcmp.ge.f32.partialorder %v8444, 0.0
  %vm8470 = vcmp.ge.f32.partialorder %v8445, 0.0
  %vm8471 = vcmp.ge.f32.partialorder %v8446, 0.0
  %vm8472 = vcmp.ge.f32.partialorder %v8447, 0.0
  %vm8473 = vcmp.ge.f32.partialorder %v8448, 0.0
  %vm8474 = vcmp.ge.f32.partialorder %v8449, 0.0
  %vm8475 = vcmp.ge.f32.partialorder %v8450, 0.0
  %vm8476 = vcmp.ge.f32.partialorder %v8451, 0.0
  %vm8477 = vcmp.ge.f32.partialorder %v8452, 0.0
  %vm8478 = vcmp.ge.f32.partialorder %v8453, 0.0
  %vm8479 = vcmp.ge.f32.partialorder %v8454, 0.0
  %vm8480 = vcmp.ge.f32.partialorder %v8455, 0.0
  %vm8481 = vcmp.ge.f32.partialorder %v8456, 0.0
  %vm8482 = vcmp.ge.f32.partialorder %v8457, 0.0
  %v8483 = vmul.f32 %v8433, 0.2
  %v8484 = vmul.f32 %v8434, 0.2
  %v8485 = vmul.f32 %v8435, 0.2
  %v8486 = vmul.f32 %v8436, 0.2
  %v8487 = vmul.f32 %v8437, 0.2
  %v8488 = vmul.f32 %v8438, 0.2
  %v8489 = vmul.f32 %v8439, 0.2
  %v8490 = vmul.f32 %v8440, 0.2
  %v8491 = vmul.f32 %v8441, 0.2
  %v8492 = vmul.f32 %v8442, 0.2
  %v8493 = vmul.f32 %v8443, 0.2
  %v8494 = vmul.f32 %v8444, 0.2
  %v8495 = vmul.f32 %v8445, 0.2
  %v8496 = vmul.f32 %v8446, 0.2
  %v8497 = vmul.f32 %v8447, 0.2
  %v8498 = vmul.f32 %v8448, 0.2
  %v8499 = vmul.f32 %v8449, 0.2
  %v8500 = vmul.f32 %v8450, 0.2
  %v8501 = vmul.f32 %v8451, 0.2
  %v8502 = vmul.f32 %v8452, 0.2
  %v8503 = vmul.f32 %v8453, 0.2
  %v8504 = vmul.f32 %v8454, 0.2
  %v8505 = vmul.f32 %v8455, 0.2
  %v8506 = vmul.f32 %v8456, 0.2
  %v8507 = vmul.f32 %v8457, 0.2
  %v8508 = vsel %vm8458, %v8433, %v8483
  %v8509 = vsel %vm8459, %v8434, %v8484
  %v8510 = vsel %vm8460, %v8435, %v8485
  %v8511 = vsel %vm8461, %v8436, %v8486
  %v8512 = vsel %vm8462, %v8437, %v8487
  %v8513 = vsel %vm8463, %v8438, %v8488
  %v8514 = vsel %vm8464, %v8439, %v8489
  %v8515 = vsel %vm8465, %v8440, %v8490
  %v8516 = vsel %vm8466, %v8441, %v8491
  %v8517 = vsel %vm8467, %v8442, %v8492
  %v8518 = vsel %vm8468, %v8443, %v8493
  %v8519 = vsel %vm8469, %v8444, %v8494
  %v8520 = vsel %vm8470, %v8445, %v8495
  %v8521 = vsel %vm8471, %v8446, %v8496
  %v8522 = vsel %vm8472, %v8447, %v8497
  %v8523 = vsel %vm8473, %v8448, %v8498
  %v8524 = vsel %vm8474, %v8449, %v8499
  %v8525 = vsel %vm8475, %v8450, %v8500
  %v8526 = vsel %vm8476, %v8451, %v8501
  %v8527 = vsel %vm8477, %v8452, %v8502
  %v8528 = vsel %vm8478, %v8453, %v8503
  %v8529 = vsel %vm8479, %v8454, %v8504
  %v8530 = vsel %vm8480, %v8455, %v8505
  %v8531 = vsel %vm8481, %v8456, %v8506
  %v8532 = vsel %vm8482, %v8457, %v8507
  %8533 = vst.msk [vmem:[#allocation4] sm:$0xff] %vm8225, %v8508
  %8534 = vst.msk [vmem:[#allocation4 + $0x8] sm:$0xff] %vm8225, %v8509
  %8535 = vst.msk [vmem:[#allocation4 + $0x10] sm:$0xff] %vm8225, %v8510
  %8536 = vst.msk [vmem:[#allocation4 + $0x18] sm:$0xff] %vm8225, %v8511
  %8537 = vst.msk [vmem:[#allocation4 + $0x20] sm:$0xff] %vm8225, %v8512
  %8538 = vst.msk [vmem:[#allocation4 + $0x28] sm:$0xff] %vm8225, %v8513
  %8539 = vst.msk [vmem:[#allocation4 + $0x30] sm:$0xff] %vm8225, %v8514
  %8540 = vst.msk [vmem:[#allocation4 + $0x38] sm:$0xff] %vm8225, %v8515
  %8541 = vst.msk [vmem:[#allocation4 + $0x40] sm:$0xff] %vm8225, %v8516
  %8542 = vst.msk [vmem:[#allocation4 + $0x48] sm:$0xff] %vm8225, %v8517
  %8543 = vst.msk [vmem:[#allocation4 + $0x50] sm:$0xff] %vm8225, %v8518
  %8544 = vst.msk [vmem:[#allocation4 + $0x58] sm:$0xff] %vm8225, %v8519
  %8545 = vst.msk [vmem:[#allocation4 + $0x60] sm:$0xff] %vm8225, %v8520
  %8546 = vst.msk [vmem:[#allocation4 + $0x68] sm:$0xff] %vm8225, %v8521
  %8547 = vst.msk [vmem:[#allocation4 + $0x70] sm:$0xff] %vm8225, %v8522
  %8548 = vst.msk [vmem:[#allocation4 + $0x78] sm:$0xff] %vm8225, %v8523
  %8549 = vst.msk [vmem:[#allocation4 + $0x80] sm:$0xff] %vm8225, %v8524
  %8550 = vst.msk [vmem:[#allocation4 + $0x88] sm:$0xff] %vm8225, %v8525
  %8551 = vst.msk [vmem:[#allocation4 + $0x90] sm:$0xff] %vm8225, %v8526
  %8552 = vst.msk [vmem:[#allocation4 + $0x98] sm:$0xff] %vm8225, %v8527
  %8553 = vst.msk [vmem:[#allocation4 + $0xa0] sm:$0xff] %vm8225, %v8528
  %8554 = vst.msk [vmem:[#allocation4 + $0xa8] sm:$0xff] %vm8225, %v8529
  %8555 = vst.msk [vmem:[#allocation4 + $0xb0] sm:$0xff] %vm8225, %v8530
  %8556 = vst.msk [vmem:[#allocation4 + $0xb8] sm:$0xff] %vm8225, %v8531
  %8557 = vst.msk [vmem:[#allocation4 + $0xc0] sm:$0xff] %vm8225, %v8532
  %v8558 = vld [vmem:[#allocation4] sm:$0xff]
  %8559 = vst.msk [vmem:[#allocation5] sm:$0xff] %vm8225, %v8558
  %v8560 = vld [vmem:[#allocation4 + $0x8] sm:$0xff]
  %8562 = vrot.lane.b32.xlu0 %v8560, 32
  %v8563 = vpop.permute.xlu0 %8562
  %vm8565 = vcmask 523520
  %8566 = vst.msk [vmem:[#allocation5] sm:$0xff] %vm8565, %v8563
  %v8567 = vld [vmem:[#allocation4 + $0x10] sm:$0xff]
  %8569 = vrot.lane.b32.xlu0 %v8567, 64
  %v8570 = vpop.permute.xlu0 %8569
  %vm8572 = vcmask 785920
  %8573 = vst.msk [vmem:[#allocation5] sm:$0xff] %vm8572, %v8570
  %v8574 = vld [vmem:[#allocation4 + $0x18] sm:$0xff]
  %8576 = vrot.lane.b32.xlu0 %v8574, 96
  %v8577 = vpop.permute.xlu0 %8576
  %vm8579 = vcmask 1048320
  %8580 = vst.msk [vmem:[#allocation5] sm:$0xff] %vm8579, %v8577
  %v8581 = vld [vmem:[#allocation4 + $0x20] sm:$0xff]
  %8582 = vst.msk [vmem:[#allocation5 + $0x8] sm:$0xff] %vm8225, %v8581
  %v8583 = vld [vmem:[#allocation4 + $0x28] sm:$0xff]
  %8585 = vrot.lane.b32.xlu0 %v8583, 32
  %v8586 = vpop.permute.xlu0 %8585
  %8588 = vst.msk [vmem:[#allocation5 + $0x8] sm:$0xff] %vm8565, %v8586
  %v8589 = vld [vmem:[#allocation4 + $0x30] sm:$0xff]
  %8591 = vrot.lane.b32.xlu0 %v8589, 64
  %v8592 = vpop.permute.xlu0 %8591
  %8594 = vst.msk [vmem:[#allocation5 + $0x8] sm:$0xff] %vm8572, %v8592
  %v8595 = vld [vmem:[#allocation4 + $0x38] sm:$0xff]
  %8597 = vrot.lane.b32.xlu0 %v8595, 96
  %v8598 = vpop.permute.xlu0 %8597
  %8600 = vst.msk [vmem:[#allocation5 + $0x8] sm:$0xff] %vm8579, %v8598
  %v8601 = vld [vmem:[#allocation4 + $0x40] sm:$0xff]
  %8602 = vst.msk [vmem:[#allocation5 + $0x10] sm:$0xff] %vm8225, %v8601
  %v8603 = vld [vmem:[#allocation4 + $0x48] sm:$0xff]
  %8605 = vrot.lane.b32.xlu0 %v8603, 32
  %v8606 = vpop.permute.xlu0 %8605
  %8608 = vst.msk [vmem:[#allocation5 + $0x10] sm:$0xff] %vm8565, %v8606
  %v8609 = vld [vmem:[#allocation4 + $0x50] sm:$0xff]
  %8611 = vrot.lane.b32.xlu0 %v8609, 64
  %v8612 = vpop.permute.xlu0 %8611
  %8614 = vst.msk [vmem:[#allocation5 + $0x10] sm:$0xff] %vm8572, %v8612
  %v8615 = vld [vmem:[#allocation4 + $0x58] sm:$0xff]
  %8617 = vrot.lane.b32.xlu0 %v8615, 96
  %v8618 = vpop.permute.xlu0 %8617
  %8620 = vst.msk [vmem:[#allocation5 + $0x10] sm:$0xff] %vm8579, %v8618
  %v8621 = vld [vmem:[#allocation4 + $0x60] sm:$0xff]
  %8622 = vst.msk [vmem:[#allocation5 + $0x18] sm:$0xff] %vm8225, %v8621
  %v8623 = vld [vmem:[#allocation4 + $0x68] sm:$0xff]
  %8625 = vrot.lane.b32.xlu0 %v8623, 32
  %v8626 = vpop.permute.xlu0 %8625
  %8628 = vst.msk [vmem:[#allocation5 + $0x18] sm:$0xff] %vm8565, %v8626
  %v8629 = vld [vmem:[#allocation4 + $0x70] sm:$0xff]
  %8631 = vrot.lane.b32.xlu0 %v8629, 64
  %v8632 = vpop.permute.xlu0 %8631
  %8634 = vst.msk [vmem:[#allocation5 + $0x18] sm:$0xff] %vm8572, %v8632
  %v8635 = vld [vmem:[#allocation4 + $0x78] sm:$0xff]
  %8637 = vrot.lane.b32.xlu0 %v8635, 96
  %v8638 = vpop.permute.xlu0 %8637
  %8640 = vst.msk [vmem:[#allocation5 + $0x18] sm:$0xff] %vm8579, %v8638
  %v8641 = vld [vmem:[#allocation4 + $0x80] sm:$0xff]
  %8642 = vst.msk [vmem:[#allocation5 + $0x20] sm:$0xff] %vm8225, %v8641
  %v8643 = vld [vmem:[#allocation4 + $0x88] sm:$0xff]
  %8645 = vrot.lane.b32.xlu0 %v8643, 32
  %v8646 = vpop.permute.xlu0 %8645
  %8648 = vst.msk [vmem:[#allocation5 + $0x20] sm:$0xff] %vm8565, %v8646
  %v8649 = vld [vmem:[#allocation4 + $0x90] sm:$0xff]
  %8651 = vrot.lane.b32.xlu0 %v8649, 64
  %v8652 = vpop.permute.xlu0 %8651
  %8654 = vst.msk [vmem:[#allocation5 + $0x20] sm:$0xff] %vm8572, %v8652
  %v8655 = vld [vmem:[#allocation4 + $0x98] sm:$0xff]
  %8657 = vrot.lane.b32.xlu0 %v8655, 96
  %v8658 = vpop.permute.xlu0 %8657
  %8660 = vst.msk [vmem:[#allocation5 + $0x20] sm:$0xff] %vm8579, %v8658
  %v8661 = vld [vmem:[#allocation4 + $0xa0] sm:$0xff]
  %8662 = vst.msk [vmem:[#allocation5 + $0x28] sm:$0xff] %vm8225, %v8661
  %v8663 = vld [vmem:[#allocation4 + $0xa8] sm:$0xff]
  %8665 = vrot.lane.b32.xlu0 %v8663, 32
  %v8666 = vpop.permute.xlu0 %8665
  %8668 = vst.msk [vmem:[#allocation5 + $0x28] sm:$0xff] %vm8565, %v8666
  %v8669 = vld [vmem:[#allocation4 + $0xb0] sm:$0xff]
  %8671 = vrot.lane.b32.xlu0 %v8669, 64
  %v8672 = vpop.permute.xlu0 %8671
  %8674 = vst.msk [vmem:[#allocation5 + $0x28] sm:$0xff] %vm8572, %v8672
  %v8675 = vld [vmem:[#allocation4 + $0xb8] sm:$0xff]
  %8677 = vrot.lane.b32.xlu0 %v8675, 96
  %v8678 = vpop.permute.xlu0 %8677
  %8680 = vst.msk [vmem:[#allocation5 + $0x28] sm:$0xff] %vm8579, %v8678
  %v8681 = vld [vmem:[#allocation4 + $0xc0] sm:$0xff]
  %8682 = vst.msk [vmem:[#allocation5 + $0x30] sm:$0xff] %vm8225, %v8681
  %v8683 = vld [vmem:[#allocation5] sm:$0xff]
  %v8684 = vld [vmem:[#allocation5 + $0x8] sm:$0xff]
  %v8685 = vld [vmem:[#allocation5 + $0x10] sm:$0xff]
  %v8686 = vld [vmem:[#allocation5 + $0x18] sm:$0xff]
  %v8687 = vld [vmem:[#allocation5 + $0x20] sm:$0xff]
  %v8688 = vld [vmem:[#allocation5 + $0x28] sm:$0xff]
  %v8689 = vld [vmem:[#allocation5 + $0x30] sm:$0xff]
  %v8690 = vld [vmem:[%s3] sm:$0xff]
  %v8691 = vld [vmem:[%s3 + $0x8] sm:$0xff]
  %v8692 = vld [vmem:[%s3 + $0x10] sm:$0xff]
  %v8693 = vld [vmem:[%s3 + $0x18] sm:$0xff]
  %v8694 = vld [vmem:[%s3 + $0x20] sm:$0xff]
  %v8695 = vld [vmem:[%s3 + $0x28] sm:$0xff]
  %v8696 = vld [vmem:[%s3 + $0x30] sm:$0xff]
  %v8697 = vld [vmem:[%s3 + $0x38] sm:$0xff]
  %v8698 = vld [vmem:[%s3 + $0x40] sm:$0xff]
  %v8699 = vld [vmem:[%s3 + $0x48] sm:$0xff]
  %v8700 = vld [vmem:[%s3 + $0x50] sm:$0xff]
  %v8701 = vld [vmem:[%s3 + $0x58] sm:$0xff]
  %v8702 = vld [vmem:[%s3 + $0x60] sm:$0xff]
  %v8703 = vld [vmem:[%s3 + $0x68] sm:$0xff]
  %v8704 = vld [vmem:[%s3 + $0x70] sm:$0xff]
  %v8705 = vld [vmem:[%s3 + $0x78] sm:$0xff]
  %v8706 = vld [vmem:[%s3 + $0x80] sm:$0xff]
  %v8707 = vld [vmem:[%s3 + $0x88] sm:$0xff]
  %v8708 = vld [vmem:[%s3 + $0x90] sm:$0xff]
  %v8709 = vld [vmem:[%s3 + $0x98] sm:$0xff]
  %v8710 = vld [vmem:[%s3 + $0xa0] sm:$0xff]
  %v8711 = vld [vmem:[%s3 + $0xa8] sm:$0xff]
  %v8712 = vld [vmem:[%s3 + $0xb0] sm:$0xff]
  %v8713 = vld [vmem:[%s3 + $0xb8] sm:$0xff]
  %v8714 = vld [vmem:[%s3 + $0xc0] sm:$0xff]
  %v8715 = vld [vmem:[%s3 + $0xc8] sm:$0xff]
  %v8716 = vld [vmem:[%s3 + $0xd0] sm:$0xff]
  %v8717 = vld [vmem:[%s3 + $0xd8] sm:$0xff]
  %v8718 = vld [vmem:[%s3 + $0xe0] sm:$0xff]
  %v8719 = vld [vmem:[%s3 + $0xe8] sm:$0xff]
  %v8720 = vld [vmem:[%s3 + $0xf0] sm:$0xff]
  %v8721 = vld [vmem:[%s3 + $0xf8] sm:$0xff]
  %v8722 = vld [vmem:[%s3 + $0x100] sm:$0xff]
  %v8723 = vld [vmem:[%s3 + $0x108] sm:$0xff]
  %v8724 = vld [vmem:[%s3 + $0x110] sm:$0xff]
  %v8725 = vld [vmem:[%s3 + $0x118] sm:$0xff]
  %v8726 = vld [vmem:[%s3 + $0x120] sm:$0xff]
  %v8727 = vld [vmem:[%s3 + $0x128] sm:$0xff]
  %v8728 = vld [vmem:[%s3 + $0x130] sm:$0xff]
  %v8729 = vld [vmem:[%s3 + $0x138] sm:$0xff]
  %v8730 = vld [vmem:[%s3 + $0x140] sm:$0xff]
  %v8731 = vld [vmem:[%s3 + $0x148] sm:$0xff]
  %v8732 = vld [vmem:[%s3 + $0x150] sm:$0xff]
  %v8733 = vld [vmem:[%s3 + $0x158] sm:$0xff]
  %v8734 = vld [vmem:[%s3 + $0x160] sm:$0xff]
  %v8735 = vld [vmem:[%s3 + $0x168] sm:$0xff]
  %v8736 = vld [vmem:[%s3 + $0x170] sm:$0xff]
  %v8737 = vld [vmem:[%s3 + $0x178] sm:$0xff]
  %v8738 = vld [vmem:[%s3 + $0x180] sm:$0xff]
  %v8739 = vld [vmem:[%s3 + $0x188] sm:$0xff]
  %v8740 = vld [vmem:[%s3 + $0x190] sm:$0xff]
  %v8741 = vld [vmem:[%s3 + $0x198] sm:$0xff]
  %v8742 = vld [vmem:[%s3 + $0x1a0] sm:$0xff]
  %v8743 = vld [vmem:[%s3 + $0x1a8] sm:$0xff]
  %v8744 = vld [vmem:[%s3 + $0x1b0] sm:$0xff]
  %v8745 = vld [vmem:[%s3 + $0x1b8] sm:$0xff]
  %v8746 = vld [vmem:[%s3 + $0x1c0] sm:$0xff]
  %v8747 = vld [vmem:[%s3 + $0x1c8] sm:$0xff]
  %v8748 = vld [vmem:[%s3 + $0x1d0] sm:$0xff]
  %v8749 = vld [vmem:[%s3 + $0x1d8] sm:$0xff]
  %v8750 = vld [vmem:[%s3 + $0x1e0] sm:$0xff]
  %v8751 = vld [vmem:[%s3 + $0x1e8] sm:$0xff]
  %v8752 = vld [vmem:[%s3 + $0x1f0] sm:$0xff]
  %v8753 = vld [vmem:[%s3 + $0x1f8] sm:$0xff]
  %v8754 = vld [vmem:[%s3 + $0x200] sm:$0xff]
  %v8755 = vld [vmem:[%s3 + $0x208] sm:$0xff]
  %v8756 = vld [vmem:[%s3 + $0x210] sm:$0xff]
  %v8757 = vld [vmem:[%s3 + $0x218] sm:$0xff]
  %v8758 = vld [vmem:[%s3 + $0x220] sm:$0xff]
  %v8759 = vld [vmem:[%s3 + $0x228] sm:$0xff]
  %v8760 = vld [vmem:[%s3 + $0x230] sm:$0xff]
  %v8761 = vld [vmem:[%s3 + $0x238] sm:$0xff]
  %v8762 = vld [vmem:[%s3 + $0x240] sm:$0xff]
  %v8763 = vld [vmem:[%s3 + $0x248] sm:$0xff]
  %v8764 = vld [vmem:[%s3 + $0x250] sm:$0xff]
  %v8765 = vld [vmem:[%s3 + $0x258] sm:$0xff]
  %v8766 = vld [vmem:[%s3 + $0x260] sm:$0xff]
  %v8767 = vld [vmem:[%s3 + $0x268] sm:$0xff]
  %v8768 = vld [vmem:[%s3 + $0x270] sm:$0xff]
  %v8769 = vld [vmem:[%s3 + $0x278] sm:$0xff]
  %v8770 = vld [vmem:[%s3 + $0x280] sm:$0xff]
  %v8771 = vld [vmem:[%s3 + $0x288] sm:$0xff]
  %v8772 = vld [vmem:[%s3 + $0x290] sm:$0xff]
  %v8773 = vld [vmem:[%s3 + $0x298] sm:$0xff]
  %v8774 = vld [vmem:[%s3 + $0x2a0] sm:$0xff]
  %v8775 = vld [vmem:[%s3 + $0x2a8] sm:$0xff]
  %v8776 = vld [vmem:[%s3 + $0x2b0] sm:$0xff]
  %v8777 = vld [vmem:[%s3 + $0x2b8] sm:$0xff]
  %v8778 = vld [vmem:[%s3 + $0x2c0] sm:$0xff]
  %v8779 = vld [vmem:[%s3 + $0x2c8] sm:$0xff]
  %v8780 = vld [vmem:[%s3 + $0x2d0] sm:$0xff]
  %v8781 = vld [vmem:[%s3 + $0x2d8] sm:$0xff]
  %v8782 = vld [vmem:[%s3 + $0x2e0] sm:$0xff]
  %v8783 = vld [vmem:[%s3 + $0x2e8] sm:$0xff]
  %v8784 = vld [vmem:[%s3 + $0x2f0] sm:$0xff]
  %v8785 = vld [vmem:[%s3 + $0x2f8] sm:$0xff]
  %v8786 = vld [vmem:[%s3 + $0x300] sm:$0xff]
  %v8787 = vld [vmem:[%s3 + $0x308] sm:$0xff]
  %v8788 = vld [vmem:[%s3 + $0x310] sm:$0xff]
  %v8789 = vld [vmem:[%s3 + $0x318] sm:$0xff]
  %v8791 = vsel %vm8225, %v8689, 0
  %8793 = vmatprep.subr.mxu0 0.0
  %8794 = vmatpush1.msra.mxu0 %v8690
  %8795 = vmatprep.subr.mxu0 0.0
  %8796 = vmatpush1.msra.mxu0 %v8691
  %8797 = vmatprep.subr.mxu0 0.0
  %8798 = vmatpush1.msra.mxu0 %v8692
  %8799 = vmatprep.subr.mxu0 0.0
  %8800 = vmatpush1.msra.mxu0 %v8693
  %8801 = vmatprep.subr.mxu0 0.0
  %8802 = vmatpush1.msra.mxu0 %v8694
  %8803 = vmatprep.subr.mxu0 0.0
  %8804 = vmatpush1.msra.mxu0 %v8695
  %8805 = vmatprep.subr.mxu0 0.0
  %8806 = vmatpush1.msra.mxu0 %v8696
  %8807 = vmatprep.subr.mxu0 0.0
  %8808 = vmatpush1.msra.mxu0 %v8697
  %8809 = vmatprep.subr.mxu0 0.0
  %8810 = vmatpush1.msra.mxu0 %v8698
  %8811 = vmatprep.subr.mxu0 0.0
  %8812 = vmatpush1.msra.mxu0 %v8699
  %8813 = vmatprep.subr.mxu0 0.0
  %8814 = vmatpush1.msra.mxu0 %v8700
  %8815 = vmatprep.subr.mxu0 0.0
  %8816 = vmatpush1.msra.mxu0 %v8701
  %8817 = vmatprep.subr.mxu0 0.0
  %8818 = vmatpush1.msra.mxu0 %v8702
  %8819 = vmatprep.subr.mxu0 0.0
  %8820 = vmatpush1.msra.mxu0 %v8703
  %8821 = vmatprep.subr.mxu0 0.0
  %8822 = vmatpush1.msra.mxu0 %v8704
  %8823 = vmatprep.subr.mxu0 0.0
  %8824 = vmatpush1.msra.mxu0 %v8705
  %8825 = vmatprep.subr.mxu0 0.0
  %8826 = vmatpush1.msra.mxu0 %v8706
  %8827 = vmatprep.subr.mxu0 0.0
  %8828 = vmatpush1.msra.mxu0 %v8707
  %8829 = vmatprep.subr.mxu0 0.0
  %8830 = vmatpush1.msra.mxu0 %v8708
  %8831 = vmatprep.subr.mxu0 0.0
  %8832 = vmatpush1.msra.mxu0 %v8709
  %8833 = vmatprep.subr.mxu0 0.0
  %8834 = vmatpush1.msra.mxu0 %v8710
  %8835 = vmatprep.subr.mxu0 0.0
  %8836 = vmatpush1.msra.mxu0 %v8711
  %8837 = vmatprep.subr.mxu0 0.0
  %8838 = vmatpush1.msra.mxu0 %v8712
  %8839 = vmatprep.subr.mxu0 0.0
  %8840 = vmatpush1.msra.mxu0 %v8713
  %8841 = vmatprep.subr.mxu0 0.0
  %8842 = vmatpush1.msra.mxu0 %v8714
  %8843 = vmatprep.subr.mxu0 0.0
  %8844 = vmatpush1.msra.mxu0 %v8715
  %8845 = vmatprep.subr.mxu0 0.0
  %8846 = vmatpush1.msra.mxu0 %v8716
  %8847 = vmatprep.subr.mxu0 0.0
  %8848 = vmatpush1.msra.mxu0 %v8717
  %8849 = vmatprep.subr.mxu0 0.0
  %8850 = vmatpush1.msra.mxu0 %v8718
  %8851 = vmatprep.subr.mxu0 0.0
  %8852 = vmatpush1.msra.mxu0 %v8719
  %8853 = vmatprep.subr.mxu0 0.0
  %8854 = vmatpush1.msra.mxu0 %v8720
  %8855 = vmatprep.subr.mxu0 0.0
  %8856 = vmatpush1.msra.mxu0 %v8721
  %8857 = vmatprep.mubr.f32.mxu0 %v8684
  %8858 = vmatmul.mubr.f32.gmra.mrb[0].mxu0 %v8683
  %v8859 = vpop.f32.mrb[0].mxu0
  %v8860 = vadd.f32 0.0, %v8859
  %v8861 = vpop.f32.mrb[0].mxu0
  %8862 = vdwg.mxu0
  %8863 = vmatprep.subr.mxu0 0.0
  %8864 = vmatpush1.msra.mxu0 %v8722
  %8865 = vmatprep.subr.mxu0 0.0
  %8866 = vmatpush1.msra.mxu0 %v8723
  %8867 = vmatprep.subr.mxu0 0.0
  %8868 = vmatpush1.msra.mxu0 %v8724
  %8869 = vmatprep.subr.mxu0 0.0
  %8870 = vmatpush1.msra.mxu0 %v8725
  %8871 = vmatprep.subr.mxu0 0.0
  %8872 = vmatpush1.msra.mxu0 %v8726
  %8873 = vmatprep.subr.mxu0 0.0
  %8874 = vmatpush1.msra.mxu0 %v8727
  %8875 = vmatprep.subr.mxu0 0.0
  %8876 = vmatpush1.msra.mxu0 %v8728
  %8877 = vmatprep.subr.mxu0 0.0
  %8878 = vmatpush1.msra.mxu0 %v8729
  %8879 = vmatprep.subr.mxu0 0.0
  %8880 = vmatpush1.msra.mxu0 %v8730
  %8881 = vmatprep.subr.mxu0 0.0
  %8882 = vmatpush1.msra.mxu0 %v8731
  %8883 = vmatprep.subr.mxu0 0.0
  %8884 = vmatpush1.msra.mxu0 %v8732
  %8885 = vmatprep.subr.mxu0 0.0
  %8886 = vmatpush1.msra.mxu0 %v8733
  %8887 = vmatprep.subr.mxu0 0.0
  %8888 = vmatpush1.msra.mxu0 %v8734
  %8889 = vmatprep.subr.mxu0 0.0
  %8890 = vmatpush1.msra.mxu0 %v8735
  %8891 = vmatprep.subr.mxu0 0.0
  %8892 = vmatpush1.msra.mxu0 %v8736
  %8893 = vmatprep.subr.mxu0 0.0
  %8894 = vmatpush1.msra.mxu0 %v8737
  %8895 = vmatprep.subr.mxu0 0.0
  %8896 = vmatpush1.msra.mxu0 %v8738
  %8897 = vmatprep.subr.mxu0 0.0
  %8898 = vmatpush1.msra.mxu0 %v8739
  %8899 = vmatprep.subr.mxu0 0.0
  %8900 = vmatpush1.msra.mxu0 %v8740
  %8901 = vmatprep.subr.mxu0 0.0
  %8902 = vmatpush1.msra.mxu0 %v8741
  %8903 = vmatprep.subr.mxu0 0.0
  %8904 = vmatpush1.msra.mxu0 %v8742
  %8905 = vmatprep.subr.mxu0 0.0
  %8906 = vmatpush1.msra.mxu0 %v8743
  %8907 = vmatprep.subr.mxu0 0.0
  %8908 = vmatpush1.msra.mxu0 %v8744
  %8909 = vmatprep.subr.mxu0 0.0
  %8910 = vmatpush1.msra.mxu0 %v8745
  %8911 = vmatprep.subr.mxu0 0.0
  %8912 = vmatpush1.msra.mxu0 %v8746
  %8913 = vmatprep.subr.mxu0 0.0
  %8914 = vmatpush1.msra.mxu0 %v8747
  %8915 = vmatprep.subr.mxu0 0.0
  %8916 = vmatpush1.msra.mxu0 %v8748
  %8917 = vmatprep.subr.mxu0 0.0
  %8918 = vmatpush1.msra.mxu0 %v8749
  %8919 = vmatprep.subr.mxu0 0.0
  %8920 = vmatpush1.msra.mxu0 %v8750
  %8921 = vmatprep.subr.mxu0 0.0
  %8922 = vmatpush1.msra.mxu0 %v8751
  %8923 = vmatprep.subr.mxu0 0.0
  %8924 = vmatpush1.msra.mxu0 %v8752
  %8925 = vmatprep.subr.mxu0 0.0
  %8926 = vmatpush1.msra.mxu0 %v8753
  %8927 = vmatprep.mubr.f32.mxu0 %v8686
  %8928 = vmatmul.mubr.f32.gmra.mrb[0].mxu0 %v8685
  %v8929 = vpop.f32.mrb[0].mxu0
  %v8930 = vadd.f32 %v8860, %v8929
  %v8931 = vpop.f32.mrb[0].mxu0
  %8932 = vdwg.mxu0
  %8933 = vmatprep.subr.mxu0 0.0
  %8934 = vmatpush1.msra.mxu0 %v8754
  %8935 = vmatprep.subr.mxu0 0.0
  %8936 = vmatpush1.msra.mxu0 %v8755
  %8937 = vmatprep.subr.mxu0 0.0
  %8938 = vmatpush1.msra.mxu0 %v8756
  %8939 = vmatprep.subr.mxu0 0.0
  %8940 = vmatpush1.msra.mxu0 %v8757
  %8941 = vmatprep.subr.mxu0 0.0
  %8942 = vmatpush1.msra.mxu0 %v8758
  %8943 = vmatprep.subr.mxu0 0.0
  %8944 = vmatpush1.msra.mxu0 %v8759
  %8945 = vmatprep.subr.mxu0 0.0
  %8946 = vmatpush1.msra.mxu0 %v8760
  %8947 = vmatprep.subr.mxu0 0.0
  %8948 = vmatpush1.msra.mxu0 %v8761
  %8949 = vmatprep.subr.mxu0 0.0
  %8950 = vmatpush1.msra.mxu0 %v8762
  %8951 = vmatprep.subr.mxu0 0.0
  %8952 = vmatpush1.msra.mxu0 %v8763
  %8953 = vmatprep.subr.mxu0 0.0
  %8954 = vmatpush1.msra.mxu0 %v8764
  %8955 = vmatprep.subr.mxu0 0.0
  %8956 = vmatpush1.msra.mxu0 %v8765
  %8957 = vmatprep.subr.mxu0 0.0
  %8958 = vmatpush1.msra.mxu0 %v8766
  %8959 = vmatprep.subr.mxu0 0.0
  %8960 = vmatpush1.msra.mxu0 %v8767
  %8961 = vmatprep.subr.mxu0 0.0
  %8962 = vmatpush1.msra.mxu0 %v8768
  %8963 = vmatprep.subr.mxu0 0.0
  %8964 = vmatpush1.msra.mxu0 %v8769
  %8965 = vmatprep.subr.mxu0 0.0
  %8966 = vmatpush1.msra.mxu0 %v8770
  %8967 = vmatprep.subr.mxu0 0.0
  %8968 = vmatpush1.msra.mxu0 %v8771
  %8969 = vmatprep.subr.mxu0 0.0
  %8970 = vmatpush1.msra.mxu0 %v8772
  %8971 = vmatprep.subr.mxu0 0.0
  %8972 = vmatpush1.msra.mxu0 %v8773
  %8973 = vmatprep.subr.mxu0 0.0
  %8974 = vmatpush1.msra.mxu0 %v8774
  %8975 = vmatprep.subr.mxu0 0.0
  %8976 = vmatpush1.msra.mxu0 %v8775
  %8977 = vmatprep.subr.mxu0 0.0
  %8978 = vmatpush1.msra.mxu0 %v8776
  %8979 = vmatprep.subr.mxu0 0.0
  %8980 = vmatpush1.msra.mxu0 %v8777
  %8981 = vmatprep.subr.mxu0 0.0
  %8982 = vmatpush1.msra.mxu0 %v8778
  %8983 = vmatprep.subr.mxu0 0.0
  %8984 = vmatpush1.msra.mxu0 %v8779
  %8985 = vmatprep.subr.mxu0 0.0
  %8986 = vmatpush1.msra.mxu0 %v8780
  %8987 = vmatprep.subr.mxu0 0.0
  %8988 = vmatpush1.msra.mxu0 %v8781
  %8989 = vmatprep.subr.mxu0 0.0
  %8990 = vmatpush1.msra.mxu0 %v8782
  %8991 = vmatprep.subr.mxu0 0.0
  %8992 = vmatpush1.msra.mxu0 %v8783
  %8993 = vmatprep.subr.mxu0 0.0
  %8994 = vmatpush1.msra.mxu0 %v8784
  %8995 = vmatprep.subr.mxu0 0.0
  %8996 = vmatpush1.msra.mxu0 %v8785
  %8997 = vmatprep.mubr.f32.mxu0 %v8688
  %8998 = vmatmul.mubr.f32.gmra.mrb[0].mxu0 %v8687
  %v8999 = vpop.f32.mrb[0].mxu0
  %v9000 = vadd.f32 %v8930, %v8999
  %v9001 = vpop.f32.mrb[0].mxu0
  %9002 = vdwg.mxu0
  %9003 = vmatprep.subr.mxu0 0.0
  %9004 = vmatpush1.msra.mxu0 %v8786
  %9005 = vmatprep.subr.mxu0 0.0
  %9006 = vmatpush1.msra.mxu0 %v8787
  %9007 = vmatprep.subr.mxu0 0.0
  %9008 = vmatpush1.msra.mxu0 %v8788
  %9009 = vmatprep.subr.mxu0 0.0
  %9010 = vmatpush1.msra.mxu0 %v8789
  %9011 = vmatprep.subr.mxu0 0.0
  %9012 = vmatpush1.msra.mxu0 0.0
  %9013 = vmatprep.subr.mxu0 0.0
  %9014 = vmatpush1.msra.mxu0 0.0
  %9015 = vmatprep.subr.mxu0 0.0
  %9016 = vmatpush1.msra.mxu0 0.0
  %9017 = vmatprep.subr.mxu0 0.0
  %9018 = vmatpush1.msra.mxu0 0.0
  %9019 = vmatprep.subr.mxu0 0.0
  %9020 = vmatpush1.msra.mxu0 0.0
  %9021 = vmatprep.subr.mxu0 0.0
  %9022 = vmatpush1.msra.mxu0 0.0
  %9023 = vmatprep.subr.mxu0 0.0
  %9024 = vmatpush1.msra.mxu0 0.0
  %9025 = vmatprep.subr.mxu0 0.0
  %9026 = vmatpush1.msra.mxu0 0.0
  %9027 = vmatprep.subr.mxu0 0.0
  %9028 = vmatpush1.msra.mxu0 0.0
  %9029 = vmatprep.subr.mxu0 0.0
  %9030 = vmatpush1.msra.mxu0 0.0
  %9031 = vmatprep.subr.mxu0 0.0
  %9032 = vmatpush1.msra.mxu0 0.0
  %9033 = vmatprep.subr.mxu0 0.0
  %9034 = vmatpush1.msra.mxu0 0.0
  %9035 = vmatprep.subr.mxu0 0.0
  %9036 = vmatpush1.msra.mxu0 0.0
  %9037 = vmatprep.subr.mxu0 0.0
  %9038 = vmatpush1.msra.mxu0 0.0
  %9039 = vmatprep.subr.mxu0 0.0
  %9040 = vmatpush1.msra.mxu0 0.0
  %9041 = vmatprep.subr.mxu0 0.0
  %9042 = vmatpush1.msra.mxu0 0.0
  %9043 = vmatprep.subr.mxu0 0.0
  %9044 = vmatpush1.msra.mxu0 0.0
  %9045 = vmatprep.subr.mxu0 0.0
  %9046 = vmatpush1.msra.mxu0 0.0
  %9047 = vmatprep.subr.mxu0 0.0
  %9048 = vmatpush1.msra.mxu0 0.0
  %9049 = vmatprep.subr.mxu0 0.0
  %9050 = vmatpush1.msra.mxu0 0.0
  %9051 = vmatprep.subr.mxu0 0.0
  %9052 = vmatpush1.msra.mxu0 0.0
  %9053 = vmatprep.subr.mxu0 0.0
  %9054 = vmatpush1.msra.mxu0 0.0
  %9055 = vmatprep.subr.mxu0 0.0
  %9056 = vmatpush1.msra.mxu0 0.0
  %9057 = vmatprep.subr.mxu0 0.0
  %9058 = vmatpush1.msra.mxu0 0.0
  %9059 = vmatprep.subr.mxu0 0.0
  %9060 = vmatpush1.msra.mxu0 0.0
  %9061 = vmatprep.subr.mxu0 0.0
  %9062 = vmatpush1.msra.mxu0 0.0
  %9063 = vmatprep.subr.mxu0 0.0
  %9064 = vmatpush1.msra.mxu0 0.0
  %9065 = vmatprep.subr.mxu0 0.0
  %9066 = vmatpush1.msra.mxu0 0.0
  %9067 = vmatprep.mubr.f32.mxu0 0.0
  %9068 = vmatmul.mubr.f32.gmra.mrb[0].mxu0 %v8791
  %v9069 = vpop.f32.mrb[0].mxu0
  %v9070 = vadd.f32 %v9000, %v9069
  %v9071 = vpop.f32.mrb[0].mxu0
  %9072 = vdwg.mxu0
  %v9073 = vld [vmem:[%s10] sm:$0x1]
  %v9074 = vld [vmem:[%s11] sm:$0x1]
  %vm9075 = vcmask 523264
  %v9076 = vsel %vm9075, %v9070, 0.0
  %v9077 = vrot.slane %v9076, 4
  %v9078 = vadd.f32 %v9076, %v9077
  %v9079 = vrot.slane %v9078, 2
  %v9080 = vadd.f32 %v9078, %v9079
  %v9081 = vrot.slane %v9080, 1
  %v9082 = vadd.f32 %v9080, %v9081
  %v9083 = vmul.f32 %v9082, 0.125
  %v9084 = vsub.f32 %v9070, %v9083
  %v9085 = vmul.f32 %v9084, %v9084
  %v9086 = vsel %vm9075, %v9085, 0.0
  %v9087 = vrot.slane %v9086, 4
  %v9088 = vadd.f32 %v9086, %v9087
  %v9089 = vrot.slane %v9088, 2
  %v9090 = vadd.f32 %v9088, %v9089
  %v9091 = vrot.slane %v9090, 1
  %v9092 = vadd.f32 %v9090, %v9091
  %v9093 = vmul.f32 %v9083, %v9083
  %v9094 = vmul.f32 %v9093, 0.0
  %v9095 = vsub.f32 %v9092, %v9094
  %v9096 = vmul.f32 %v9095, 0.125
  %v9097 = vadd.f32 %v9096, 1e-05
  %v9098 = vrsqrt.pop %v9097
  %v9099 = vmul.f32 %v9073, %v9098
  %v9100 = vmul.f32 %v9083, %v9099
  %v9101 = vsub.f32 %v9074, %v9100
  %v9103 = vlaneseq
  %v9104 = vshrl.u32 %v9103, 7
  %v9105 = vsub.s32 0, %v9104
  %v9106 = vrot.slane %v9099, %v9105
  %v9108 = vmul.f32 %v9070, %v9106
  %v9110 = vlaneseq
  %v9111 = vshrl.u32 %v9110, 7
  %v9112 = vsub.s32 0, %v9111
  %v9113 = vrot.slane %v9101, %v9112
  %v9115 = vadd.f32 %v9108, %v9113
  %vm9116 = vcmp.ge.f32.partialorder %v9115, 0.0
  %v9117 = vmul.f32 %v9115, 0.2
  %v9118 = vsel %vm9116, %v9115, %v9117
  %v9119 = vld [vmem:[%s4] sm:$0x1]
  %v9121 = vlaneseq
  %v9122 = vshrl.u32 %v9121, 7
  %v9123 = vsub.s32 0, %v9122
  %v9124 = vrot.slane %v9119, %v9123
  %v9126 = vmul.f32 %v9118, %v9124
  %v9127 = vsel %vm9075, %v9126, 0.0
  %9128 = vadd.xlane.f32.xlu0 %v9127
  %v9129 = vpop.xlane.xlu0 %9128
  %v9130 = vld [vmem:[#allocation6] sm:$0x1]
  %v9132 = vlaneseq
  %v9133 = vshrl.u32 %v9132, 7
  %v9134 = vsub.s32 0, %v9133
  %v9135 = vrot.slane %v9130, %v9134
  %v9137 = vadd.f32 %v9129, %v9135
  %vm9138 = vcmask 7168
  %9139 = vst.msk [vmem:[%s12] sm:$0xff] %vm9138, %v9137
  // Predicated region
  $region50: #{discriminator_forward.1} parent=0 // pred_check
    _
  $region51: #{discriminator_forward.1} parent=0 // pred_check_branch
    %9141 = sbr.rel (0) target = $region53
  $region52: #{discriminator_forward.1} parent=0 // pred_region
    _
  $region53: #{discriminator_forward.1} parent=0 // pred_fallthru
    _
  // Predicated region
  $region54: #{discriminator_forward.1} parent=0 // pred_check
    _
  $region55: #{discriminator_forward.1} parent=0 // pred_check_branch
    %9143 = sbr.rel (0) target = $region57
  $region56: #{discriminator_forward.1} parent=0 // pred_region
    _
  $region57: #{discriminator_forward.1} parent=0 // pred_fallthru
    _

</llo_original>
